<compile_context>
chip_gen: v7x
topology: tpu7x:2x2x1
jax: 0.10.0
libtpu: 0.0.40
codegen_flags: <defaults>
</compile_context>

<pallas_src>
import functools

import jax
import jax.numpy as jnp
import numpy as np
from jax.experimental import pallas as pl
from jax.experimental.pallas import tpu as pltpu


# ----------------------------- Pallas kernels ------------------------------ #

def conv_cmajor_kernel(xt_ref, w_ref, b_ref, o_ref):
    # xt_ref: (1, K, HW)    bf16 im2col'd 3x3 taps of one image (K = 9*Cin, maybe padded)
    # w_ref:  (Cout, K)     bf16 conv weight, C-major (K index = tap*Cin + cin)
    # b_ref:  (Cout, 1)     f32
    # o_ref:  (1, Cout, HW) bf16 ReLU(w @ x + b); HW on lanes -> lane-dense stores
    acc = jnp.dot(w_ref[...], xt_ref[0], preferred_element_type=jnp.float32)
    o_ref[0] = jnp.maximum(acc + b_ref[...], 0.0).astype(o_ref.dtype)


def fc_kernel(x_ref, w_ref, b_ref, o_ref, *, apply_relu):
    # grid = (nout // tn [parallel], K // tk [arbitrary, reduction, innermost]).
    # The output block index is constant along k, so o_ref (f32) stays resident
    # in VMEM across the reduction and is used directly as the accumulator.
    # x_ref: (N, tk), w_ref: (tk, tn), b_ref: (1, tn) f32, o_ref: (N, tn) f32.
    k = pl.program_id(1)

    @pl.when(k == 0)
    def _():
        o_ref[...] = jnp.broadcast_to(b_ref[...], o_ref.shape).astype(o_ref.dtype)

    xv = x_ref[...]
    wv = w_ref[...]
    if xv.dtype != wv.dtype:  # trace-time only; FC1 is bf16 x bf16 -> no cast emitted
        xv = xv.astype(wv.dtype)
    o_ref[...] += jnp.dot(xv, wv, preferred_element_type=jnp.float32).astype(o_ref.dtype)

    if apply_relu:
        @pl.when(k == pl.num_programs(1) - 1)
        def _():
            o_ref[...] = jnp.maximum(o_ref[...], 0.0)


# ------------------------------ wrappers ----------------------------------- #

def im2col_cmajor(x_nchw):
    """(N, C, H, W) -> (N, 9*C, H*W) for a 3x3 / pad=1 conv; K index = tap*C + c."""
    n, c, h, w = x_nchw.shape
    xp = jnp.pad(x_nchw, ((0, 0), (0, 0), (1, 1), (1, 1)))
    taps = [xp[:, :, dy:dy + h, dx:dx + w].reshape(n, 1, c, h * w)
            for dy in range(3) for dx in range(3)]
    return jnp.concatenate(taps, axis=1).reshape(n, 9 * c, h * w)


def conv3x3_relu_cmajor(x_nchw, w_cm, b):
    """x: (N, Cin, H, W); w_cm: (Cout, Kpad >= 9*Cin) bf16; b: (Cout,) -> (N, Cout, H*W) bf16."""
    n, cin, h, w = x_nchw.shape
    cout, k_pad = w_cm.shape
    hw = h * w
    xt = im2col_cmajor(x_nchw.astype(jnp.bfloat16))          # (N, 9*Cin, HW) bf16
    if k_pad != xt.shape[1]:
        xt = jnp.pad(xt, ((0, 0), (0, k_pad - xt.shape[1]), (0, 0)))
    out = pl.pallas_call(
        conv_cmajor_kernel,
        out_shape=jax.ShapeDtypeStruct((n, cout, hw), jnp.bfloat16),
        grid_spec=pltpu.PrefetchScalarGridSpec(
            num_scalar_prefetch=0,
            grid=(n,),
            in_specs=[
                pl.BlockSpec((1, k_pad, hw), lambda i: (i, 0, 0)),
                pl.BlockSpec((cout, k_pad), lambda i: (0, 0)),
                pl.BlockSpec((cout, 1), lambda i: (0, 0)),
            ],
            out_specs=pl.BlockSpec((1, cout, hw), lambda i: (i, 0, 0)),
        ),
        compiler_params=pltpu.CompilerParams(dimension_semantics=("parallel",)),
    )(xt, w_cm, b.reshape(cout, 1))
    return out  # (N, Cout, HW) C-major -> torch-style NCHW flatten is a free reshape


def linear(x, w, b, *, apply_relu, tk, tn):
    """y = relu?(x @ w + b); accumulation is f32 directly in the resident output block."""
    n, k = x.shape
    kw, nout = w.shape
    assert k == kw and k % tk == 0 and nout % tn == 0
    ce = pl.CostEstimate(
        flops=2 * n * k * nout,
        transcendentals=0,
        bytes_accessed=(k * nout * w.dtype.itemsize
                        + (nout // tn) * n * k * x.dtype.itemsize
                        + n * nout * 4),
    )
    return pl.pallas_call(
        functools.partial(fc_kernel, apply_relu=apply_relu),
        out_shape=jax.ShapeDtypeStruct((n, nout), jnp.float32),
        grid_spec=pltpu.PrefetchScalarGridSpec(
            num_scalar_prefetch=0,
            grid=(nout // tn, k // tk),
            in_specs=[
                pl.BlockSpec((n, tk), lambda i, j: (0, j)),
                pl.BlockSpec((tk, tn), lambda i, j: (j, i)),
                pl.BlockSpec((1, tn), lambda i, j: (0, i)),
            ],
            out_specs=pl.BlockSpec((n, tn), lambda i, j: (0, i)),
        ),
        compiler_params=pltpu.CompilerParams(
            dimension_semantics=("parallel", "arbitrary")),
        cost_estimate=ce,
    )(x, w, b.reshape(1, nout))


@functools.partial(jax.jit, static_argnames="num_classes")
def cnn_forward(x_nchw, p, *, num_classes):
    n = x_nchw.shape[0]
    h1 = conv3x3_relu_cmajor(x_nchw, p["w1_cm"], p["b1"])     # (N, 32, 784) bf16
    h1 = h1.reshape(n, 32, 28, 28)
    h2 = conv3x3_relu_cmajor(h1, p["w2_cm"], p["b2"])         # (N, 64, 784) bf16
    # torch.nn.Flatten on NCHW: h2 is already C-major per image -> free reshape.
    flat = h2.reshape(n, 64 * 28 * 28)                        # (N, 50176) bf16
    h3 = linear(flat, p["wf1"], p["bf1"], apply_relu=True, tk=12544, tn=128)   # f32
    out_pad = linear(h3, p["wf2_pad"], p["bf2_pad"], apply_relu=False,
                     tk=256, tn=128)
    return out_pad[:, :num_classes]


# --------------------------- params & reference ---------------------------- #

def init_params(key, num_classes):
    ks = jax.random.split(key, 8)

    def uinit(k, shape, fan_in):
        bound = 1.0 / float(np.sqrt(fan_in))
        return jax.random.uniform(k, shape, jnp.float32, minval=-bound, maxval=bound)

    w1_hwio = uinit(ks[0], (3, 3, 1, 32), 1 * 9)
    b1 = uinit(ks[1], (32,), 1 * 9)
    w2_hwio = uinit(ks[2], (3, 3, 32, 64), 32 * 9)
    b2 = uinit(ks[3], (64,), 32 * 9)
    wf1 = uinit(ks[4], (64 * 28 * 28, 256), 64 * 28 * 28)
    bf1 = uinit(ks[5], (256,), 64 * 28 * 28)
    wf2 = uinit(ks[6], (256, num_classes), 256)
    bf2 = uinit(ks[7], (num_classes,), 256)

    # C-major conv weights for the fused im2col matmul: (Cout, 9*Cin), K = tap*Cin + cin.
    w1_cm = jnp.transpose(w1_hwio.reshape(9 * 1, 32))         # (32, 9)
    w1_cm = jnp.pad(w1_cm, ((0, 0), (0, 16 - 9)))             # pad K 9 -> 16 (zeros)
    w2_cm = jnp.transpose(w2_hwio.reshape(9 * 32, 64))        # (64, 288)

    # FC1 weights streamed as bf16 (f32 accumulate in-kernel); FC2 padded to 128 cols, f32.
    nc_pad = 128
    wf2_pad = jnp.zeros((256, nc_pad), jnp.float32).at[:, :num_classes].set(wf2)
    bf2_pad = jnp.zeros((nc_pad,), jnp.float32).at[:num_classes].set(bf2)

    p = dict(w1_cm=w1_cm.astype(jnp.bfloat16), b1=b1,
             w2_cm=w2_cm.astype(jnp.bfloat16), b2=b2,
             wf1=wf1.astype(jnp.bfloat16), bf1=bf1,
             wf2_pad=wf2_pad, bf2_pad=bf2_pad)
    ref = dict(w1_hwio=w1_hwio, b1=b1, w2_hwio=w2_hwio, b2=b2,
               wf1=wf1, bf1=bf1, wf2=wf2, bf2=bf2)
    return p, ref


def reference_forward(x_nchw, r):
    x = jnp.transpose(x_nchw, (0, 2, 3, 1))
    dn1 = jax.lax.conv_dimension_numbers(x.shape, r["w1_hwio"].shape,
                                         ("NHWC", "HWIO", "NHWC"))
    h1 = jax.nn.relu(jax.lax.conv_general_dilated(
        x, r["w1_hwio"], (1, 1), "SAME", dimension_numbers=dn1) + r["b1"])
    dn2 = jax.lax.conv_dimension_numbers(h1.shape, r["w2_hwio"].shape,
                                         ("NHWC", "HWIO", "NHWC"))
    h2 = jax.nn.relu(jax.lax.conv_general_dilated(
        h1, r["w2_hwio"], (1, 1), "SAME", dimension_numbers=dn2) + r["b2"])
    flat = jnp.transpose(h2, (0, 3, 1, 2)).reshape(x.shape[0], -1)
    h3 = jax.nn.relu(flat @ r["wf1"] + r["bf1"])
    return h3 @ r["wf2"] + r["bf2"]


# --------------------------------- main ------------------------------------ #

if __name__ == "__main__":
    num_classes = 10
    key = jax.random.PRNGKey(0)
    k_param, k_x = jax.random.split(key)
    params, ref_params = init_params(k_param, num_classes)

    # Input must be 28x28 because fc1 expects 64*28*28 features (per the module spec).
    x = jax.random.normal(k_x, (2, 1, 28, 28), jnp.float32)

    out = cnn_forward(x, params, num_classes=num_classes)
    out = jax.block_until_ready(out)
    assert out.shape == (2, num_classes) and out.dtype == jnp.float32

    # Sanity check against a plain-JAX f32 reference (kernel path is bf16 with f32
    # accumulation, expected <~1% relative error on this metric).
    ref = jax.block_until_ready(reference_forward(x, ref_params))
    rel_err = float(jnp.max(jnp.abs(out - ref)) / (jnp.max(jnp.abs(ref)) + 1e-6))
    assert rel_err < 3e-2, f"mismatch vs reference, rel_err={rel_err}"

    print("KERNEL_OK")
</pallas_src>

<mosaic_0001>
module attributes {stable_mosaic.version = 11 : i64} {
  func.func @conv_cmajor_kernel(%arg0: i32, %arg1: memref<1x16x784xbf16, #tpu.memory_space<vmem>>, %arg2: memref<32x16xbf16, #tpu.memory_space<vmem>>, %arg3: memref<32x1xf32, #tpu.memory_space<vmem>>, %arg4: memref<1x32x784xbf16, #tpu.memory_space<vmem>>) attributes {dimension_semantics = [#tpu.dimension_semantics<parallel>], iteration_bounds = array<i64: 2>, scalar_prefetch = 0 : i64, scratch_operands = 0 : i64, tpu.core_type = #tpu.core_type<tc>, window_params = [{transform_indices = @transform_0, window_bounds = array<i64: 1, 16, 784>}, {pipeline_mode = #tpu.pipeline_mode<synchronous>, transform_indices = @transform_1, window_bounds = array<i64: 32, 16>}, {pipeline_mode = #tpu.pipeline_mode<synchronous>, transform_indices = @transform_2, window_bounds = array<i64: 32, 1>}, {transform_indices = @transform_3, window_bounds = array<i64: 1, 32, 784>}]} {
    %c0 = arith.constant 0 : index
    %c0_0 = arith.constant 0 : index
    %0 = vector.load %arg2[%c0, %c0_0] : memref<32x16xbf16, #tpu.memory_space<vmem>>, vector<32x16xbf16>
    %c0_1 = arith.constant 0 : index
    %c0_2 = arith.constant 0 : index
    %c0_3 = arith.constant 0 : index
    %1 = vector.load %arg1[%c0_1, %c0_2, %c0_3] : memref<1x16x784xbf16, #tpu.memory_space<vmem>>, vector<1x16x784xbf16>
    %2 = vector.shape_cast %1 : vector<1x16x784xbf16> to vector<16x784xbf16>
    %cst = arith.constant dense<0.000000e+00> : vector<32x784xf32>
    %3 = tpu.matmul %0, %2, %cst {dimension_numbers = #tpu.dot_dimension_numbers<[1], [0], [0], [1], [0, 0, 1, 1], [], []>} : vector<32x16xbf16>, vector<16x784xbf16>, vector<32x784xf32> -> vector<32x784xf32>
    %c0_4 = arith.constant 0 : index
    %c0_5 = arith.constant 0 : index
    %4 = vector.load %arg3[%c0_4, %c0_5] : memref<32x1xf32, #tpu.memory_space<vmem>>, vector<32x1xf32>
    %5 = vector.broadcast %4 : vector<32x1xf32> to vector<32x784xf32>
    %6 = arith.addf %3, %5 : vector<32x784xf32>
    %cst_6 = arith.constant 0.000000e+00 : f32
    %7 = vector.broadcast %cst_6 : f32 to vector<32x784xf32>
    %8 = arith.maximumf %6, %7 : vector<32x784xf32>
    %9 = arith.truncf %8 : vector<32x784xf32> to vector<32x784xbf16>
    %c0_7 = arith.constant 0 : index
    %c0_8 = arith.constant 0 : index
    %c0_9 = arith.constant 0 : index
    %10 = vector.load %arg4[%c0_7, %c0_8, %c0_9] : memref<1x32x784xbf16, #tpu.memory_space<vmem>>, vector<1x32x784xbf16>
    %11 = vector.shape_cast %10 : vector<1x32x784xbf16> to vector<32x784xbf16>
    %12 = vector.shape_cast %9 : vector<32x784xbf16> to vector<1x32x784xbf16>
    tpu.vector_store %arg4[%c0_7, %c0_8, %c0_9], %12 {strides = array<i32>} : memref<1x32x784xbf16, #tpu.memory_space<vmem>>, vector<1x32x784xbf16>,
    return
  }
  func.func @transform_0(%arg0: i32) -> (i32, i32, i32) {
    %c0_i32 = arith.constant 0 : i32
    %c0_i32_0 = arith.constant 0 : i32
    %c0_i32_1 = arith.constant 0 : i32
    return %arg0, %c0_i32, %c0_i32_0 : i32, i32, i32
  }
  func.func @transform_1(%arg0: i32) -> (i32, i32) {
    %c0_i32 = arith.constant 0 : i32
    %c0_i32_0 = arith.constant 0 : i32
    %c0_i32_1 = arith.constant 0 : i32
    return %c0_i32, %c0_i32_0 : i32, i32
  }
  func.func @transform_2(%arg0: i32) -> (i32, i32) {
    %c0_i32 = arith.constant 0 : i32
    %c0_i32_0 = arith.constant 0 : i32
    %c0_i32_1 = arith.constant 0 : i32
    return %c0_i32, %c0_i32_0 : i32, i32
  }
  func.func @transform_3(%arg0: i32) -> (i32, i32, i32) {
    %c0_i32 = arith.constant 0 : i32
    %c0_i32_0 = arith.constant 0 : i32
    %c0_i32_1 = arith.constant 0 : i32
    return %arg0, %c0_i32, %c0_i32_0 : i32, i32, i32
  }
}

module attributes {stable_mosaic.version = 11 : i64} {
  func.func @conv_cmajor_kernel(%arg0: i32, %arg1: memref<1x288x784xbf16, #tpu.memory_space<vmem>>, %arg2: memref<64x288xbf16, #tpu.memory_space<vmem>>, %arg3: memref<64x1xf32, #tpu.memory_space<vmem>>, %arg4: memref<1x64x784xbf16, #tpu.memory_space<vmem>>) attributes {dimension_semantics = [#tpu.dimension_semantics<parallel>], iteration_bounds = array<i64: 2>, scalar_prefetch = 0 : i64, scratch_operands = 0 : i64, tpu.core_type = #tpu.core_type<tc>, window_params = [{transform_indices = @transform_0, window_bounds = array<i64: 1, 288, 784>}, {pipeline_mode = #tpu.pipeline_mode<synchronous>, transform_indices = @transform_1, window_bounds = array<i64: 64, 288>}, {pipeline_mode = #tpu.pipeline_mode<synchronous>, transform_indices = @transform_2, window_bounds = array<i64: 64, 1>}, {transform_indices = @transform_3, window_bounds = array<i64: 1, 64, 784>}]} {
    %c0 = arith.constant 0 : index
    %c0_0 = arith.constant 0 : index
    %0 = vector.load %arg2[%c0, %c0_0] : memref<64x288xbf16, #tpu.memory_space<vmem>>, vector<64x288xbf16>
    %c0_1 = arith.constant 0 : index
    %c0_2 = arith.constant 0 : index
    %c0_3 = arith.constant 0 : index
    %1 = vector.load %arg1[%c0_1, %c0_2, %c0_3] : memref<1x288x784xbf16, #tpu.memory_space<vmem>>, vector<1x288x784xbf16>
    %2 = vector.shape_cast %1 : vector<1x288x784xbf16> to vector<288x784xbf16>
    %cst = arith.constant dense<0.000000e+00> : vector<64x784xf32>
    %3 = tpu.matmul %0, %2, %cst {dimension_numbers = #tpu.dot_dimension_numbers<[1], [0], [0], [1], [0, 0, 1, 1], [], []>} : vector<64x288xbf16>, vector<288x784xbf16>, vector<64x784xf32> -> vector<64x784xf32>
    %c0_4 = arith.constant 0 : index
    %c0_5 = arith.constant 0 : index
    %4 = vector.load %arg3[%c0_4, %c0_5] : memref<64x1xf32, #tpu.memory_space<vmem>>, vector<64x1xf32>
    %5 = vector.broadcast %4 : vector<64x1xf32> to vector<64x784xf32>
    %6 = arith.addf %3, %5 : vector<64x784xf32>
    %cst_6 = arith.constant 0.000000e+00 : f32
    %7 = vector.broadcast %cst_6 : f32 to vector<64x784xf32>
    %8 = arith.maximumf %6, %7 : vector<64x784xf32>
    %9 = arith.truncf %8 : vector<64x784xf32> to vector<64x784xbf16>
    %c0_7 = arith.constant 0 : index
    %c0_8 = arith.constant 0 : index
    %c0_9 = arith.constant 0 : index
    %10 = vector.load %arg4[%c0_7, %c0_8, %c0_9] : memref<1x64x784xbf16, #tpu.memory_space<vmem>>, vector<1x64x784xbf16>
    %11 = vector.shape_cast %10 : vector<1x64x784xbf16> to vector<64x784xbf16>
    %12 = vector.shape_cast %9 : vector<64x784xbf16> to vector<1x64x784xbf16>
    tpu.vector_store %arg4[%c0_7, %c0_8, %c0_9], %12 {strides = array<i32>} : memref<1x64x784xbf16, #tpu.memory_space<vmem>>, vector<1x64x784xbf16>,
    return
  }
  func.func @transform_0(%arg0: i32) -> (i32, i32, i32) {
    %c0_i32 = arith.constant 0 : i32
    %c0_i32_0 = arith.constant 0 : i32
    %c0_i32_1 = arith.constant 0 : i32
    return %arg0, %c0_i32, %c0_i32_0 : i32, i32, i32
  }
  func.func @transform_1(%arg0: i32) -> (i32, i32) {
    %c0_i32 = arith.constant 0 : i32
    %c0_i32_0 = arith.constant 0 : i32
    %c0_i32_1 = arith.constant 0 : i32
    return %c0_i32, %c0_i32_0 : i32, i32
  }
  func.func @transform_2(%arg0: i32) -> (i32, i32) {
    %c0_i32 = arith.constant 0 : i32
    %c0_i32_0 = arith.constant 0 : i32
    %c0_i32_1 = arith.constant 0 : i32
    return %c0_i32, %c0_i32_0 : i32, i32
  }
  func.func @transform_3(%arg0: i32) -> (i32, i32, i32) {
    %c0_i32 = arith.constant 0 : i32
    %c0_i32_0 = arith.constant 0 : i32
    %c0_i32_1 = arith.constant 0 : i32
    return %arg0, %c0_i32, %c0_i32_0 : i32, i32, i32
  }
}

module attributes {stable_mosaic.version = 11 : i64} {
  func.func @fc_kernel(%arg0: i32, %arg1: i32, %arg2: memref<2x12544xbf16, #tpu.memory_space<vmem>>, %arg3: memref<12544x128xbf16, #tpu.memory_space<vmem>>, %arg4: memref<1x128xf32, #tpu.memory_space<vmem>>, %arg5: memref<2x128xf32, #tpu.memory_space<vmem>>) attributes {dimension_semantics = [#tpu.dimension_semantics<parallel>, #tpu.dimension_semantics<arbitrary>], iteration_bounds = array<i64: 2, 4>, scalar_prefetch = 0 : i64, scratch_operands = 0 : i64, tpu.core_type = #tpu.core_type<tc>, window_params = [{transform_indices = @transform_0, window_bounds = array<i64: 2, 12544>}, {transform_indices = @transform_1, window_bounds = array<i64: 12544, 128>}, {transform_indices = @transform_2, window_bounds = array<i64: 1, 128>}, {transform_indices = @transform_3, window_bounds = array<i64: 2, 128>}]} {
    %c0_i32 = arith.constant 0 : i32
    %0 = arith.cmpi eq, %arg1, %c0_i32 : i32
    %1 = arith.extui %0 : i1 to i32
    %c0_i32_0 = arith.constant 0 : i32
    %2 = arith.cmpi ne, %1, %c0_i32_0 : i32
    scf.if %2 {
      %c0_9 = arith.constant 0 : index
      %c0_10 = arith.constant 0 : index
      %12 = vector.load %arg4[%c0_9, %c0_10] : memref<1x128xf32, #tpu.memory_space<vmem>>, vector<1x128xf32>
      %13 = vector.shape_cast %12 : vector<1x128xf32> to vector<1x128xf32>
      %14 = vector.broadcast %13 : vector<1x128xf32> to vector<2x128xf32>
      %c0_11 = arith.constant 0 : index
      %c0_12 = arith.constant 0 : index
      %15 = vector.load %arg5[%c0_11, %c0_12] : memref<2x128xf32, #tpu.memory_space<vmem>>, vector<2x128xf32>
      tpu.vector_store %arg5[%c0_11, %c0_12], %14 {strides = array<i32>} : memref<2x128xf32, #tpu.memory_space<vmem>>, vector<2x128xf32>,
    } else {
    }
    %c0 = arith.constant 0 : index
    %c0_1 = arith.constant 0 : index
    %3 = vector.load %arg2[%c0, %c0_1] : memref<2x12544xbf16, #tpu.memory_space<vmem>>, vector<2x12544xbf16>
    %c0_2 = arith.constant 0 : index
    %c0_3 = arith.constant 0 : index
    %4 = vector.load %arg3[%c0_2, %c0_3] : memref<12544x128xbf16, #tpu.memory_space<vmem>>, vector<12544x128xbf16>
    %c0_4 = arith.constant 0 : index
    %c0_5 = arith.constant 0 : index
    %5 = vector.load %arg5[%c0_4, %c0_5] : memref<2x128xf32, #tpu.memory_space<vmem>>, vector<2x128xf32>
    %cst = arith.constant dense<0.000000e+00> : vector<2x128xf32>
    %6 = tpu.matmul %3, %4, %cst {dimension_numbers = #tpu.dot_dimension_numbers<[1], [0], [0], [1], [0, 0, 1, 1], [], []>} : vector<2x12544xbf16>, vector<12544x128xbf16>, vector<2x128xf32> -> vector<2x128xf32>
    %7 = arith.addf %5, %6 : vector<2x128xf32>
    %c0_6 = arith.constant 0 : index
    %c0_7 = arith.constant 0 : index
    %8 = vector.load %arg5[%c0_6, %c0_7] : memref<2x128xf32, #tpu.memory_space<vmem>>, vector<2x128xf32>
    tpu.vector_store %arg5[%c0_6, %c0_7], %7 {strides = array<i32>} : memref<2x128xf32, #tpu.memory_space<vmem>>, vector<2x128xf32>,
    %c3_i32 = arith.constant 3 : i32
    %9 = arith.cmpi eq, %arg1, %c3_i32 : i32
    %10 = arith.extui %9 : i1 to i32
    %c0_i32_8 = arith.constant 0 : i32
    %11 = arith.cmpi ne, %10, %c0_i32_8 : i32
    scf.if %11 {
      %c0_9 = arith.constant 0 : index
      %c0_10 = arith.constant 0 : index
      %12 = vector.load %arg5[%c0_9, %c0_10] : memref<2x128xf32, #tpu.memory_space<vmem>>, vector<2x128xf32>
      %cst_11 = arith.constant 0.000000e+00 : f32
      %13 = vector.broadcast %cst_11 : f32 to vector<2x128xf32>
      %14 = arith.maximumf %12, %13 : vector<2x128xf32>
      %c0_12 = arith.constant 0 : index
      %c0_13 = arith.constant 0 : index
      %15 = vector.load %arg5[%c0_12, %c0_13] : memref<2x128xf32, #tpu.memory_space<vmem>>, vector<2x128xf32>
      tpu.vector_store %arg5[%c0_12, %c0_13], %14 {strides = array<i32>} : memref<2x128xf32, #tpu.memory_space<vmem>>, vector<2x128xf32>,
    } else {
    }
    return
  }
  func.func @transform_0(%arg0: i32, %arg1: i32) -> (i32, i32) {
    %c0_i32 = arith.constant 0 : i32
    %c0_i32_0 = arith.constant 0 : i32
    return %c0_i32, %arg1 : i32, i32
  }
  func.func @transform_1(%arg0: i32, %arg1: i32) -> (i32, i32) {
    %c0_i32 = arith.constant 0 : i32
    return %arg1, %arg0 : i32, i32
  }
  func.func @transform_2(%arg0: i32, %arg1: i32) -> (i32, i32) {
    %c0_i32 = arith.constant 0 : i32
    %c0_i32_0 = arith.constant 0 : i32
    return %c0_i32, %arg0 : i32, i32
  }
  func.func @transform_3(%arg0: i32, %arg1: i32) -> (i32, i32) {
    %c0_i32 = arith.constant 0 : i32
    %c0_i32_0 = arith.constant 0 : i32
    return %c0_i32, %arg0 : i32, i32
  }
}

module attributes {stable_mosaic.version = 11 : i64} {
  func.func @fc_kernel(%arg0: i32, %arg1: i32, %arg2: memref<2x256xf32, #tpu.memory_space<vmem>>, %arg3: memref<256x128xf32, #tpu.memory_space<vmem>>, %arg4: memref<1x128xf32, #tpu.memory_space<vmem>>, %arg5: memref<2x128xf32, #tpu.memory_space<vmem>>) attributes {dimension_semantics = [#tpu.dimension_semantics<parallel>, #tpu.dimension_semantics<arbitrary>], iteration_bounds = array<i64: 1, 1>, scalar_prefetch = 0 : i64, scratch_operands = 0 : i64, tpu.core_type = #tpu.core_type<tc>, window_params = [{transform_indices = @transform_0, window_bounds = array<i64: 2, 256>}, {transform_indices = @transform_1, window_bounds = array<i64: 256, 128>}, {transform_indices = @transform_2, window_bounds = array<i64: 1, 128>}, {transform_indices = @transform_3, window_bounds = array<i64: 2, 128>}]} {
    %c0_i32 = arith.constant 0 : i32
    %0 = arith.cmpi eq, %arg1, %c0_i32 : i32
    %1 = arith.extui %0 : i1 to i32
    %c0_i32_0 = arith.constant 0 : i32
    %2 = arith.cmpi ne, %1, %c0_i32_0 : i32
    scf.if %2 {
      %c0_8 = arith.constant 0 : index
      %c0_9 = arith.constant 0 : index
      %9 = vector.load %arg4[%c0_8, %c0_9] : memref<1x128xf32, #tpu.memory_space<vmem>>, vector<1x128xf32>
      %10 = vector.shape_cast %9 : vector<1x128xf32> to vector<1x128xf32>
      %11 = vector.broadcast %10 : vector<1x128xf32> to vector<2x128xf32>
      %c0_10 = arith.constant 0 : index
      %c0_11 = arith.constant 0 : index
      %12 = vector.load %arg5[%c0_10, %c0_11] : memref<2x128xf32, #tpu.memory_space<vmem>>, vector<2x128xf32>
      tpu.vector_store %arg5[%c0_10, %c0_11], %11 {strides = array<i32>} : memref<2x128xf32, #tpu.memory_space<vmem>>, vector<2x128xf32>,
    } else {
    }
    %c0 = arith.constant 0 : index
    %c0_1 = arith.constant 0 : index
    %3 = vector.load %arg2[%c0, %c0_1] : memref<2x256xf32, #tpu.memory_space<vmem>>, vector<2x256xf32>
    %c0_2 = arith.constant 0 : index
    %c0_3 = arith.constant 0 : index
    %4 = vector.load %arg3[%c0_2, %c0_3] : memref<256x128xf32, #tpu.memory_space<vmem>>, vector<256x128xf32>
    %c0_4 = arith.constant 0 : index
    %c0_5 = arith.constant 0 : index
    %5 = vector.load %arg5[%c0_4, %c0_5] : memref<2x128xf32, #tpu.memory_space<vmem>>, vector<2x128xf32>
    %cst = arith.constant dense<0.000000e+00> : vector<2x128xf32>
    %6 = tpu.matmul %3, %4, %cst {dimension_numbers = #tpu.dot_dimension_numbers<[1], [0], [0], [1], [0, 0, 1, 1], [], []>} : vector<2x256xf32>, vector<256x128xf32>, vector<2x128xf32> -> vector<2x128xf32>
    %7 = arith.addf %5, %6 : vector<2x128xf32>
    %c0_6 = arith.constant 0 : index
    %c0_7 = arith.constant 0 : index
    %8 = vector.load %arg5[%c0_6, %c0_7] : memref<2x128xf32, #tpu.memory_space<vmem>>, vector<2x128xf32>
    tpu.vector_store %arg5[%c0_6, %c0_7], %7 {strides = array<i32>} : memref<2x128xf32, #tpu.memory_space<vmem>>, vector<2x128xf32>,
    return
  }
  func.func @transform_0(%arg0: i32, %arg1: i32) -> (i32, i32) {
    %c0_i32 = arith.constant 0 : i32
    %c0_i32_0 = arith.constant 0 : i32
    return %c0_i32, %arg1 : i32, i32
  }
  func.func @transform_1(%arg0: i32, %arg1: i32) -> (i32, i32) {
    %c0_i32 = arith.constant 0 : i32
    return %arg1, %arg0 : i32, i32
  }
  func.func @transform_2(%arg0: i32, %arg1: i32) -> (i32, i32) {
    %c0_i32 = arith.constant 0 : i32
    %c0_i32_0 = arith.constant 0 : i32
    return %c0_i32, %arg0 : i32, i32
  }
  func.func @transform_3(%arg0: i32, %arg1: i32) -> (i32, i32) {
    %c0_i32 = arith.constant 0 : i32
    %c0_i32_0 = arith.constant 0 : i32
    return %c0_i32, %arg0 : i32, i32
  }
}

</mosaic_0001>

<llo_original>
// kernel: cnn_forward.4
$region0: #{cnn_forward.4}
  #allocation0 [shape = 'u32[]', space=smem, size = 0x4, offset = 0x4, fixed_abs, tag = 'smem constant byte address 0x4 - core index']
  #allocation1 [shape = 'u32[144,128]{1,0:T(1,128)}', space=vmem, size = 0x12000, scoped, tag = 'internal scratch']
  %s0 = inlined_call_operand.vmem [shape: bf16[2,16,784], index: 0, kind: input, shape index: {}]
  %s1 = inlined_call_operand.vmem [shape: bf16[32,16], index: 1, kind: input, shape index: {}]
  %s2 = inlined_call_operand.vmem [shape: f32[32,1], index: 2, kind: input, shape index: {}]
  %s3 = inlined_call_operand.vmem [shape: bf16[2,32,784], index: 3, kind: output, shape index: {}]
  %s4 = sld [smem:[#allocation0]]
  $region45: #{cnn_forward.4} parent=0
    _
  %s6 = ssub.s32 1, %s4
  %s7 = scalar_select 0, %s6, %s4
  loop: start=0, step=1, limit=4
  $region2: #{cnn_forward.4} parent=0 // loop_pre_header
    _
  $region3: #{cnn_forward.4} parent=0 // loop_header
    %s9 = sphi 0, %s13
    %p10 = scmp.ge.s32.totalorder %s9, 4
    %s19 = sphi 0, %s21
    %s22 = sphi 0, %s19
    %s23 = sphi 0, %s22
    %s39 = sphi 0, %s23
    %s43 = sphi 0, %s43
    %s45 = sphi 0, %s43
    %s46 = sphi 0, %s45
    %s60 = sphi 0, %s46
    %s64 = sphi 0, %s64
    %s66 = sphi 0, %s64
    %s67 = sphi 0, %s66
    %s81 = sphi 0, %s67
    %s87 = sphi 0, %s89
    %s90 = sphi 0, %s87
    %s91 = sphi 0, %s90
    %s107 = sphi 0, %s91
  $region4: #{cnn_forward.4} parent=0 // loop_header_branch
    %12 = sbr.rel (%p10) target = $region8
  $region5: #{cnn_forward.4} parent=0 // loop_body
    %s14 = ssub.s32 %s9, 1
    %s15 = ssub.s32 %s9, 2
    %s16 = sadd.s32 %s9, 1
    %s17 = ssub.s32 %s9, %s16
    %p18 = scmp.eq.s32.totalorder %s17, 0
    %s20 = sadd.s32 %s19, 1
    %s21 = scalar_select %p18, %s19, %s20
    %p24 = pneg %p18
    %p25 = scmp.eq.s32.totalorder %s9, 1
    %p26 = por %p24, %p25
    %p27 = scmp.ne.s32.totalorder %s19, %s22
    %p28 = scmp.eq.s32.totalorder %s9, 0
    %p29 = por %p27, %p28
    %p30 = scmp.ne.s32.totalorder %s19, %s22
    %p31 = scmp.eq.s32.totalorder %s14, 1
    %p32 = por %p30, %p31
    %p33 = scmp.ne.s32.totalorder %s22, %s23
    %p34 = scmp.eq.s32.totalorder %s14, 0
    %p35 = por %p33, %p34
    %p36 = scmp.ne.s32.totalorder %s22, %s23
    %p37 = scmp.eq.s32.totalorder %s15, 1
    %p38 = por %p36, %p37
    %p40 = scmp.ne.s32.totalorder %s23, %s39
    %p41 = scmp.eq.s32.totalorder %s15, 0
    %p42 = por %p40, %p41
    %s44 = sadd.s32 %s43, 1
    %p47 = scmp.eq.s32.totalorder %s9, 1
    %p48 = scmp.ne.s32.totalorder %s43, %s45
    %p49 = scmp.eq.s32.totalorder %s9, 0
    %p50 = por %p48, %p49
    %p51 = scmp.ne.s32.totalorder %s43, %s45
    %p52 = scmp.eq.s32.totalorder %s14, 1
    %p53 = por %p51, %p52
    %p54 = scmp.ne.s32.totalorder %s45, %s46
    %p55 = scmp.eq.s32.totalorder %s14, 0
    %p56 = por %p54, %p55
    %p57 = scmp.ne.s32.totalorder %s45, %s46
    %p58 = scmp.eq.s32.totalorder %s15, 1
    %p59 = por %p57, %p58
    %p61 = scmp.ne.s32.totalorder %s46, %s60
    %p62 = scmp.eq.s32.totalorder %s15, 0
    %p63 = por %p61, %p62
    %s65 = sadd.s32 %s64, 1
    %p68 = scmp.eq.s32.totalorder %s9, 1
    %p69 = scmp.ne.s32.totalorder %s64, %s66
    %p70 = scmp.eq.s32.totalorder %s9, 0
    %p71 = por %p69, %p70
    %p72 = scmp.ne.s32.totalorder %s64, %s66
    %p73 = scmp.eq.s32.totalorder %s14, 1
    %p74 = por %p72, %p73
    %p75 = scmp.ne.s32.totalorder %s66, %s67
    %p76 = scmp.eq.s32.totalorder %s14, 0
    %p77 = por %p75, %p76
    %p78 = scmp.ne.s32.totalorder %s66, %s67
    %p79 = scmp.eq.s32.totalorder %s15, 1
    %p80 = por %p78, %p79
    %p82 = scmp.ne.s32.totalorder %s67, %s81
    %p83 = scmp.eq.s32.totalorder %s15, 0
    %p84 = por %p82, %p83
    %s85 = ssub.s32 %s9, %s16
    %p86 = scmp.eq.s32.totalorder %s85, 0
    %s88 = sadd.s32 %s87, 1
    %s89 = scalar_select %p86, %s87, %s88
    %p92 = pneg %p86
    %p93 = scmp.eq.s32.totalorder %s9, 1
    %p94 = por %p92, %p93
    %p95 = scmp.ne.s32.totalorder %s87, %s90
    %p96 = scmp.eq.s32.totalorder %s9, 0
    %p97 = por %p95, %p96
    %p98 = scmp.ne.s32.totalorder %s87, %s90
    %p99 = scmp.eq.s32.totalorder %s14, 1
    %p100 = por %p98, %p99
    %p101 = scmp.ne.s32.totalorder %s90, %s91
    %p102 = scmp.eq.s32.totalorder %s14, 0
    %p103 = por %p101, %p102
    %p104 = scmp.ne.s32.totalorder %s90, %s91
    %p105 = scmp.eq.s32.totalorder %s15, 1
    %p106 = por %p104, %p105
    %p108 = scmp.ne.s32.totalorder %s91, %s107
    %p109 = scmp.eq.s32.totalorder %s15, 0
    %p110 = por %p108, %p109
    %p111 = scmp.le.s32.totalorder 1, %s9
    %p112 = scmp.lt.s32.totalorder %s9, 3
    %p113 = pnand %p111, %p112
    %p114 = pneg %p113
    // Predicated region
    $region9: #{cnn_forward.4} parent=5 // pred_check
      _
    $region10: #{cnn_forward.4} parent=5 // pred_check_branch
      %116 = sbr.rel (%p113) target = $region12
    $region11: #{cnn_forward.4} parent=5 // pred_region
      %s117 = ssub.s32 %s9, 1
      // Predicated region
      $region13: #{cnn_forward.4} parent=11 // pred_check
        %p118 = pneg %p56
      $region14: #{cnn_forward.4} parent=11 // pred_check_branch
        %120 = sbr.rel (%p118) target = $region16
      $region15: #{cnn_forward.4} parent=11 // pred_region
        _
      $region16: #{cnn_forward.4} parent=11 // pred_fallthru
        _
      // Predicated region
      $region17: #{cnn_forward.4} parent=11 // pred_check
        %p121 = pneg %p77
      $region18: #{cnn_forward.4} parent=11 // pred_check_branch
        %123 = sbr.rel (%p121) target = $region20
      $region19: #{cnn_forward.4} parent=11 // pred_region
        _
      $region20: #{cnn_forward.4} parent=11 // pred_fallthru
        _
    $region12: #{cnn_forward.4} parent=5 // pred_fallthru
      _
    %p124 = scmp.lt.s32.totalorder %s9, 2
    // Predicated region
    $region21: #{cnn_forward.4} parent=5 // pred_check
      %p125 = pneg %p124
    $region22: #{cnn_forward.4} parent=5 // pred_check_branch
      %127 = sbr.rel (%p125) target = $region24
    $region23: #{cnn_forward.4} parent=5 // pred_region
      // Predicated region
      $region25: #{cnn_forward.4} parent=23 // pred_check
        %p128 = pneg %p29
      $region26: #{cnn_forward.4} parent=23 // pred_check_branch
        %130 = sbr.rel (%p128) target = $region28
      $region27: #{cnn_forward.4} parent=23 // pred_region
        %p131 = scmp.lt.s32.totalorder %s9, 1
        %s132 = scalar_select %p131, %s9, 1
        %s133 = smul.addr %s132, 14
        %s134 = smul.addr %s133, 4
        %s135 = scalar_lea.vmem %s0, %s134
      $region28: #{cnn_forward.4} parent=23 // pred_fallthru
        _
    $region24: #{cnn_forward.4} parent=5 // pred_fallthru
      _
    %p136 = scmp.le.s32.totalorder 1, %s9
    %p137 = scmp.lt.s32.totalorder %s9, 3
    %p138 = pnand %p136, %p137
    %p139 = pneg %p138
    // Predicated region
    $region29: #{cnn_forward.4} parent=5 // pred_check
      _
    $region30: #{cnn_forward.4} parent=5 // pred_check_branch
      %141 = sbr.rel (%p138) target = $region32
    $region31: #{cnn_forward.4} parent=5 // pred_region
      %s142 = ssub.s32 %s9, 1
      %p143 = scmp.lt.s32.totalorder %s14, 1
      %s144 = scalar_select %p143, %s14, 1
      %s145 = smul.addr %s144, 14
      %s146 = smul.addr %s145, 4
      %s147 = scalar_lea.vmem %s0, %s146
      %p148 = pneg %p35
      %p149 = pneg %p32
      %p150 = pneg %p56
      %p151 = pneg %p53
      %p152 = pneg %p77
      %p153 = pneg %p74
      %p154 = pneg %p103
      %p155 = pneg %p100
      %p156 = scmp.lt.s32.totalorder %s14, 1
      %s157 = scalar_select %p156, %s14, 1
      %s158 = smul.addr %s157, 28
      %s159 = smul.addr %s158, 4
      %s160 = scalar_lea.vmem %s3, %s159
      %p161 = scmp.lt.s32.totalorder %s14, 1
      %s162 = scalar_select %p161, %s14, 1
      %s163 = smul.addr %s162, 14
      %s164 = smul.addr %s163, 4
      %s165 = scalar_lea.vmem %s0, %s164
      %p166 = scmp.lt.s32.totalorder %s14, 1
      %s167 = scalar_select %p166, %s14, 1
      %s168 = smul.addr %s167, 28
      %s169 = smul.addr %s168, 4
      %s170 = scalar_lea.vmem %s3, %s169
      %v172 = vld [vmem:[%s1] sm:$0xf]
      %v173 = vld [vmem:[%s1 + $0x4] sm:$0xf]
      %v174 = vld [vmem:[%s1 + $0x8] sm:$0xf]
      %v175 = vld [vmem:[%s1 + $0xc] sm:$0xf]
      %v176 = vld [vmem:[%s165] sm:$0xff]
      %v177 = vld [vmem:[%s165 + $0x8] sm:$0xff]
      %v178 = vld [vmem:[%s165 + $0x10] sm:$0xff]
      %v179 = vld [vmem:[%s165 + $0x18] sm:$0xf]
      %v180 = vld [vmem:[%s165 + $0x1c] sm:$0xff]
      %v181 = vld [vmem:[%s165 + $0x24] sm:$0xff]
      %v182 = vld [vmem:[%s165 + $0x2c] sm:$0xff]
      %v183 = vld [vmem:[%s165 + $0x34] sm:$0xf]
      %v184 = vld [vmem:[%s2] sm:$0xff]
      %v185 = vld [vmem:[%s2 + $0x8] sm:$0xff]
      %v186 = vld [vmem:[%s2 + $0x10] sm:$0xff]
      %v187 = vld [vmem:[%s2 + $0x18] sm:$0xff]
      %189 = vset.pattern.permute.xlu0 0
      %190 = vperm.xlu0 %189, %v184
      %v191 = vpop.permute.xlu0 %190
      %194 = vset.pattern.permute.xlu0 0
      %195 = vperm.xlu0 %194, %v185
      %v196 = vpop.permute.xlu0 %195
      %199 = vset.pattern.permute.xlu0 0
      %200 = vperm.xlu0 %199, %v186
      %v201 = vpop.permute.xlu0 %200
      %204 = vset.pattern.permute.xlu0 0
      %205 = vperm.xlu0 %204, %v187
      %v206 = vpop.permute.xlu0 %205
      %v212 = vunpack.c.l.b16 %v172
      %v213 = vunpack.c.l.b16 %v173
      %v214 = vunpack.c.l.b16 %v174
      %v215 = vunpack.c.l.b16 %v175
      %v216 = vpack.c.b16 %v213, %v212
      %v217 = vpack.c.b16 %v215, %v214
      %v226 = vunpack.c.l.b16 %v176
      %v227 = vunpack.c.h.b16 %v176
      %v228 = vunpack.c.l.b16 %v177
      %v229 = vunpack.c.h.b16 %v177
      %v230 = vunpack.c.l.b16 %v178
      %v231 = vunpack.c.h.b16 %v178
      %v232 = vunpack.c.l.b16 %v179
      %v233 = vunpack.c.l.b16 %v180
      %v234 = vunpack.c.h.b16 %v180
      %v235 = vunpack.c.l.b16 %v181
      %v236 = vunpack.c.h.b16 %v181
      %v237 = vunpack.c.l.b16 %v182
      %v238 = vunpack.c.h.b16 %v182
      %v239 = vunpack.c.l.b16 %v183
      %v240 = vpack.c.b16 %v233, %v226
      %v241 = vpack.c.b16 %v234, %v227
      %v242 = vpack.c.b16 %v235, %v228
      %v243 = vpack.c.b16 %v236, %v229
      %v244 = vpack.c.b16 %v237, %v230
      %v245 = vpack.c.b16 %v238, %v231
      %v246 = vpack.c.b16 %v239, %v232
      %vm254 = vcmask 130048
      %v256 = vsel %vm254, %v216, 0
      %v259 = vsel %vm254, %v217, 0
      %261 = vmatprep.subr.bf16.mxu0 %v241
      %262 = vmatpush1.bf16.msra.mxu0 %v240
      %263 = vmatprep.subr.bf16.mxu0 0
      %264 = vmatpush1.bf16.msra.mxu0 0
      %265 = vmatprep.subr.bf16.mxu0 0
      %266 = vmatpush1.bf16.msra.mxu0 0
      %267 = vmatprep.subr.bf16.mxu0 0
      %268 = vmatpush1.bf16.msra.mxu0 0
      %269 = vmatprep.subr.bf16.mxu0 0
      %270 = vmatpush1.bf16.msra.mxu0 0
      %271 = vmatprep.subr.bf16.mxu0 0
      %272 = vmatpush1.bf16.msra.mxu0 0
      %273 = vmatprep.subr.bf16.mxu0 0
      %274 = vmatpush1.bf16.msra.mxu0 0
      %275 = vmatprep.subr.bf16.mxu0 0
      %276 = vmatpush1.bf16.msra.mxu0 0
      %277 = vmatprep.subr.bf16.mxu0 0
      %278 = vmatpush1.bf16.msra.mxu0 0
      %279 = vmatprep.subr.bf16.mxu0 0
      %280 = vmatpush1.bf16.msra.mxu0 0
      %281 = vmatprep.subr.bf16.mxu0 0
      %282 = vmatpush1.bf16.msra.mxu0 0
      %283 = vmatprep.subr.bf16.mxu0 0
      %284 = vmatpush1.bf16.msra.mxu0 0
      %285 = vmatprep.subr.bf16.mxu0 0
      %286 = vmatpush1.bf16.msra.mxu0 0
      %287 = vmatprep.subr.bf16.mxu0 0
      %288 = vmatpush1.bf16.msra.mxu0 0
      %289 = vmatprep.subr.bf16.mxu0 0
      %290 = vmatpush1.bf16.msra.mxu0 0
      %291 = vmatprep.subr.bf16.mxu0 0
      %292 = vmatpush1.bf16.msra.mxu0 0
      %293 = vmatprep.mubr.bf16.mxu0 0
      %294 = vmatmul.mubr.bf16.gmra.mrb[0].mxu0 %v256
      %v295 = vpop.f32.mrb[0].mxu0
      %v296 = vadd.f32 %v191, %v295
      %v297 = vpop.f32.mrb[0].mxu0
      %v298 = vadd.f32 %v191, %v297
      %v299 = vpop.f32.mrb[0].mxu0
      %v300 = vadd.f32 %v196, %v299
      %v301 = vpop.f32.mrb[0].mxu0
      %v302 = vadd.f32 %v196, %v301
      %303 = vmatprep.mubr.bf16.mxu0 0
      %304 = vmatmul.mubr.bf16.gmra.mrb[0].mxu0 %v259
      %v305 = vpop.f32.mrb[0].mxu0
      %v306 = vadd.f32 %v201, %v305
      %v307 = vpop.f32.mrb[0].mxu0
      %v308 = vadd.f32 %v201, %v307
      %v309 = vpop.f32.mrb[0].mxu0
      %v310 = vadd.f32 %v206, %v309
      %v311 = vpop.f32.mrb[0].mxu0
      %v312 = vadd.f32 %v206, %v311
      %313 = vdwg.mxu0
      %314 = vmatprep.subr.bf16.mxu0 %v243
      %315 = vmatpush1.bf16.msra.mxu0 %v242
      %316 = vmatprep.subr.bf16.mxu0 0
      %317 = vmatpush1.bf16.msra.mxu0 0
      %318 = vmatprep.subr.bf16.mxu0 0
      %319 = vmatpush1.bf16.msra.mxu0 0
      %320 = vmatprep.subr.bf16.mxu0 0
      %321 = vmatpush1.bf16.msra.mxu0 0
      %322 = vmatprep.subr.bf16.mxu0 0
      %323 = vmatpush1.bf16.msra.mxu0 0
      %324 = vmatprep.subr.bf16.mxu0 0
      %325 = vmatpush1.bf16.msra.mxu0 0
      %326 = vmatprep.subr.bf16.mxu0 0
      %327 = vmatpush1.bf16.msra.mxu0 0
      %328 = vmatprep.subr.bf16.mxu0 0
      %329 = vmatpush1.bf16.msra.mxu0 0
      %330 = vmatprep.subr.bf16.mxu0 0
      %331 = vmatpush1.bf16.msra.mxu0 0
      %332 = vmatprep.subr.bf16.mxu0 0
      %333 = vmatpush1.bf16.msra.mxu0 0
      %334 = vmatprep.subr.bf16.mxu0 0
      %335 = vmatpush1.bf16.msra.mxu0 0
      %336 = vmatprep.subr.bf16.mxu0 0
      %337 = vmatpush1.bf16.msra.mxu0 0
      %338 = vmatprep.subr.bf16.mxu0 0
      %339 = vmatpush1.bf16.msra.mxu0 0
      %340 = vmatprep.subr.bf16.mxu0 0
      %341 = vmatpush1.bf16.msra.mxu0 0
      %342 = vmatprep.subr.bf16.mxu0 0
      %343 = vmatpush1.bf16.msra.mxu0 0
      %344 = vmatprep.subr.bf16.mxu0 0
      %345 = vmatpush1.bf16.msra.mxu0 0
      %346 = vmatprep.mubr.bf16.mxu0 0
      %347 = vmatmul.mubr.bf16.gmra.mrb[0].mxu0 %v256
      %v348 = vpop.f32.mrb[0].mxu0
      %v349 = vadd.f32 %v191, %v348
      %v350 = vpop.f32.mrb[0].mxu0
      %v351 = vadd.f32 %v191, %v350
      %v352 = vpop.f32.mrb[0].mxu0
      %v353 = vadd.f32 %v196, %v352
      %v354 = vpop.f32.mrb[0].mxu0
      %v355 = vadd.f32 %v196, %v354
      %356 = vmatprep.mubr.bf16.mxu0 0
      %357 = vmatmul.mubr.bf16.gmra.mrb[0].mxu0 %v259
      %v358 = vpop.f32.mrb[0].mxu0
      %v359 = vadd.f32 %v201, %v358
      %v360 = vpop.f32.mrb[0].mxu0
      %v361 = vadd.f32 %v201, %v360
      %v362 = vpop.f32.mrb[0].mxu0
      %v363 = vadd.f32 %v206, %v362
      %v364 = vpop.f32.mrb[0].mxu0
      %v365 = vadd.f32 %v206, %v364
      %366 = vdwg.mxu0
      %367 = vmatprep.subr.bf16.mxu0 %v245
      %368 = vmatpush1.bf16.msra.mxu0 %v244
      %369 = vmatprep.subr.bf16.mxu0 0
      %370 = vmatpush1.bf16.msra.mxu0 0
      %371 = vmatprep.subr.bf16.mxu0 0
      %372 = vmatpush1.bf16.msra.mxu0 0
      %373 = vmatprep.subr.bf16.mxu0 0
      %374 = vmatpush1.bf16.msra.mxu0 0
      %375 = vmatprep.subr.bf16.mxu0 0
      %376 = vmatpush1.bf16.msra.mxu0 0
      %377 = vmatprep.subr.bf16.mxu0 0
      %378 = vmatpush1.bf16.msra.mxu0 0
      %379 = vmatprep.subr.bf16.mxu0 0
      %380 = vmatpush1.bf16.msra.mxu0 0
      %381 = vmatprep.subr.bf16.mxu0 0
      %382 = vmatpush1.bf16.msra.mxu0 0
      %383 = vmatprep.subr.bf16.mxu0 0
      %384 = vmatpush1.bf16.msra.mxu0 0
      %385 = vmatprep.subr.bf16.mxu0 0
      %386 = vmatpush1.bf16.msra.mxu0 0
      %387 = vmatprep.subr.bf16.mxu0 0
      %388 = vmatpush1.bf16.msra.mxu0 0
      %389 = vmatprep.subr.bf16.mxu0 0
      %390 = vmatpush1.bf16.msra.mxu0 0
      %391 = vmatprep.subr.bf16.mxu0 0
      %392 = vmatpush1.bf16.msra.mxu0 0
      %393 = vmatprep.subr.bf16.mxu0 0
      %394 = vmatpush1.bf16.msra.mxu0 0
      %395 = vmatprep.subr.bf16.mxu0 0
      %396 = vmatpush1.bf16.msra.mxu0 0
      %397 = vmatprep.subr.bf16.mxu0 0
      %398 = vmatpush1.bf16.msra.mxu0 0
      %399 = vmatprep.mubr.bf16.mxu0 0
      %400 = vmatmul.mubr.bf16.gmra.mrb[0].mxu0 %v256
      %v401 = vpop.f32.mrb[0].mxu0
      %v402 = vadd.f32 %v191, %v401
      %v403 = vpop.f32.mrb[0].mxu0
      %v404 = vadd.f32 %v191, %v403
      %v405 = vpop.f32.mrb[0].mxu0
      %v406 = vadd.f32 %v196, %v405
      %v407 = vpop.f32.mrb[0].mxu0
      %v408 = vadd.f32 %v196, %v407
      %409 = vmatprep.mubr.bf16.mxu0 0
      %410 = vmatmul.mubr.bf16.gmra.mrb[0].mxu0 %v259
      %v411 = vpop.f32.mrb[0].mxu0
      %v412 = vadd.f32 %v201, %v411
      %v413 = vpop.f32.mrb[0].mxu0
      %v414 = vadd.f32 %v201, %v413
      %v415 = vpop.f32.mrb[0].mxu0
      %v416 = vadd.f32 %v206, %v415
      %v417 = vpop.f32.mrb[0].mxu0
      %v418 = vadd.f32 %v206, %v417
      %419 = vdwg.mxu0
      %420 = vmatprep.subr.bf16.mxu0 0
      %421 = vmatpush1.bf16.msra.mxu0 %v246
      %422 = vmatprep.subr.bf16.mxu0 0
      %423 = vmatpush1.bf16.msra.mxu0 0
      %424 = vmatprep.subr.bf16.mxu0 0
      %425 = vmatpush1.bf16.msra.mxu0 0
      %426 = vmatprep.subr.bf16.mxu0 0
      %427 = vmatpush1.bf16.msra.mxu0 0
      %428 = vmatprep.subr.bf16.mxu0 0
      %429 = vmatpush1.bf16.msra.mxu0 0
      %430 = vmatprep.subr.bf16.mxu0 0
      %431 = vmatpush1.bf16.msra.mxu0 0
      %432 = vmatprep.subr.bf16.mxu0 0
      %433 = vmatpush1.bf16.msra.mxu0 0
      %434 = vmatprep.subr.bf16.mxu0 0
      %435 = vmatpush1.bf16.msra.mxu0 0
      %436 = vmatprep.subr.bf16.mxu0 0
      %437 = vmatpush1.bf16.msra.mxu0 0
      %438 = vmatprep.subr.bf16.mxu0 0
      %439 = vmatpush1.bf16.msra.mxu0 0
      %440 = vmatprep.subr.bf16.mxu0 0
      %441 = vmatpush1.bf16.msra.mxu0 0
      %442 = vmatprep.subr.bf16.mxu0 0
      %443 = vmatpush1.bf16.msra.mxu0 0
      %444 = vmatprep.subr.bf16.mxu0 0
      %445 = vmatpush1.bf16.msra.mxu0 0
      %446 = vmatprep.subr.bf16.mxu0 0
      %447 = vmatpush1.bf16.msra.mxu0 0
      %448 = vmatprep.subr.bf16.mxu0 0
      %449 = vmatpush1.bf16.msra.mxu0 0
      %450 = vmatprep.subr.bf16.mxu0 0
      %451 = vmatpush1.bf16.msra.mxu0 0
      %452 = vmatprep.mubr.bf16.mxu0 0
      %453 = vmatmul.mubr.bf16.gmra.mrb[0].mxu0 %v256
      %v454 = vpop.f32.mrb[0].mxu0
      %v455 = vadd.f32 %v191, %v454
      %v456 = vpop.f32.mrb[0].mxu0
      %v457 = vpop.f32.mrb[0].mxu0
      %v458 = vadd.f32 %v196, %v457
      %v459 = vpop.f32.mrb[0].mxu0
      %460 = vmatprep.mubr.bf16.mxu0 0
      %461 = vmatmul.mubr.bf16.gmra.mrb[0].mxu0 %v259
      %v462 = vpop.f32.mrb[0].mxu0
      %v463 = vadd.f32 %v201, %v462
      %v464 = vpop.f32.mrb[0].mxu0
      %v465 = vpop.f32.mrb[0].mxu0
      %v466 = vadd.f32 %v206, %v465
      %v467 = vpop.f32.mrb[0].mxu0
      %468 = vdwg.mxu0
      %v469 = vmax.f32 %v296, 0.0
      %v470 = vmax.f32 %v298, 0.0
      %v471 = vmax.f32 %v349, 0.0
      %v472 = vmax.f32 %v351, 0.0
      %v473 = vmax.f32 %v402, 0.0
      %v474 = vmax.f32 %v404, 0.0
      %v475 = vmax.f32 %v455, 0.0
      %v476 = vmax.f32 %v300, 0.0
      %v477 = vmax.f32 %v302, 0.0
      %v478 = vmax.f32 %v353, 0.0
      %v479 = vmax.f32 %v355, 0.0
      %v480 = vmax.f32 %v406, 0.0
      %v481 = vmax.f32 %v408, 0.0
      %v482 = vmax.f32 %v458, 0.0
      %v483 = vmax.f32 %v306, 0.0
      %v484 = vmax.f32 %v308, 0.0
      %v485 = vmax.f32 %v359, 0.0
      %v486 = vmax.f32 %v361, 0.0
      %v487 = vmax.f32 %v412, 0.0
      %v488 = vmax.f32 %v414, 0.0
      %v489 = vmax.f32 %v463, 0.0
      %v490 = vmax.f32 %v310, 0.0
      %v491 = vmax.f32 %v312, 0.0
      %v492 = vmax.f32 %v363, 0.0
      %v493 = vmax.f32 %v365, 0.0
      %v494 = vmax.f32 %v416, 0.0
      %v495 = vmax.f32 %v418, 0.0
      %v496 = vmax.f32 %v466, 0.0
      %v497 = vpack.c.bf16 %v476, %v469
      %v498 = vpack.c.bf16 %v477, %v470
      %v499 = vpack.c.bf16 %v478, %v471
      %v500 = vpack.c.bf16 %v479, %v472
      %v501 = vpack.c.bf16 %v480, %v473
      %v502 = vpack.c.bf16 %v481, %v474
      %v503 = vpack.c.bf16 %v482, %v475
      %v504 = vpack.c.bf16 %v490, %v483
      %v505 = vpack.c.bf16 %v491, %v484
      %v506 = vpack.c.bf16 %v492, %v485
      %v507 = vpack.c.bf16 %v493, %v486
      %v508 = vpack.c.bf16 %v494, %v487
      %v509 = vpack.c.bf16 %v495, %v488
      %v510 = vpack.c.bf16 %v496, %v489
      %v525 = vunpack.c.l.b16 %v497
      %v526 = vunpack.c.l.b16 %v498
      %v527 = vunpack.c.l.b16 %v499
      %v528 = vunpack.c.l.b16 %v500
      %v529 = vunpack.c.l.b16 %v501
      %v530 = vunpack.c.l.b16 %v502
      %v531 = vunpack.c.l.b16 %v503
      %v532 = vunpack.c.h.b16 %v497
      %v533 = vunpack.c.h.b16 %v498
      %v534 = vunpack.c.h.b16 %v499
      %v535 = vunpack.c.h.b16 %v500
      %v536 = vunpack.c.h.b16 %v501
      %v537 = vunpack.c.h.b16 %v502
      %v538 = vunpack.c.h.b16 %v503
      %v539 = vunpack.c.l.b16 %v504
      %v540 = vunpack.c.l.b16 %v505
      %v541 = vunpack.c.l.b16 %v506
      %v542 = vunpack.c.l.b16 %v507
      %v543 = vunpack.c.l.b16 %v508
      %v544 = vunpack.c.l.b16 %v509
      %v545 = vunpack.c.l.b16 %v510
      %v546 = vunpack.c.h.b16 %v504
      %v547 = vunpack.c.h.b16 %v505
      %v548 = vunpack.c.h.b16 %v506
      %v549 = vunpack.c.h.b16 %v507
      %v550 = vunpack.c.h.b16 %v508
      %v551 = vunpack.c.h.b16 %v509
      %v552 = vunpack.c.h.b16 %v510
      %v553 = vpack.c.b16 %v526, %v525
      %v554 = vpack.c.b16 %v528, %v527
      %v555 = vpack.c.b16 %v530, %v529
      %v556 = vpack.c.b16 %v531, %v531
      %v557 = vpack.c.b16 %v533, %v532
      %v558 = vpack.c.b16 %v535, %v534
      %v559 = vpack.c.b16 %v537, %v536
      %v560 = vpack.c.b16 %v538, %v538
      %v561 = vpack.c.b16 %v540, %v539
      %v562 = vpack.c.b16 %v542, %v541
      %v563 = vpack.c.b16 %v544, %v543
      %v564 = vpack.c.b16 %v545, %v545
      %v565 = vpack.c.b16 %v547, %v546
      %v566 = vpack.c.b16 %v549, %v548
      %v567 = vpack.c.b16 %v551, %v550
      %v568 = vpack.c.b16 %v552, %v552
      %585 = vst [vmem:[%s170] sm:$0xff] %v553
      %586 = vst [vmem:[%s170 + $0x8] sm:$0xff] %v554
      %587 = vst [vmem:[%s170 + $0x10] sm:$0xff] %v555
      %vm588 = vcmask 125952
      %589 = vst.msk [vmem:[%s170 + $0x18] sm:$0xf] %vm588, %v556
      %590 = vst [vmem:[%s170 + $0x1c] sm:$0xff] %v557
      %591 = vst [vmem:[%s170 + $0x24] sm:$0xff] %v558
      %592 = vst [vmem:[%s170 + $0x2c] sm:$0xff] %v559
      %593 = vst.msk [vmem:[%s170 + $0x34] sm:$0xf] %vm588, %v560
      %594 = vst [vmem:[%s170 + $0x38] sm:$0xff] %v561
      %595 = vst [vmem:[%s170 + $0x40] sm:$0xff] %v562
      %596 = vst [vmem:[%s170 + $0x48] sm:$0xff] %v563
      %597 = vst.msk [vmem:[%s170 + $0x50] sm:$0xf] %vm588, %v564
      %598 = vst [vmem:[%s170 + $0x54] sm:$0xff] %v565
      %599 = vst [vmem:[%s170 + $0x5c] sm:$0xff] %v566
      %600 = vst [vmem:[%s170 + $0x64] sm:$0xff] %v567
      %601 = vst.msk [vmem:[%s170 + $0x6c] sm:$0xf] %vm588, %v568
      %p602 = scmp.lt.s32.totalorder %s14, 1
      %s603 = scalar_select %p602, %s14, 1
      %s604 = smul.addr %s603, 28
      %s605 = smul.addr %s604, 4
      %s606 = scalar_lea.vmem %s3, %s605
      // Predicated region
      $region33: #{cnn_forward.4} parent=31 // pred_check
        %p607 = pneg %p100
      $region34: #{cnn_forward.4} parent=31 // pred_check_branch
        %609 = sbr.rel (%p607) target = $region36
      $region35: #{cnn_forward.4} parent=31 // pred_region
        _
      $region36: #{cnn_forward.4} parent=31 // pred_fallthru
        _
    $region32: #{cnn_forward.4} parent=5 // pred_fallthru
      _
    %p610 = scmp.le.s32.totalorder 2, %s9
    // Predicated region
    $region37: #{cnn_forward.4} parent=5 // pred_check
      %p611 = pneg %p610
    $region38: #{cnn_forward.4} parent=5 // pred_check_branch
      %613 = sbr.rel (%p611) target = $region40
    $region39: #{cnn_forward.4} parent=5 // pred_region
      %s614 = ssub.s32 %s9, 2
      // Predicated region
      $region41: #{cnn_forward.4} parent=39 // pred_check
        %p615 = pneg %p106
      $region42: #{cnn_forward.4} parent=39 // pred_check_branch
        %617 = sbr.rel (%p615) target = $region44
      $region43: #{cnn_forward.4} parent=39 // pred_region
        %p618 = scmp.lt.s32.totalorder %s15, 1
        %s619 = scalar_select %p618, %s15, 1
        %s620 = smul.addr %s619, 28
        %s621 = smul.addr %s620, 4
        %s622 = scalar_lea.vmem %s3, %s621
      $region44: #{cnn_forward.4} parent=39 // pred_fallthru
        _
    $region40: #{cnn_forward.4} parent=5 // pred_fallthru
      _
  $region6: #{cnn_forward.4} parent=0 // loop_footer
    %s13 = sadd.s32 1, %s9
  $region7: #{cnn_forward.4} parent=0 // loop_footer_branch
    %8 = sbr.rel target = $region3
  $region8: #{cnn_forward.4} parent=0 // loop_exit
    _

// kernel: cnn_forward.5
$region0: #{cnn_forward.5}
  #allocation0 [shape = 'u32[]', space=smem, size = 0x4, offset = 0x4, fixed_abs, tag = 'smem constant byte address 0x4 - core index']
  #allocation1 [shape = 'u32[144,128]{1,0:T(1,128)}', space=vmem, size = 0x12000, scoped, tag = 'internal scratch']
  %s0 = inlined_call_operand.vmem [shape: bf16[2,288,784], index: 0, kind: input, shape index: {}]
  %s1 = inlined_call_operand.hbm [shape: bf16[64,288], index: 1, kind: input, shape index: {}]
  %s2 = inlined_call_operand.vmem [shape: f32[64,1], index: 2, kind: input, shape index: {}]
  %s3 = inlined_call_operand.vmem [shape: bf16[2,64,784], index: 3, kind: output, shape index: {}]
  %s4 = sld [smem:[#allocation0]]
  $region49: #{cnn_forward.5} parent=0
    _
  %s6 = ssub.s32 1, %s4
  %s7 = scalar_select 0, %s6, %s4
  $region1: #{cnn_forward.5} parent=0
    #allocation2 [shape = 'u8[49152]{0}', space=vmem, size = 0xc000, scoped, tag = 'input window, operand 1, single buffered']
    #allocation3 [shape = 's32[2]{0}', space=sflag, size = 0x8, scoped, tag = 'scoped memory for cnn_forward.5']
    %8 = vsyncpa [#allocation3], 0
    loop: start=0, step=1, limit=4
    $region2: #{cnn_forward.5} parent=1 // loop_pre_header
      _
    $region3: #{cnn_forward.5} parent=1 // loop_header
      %s10 = sphi 0, %s14
      %p11 = scmp.ge.s32.totalorder %s10, 4
      %s20 = sphi 0, %s22
      %s23 = sphi 0, %s20
      %s24 = sphi 0, %s23
      %s40 = sphi 0, %s24
      %s44 = sphi 0, %s44
      %s46 = sphi 0, %s44
      %s47 = sphi 0, %s46
      %s61 = sphi 0, %s47
      %s65 = sphi 0, %s65
      %s67 = sphi 0, %s65
      %s68 = sphi 0, %s67
      %s82 = sphi 0, %s68
      %s88 = sphi 0, %s90
      %s91 = sphi 0, %s88
      %s92 = sphi 0, %s91
      %s108 = sphi 0, %s92
    $region4: #{cnn_forward.5} parent=1 // loop_header_branch
      %13 = sbr.rel (%p11) target = $region8
    $region5: #{cnn_forward.5} parent=1 // loop_body
      %s15 = ssub.s32 %s10, 1
      %s16 = ssub.s32 %s10, 2
      %s17 = sadd.s32 %s10, 1
      %s18 = ssub.s32 %s10, %s17
      %p19 = scmp.eq.s32.totalorder %s18, 0
      %s21 = sadd.s32 %s20, 1
      %s22 = scalar_select %p19, %s20, %s21
      %p25 = pneg %p19
      %p26 = scmp.eq.s32.totalorder %s10, 1
      %p27 = por %p25, %p26
      %p28 = scmp.ne.s32.totalorder %s20, %s23
      %p29 = scmp.eq.s32.totalorder %s10, 0
      %p30 = por %p28, %p29
      %p31 = scmp.ne.s32.totalorder %s20, %s23
      %p32 = scmp.eq.s32.totalorder %s15, 1
      %p33 = por %p31, %p32
      %p34 = scmp.ne.s32.totalorder %s23, %s24
      %p35 = scmp.eq.s32.totalorder %s15, 0
      %p36 = por %p34, %p35
      %p37 = scmp.ne.s32.totalorder %s23, %s24
      %p38 = scmp.eq.s32.totalorder %s16, 1
      %p39 = por %p37, %p38
      %p41 = scmp.ne.s32.totalorder %s24, %s40
      %p42 = scmp.eq.s32.totalorder %s16, 0
      %p43 = por %p41, %p42
      %s45 = sadd.s32 %s44, 1
      %p48 = scmp.eq.s32.totalorder %s10, 1
      %p49 = scmp.ne.s32.totalorder %s44, %s46
      %p50 = scmp.eq.s32.totalorder %s10, 0
      %p51 = por %p49, %p50
      %p52 = scmp.ne.s32.totalorder %s44, %s46
      %p53 = scmp.eq.s32.totalorder %s15, 1
      %p54 = por %p52, %p53
      %p55 = scmp.ne.s32.totalorder %s46, %s47
      %p56 = scmp.eq.s32.totalorder %s15, 0
      %p57 = por %p55, %p56
      %p58 = scmp.ne.s32.totalorder %s46, %s47
      %p59 = scmp.eq.s32.totalorder %s16, 1
      %p60 = por %p58, %p59
      %p62 = scmp.ne.s32.totalorder %s47, %s61
      %p63 = scmp.eq.s32.totalorder %s16, 0
      %p64 = por %p62, %p63
      %s66 = sadd.s32 %s65, 1
      %p69 = scmp.eq.s32.totalorder %s10, 1
      %p70 = scmp.ne.s32.totalorder %s65, %s67
      %p71 = scmp.eq.s32.totalorder %s10, 0
      %p72 = por %p70, %p71
      %p73 = scmp.ne.s32.totalorder %s65, %s67
      %p74 = scmp.eq.s32.totalorder %s15, 1
      %p75 = por %p73, %p74
      %p76 = scmp.ne.s32.totalorder %s67, %s68
      %p77 = scmp.eq.s32.totalorder %s15, 0
      %p78 = por %p76, %p77
      %p79 = scmp.ne.s32.totalorder %s67, %s68
      %p80 = scmp.eq.s32.totalorder %s16, 1
      %p81 = por %p79, %p80
      %p83 = scmp.ne.s32.totalorder %s68, %s82
      %p84 = scmp.eq.s32.totalorder %s16, 0
      %p85 = por %p83, %p84
      %s86 = ssub.s32 %s10, %s17
      %p87 = scmp.eq.s32.totalorder %s86, 0
      %s89 = sadd.s32 %s88, 1
      %s90 = scalar_select %p87, %s88, %s89
      %p93 = pneg %p87
      %p94 = scmp.eq.s32.totalorder %s10, 1
      %p95 = por %p93, %p94
      %p96 = scmp.ne.s32.totalorder %s88, %s91
      %p97 = scmp.eq.s32.totalorder %s10, 0
      %p98 = por %p96, %p97
      %p99 = scmp.ne.s32.totalorder %s88, %s91
      %p100 = scmp.eq.s32.totalorder %s15, 1
      %p101 = por %p99, %p100
      %p102 = scmp.ne.s32.totalorder %s91, %s92
      %p103 = scmp.eq.s32.totalorder %s15, 0
      %p104 = por %p102, %p103
      %p105 = scmp.ne.s32.totalorder %s91, %s92
      %p106 = scmp.eq.s32.totalorder %s16, 1
      %p107 = por %p105, %p106
      %p109 = scmp.ne.s32.totalorder %s92, %s108
      %p110 = scmp.eq.s32.totalorder %s16, 0
      %p111 = por %p109, %p110
      %p112 = scmp.le.s32.totalorder 1, %s10
      %p113 = scmp.lt.s32.totalorder %s10, 3
      %p114 = pnand %p112, %p113
      %p115 = pneg %p114
      // Predicated region
      $region9: #{cnn_forward.5} parent=5 // pred_check
        _
      $region10: #{cnn_forward.5} parent=5 // pred_check_branch
        %117 = sbr.rel (%p114) target = $region12
      $region11: #{cnn_forward.5} parent=5 // pred_region
        %s118 = ssub.s32 %s10, 1
        // Predicated region
        $region13: #{cnn_forward.5} parent=11 // pred_check
          %p119 = pneg %p57
        $region14: #{cnn_forward.5} parent=11 // pred_check_branch
          %121 = sbr.rel (%p119) target = $region16
        $region15: #{cnn_forward.5} parent=11 // pred_region
          %s123 = ssub.s32 1536, 1536
          %124 = vsyncadd [#allocation3], %s123
          %s125 = sshll.u32 [#allocation2], 4
          %s126 = int_to_ptr.vmem [resolvable:$true] %s125
          %131 = dma.hbm_to_vmem [thread:$0]  %s1, 1536, %s126, [#allocation3], 192, 192, 12
        $region16: #{cnn_forward.5} parent=11 // pred_fallthru
          _
        // Predicated region
        $region17: #{cnn_forward.5} parent=11 // pred_check
          %p132 = pneg %p78
        $region18: #{cnn_forward.5} parent=11 // pred_check_branch
          %134 = sbr.rel (%p132) target = $region20
        $region19: #{cnn_forward.5} parent=11 // pred_region
          _
        $region20: #{cnn_forward.5} parent=11 // pred_fallthru
          _
      $region12: #{cnn_forward.5} parent=5 // pred_fallthru
        _
      %p135 = scmp.lt.s32.totalorder %s10, 2
      // Predicated region
      $region21: #{cnn_forward.5} parent=5 // pred_check
        %p136 = pneg %p135
      $region22: #{cnn_forward.5} parent=5 // pred_check_branch
        %138 = sbr.rel (%p136) target = $region24
      $region23: #{cnn_forward.5} parent=5 // pred_region
        // Predicated region
        $region25: #{cnn_forward.5} parent=23 // pred_check
          %p139 = pneg %p30
        $region26: #{cnn_forward.5} parent=23 // pred_check_branch
          %141 = sbr.rel (%p139) target = $region28
        $region27: #{cnn_forward.5} parent=23 // pred_region
          %p142 = scmp.lt.s32.totalorder %s10, 1
          %s143 = scalar_select %p142, %s10, 1
          %s144 = smul.addr %s143, 252
          %s145 = smul.addr %s144, 4
          %s146 = scalar_lea.vmem %s0, %s145
        $region28: #{cnn_forward.5} parent=23 // pred_fallthru
          _
      $region24: #{cnn_forward.5} parent=5 // pred_fallthru
        _
      %p147 = scmp.le.s32.totalorder 1, %s10
      %p148 = scmp.lt.s32.totalorder %s10, 3
      %p149 = pnand %p147, %p148
      %p150 = pneg %p149
      // Predicated region
      $region29: #{cnn_forward.5} parent=5 // pred_check
        _
      $region30: #{cnn_forward.5} parent=5 // pred_check_branch
        %152 = sbr.rel (%p149) target = $region32
      $region31: #{cnn_forward.5} parent=5 // pred_region
        %s153 = ssub.s32 %s10, 1
        // Predicated region
        $region33: #{cnn_forward.5} parent=31 // pred_check
          %p154 = pneg %p57
        $region34: #{cnn_forward.5} parent=31 // pred_check_branch
          %156 = sbr.rel (%p154) target = $region36
        $region35: #{cnn_forward.5} parent=31 // pred_region
          %157 = dma.done [#allocation3], 1536
        $region36: #{cnn_forward.5} parent=31 // pred_fallthru
          _
        %p158 = scmp.lt.s32.totalorder %s15, 1
        %s159 = scalar_select %p158, %s15, 1
        %s160 = smul.addr %s159, 252
        %s161 = smul.addr %s160, 4
        %s162 = scalar_lea.vmem %s0, %s161
        %p163 = pneg %p36
        %p164 = pneg %p33
        %p165 = pneg %p57
        %p166 = pneg %p54
        %p167 = pneg %p78
        %p168 = pneg %p75
        %p169 = pneg %p104
        %p170 = pneg %p101
        %p171 = scmp.lt.s32.totalorder %s15, 1
        %s172 = scalar_select %p171, %s15, 1
        %s173 = smul.addr %s172, 56
        %s174 = smul.addr %s173, 4
        %s175 = scalar_lea.vmem %s3, %s174
        %p176 = scmp.lt.s32.totalorder %s15, 1
        %s177 = scalar_select %p176, %s15, 1
        %s178 = smul.addr %s177, 252
        %s179 = smul.addr %s178, 4
        %s180 = scalar_lea.vmem %s0, %s179
        %p181 = scmp.lt.s32.totalorder %s15, 1
        %s182 = scalar_select %p181, %s15, 1
        %s183 = smul.addr %s182, 56
        %s184 = smul.addr %s183, 4
        %s185 = scalar_lea.vmem %s3, %s184
        %v187 = vld [vmem:[#allocation2] sm:$0xff]
        %v188 = vld [vmem:[#allocation2 + $0x8] sm:$0xf]
        %v189 = vld [vmem:[#allocation2 + $0xc] sm:$0xff]
        %v190 = vld [vmem:[#allocation2 + $0x14] sm:$0xf]
        %v191 = vld [vmem:[#allocation2 + $0x18] sm:$0xff]
        %v192 = vld [vmem:[#allocation2 + $0x20] sm:$0xf]
        %v193 = vld [vmem:[#allocation2 + $0x24] sm:$0xff]
        %v194 = vld [vmem:[#allocation2 + $0x2c] sm:$0xf]
        %v195 = vld [vmem:[#allocation2 + $0x30] sm:$0xff]
        %v196 = vld [vmem:[#allocation2 + $0x38] sm:$0xf]
        %v197 = vld [vmem:[#allocation2 + $0x3c] sm:$0xff]
        %v198 = vld [vmem:[#allocation2 + $0x44] sm:$0xf]
        %v199 = vld [vmem:[#allocation2 + $0x48] sm:$0xff]
        %v200 = vld [vmem:[#allocation2 + $0x50] sm:$0xf]
        %v201 = vld [vmem:[#allocation2 + $0x54] sm:$0xff]
        %v202 = vld [vmem:[#allocation2 + $0x5c] sm:$0xf]
        %v203 = vld [vmem:[%s180] sm:$0xff]
        %v204 = vld [vmem:[%s180 + $0x8] sm:$0xff]
        %v205 = vld [vmem:[%s180 + $0x10] sm:$0xff]
        %v206 = vld [vmem:[%s180 + $0x18] sm:$0xf]
        %v207 = vld [vmem:[%s180 + $0x1c] sm:$0xff]
        %v208 = vld [vmem:[%s180 + $0x24] sm:$0xff]
        %v209 = vld [vmem:[%s180 + $0x2c] sm:$0xff]
        %v210 = vld [vmem:[%s180 + $0x34] sm:$0xf]
        %v211 = vld [vmem:[%s180 + $0x38] sm:$0xff]
        %v212 = vld [vmem:[%s180 + $0x40] sm:$0xff]
        %v213 = vld [vmem:[%s180 + $0x48] sm:$0xff]
        %v214 = vld [vmem:[%s180 + $0x50] sm:$0xf]
        %v215 = vld [vmem:[%s180 + $0x54] sm:$0xff]
        %v216 = vld [vmem:[%s180 + $0x5c] sm:$0xff]
        %v217 = vld [vmem:[%s180 + $0x64] sm:$0xff]
        %v218 = vld [vmem:[%s180 + $0x6c] sm:$0xf]
        %v219 = vld [vmem:[%s180 + $0x70] sm:$0xff]
        %v220 = vld [vmem:[%s180 + $0x78] sm:$0xff]
        %v221 = vld [vmem:[%s180 + $0x80] sm:$0xff]
        %v222 = vld [vmem:[%s180 + $0x88] sm:$0xf]
        %v223 = vld [vmem:[%s180 + $0x8c] sm:$0xff]
        %v224 = vld [vmem:[%s180 + $0x94] sm:$0xff]
        %v225 = vld [vmem:[%s180 + $0x9c] sm:$0xff]
        %v226 = vld [vmem:[%s180 + $0xa4] sm:$0xf]
        %v227 = vld [vmem:[%s180 + $0xa8] sm:$0xff]
        %v228 = vld [vmem:[%s180 + $0xb0] sm:$0xff]
        %v229 = vld [vmem:[%s180 + $0xb8] sm:$0xff]
        %v230 = vld [vmem:[%s180 + $0xc0] sm:$0xf]
        %v231 = vld [vmem:[%s180 + $0xc4] sm:$0xff]
        %v232 = vld [vmem:[%s180 + $0xcc] sm:$0xff]
        %v233 = vld [vmem:[%s180 + $0xd4] sm:$0xff]
        %v234 = vld [vmem:[%s180 + $0xdc] sm:$0xf]
        %v235 = vld [vmem:[%s180 + $0xe0] sm:$0xff]
        %v236 = vld [vmem:[%s180 + $0xe8] sm:$0xff]
        %v237 = vld [vmem:[%s180 + $0xf0] sm:$0xff]
        %v238 = vld [vmem:[%s180 + $0xf8] sm:$0xf]
        %v239 = vld [vmem:[%s180 + $0xfc] sm:$0xff]
        %v240 = vld [vmem:[%s180 + $0x104] sm:$0xff]
        %v241 = vld [vmem:[%s180 + $0x10c] sm:$0xff]
        %v242 = vld [vmem:[%s180 + $0x114] sm:$0xf]
        %v243 = vld [vmem:[%s180 + $0x118] sm:$0xff]
        %v244 = vld [vmem:[%s180 + $0x120] sm:$0xff]
        %v245 = vld [vmem:[%s180 + $0x128] sm:$0xff]
        %v246 = vld [vmem:[%s180 + $0x130] sm:$0xf]
        %v247 = vld [vmem:[%s180 + $0x134] sm:$0xff]
        %v248 = vld [vmem:[%s180 + $0x13c] sm:$0xff]
        %v249 = vld [vmem:[%s180 + $0x144] sm:$0xff]
        %v250 = vld [vmem:[%s180 + $0x14c] sm:$0xf]
        %v251 = vld [vmem:[%s180 + $0x150] sm:$0xff]
        %v252 = vld [vmem:[%s180 + $0x158] sm:$0xff]
        %v253 = vld [vmem:[%s180 + $0x160] sm:$0xff]
        %v254 = vld [vmem:[%s180 + $0x168] sm:$0xf]
        %v255 = vld [vmem:[%s180 + $0x16c] sm:$0xff]
        %v256 = vld [vmem:[%s180 + $0x174] sm:$0xff]
        %v257 = vld [vmem:[%s180 + $0x17c] sm:$0xff]
        %v258 = vld [vmem:[%s180 + $0x184] sm:$0xf]
        %v259 = vld [vmem:[%s180 + $0x188] sm:$0xff]
        %v260 = vld [vmem:[%s180 + $0x190] sm:$0xff]
        %v261 = vld [vmem:[%s180 + $0x198] sm:$0xff]
        %v262 = vld [vmem:[%s180 + $0x1a0] sm:$0xf]
        %v263 = vld [vmem:[%s180 + $0x1a4] sm:$0xff]
        %v264 = vld [vmem:[%s180 + $0x1ac] sm:$0xff]
        %v265 = vld [vmem:[%s180 + $0x1b4] sm:$0xff]
        %v266 = vld [vmem:[%s180 + $0x1bc] sm:$0xf]
        %v267 = vld [vmem:[%s180 + $0x1c0] sm:$0xff]
        %v268 = vld [vmem:[%s180 + $0x1c8] sm:$0xff]
        %v269 = vld [vmem:[%s180 + $0x1d0] sm:$0xff]
        %v270 = vld [vmem:[%s180 + $0x1d8] sm:$0xf]
        %v271 = vld [vmem:[%s180 + $0x1dc] sm:$0xff]
        %v272 = vld [vmem:[%s180 + $0x1e4] sm:$0xff]
        %v273 = vld [vmem:[%s180 + $0x1ec] sm:$0xff]
        %v274 = vld [vmem:[%s180 + $0x1f4] sm:$0xf]
        %v275 = vld [vmem:[%s180 + $0x1f8] sm:$0xff]
        %v276 = vld [vmem:[%s180 + $0x200] sm:$0xff]
        %v277 = vld [vmem:[%s180 + $0x208] sm:$0xff]
        %v278 = vld [vmem:[%s180 + $0x210] sm:$0xf]
        %v279 = vld [vmem:[%s180 + $0x214] sm:$0xff]
        %v280 = vld [vmem:[%s180 + $0x21c] sm:$0xff]
        %v281 = vld [vmem:[%s180 + $0x224] sm:$0xff]
        %v282 = vld [vmem:[%s180 + $0x22c] sm:$0xf]
        %v283 = vld [vmem:[%s180 + $0x230] sm:$0xff]
        %v284 = vld [vmem:[%s180 + $0x238] sm:$0xff]
        %v285 = vld [vmem:[%s180 + $0x240] sm:$0xff]
        %v286 = vld [vmem:[%s180 + $0x248] sm:$0xf]
        %v287 = vld [vmem:[%s180 + $0x24c] sm:$0xff]
        %v288 = vld [vmem:[%s180 + $0x254] sm:$0xff]
        %v289 = vld [vmem:[%s180 + $0x25c] sm:$0xff]
        %v290 = vld [vmem:[%s180 + $0x264] sm:$0xf]
        %v291 = vld [vmem:[%s180 + $0x268] sm:$0xff]
        %v292 = vld [vmem:[%s180 + $0x270] sm:$0xff]
        %v293 = vld [vmem:[%s180 + $0x278] sm:$0xff]
        %v294 = vld [vmem:[%s180 + $0x280] sm:$0xf]
        %v295 = vld [vmem:[%s180 + $0x284] sm:$0xff]
        %v296 = vld [vmem:[%s180 + $0x28c] sm:$0xff]
        %v297 = vld [vmem:[%s180 + $0x294] sm:$0xff]
        %v298 = vld [vmem:[%s180 + $0x29c] sm:$0xf]
        %v299 = vld [vmem:[%s180 + $0x2a0] sm:$0xff]
        %v300 = vld [vmem:[%s180 + $0x2a8] sm:$0xff]
        %v301 = vld [vmem:[%s180 + $0x2b0] sm:$0xff]
        %v302 = vld [vmem:[%s180 + $0x2b8] sm:$0xf]
        %v303 = vld [vmem:[%s180 + $0x2bc] sm:$0xff]
        %v304 = vld [vmem:[%s180 + $0x2c4] sm:$0xff]
        %v305 = vld [vmem:[%s180 + $0x2cc] sm:$0xff]
        %v306 = vld [vmem:[%s180 + $0x2d4] sm:$0xf]
        %v307 = vld [vmem:[%s180 + $0x2d8] sm:$0xff]
        %v308 = vld [vmem:[%s180 + $0x2e0] sm:$0xff]
        %v309 = vld [vmem:[%s180 + $0x2e8] sm:$0xff]
        %v310 = vld [vmem:[%s180 + $0x2f0] sm:$0xf]
        %v311 = vld [vmem:[%s180 + $0x2f4] sm:$0xff]
        %v312 = vld [vmem:[%s180 + $0x2fc] sm:$0xff]
        %v313 = vld [vmem:[%s180 + $0x304] sm:$0xff]
        %v314 = vld [vmem:[%s180 + $0x30c] sm:$0xf]
        %v315 = vld [vmem:[%s180 + $0x310] sm:$0xff]
        %v316 = vld [vmem:[%s180 + $0x318] sm:$0xff]
        %v317 = vld [vmem:[%s180 + $0x320] sm:$0xff]
        %v318 = vld [vmem:[%s180 + $0x328] sm:$0xf]
        %v319 = vld [vmem:[%s180 + $0x32c] sm:$0xff]
        %v320 = vld [vmem:[%s180 + $0x334] sm:$0xff]
        %v321 = vld [vmem:[%s180 + $0x33c] sm:$0xff]
        %v322 = vld [vmem:[%s180 + $0x344] sm:$0xf]
        %v323 = vld [vmem:[%s180 + $0x348] sm:$0xff]
        %v324 = vld [vmem:[%s180 + $0x350] sm:$0xff]
        %v325 = vld [vmem:[%s180 + $0x358] sm:$0xff]
        %v326 = vld [vmem:[%s180 + $0x360] sm:$0xf]
        %v327 = vld [vmem:[%s180 + $0x364] sm:$0xff]
        %v328 = vld [vmem:[%s180 + $0x36c] sm:$0xff]
        %v329 = vld [vmem:[%s180 + $0x374] sm:$0xff]
        %v330 = vld [vmem:[%s180 + $0x37c] sm:$0xf]
        %v331 = vld [vmem:[%s180 + $0x380] sm:$0xff]
        %v332 = vld [vmem:[%s180 + $0x388] sm:$0xff]
        %v333 = vld [vmem:[%s180 + $0x390] sm:$0xff]
        %v334 = vld [vmem:[%s180 + $0x398] sm:$0xf]
        %v335 = vld [vmem:[%s180 + $0x39c] sm:$0xff]
        %v336 = vld [vmem:[%s180 + $0x3a4] sm:$0xff]
        %v337 = vld [vmem:[%s180 + $0x3ac] sm:$0xff]
        %v338 = vld [vmem:[%s180 + $0x3b4] sm:$0xf]
        %v339 = vld [vmem:[%s180 + $0x3b8] sm:$0xff]
        %v340 = vld [vmem:[%s180 + $0x3c0] sm:$0xff]
        %v341 = vld [vmem:[%s180 + $0x3c8] sm:$0xff]
        %v342 = vld [vmem:[%s180 + $0x3d0] sm:$0xf]
        %v343 = vld [vmem:[%s180 + $0x3d4] sm:$0xff]
        %v344 = vld [vmem:[%s180 + $0x3dc] sm:$0xff]
        %v345 = vld [vmem:[%s180 + $0x3e4] sm:$0xff]
        %v346 = vld [vmem:[%s180 + $0x3ec] sm:$0xf]
        %v347 = vld [vmem:[%s2] sm:$0xff]
        %v348 = vld [vmem:[%s2 + $0x8] sm:$0xff]
        %v349 = vld [vmem:[%s2 + $0x10] sm:$0xff]
        %v350 = vld [vmem:[%s2 + $0x18] sm:$0xff]
        %v351 = vld [vmem:[%s2 + $0x20] sm:$0xff]
        %v352 = vld [vmem:[%s2 + $0x28] sm:$0xff]
        %v353 = vld [vmem:[%s2 + $0x30] sm:$0xff]
        %v354 = vld [vmem:[%s2 + $0x38] sm:$0xff]
        %356 = vset.pattern.permute.xlu0 0
        %357 = vperm.xlu0 %356, %v347
        %v358 = vpop.permute.xlu0 %357
        %361 = vset.pattern.permute.xlu0 0
        %362 = vperm.xlu0 %361, %v348
        %v363 = vpop.permute.xlu0 %362
        %366 = vset.pattern.permute.xlu0 0
        %367 = vperm.xlu0 %366, %v349
        %v368 = vpop.permute.xlu0 %367
        %371 = vset.pattern.permute.xlu0 0
        %372 = vperm.xlu0 %371, %v350
        %v373 = vpop.permute.xlu0 %372
        %376 = vset.pattern.permute.xlu0 0
        %377 = vperm.xlu0 %376, %v351
        %v378 = vpop.permute.xlu0 %377
        %381 = vset.pattern.permute.xlu0 0
        %382 = vperm.xlu0 %381, %v352
        %v383 = vpop.permute.xlu0 %382
        %386 = vset.pattern.permute.xlu0 0
        %387 = vperm.xlu0 %386, %v353
        %v388 = vpop.permute.xlu0 %387
        %391 = vset.pattern.permute.xlu0 0
        %392 = vperm.xlu0 %391, %v354
        %v393 = vpop.permute.xlu0 %392
        %v411 = vunpack.c.l.b16 %v187
        %v412 = vunpack.c.h.b16 %v187
        %v413 = vunpack.c.l.b16 %v188
        %v414 = vunpack.c.l.b16 %v189
        %v415 = vunpack.c.h.b16 %v189
        %v416 = vunpack.c.l.b16 %v190
        %v417 = vunpack.c.l.b16 %v191
        %v418 = vunpack.c.h.b16 %v191
        %v419 = vunpack.c.l.b16 %v192
        %v420 = vunpack.c.l.b16 %v193
        %v421 = vunpack.c.h.b16 %v193
        %v422 = vunpack.c.l.b16 %v194
        %v423 = vunpack.c.l.b16 %v195
        %v424 = vunpack.c.h.b16 %v195
        %v425 = vunpack.c.l.b16 %v196
        %v426 = vunpack.c.l.b16 %v197
        %v427 = vunpack.c.h.b16 %v197
        %v428 = vunpack.c.l.b16 %v198
        %v429 = vunpack.c.l.b16 %v199
        %v430 = vunpack.c.h.b16 %v199
        %v431 = vunpack.c.l.b16 %v200
        %v432 = vunpack.c.l.b16 %v201
        %v433 = vunpack.c.h.b16 %v201
        %v434 = vunpack.c.l.b16 %v202
        %v435 = vpack.c.b16 %v414, %v411
        %v436 = vpack.c.b16 %v415, %v412
        %v437 = vpack.c.b16 %v416, %v413
        %v438 = vpack.c.b16 %v420, %v417
        %v439 = vpack.c.b16 %v421, %v418
        %v440 = vpack.c.b16 %v422, %v419
        %v441 = vpack.c.b16 %v426, %v423
        %v442 = vpack.c.b16 %v427, %v424
        %v443 = vpack.c.b16 %v428, %v425
        %v444 = vpack.c.b16 %v432, %v429
        %v445 = vpack.c.b16 %v433, %v430
        %v446 = vpack.c.b16 %v434, %v431
        %v599 = vunpack.c.l.b16 %v203
        %v600 = vunpack.c.h.b16 %v203
        %v601 = vunpack.c.l.b16 %v204
        %v602 = vunpack.c.h.b16 %v204
        %v603 = vunpack.c.l.b16 %v205
        %v604 = vunpack.c.h.b16 %v205
        %v605 = vunpack.c.l.b16 %v206
        %v606 = vunpack.c.l.b16 %v207
        %v607 = vunpack.c.h.b16 %v207
        %v608 = vunpack.c.l.b16 %v208
        %v609 = vunpack.c.h.b16 %v208
        %v610 = vunpack.c.l.b16 %v209
        %v611 = vunpack.c.h.b16 %v209
        %v612 = vunpack.c.l.b16 %v210
        %v613 = vunpack.c.l.b16 %v211
        %v614 = vunpack.c.h.b16 %v211
        %v615 = vunpack.c.l.b16 %v212
        %v616 = vunpack.c.h.b16 %v212
        %v617 = vunpack.c.l.b16 %v213
        %v618 = vunpack.c.h.b16 %v213
        %v619 = vunpack.c.l.b16 %v214
        %v620 = vunpack.c.l.b16 %v215
        %v621 = vunpack.c.h.b16 %v215
        %v622 = vunpack.c.l.b16 %v216
        %v623 = vunpack.c.h.b16 %v216
        %v624 = vunpack.c.l.b16 %v217
        %v625 = vunpack.c.h.b16 %v217
        %v626 = vunpack.c.l.b16 %v218
        %v627 = vunpack.c.l.b16 %v219
        %v628 = vunpack.c.h.b16 %v219
        %v629 = vunpack.c.l.b16 %v220
        %v630 = vunpack.c.h.b16 %v220
        %v631 = vunpack.c.l.b16 %v221
        %v632 = vunpack.c.h.b16 %v221
        %v633 = vunpack.c.l.b16 %v222
        %v634 = vunpack.c.l.b16 %v223
        %v635 = vunpack.c.h.b16 %v223
        %v636 = vunpack.c.l.b16 %v224
        %v637 = vunpack.c.h.b16 %v224
        %v638 = vunpack.c.l.b16 %v225
        %v639 = vunpack.c.h.b16 %v225
        %v640 = vunpack.c.l.b16 %v226
        %v641 = vunpack.c.l.b16 %v227
        %v642 = vunpack.c.h.b16 %v227
        %v643 = vunpack.c.l.b16 %v228
        %v644 = vunpack.c.h.b16 %v228
        %v645 = vunpack.c.l.b16 %v229
        %v646 = vunpack.c.h.b16 %v229
        %v647 = vunpack.c.l.b16 %v230
        %v648 = vunpack.c.l.b16 %v231
        %v649 = vunpack.c.h.b16 %v231
        %v650 = vunpack.c.l.b16 %v232
        %v651 = vunpack.c.h.b16 %v232
        %v652 = vunpack.c.l.b16 %v233
        %v653 = vunpack.c.h.b16 %v233
        %v654 = vunpack.c.l.b16 %v234
        %v655 = vunpack.c.l.b16 %v235
        %v656 = vunpack.c.h.b16 %v235
        %v657 = vunpack.c.l.b16 %v236
        %v658 = vunpack.c.h.b16 %v236
        %v659 = vunpack.c.l.b16 %v237
        %v660 = vunpack.c.h.b16 %v237
        %v661 = vunpack.c.l.b16 %v238
        %v662 = vunpack.c.l.b16 %v239
        %v663 = vunpack.c.h.b16 %v239
        %v664 = vunpack.c.l.b16 %v240
        %v665 = vunpack.c.h.b16 %v240
        %v666 = vunpack.c.l.b16 %v241
        %v667 = vunpack.c.h.b16 %v241
        %v668 = vunpack.c.l.b16 %v242
        %v669 = vunpack.c.l.b16 %v243
        %v670 = vunpack.c.h.b16 %v243
        %v671 = vunpack.c.l.b16 %v244
        %v672 = vunpack.c.h.b16 %v244
        %v673 = vunpack.c.l.b16 %v245
        %v674 = vunpack.c.h.b16 %v245
        %v675 = vunpack.c.l.b16 %v246
        %v676 = vunpack.c.l.b16 %v247
        %v677 = vunpack.c.h.b16 %v247
        %v678 = vunpack.c.l.b16 %v248
        %v679 = vunpack.c.h.b16 %v248
        %v680 = vunpack.c.l.b16 %v249
        %v681 = vunpack.c.h.b16 %v249
        %v682 = vunpack.c.l.b16 %v250
        %v683 = vunpack.c.l.b16 %v251
        %v684 = vunpack.c.h.b16 %v251
        %v685 = vunpack.c.l.b16 %v252
        %v686 = vunpack.c.h.b16 %v252
        %v687 = vunpack.c.l.b16 %v253
        %v688 = vunpack.c.h.b16 %v253
        %v689 = vunpack.c.l.b16 %v254
        %v690 = vunpack.c.l.b16 %v255
        %v691 = vunpack.c.h.b16 %v255
        %v692 = vunpack.c.l.b16 %v256
        %v693 = vunpack.c.h.b16 %v256
        %v694 = vunpack.c.l.b16 %v257
        %v695 = vunpack.c.h.b16 %v257
        %v696 = vunpack.c.l.b16 %v258
        %v697 = vunpack.c.l.b16 %v259
        %v698 = vunpack.c.h.b16 %v259
        %v699 = vunpack.c.l.b16 %v260
        %v700 = vunpack.c.h.b16 %v260
        %v701 = vunpack.c.l.b16 %v261
        %v702 = vunpack.c.h.b16 %v261
        %v703 = vunpack.c.l.b16 %v262
        %v704 = vunpack.c.l.b16 %v263
        %v705 = vunpack.c.h.b16 %v263
        %v706 = vunpack.c.l.b16 %v264
        %v707 = vunpack.c.h.b16 %v264
        %v708 = vunpack.c.l.b16 %v265
        %v709 = vunpack.c.h.b16 %v265
        %v710 = vunpack.c.l.b16 %v266
        %v711 = vunpack.c.l.b16 %v267
        %v712 = vunpack.c.h.b16 %v267
        %v713 = vunpack.c.l.b16 %v268
        %v714 = vunpack.c.h.b16 %v268
        %v715 = vunpack.c.l.b16 %v269
        %v716 = vunpack.c.h.b16 %v269
        %v717 = vunpack.c.l.b16 %v270
        %v718 = vunpack.c.l.b16 %v271
        %v719 = vunpack.c.h.b16 %v271
        %v720 = vunpack.c.l.b16 %v272
        %v721 = vunpack.c.h.b16 %v272
        %v722 = vunpack.c.l.b16 %v273
        %v723 = vunpack.c.h.b16 %v273
        %v724 = vunpack.c.l.b16 %v274
        %v725 = vunpack.c.l.b16 %v275
        %v726 = vunpack.c.h.b16 %v275
        %v727 = vunpack.c.l.b16 %v276
        %v728 = vunpack.c.h.b16 %v276
        %v729 = vunpack.c.l.b16 %v277
        %v730 = vunpack.c.h.b16 %v277
        %v731 = vunpack.c.l.b16 %v278
        %v732 = vunpack.c.l.b16 %v279
        %v733 = vunpack.c.h.b16 %v279
        %v734 = vunpack.c.l.b16 %v280
        %v735 = vunpack.c.h.b16 %v280
        %v736 = vunpack.c.l.b16 %v281
        %v737 = vunpack.c.h.b16 %v281
        %v738 = vunpack.c.l.b16 %v282
        %v739 = vunpack.c.l.b16 %v283
        %v740 = vunpack.c.h.b16 %v283
        %v741 = vunpack.c.l.b16 %v284
        %v742 = vunpack.c.h.b16 %v284
        %v743 = vunpack.c.l.b16 %v285
        %v744 = vunpack.c.h.b16 %v285
        %v745 = vunpack.c.l.b16 %v286
        %v746 = vunpack.c.l.b16 %v287
        %v747 = vunpack.c.h.b16 %v287
        %v748 = vunpack.c.l.b16 %v288
        %v749 = vunpack.c.h.b16 %v288
        %v750 = vunpack.c.l.b16 %v289
        %v751 = vunpack.c.h.b16 %v289
        %v752 = vunpack.c.l.b16 %v290
        %v753 = vunpack.c.l.b16 %v291
        %v754 = vunpack.c.h.b16 %v291
        %v755 = vunpack.c.l.b16 %v292
        %v756 = vunpack.c.h.b16 %v292
        %v757 = vunpack.c.l.b16 %v293
        %v758 = vunpack.c.h.b16 %v293
        %v759 = vunpack.c.l.b16 %v294
        %v760 = vunpack.c.l.b16 %v295
        %v761 = vunpack.c.h.b16 %v295
        %v762 = vunpack.c.l.b16 %v296
        %v763 = vunpack.c.h.b16 %v296
        %v764 = vunpack.c.l.b16 %v297
        %v765 = vunpack.c.h.b16 %v297
        %v766 = vunpack.c.l.b16 %v298
        %v767 = vunpack.c.l.b16 %v299
        %v768 = vunpack.c.h.b16 %v299
        %v769 = vunpack.c.l.b16 %v300
        %v770 = vunpack.c.h.b16 %v300
        %v771 = vunpack.c.l.b16 %v301
        %v772 = vunpack.c.h.b16 %v301
        %v773 = vunpack.c.l.b16 %v302
        %v774 = vunpack.c.l.b16 %v303
        %v775 = vunpack.c.h.b16 %v303
        %v776 = vunpack.c.l.b16 %v304
        %v777 = vunpack.c.h.b16 %v304
        %v778 = vunpack.c.l.b16 %v305
        %v779 = vunpack.c.h.b16 %v305
        %v780 = vunpack.c.l.b16 %v306
        %v781 = vunpack.c.l.b16 %v307
        %v782 = vunpack.c.h.b16 %v307
        %v783 = vunpack.c.l.b16 %v308
        %v784 = vunpack.c.h.b16 %v308
        %v785 = vunpack.c.l.b16 %v309
        %v786 = vunpack.c.h.b16 %v309
        %v787 = vunpack.c.l.b16 %v310
        %v788 = vunpack.c.l.b16 %v311
        %v789 = vunpack.c.h.b16 %v311
        %v790 = vunpack.c.l.b16 %v312
        %v791 = vunpack.c.h.b16 %v312
        %v792 = vunpack.c.l.b16 %v313
        %v793 = vunpack.c.h.b16 %v313
        %v794 = vunpack.c.l.b16 %v314
        %v795 = vunpack.c.l.b16 %v315
        %v796 = vunpack.c.h.b16 %v315
        %v797 = vunpack.c.l.b16 %v316
        %v798 = vunpack.c.h.b16 %v316
        %v799 = vunpack.c.l.b16 %v317
        %v800 = vunpack.c.h.b16 %v317
        %v801 = vunpack.c.l.b16 %v318
        %v802 = vunpack.c.l.b16 %v319
        %v803 = vunpack.c.h.b16 %v319
        %v804 = vunpack.c.l.b16 %v320
        %v805 = vunpack.c.h.b16 %v320
        %v806 = vunpack.c.l.b16 %v321
        %v807 = vunpack.c.h.b16 %v321
        %v808 = vunpack.c.l.b16 %v322
        %v809 = vunpack.c.l.b16 %v323
        %v810 = vunpack.c.h.b16 %v323
        %v811 = vunpack.c.l.b16 %v324
        %v812 = vunpack.c.h.b16 %v324
        %v813 = vunpack.c.l.b16 %v325
        %v814 = vunpack.c.h.b16 %v325
        %v815 = vunpack.c.l.b16 %v326
        %v816 = vunpack.c.l.b16 %v327
        %v817 = vunpack.c.h.b16 %v327
        %v818 = vunpack.c.l.b16 %v328
        %v819 = vunpack.c.h.b16 %v328
        %v820 = vunpack.c.l.b16 %v329
        %v821 = vunpack.c.h.b16 %v329
        %v822 = vunpack.c.l.b16 %v330
        %v823 = vunpack.c.l.b16 %v331
        %v824 = vunpack.c.h.b16 %v331
        %v825 = vunpack.c.l.b16 %v332
        %v826 = vunpack.c.h.b16 %v332
        %v827 = vunpack.c.l.b16 %v333
        %v828 = vunpack.c.h.b16 %v333
        %v829 = vunpack.c.l.b16 %v334
        %v830 = vunpack.c.l.b16 %v335
        %v831 = vunpack.c.h.b16 %v335
        %v832 = vunpack.c.l.b16 %v336
        %v833 = vunpack.c.h.b16 %v336
        %v834 = vunpack.c.l.b16 %v337
        %v835 = vunpack.c.h.b16 %v337
        %v836 = vunpack.c.l.b16 %v338
        %v837 = vunpack.c.l.b16 %v339
        %v838 = vunpack.c.h.b16 %v339
        %v839 = vunpack.c.l.b16 %v340
        %v840 = vunpack.c.h.b16 %v340
        %v841 = vunpack.c.l.b16 %v341
        %v842 = vunpack.c.h.b16 %v341
        %v843 = vunpack.c.l.b16 %v342
        %v844 = vunpack.c.l.b16 %v343
        %v845 = vunpack.c.h.b16 %v343
        %v846 = vunpack.c.l.b16 %v344
        %v847 = vunpack.c.h.b16 %v344
        %v848 = vunpack.c.l.b16 %v345
        %v849 = vunpack.c.h.b16 %v345
        %v850 = vunpack.c.l.b16 %v346
        %v851 = vpack.c.b16 %v606, %v599
        %v852 = vpack.c.b16 %v607, %v600
        %v853 = vpack.c.b16 %v608, %v601
        %v854 = vpack.c.b16 %v609, %v602
        %v855 = vpack.c.b16 %v610, %v603
        %v856 = vpack.c.b16 %v611, %v604
        %v857 = vpack.c.b16 %v612, %v605
        %v858 = vpack.c.b16 %v620, %v613
        %v859 = vpack.c.b16 %v621, %v614
        %v860 = vpack.c.b16 %v622, %v615
        %v861 = vpack.c.b16 %v623, %v616
        %v862 = vpack.c.b16 %v624, %v617
        %v863 = vpack.c.b16 %v625, %v618
        %v864 = vpack.c.b16 %v626, %v619
        %v865 = vpack.c.b16 %v634, %v627
        %v866 = vpack.c.b16 %v635, %v628
        %v867 = vpack.c.b16 %v636, %v629
        %v868 = vpack.c.b16 %v637, %v630
        %v869 = vpack.c.b16 %v638, %v631
        %v870 = vpack.c.b16 %v639, %v632
        %v871 = vpack.c.b16 %v640, %v633
        %v872 = vpack.c.b16 %v648, %v641
        %v873 = vpack.c.b16 %v649, %v642
        %v874 = vpack.c.b16 %v650, %v643
        %v875 = vpack.c.b16 %v651, %v644
        %v876 = vpack.c.b16 %v652, %v645
        %v877 = vpack.c.b16 %v653, %v646
        %v878 = vpack.c.b16 %v654, %v647
        %v879 = vpack.c.b16 %v662, %v655
        %v880 = vpack.c.b16 %v663, %v656
        %v881 = vpack.c.b16 %v664, %v657
        %v882 = vpack.c.b16 %v665, %v658
        %v883 = vpack.c.b16 %v666, %v659
        %v884 = vpack.c.b16 %v667, %v660
        %v885 = vpack.c.b16 %v668, %v661
        %v886 = vpack.c.b16 %v676, %v669
        %v887 = vpack.c.b16 %v677, %v670
        %v888 = vpack.c.b16 %v678, %v671
        %v889 = vpack.c.b16 %v679, %v672
        %v890 = vpack.c.b16 %v680, %v673
        %v891 = vpack.c.b16 %v681, %v674
        %v892 = vpack.c.b16 %v682, %v675
        %v893 = vpack.c.b16 %v690, %v683
        %v894 = vpack.c.b16 %v691, %v684
        %v895 = vpack.c.b16 %v692, %v685
        %v896 = vpack.c.b16 %v693, %v686
        %v897 = vpack.c.b16 %v694, %v687
        %v898 = vpack.c.b16 %v695, %v688
        %v899 = vpack.c.b16 %v696, %v689
        %v900 = vpack.c.b16 %v704, %v697
        %v901 = vpack.c.b16 %v705, %v698
        %v902 = vpack.c.b16 %v706, %v699
        %v903 = vpack.c.b16 %v707, %v700
        %v904 = vpack.c.b16 %v708, %v701
        %v905 = vpack.c.b16 %v709, %v702
        %v906 = vpack.c.b16 %v710, %v703
        %v907 = vpack.c.b16 %v718, %v711
        %v908 = vpack.c.b16 %v719, %v712
        %v909 = vpack.c.b16 %v720, %v713
        %v910 = vpack.c.b16 %v721, %v714
        %v911 = vpack.c.b16 %v722, %v715
        %v912 = vpack.c.b16 %v723, %v716
        %v913 = vpack.c.b16 %v724, %v717
        %v914 = vpack.c.b16 %v732, %v725
        %v915 = vpack.c.b16 %v733, %v726
        %v916 = vpack.c.b16 %v734, %v727
        %v917 = vpack.c.b16 %v735, %v728
        %v918 = vpack.c.b16 %v736, %v729
        %v919 = vpack.c.b16 %v737, %v730
        %v920 = vpack.c.b16 %v738, %v731
        %v921 = vpack.c.b16 %v746, %v739
        %v922 = vpack.c.b16 %v747, %v740
        %v923 = vpack.c.b16 %v748, %v741
        %v924 = vpack.c.b16 %v749, %v742
        %v925 = vpack.c.b16 %v750, %v743
        %v926 = vpack.c.b16 %v751, %v744
        %v927 = vpack.c.b16 %v752, %v745
        %v928 = vpack.c.b16 %v760, %v753
        %v929 = vpack.c.b16 %v761, %v754
        %v930 = vpack.c.b16 %v762, %v755
        %v931 = vpack.c.b16 %v763, %v756
        %v932 = vpack.c.b16 %v764, %v757
        %v933 = vpack.c.b16 %v765, %v758
        %v934 = vpack.c.b16 %v766, %v759
        %v935 = vpack.c.b16 %v774, %v767
        %v936 = vpack.c.b16 %v775, %v768
        %v937 = vpack.c.b16 %v776, %v769
        %v938 = vpack.c.b16 %v777, %v770
        %v939 = vpack.c.b16 %v778, %v771
        %v940 = vpack.c.b16 %v779, %v772
        %v941 = vpack.c.b16 %v780, %v773
        %v942 = vpack.c.b16 %v788, %v781
        %v943 = vpack.c.b16 %v789, %v782
        %v944 = vpack.c.b16 %v790, %v783
        %v945 = vpack.c.b16 %v791, %v784
        %v946 = vpack.c.b16 %v792, %v785
        %v947 = vpack.c.b16 %v793, %v786
        %v948 = vpack.c.b16 %v794, %v787
        %v949 = vpack.c.b16 %v802, %v795
        %v950 = vpack.c.b16 %v803, %v796
        %v951 = vpack.c.b16 %v804, %v797
        %v952 = vpack.c.b16 %v805, %v798
        %v953 = vpack.c.b16 %v806, %v799
        %v954 = vpack.c.b16 %v807, %v800
        %v955 = vpack.c.b16 %v808, %v801
        %v956 = vpack.c.b16 %v816, %v809
        %v957 = vpack.c.b16 %v817, %v810
        %v958 = vpack.c.b16 %v818, %v811
        %v959 = vpack.c.b16 %v819, %v812
        %v960 = vpack.c.b16 %v820, %v813
        %v961 = vpack.c.b16 %v821, %v814
        %v962 = vpack.c.b16 %v822, %v815
        %v963 = vpack.c.b16 %v830, %v823
        %v964 = vpack.c.b16 %v831, %v824
        %v965 = vpack.c.b16 %v832, %v825
        %v966 = vpack.c.b16 %v833, %v826
        %v967 = vpack.c.b16 %v834, %v827
        %v968 = vpack.c.b16 %v835, %v828
        %v969 = vpack.c.b16 %v836, %v829
        %v970 = vpack.c.b16 %v844, %v837
        %v971 = vpack.c.b16 %v845, %v838
        %v972 = vpack.c.b16 %v846, %v839
        %v973 = vpack.c.b16 %v847, %v840
        %v974 = vpack.c.b16 %v848, %v841
        %v975 = vpack.c.b16 %v849, %v842
        %v976 = vpack.c.b16 %v850, %v843
        %vm1103 = vcmask 261120
        %v1105 = vsel %vm1103, %v437, 0
        %v1108 = vsel %vm1103, %v440, 0
        %v1111 = vsel %vm1103, %v443, 0
        %v1114 = vsel %vm1103, %v446, 0
        %1116 = vmatprep.subr.bf16.mxu0 %v852
        %1117 = vmatpush1.bf16.msra.mxu0 %v851
        %1118 = vmatprep.subr.bf16.mxu0 %v859
        %1119 = vmatpush1.bf16.msra.mxu0 %v858
        %1120 = vmatprep.subr.bf16.mxu0 %v866
        %1121 = vmatpush1.bf16.msra.mxu0 %v865
        %1122 = vmatprep.subr.bf16.mxu0 %v873
        %1123 = vmatpush1.bf16.msra.mxu0 %v872
        %1124 = vmatprep.subr.bf16.mxu0 %v880
        %1125 = vmatpush1.bf16.msra.mxu0 %v879
        %1126 = vmatprep.subr.bf16.mxu0 %v887
        %1127 = vmatpush1.bf16.msra.mxu0 %v886
        %1128 = vmatprep.subr.bf16.mxu0 %v894
        %1129 = vmatpush1.bf16.msra.mxu0 %v893
        %1130 = vmatprep.subr.bf16.mxu0 %v901
        %1131 = vmatpush1.bf16.msra.mxu0 %v900
        %1132 = vmatprep.subr.bf16.mxu0 %v908
        %1133 = vmatpush1.bf16.msra.mxu0 %v907
        %1134 = vmatprep.subr.bf16.mxu0 %v915
        %1135 = vmatpush1.bf16.msra.mxu0 %v914
        %1136 = vmatprep.subr.bf16.mxu0 %v922
        %1137 = vmatpush1.bf16.msra.mxu0 %v921
        %1138 = vmatprep.subr.bf16.mxu0 %v929
        %1139 = vmatpush1.bf16.msra.mxu0 %v928
        %1140 = vmatprep.subr.bf16.mxu0 %v936
        %1141 = vmatpush1.bf16.msra.mxu0 %v935
        %1142 = vmatprep.subr.bf16.mxu0 %v943
        %1143 = vmatpush1.bf16.msra.mxu0 %v942
        %1144 = vmatprep.subr.bf16.mxu0 %v950
        %1145 = vmatpush1.bf16.msra.mxu0 %v949
        %1146 = vmatprep.subr.bf16.mxu0 %v957
        %1147 = vmatpush1.bf16.msra.mxu0 %v956
        %1148 = vmatprep.mubr.bf16.mxu0 %v436
        %1149 = vmatmul.mubr.bf16.gmra.mrb[0].mxu0 %v435
        %v1150 = vpop.f32.mrb[0].mxu0
        %v1151 = vadd.f32 %v358, %v1150
        %v1152 = vpop.f32.mrb[0].mxu0
        %v1153 = vadd.f32 %v358, %v1152
        %v1154 = vpop.f32.mrb[0].mxu0
        %v1155 = vadd.f32 %v363, %v1154
        %v1156 = vpop.f32.mrb[0].mxu0
        %v1157 = vadd.f32 %v363, %v1156
        %1158 = vmatprep.mubr.bf16.mxu0 %v439
        %1159 = vmatmul.mubr.bf16.gmra.mrb[0].mxu0 %v438
        %v1160 = vpop.f32.mrb[0].mxu0
        %v1161 = vadd.f32 %v368, %v1160
        %v1162 = vpop.f32.mrb[0].mxu0
        %v1163 = vadd.f32 %v368, %v1162
        %v1164 = vpop.f32.mrb[0].mxu0
        %v1165 = vadd.f32 %v373, %v1164
        %v1166 = vpop.f32.mrb[0].mxu0
        %v1167 = vadd.f32 %v373, %v1166
        %1168 = vmatprep.mubr.bf16.mxu0 %v442
        %1169 = vmatmul.mubr.bf16.gmra.mrb[0].mxu0 %v441
        %v1170 = vpop.f32.mrb[0].mxu0
        %v1171 = vadd.f32 %v378, %v1170
        %v1172 = vpop.f32.mrb[0].mxu0
        %v1173 = vadd.f32 %v378, %v1172
        %v1174 = vpop.f32.mrb[0].mxu0
        %v1175 = vadd.f32 %v383, %v1174
        %v1176 = vpop.f32.mrb[0].mxu0
        %v1177 = vadd.f32 %v383, %v1176
        %1178 = vmatprep.mubr.bf16.mxu0 %v445
        %1179 = vmatmul.mubr.bf16.gmra.mrb[0].mxu0 %v444
        %v1180 = vpop.f32.mrb[0].mxu0
        %v1181 = vadd.f32 %v388, %v1180
        %v1182 = vpop.f32.mrb[0].mxu0
        %v1183 = vadd.f32 %v388, %v1182
        %v1184 = vpop.f32.mrb[0].mxu0
        %v1185 = vadd.f32 %v393, %v1184
        %v1186 = vpop.f32.mrb[0].mxu0
        %v1187 = vadd.f32 %v393, %v1186
        %1188 = vdwg.mxu0
        %1189 = vmatprep.subr.bf16.mxu0 %v964
        %1190 = vmatpush1.bf16.msra.mxu0 %v963
        %1191 = vmatprep.subr.bf16.mxu0 %v971
        %1192 = vmatpush1.bf16.msra.mxu0 %v970
        %1193 = vmatprep.subr.bf16.mxu0 0
        %1194 = vmatpush1.bf16.msra.mxu0 0
        %1195 = vmatprep.subr.bf16.mxu0 0
        %1196 = vmatpush1.bf16.msra.mxu0 0
        %1197 = vmatprep.subr.bf16.mxu0 0
        %1198 = vmatpush1.bf16.msra.mxu0 0
        %1199 = vmatprep.subr.bf16.mxu0 0
        %1200 = vmatpush1.bf16.msra.mxu0 0
        %1201 = vmatprep.subr.bf16.mxu0 0
        %1202 = vmatpush1.bf16.msra.mxu0 0
        %1203 = vmatprep.subr.bf16.mxu0 0
        %1204 = vmatpush1.bf16.msra.mxu0 0
        %1205 = vmatprep.subr.bf16.mxu0 0
        %1206 = vmatpush1.bf16.msra.mxu0 0
        %1207 = vmatprep.subr.bf16.mxu0 0
        %1208 = vmatpush1.bf16.msra.mxu0 0
        %1209 = vmatprep.subr.bf16.mxu0 0
        %1210 = vmatpush1.bf16.msra.mxu0 0
        %1211 = vmatprep.subr.bf16.mxu0 0
        %1212 = vmatpush1.bf16.msra.mxu0 0
        %1213 = vmatprep.subr.bf16.mxu0 0
        %1214 = vmatpush1.bf16.msra.mxu0 0
        %1215 = vmatprep.subr.bf16.mxu0 0
        %1216 = vmatpush1.bf16.msra.mxu0 0
        %1217 = vmatprep.subr.bf16.mxu0 0
        %1218 = vmatpush1.bf16.msra.mxu0 0
        %1219 = vmatprep.subr.bf16.mxu0 0
        %1220 = vmatpush1.bf16.msra.mxu0 0
        %1221 = vmatprep.mubr.bf16.mxu0 0
        %1222 = vmatmul.mubr.bf16.gmra.mrb[0].mxu0 %v1105
        %v1223 = vpop.f32.mrb[0].mxu0
        %v1224 = vadd.f32 %v1151, %v1223
        %v1225 = vpop.f32.mrb[0].mxu0
        %v1226 = vadd.f32 %v1153, %v1225
        %v1227 = vpop.f32.mrb[0].mxu0
        %v1228 = vadd.f32 %v1155, %v1227
        %v1229 = vpop.f32.mrb[0].mxu0
        %v1230 = vadd.f32 %v1157, %v1229
        %1231 = vmatprep.mubr.bf16.mxu0 0
        %1232 = vmatmul.mubr.bf16.gmra.mrb[0].mxu0 %v1108
        %v1233 = vpop.f32.mrb[0].mxu0
        %v1234 = vadd.f32 %v1161, %v1233
        %v1235 = vpop.f32.mrb[0].mxu0
        %v1236 = vadd.f32 %v1163, %v1235
        %v1237 = vpop.f32.mrb[0].mxu0
        %v1238 = vadd.f32 %v1165, %v1237
        %v1239 = vpop.f32.mrb[0].mxu0
        %v1240 = vadd.f32 %v1167, %v1239
        %1241 = vmatprep.mubr.bf16.mxu0 0
        %1242 = vmatmul.mubr.bf16.gmra.mrb[0].mxu0 %v1111
        %v1243 = vpop.f32.mrb[0].mxu0
        %v1244 = vadd.f32 %v1171, %v1243
        %v1245 = vpop.f32.mrb[0].mxu0
        %v1246 = vadd.f32 %v1173, %v1245
        %v1247 = vpop.f32.mrb[0].mxu0
        %v1248 = vadd.f32 %v1175, %v1247
        %v1249 = vpop.f32.mrb[0].mxu0
        %v1250 = vadd.f32 %v1177, %v1249
        %1251 = vmatprep.mubr.bf16.mxu0 0
        %1252 = vmatmul.mubr.bf16.gmra.mrb[0].mxu0 %v1114
        %v1253 = vpop.f32.mrb[0].mxu0
        %v1254 = vadd.f32 %v1181, %v1253
        %v1255 = vpop.f32.mrb[0].mxu0
        %v1256 = vadd.f32 %v1183, %v1255
        %v1257 = vpop.f32.mrb[0].mxu0
        %v1258 = vadd.f32 %v1185, %v1257
        %v1259 = vpop.f32.mrb[0].mxu0
        %v1260 = vadd.f32 %v1187, %v1259
        %1261 = vdwg.mxu0
        %1262 = vmatprep.subr.bf16.mxu0 %v854
        %1263 = vmatpush1.bf16.msra.mxu0 %v853
        %1264 = vmatprep.subr.bf16.mxu0 %v861
        %1265 = vmatpush1.bf16.msra.mxu0 %v860
        %1266 = vmatprep.subr.bf16.mxu0 %v868
        %1267 = vmatpush1.bf16.msra.mxu0 %v867
        %1268 = vmatprep.subr.bf16.mxu0 %v875
        %1269 = vmatpush1.bf16.msra.mxu0 %v874
        %1270 = vmatprep.subr.bf16.mxu0 %v882
        %1271 = vmatpush1.bf16.msra.mxu0 %v881
        %1272 = vmatprep.subr.bf16.mxu0 %v889
        %1273 = vmatpush1.bf16.msra.mxu0 %v888
        %1274 = vmatprep.subr.bf16.mxu0 %v896
        %1275 = vmatpush1.bf16.msra.mxu0 %v895
        %1276 = vmatprep.subr.bf16.mxu0 %v903
        %1277 = vmatpush1.bf16.msra.mxu0 %v902
        %1278 = vmatprep.subr.bf16.mxu0 %v910
        %1279 = vmatpush1.bf16.msra.mxu0 %v909
        %1280 = vmatprep.subr.bf16.mxu0 %v917
        %1281 = vmatpush1.bf16.msra.mxu0 %v916
        %1282 = vmatprep.subr.bf16.mxu0 %v924
        %1283 = vmatpush1.bf16.msra.mxu0 %v923
        %1284 = vmatprep.subr.bf16.mxu0 %v931
        %1285 = vmatpush1.bf16.msra.mxu0 %v930
        %1286 = vmatprep.subr.bf16.mxu0 %v938
        %1287 = vmatpush1.bf16.msra.mxu0 %v937
        %1288 = vmatprep.subr.bf16.mxu0 %v945
        %1289 = vmatpush1.bf16.msra.mxu0 %v944
        %1290 = vmatprep.subr.bf16.mxu0 %v952
        %1291 = vmatpush1.bf16.msra.mxu0 %v951
        %1292 = vmatprep.subr.bf16.mxu0 %v959
        %1293 = vmatpush1.bf16.msra.mxu0 %v958
        %1294 = vmatprep.mubr.bf16.mxu0 %v436
        %1295 = vmatmul.mubr.bf16.gmra.mrb[0].mxu0 %v435
        %v1296 = vpop.f32.mrb[0].mxu0
        %v1297 = vadd.f32 %v358, %v1296
        %v1298 = vpop.f32.mrb[0].mxu0
        %v1299 = vadd.f32 %v358, %v1298
        %v1300 = vpop.f32.mrb[0].mxu0
        %v1301 = vadd.f32 %v363, %v1300
        %v1302 = vpop.f32.mrb[0].mxu0
        %v1303 = vadd.f32 %v363, %v1302
        %1304 = vmatprep.mubr.bf16.mxu0 %v439
        %1305 = vmatmul.mubr.bf16.gmra.mrb[0].mxu0 %v438
        %v1306 = vpop.f32.mrb[0].mxu0
        %v1307 = vadd.f32 %v368, %v1306
        %v1308 = vpop.f32.mrb[0].mxu0
        %v1309 = vadd.f32 %v368, %v1308
        %v1310 = vpop.f32.mrb[0].mxu0
        %v1311 = vadd.f32 %v373, %v1310
        %v1312 = vpop.f32.mrb[0].mxu0
        %v1313 = vadd.f32 %v373, %v1312
        %1314 = vmatprep.mubr.bf16.mxu0 %v442
        %1315 = vmatmul.mubr.bf16.gmra.mrb[0].mxu0 %v441
        %v1316 = vpop.f32.mrb[0].mxu0
        %v1317 = vadd.f32 %v378, %v1316
        %v1318 = vpop.f32.mrb[0].mxu0
        %v1319 = vadd.f32 %v378, %v1318
        %v1320 = vpop.f32.mrb[0].mxu0
        %v1321 = vadd.f32 %v383, %v1320
        %v1322 = vpop.f32.mrb[0].mxu0
        %v1323 = vadd.f32 %v383, %v1322
        %1324 = vmatprep.mubr.bf16.mxu0 %v445
        %1325 = vmatmul.mubr.bf16.gmra.mrb[0].mxu0 %v444
        %v1326 = vpop.f32.mrb[0].mxu0
        %v1327 = vadd.f32 %v388, %v1326
        %v1328 = vpop.f32.mrb[0].mxu0
        %v1329 = vadd.f32 %v388, %v1328
        %v1330 = vpop.f32.mrb[0].mxu0
        %v1331 = vadd.f32 %v393, %v1330
        %v1332 = vpop.f32.mrb[0].mxu0
        %v1333 = vadd.f32 %v393, %v1332
        %1334 = vdwg.mxu0
        %1335 = vmatprep.subr.bf16.mxu0 %v966
        %1336 = vmatpush1.bf16.msra.mxu0 %v965
        %1337 = vmatprep.subr.bf16.mxu0 %v973
        %1338 = vmatpush1.bf16.msra.mxu0 %v972
        %1339 = vmatprep.subr.bf16.mxu0 0
        %1340 = vmatpush1.bf16.msra.mxu0 0
        %1341 = vmatprep.subr.bf16.mxu0 0
        %1342 = vmatpush1.bf16.msra.mxu0 0
        %1343 = vmatprep.subr.bf16.mxu0 0
        %1344 = vmatpush1.bf16.msra.mxu0 0
        %1345 = vmatprep.subr.bf16.mxu0 0
        %1346 = vmatpush1.bf16.msra.mxu0 0
        %1347 = vmatprep.subr.bf16.mxu0 0
        %1348 = vmatpush1.bf16.msra.mxu0 0
        %1349 = vmatprep.subr.bf16.mxu0 0
        %1350 = vmatpush1.bf16.msra.mxu0 0
        %1351 = vmatprep.subr.bf16.mxu0 0
        %1352 = vmatpush1.bf16.msra.mxu0 0
        %1353 = vmatprep.subr.bf16.mxu0 0
        %1354 = vmatpush1.bf16.msra.mxu0 0
        %1355 = vmatprep.subr.bf16.mxu0 0
        %1356 = vmatpush1.bf16.msra.mxu0 0
        %1357 = vmatprep.subr.bf16.mxu0 0
        %1358 = vmatpush1.bf16.msra.mxu0 0
        %1359 = vmatprep.subr.bf16.mxu0 0
        %1360 = vmatpush1.bf16.msra.mxu0 0
        %1361 = vmatprep.subr.bf16.mxu0 0
        %1362 = vmatpush1.bf16.msra.mxu0 0
        %1363 = vmatprep.subr.bf16.mxu0 0
        %1364 = vmatpush1.bf16.msra.mxu0 0
        %1365 = vmatprep.subr.bf16.mxu0 0
        %1366 = vmatpush1.bf16.msra.mxu0 0
        %1367 = vmatprep.mubr.bf16.mxu0 0
        %1368 = vmatmul.mubr.bf16.gmra.mrb[0].mxu0 %v1105
        %v1369 = vpop.f32.mrb[0].mxu0
        %v1370 = vadd.f32 %v1297, %v1369
        %v1371 = vpop.f32.mrb[0].mxu0
        %v1372 = vadd.f32 %v1299, %v1371
        %v1373 = vpop.f32.mrb[0].mxu0
        %v1374 = vadd.f32 %v1301, %v1373
        %v1375 = vpop.f32.mrb[0].mxu0
        %v1376 = vadd.f32 %v1303, %v1375
        %1377 = vmatprep.mubr.bf16.mxu0 0
        %1378 = vmatmul.mubr.bf16.gmra.mrb[0].mxu0 %v1108
        %v1379 = vpop.f32.mrb[0].mxu0
        %v1380 = vadd.f32 %v1307, %v1379
        %v1381 = vpop.f32.mrb[0].mxu0
        %v1382 = vadd.f32 %v1309, %v1381
        %v1383 = vpop.f32.mrb[0].mxu0
        %v1384 = vadd.f32 %v1311, %v1383
        %v1385 = vpop.f32.mrb[0].mxu0
        %v1386 = vadd.f32 %v1313, %v1385
        %1387 = vmatprep.mubr.bf16.mxu0 0
        %1388 = vmatmul.mubr.bf16.gmra.mrb[0].mxu0 %v1111
        %v1389 = vpop.f32.mrb[0].mxu0
        %v1390 = vadd.f32 %v1317, %v1389
        %v1391 = vpop.f32.mrb[0].mxu0
        %v1392 = vadd.f32 %v1319, %v1391
        %v1393 = vpop.f32.mrb[0].mxu0
        %v1394 = vadd.f32 %v1321, %v1393
        %v1395 = vpop.f32.mrb[0].mxu0
        %v1396 = vadd.f32 %v1323, %v1395
        %1397 = vmatprep.mubr.bf16.mxu0 0
        %1398 = vmatmul.mubr.bf16.gmra.mrb[0].mxu0 %v1114
        %v1399 = vpop.f32.mrb[0].mxu0
        %v1400 = vadd.f32 %v1327, %v1399
        %v1401 = vpop.f32.mrb[0].mxu0
        %v1402 = vadd.f32 %v1329, %v1401
        %v1403 = vpop.f32.mrb[0].mxu0
        %v1404 = vadd.f32 %v1331, %v1403
        %v1405 = vpop.f32.mrb[0].mxu0
        %v1406 = vadd.f32 %v1333, %v1405
        %1407 = vdwg.mxu0
        %1408 = vmatprep.subr.bf16.mxu0 %v856
        %1409 = vmatpush1.bf16.msra.mxu0 %v855
        %1410 = vmatprep.subr.bf16.mxu0 %v863
        %1411 = vmatpush1.bf16.msra.mxu0 %v862
        %1412 = vmatprep.subr.bf16.mxu0 %v870
        %1413 = vmatpush1.bf16.msra.mxu0 %v869
        %1414 = vmatprep.subr.bf16.mxu0 %v877
        %1415 = vmatpush1.bf16.msra.mxu0 %v876
        %1416 = vmatprep.subr.bf16.mxu0 %v884
        %1417 = vmatpush1.bf16.msra.mxu0 %v883
        %1418 = vmatprep.subr.bf16.mxu0 %v891
        %1419 = vmatpush1.bf16.msra.mxu0 %v890
        %1420 = vmatprep.subr.bf16.mxu0 %v898
        %1421 = vmatpush1.bf16.msra.mxu0 %v897
        %1422 = vmatprep.subr.bf16.mxu0 %v905
        %1423 = vmatpush1.bf16.msra.mxu0 %v904
        %1424 = vmatprep.subr.bf16.mxu0 %v912
        %1425 = vmatpush1.bf16.msra.mxu0 %v911
        %1426 = vmatprep.subr.bf16.mxu0 %v919
        %1427 = vmatpush1.bf16.msra.mxu0 %v918
        %1428 = vmatprep.subr.bf16.mxu0 %v926
        %1429 = vmatpush1.bf16.msra.mxu0 %v925
        %1430 = vmatprep.subr.bf16.mxu0 %v933
        %1431 = vmatpush1.bf16.msra.mxu0 %v932
        %1432 = vmatprep.subr.bf16.mxu0 %v940
        %1433 = vmatpush1.bf16.msra.mxu0 %v939
        %1434 = vmatprep.subr.bf16.mxu0 %v947
        %1435 = vmatpush1.bf16.msra.mxu0 %v946
        %1436 = vmatprep.subr.bf16.mxu0 %v954
        %1437 = vmatpush1.bf16.msra.mxu0 %v953
        %1438 = vmatprep.subr.bf16.mxu0 %v961
        %1439 = vmatpush1.bf16.msra.mxu0 %v960
        %1440 = vmatprep.mubr.bf16.mxu0 %v436
        %1441 = vmatmul.mubr.bf16.gmra.mrb[0].mxu0 %v435
        %v1442 = vpop.f32.mrb[0].mxu0
        %v1443 = vadd.f32 %v358, %v1442
        %v1444 = vpop.f32.mrb[0].mxu0
        %v1445 = vadd.f32 %v358, %v1444
        %v1446 = vpop.f32.mrb[0].mxu0
        %v1447 = vadd.f32 %v363, %v1446
        %v1448 = vpop.f32.mrb[0].mxu0
        %v1449 = vadd.f32 %v363, %v1448
        %1450 = vmatprep.mubr.bf16.mxu0 %v439
        %1451 = vmatmul.mubr.bf16.gmra.mrb[0].mxu0 %v438
        %v1452 = vpop.f32.mrb[0].mxu0
        %v1453 = vadd.f32 %v368, %v1452
        %v1454 = vpop.f32.mrb[0].mxu0
        %v1455 = vadd.f32 %v368, %v1454
        %v1456 = vpop.f32.mrb[0].mxu0
        %v1457 = vadd.f32 %v373, %v1456
        %v1458 = vpop.f32.mrb[0].mxu0
        %v1459 = vadd.f32 %v373, %v1458
        %1460 = vmatprep.mubr.bf16.mxu0 %v442
        %1461 = vmatmul.mubr.bf16.gmra.mrb[0].mxu0 %v441
        %v1462 = vpop.f32.mrb[0].mxu0
        %v1463 = vadd.f32 %v378, %v1462
        %v1464 = vpop.f32.mrb[0].mxu0
        %v1465 = vadd.f32 %v378, %v1464
        %v1466 = vpop.f32.mrb[0].mxu0
        %v1467 = vadd.f32 %v383, %v1466
        %v1468 = vpop.f32.mrb[0].mxu0
        %v1469 = vadd.f32 %v383, %v1468
        %1470 = vmatprep.mubr.bf16.mxu0 %v445
        %1471 = vmatmul.mubr.bf16.gmra.mrb[0].mxu0 %v444
        %v1472 = vpop.f32.mrb[0].mxu0
        %v1473 = vadd.f32 %v388, %v1472
        %v1474 = vpop.f32.mrb[0].mxu0
        %v1475 = vadd.f32 %v388, %v1474
        %v1476 = vpop.f32.mrb[0].mxu0
        %v1477 = vadd.f32 %v393, %v1476
        %v1478 = vpop.f32.mrb[0].mxu0
        %v1479 = vadd.f32 %v393, %v1478
        %1480 = vdwg.mxu0
        %1481 = vmatprep.subr.bf16.mxu0 %v968
        %1482 = vmatpush1.bf16.msra.mxu0 %v967
        %1483 = vmatprep.subr.bf16.mxu0 %v975
        %1484 = vmatpush1.bf16.msra.mxu0 %v974
        %1485 = vmatprep.subr.bf16.mxu0 0
        %1486 = vmatpush1.bf16.msra.mxu0 0
        %1487 = vmatprep.subr.bf16.mxu0 0
        %1488 = vmatpush1.bf16.msra.mxu0 0
        %1489 = vmatprep.subr.bf16.mxu0 0
        %1490 = vmatpush1.bf16.msra.mxu0 0
        %1491 = vmatprep.subr.bf16.mxu0 0
        %1492 = vmatpush1.bf16.msra.mxu0 0
        %1493 = vmatprep.subr.bf16.mxu0 0
        %1494 = vmatpush1.bf16.msra.mxu0 0
        %1495 = vmatprep.subr.bf16.mxu0 0
        %1496 = vmatpush1.bf16.msra.mxu0 0
        %1497 = vmatprep.subr.bf16.mxu0 0
        %1498 = vmatpush1.bf16.msra.mxu0 0
        %1499 = vmatprep.subr.bf16.mxu0 0
        %1500 = vmatpush1.bf16.msra.mxu0 0
        %1501 = vmatprep.subr.bf16.mxu0 0
        %1502 = vmatpush1.bf16.msra.mxu0 0
        %1503 = vmatprep.subr.bf16.mxu0 0
        %1504 = vmatpush1.bf16.msra.mxu0 0
        %1505 = vmatprep.subr.bf16.mxu0 0
        %1506 = vmatpush1.bf16.msra.mxu0 0
        %1507 = vmatprep.subr.bf16.mxu0 0
        %1508 = vmatpush1.bf16.msra.mxu0 0
        %1509 = vmatprep.subr.bf16.mxu0 0
        %1510 = vmatpush1.bf16.msra.mxu0 0
        %1511 = vmatprep.subr.bf16.mxu0 0
        %1512 = vmatpush1.bf16.msra.mxu0 0
        %1513 = vmatprep.mubr.bf16.mxu0 0
        %1514 = vmatmul.mubr.bf16.gmra.mrb[0].mxu0 %v1105
        %v1515 = vpop.f32.mrb[0].mxu0
        %v1516 = vadd.f32 %v1443, %v1515
        %v1517 = vpop.f32.mrb[0].mxu0
        %v1518 = vadd.f32 %v1445, %v1517
        %v1519 = vpop.f32.mrb[0].mxu0
        %v1520 = vadd.f32 %v1447, %v1519
        %v1521 = vpop.f32.mrb[0].mxu0
        %v1522 = vadd.f32 %v1449, %v1521
        %1523 = vmatprep.mubr.bf16.mxu0 0
        %1524 = vmatmul.mubr.bf16.gmra.mrb[0].mxu0 %v1108
        %v1525 = vpop.f32.mrb[0].mxu0
        %v1526 = vadd.f32 %v1453, %v1525
        %v1527 = vpop.f32.mrb[0].mxu0
        %v1528 = vadd.f32 %v1455, %v1527
        %v1529 = vpop.f32.mrb[0].mxu0
        %v1530 = vadd.f32 %v1457, %v1529
        %v1531 = vpop.f32.mrb[0].mxu0
        %v1532 = vadd.f32 %v1459, %v1531
        %1533 = vmatprep.mubr.bf16.mxu0 0
        %1534 = vmatmul.mubr.bf16.gmra.mrb[0].mxu0 %v1111
        %v1535 = vpop.f32.mrb[0].mxu0
        %v1536 = vadd.f32 %v1463, %v1535
        %v1537 = vpop.f32.mrb[0].mxu0
        %v1538 = vadd.f32 %v1465, %v1537
        %v1539 = vpop.f32.mrb[0].mxu0
        %v1540 = vadd.f32 %v1467, %v1539
        %v1541 = vpop.f32.mrb[0].mxu0
        %v1542 = vadd.f32 %v1469, %v1541
        %1543 = vmatprep.mubr.bf16.mxu0 0
        %1544 = vmatmul.mubr.bf16.gmra.mrb[0].mxu0 %v1114
        %v1545 = vpop.f32.mrb[0].mxu0
        %v1546 = vadd.f32 %v1473, %v1545
        %v1547 = vpop.f32.mrb[0].mxu0
        %v1548 = vadd.f32 %v1475, %v1547
        %v1549 = vpop.f32.mrb[0].mxu0
        %v1550 = vadd.f32 %v1477, %v1549
        %v1551 = vpop.f32.mrb[0].mxu0
        %v1552 = vadd.f32 %v1479, %v1551
        %1553 = vdwg.mxu0
        %1554 = vmatprep.subr.bf16.mxu0 0
        %1555 = vmatpush1.bf16.msra.mxu0 %v857
        %1556 = vmatprep.subr.bf16.mxu0 0
        %1557 = vmatpush1.bf16.msra.mxu0 %v864
        %1558 = vmatprep.subr.bf16.mxu0 0
        %1559 = vmatpush1.bf16.msra.mxu0 %v871
        %1560 = vmatprep.subr.bf16.mxu0 0
        %1561 = vmatpush1.bf16.msra.mxu0 %v878
        %1562 = vmatprep.subr.bf16.mxu0 0
        %1563 = vmatpush1.bf16.msra.mxu0 %v885
        %1564 = vmatprep.subr.bf16.mxu0 0
        %1565 = vmatpush1.bf16.msra.mxu0 %v892
        %1566 = vmatprep.subr.bf16.mxu0 0
        %1567 = vmatpush1.bf16.msra.mxu0 %v899
        %1568 = vmatprep.subr.bf16.mxu0 0
        %1569 = vmatpush1.bf16.msra.mxu0 %v906
        %1570 = vmatprep.subr.bf16.mxu0 0
        %1571 = vmatpush1.bf16.msra.mxu0 %v913
        %1572 = vmatprep.subr.bf16.mxu0 0
        %1573 = vmatpush1.bf16.msra.mxu0 %v920
        %1574 = vmatprep.subr.bf16.mxu0 0
        %1575 = vmatpush1.bf16.msra.mxu0 %v927
        %1576 = vmatprep.subr.bf16.mxu0 0
        %1577 = vmatpush1.bf16.msra.mxu0 %v934
        %1578 = vmatprep.subr.bf16.mxu0 0
        %1579 = vmatpush1.bf16.msra.mxu0 %v941
        %1580 = vmatprep.subr.bf16.mxu0 0
        %1581 = vmatpush1.bf16.msra.mxu0 %v948
        %1582 = vmatprep.subr.bf16.mxu0 0
        %1583 = vmatpush1.bf16.msra.mxu0 %v955
        %1584 = vmatprep.subr.bf16.mxu0 0
        %1585 = vmatpush1.bf16.msra.mxu0 %v962
        %1586 = vmatprep.mubr.bf16.mxu0 %v436
        %1587 = vmatmul.mubr.bf16.gmra.mrb[0].mxu0 %v435
        %v1588 = vpop.f32.mrb[0].mxu0
        %v1589 = vadd.f32 %v358, %v1588
        %v1590 = vpop.f32.mrb[0].mxu0
        %v1591 = vpop.f32.mrb[0].mxu0
        %v1592 = vadd.f32 %v363, %v1591
        %v1593 = vpop.f32.mrb[0].mxu0
        %1594 = vmatprep.mubr.bf16.mxu0 %v439
        %1595 = vmatmul.mubr.bf16.gmra.mrb[0].mxu0 %v438
        %v1596 = vpop.f32.mrb[0].mxu0
        %v1597 = vadd.f32 %v368, %v1596
        %v1598 = vpop.f32.mrb[0].mxu0
        %v1599 = vpop.f32.mrb[0].mxu0
        %v1600 = vadd.f32 %v373, %v1599
        %v1601 = vpop.f32.mrb[0].mxu0
        %1602 = vmatprep.mubr.bf16.mxu0 %v442
        %1603 = vmatmul.mubr.bf16.gmra.mrb[0].mxu0 %v441
        %v1604 = vpop.f32.mrb[0].mxu0
        %v1605 = vadd.f32 %v378, %v1604
        %v1606 = vpop.f32.mrb[0].mxu0
        %v1607 = vpop.f32.mrb[0].mxu0
        %v1608 = vadd.f32 %v383, %v1607
        %v1609 = vpop.f32.mrb[0].mxu0
        %1610 = vmatprep.mubr.bf16.mxu0 %v445
        %1611 = vmatmul.mubr.bf16.gmra.mrb[0].mxu0 %v444
        %v1612 = vpop.f32.mrb[0].mxu0
        %v1613 = vadd.f32 %v388, %v1612
        %v1614 = vpop.f32.mrb[0].mxu0
        %v1615 = vpop.f32.mrb[0].mxu0
        %v1616 = vadd.f32 %v393, %v1615
        %v1617 = vpop.f32.mrb[0].mxu0
        %1618 = vdwg.mxu0
        %1619 = vmatprep.subr.bf16.mxu0 0
        %1620 = vmatpush1.bf16.msra.mxu0 %v969
        %1621 = vmatprep.subr.bf16.mxu0 0
        %1622 = vmatpush1.bf16.msra.mxu0 %v976
        %1623 = vmatprep.subr.bf16.mxu0 0
        %1624 = vmatpush1.bf16.msra.mxu0 0
        %1625 = vmatprep.subr.bf16.mxu0 0
        %1626 = vmatpush1.bf16.msra.mxu0 0
        %1627 = vmatprep.subr.bf16.mxu0 0
        %1628 = vmatpush1.bf16.msra.mxu0 0
        %1629 = vmatprep.subr.bf16.mxu0 0
        %1630 = vmatpush1.bf16.msra.mxu0 0
        %1631 = vmatprep.subr.bf16.mxu0 0
        %1632 = vmatpush1.bf16.msra.mxu0 0
        %1633 = vmatprep.subr.bf16.mxu0 0
        %1634 = vmatpush1.bf16.msra.mxu0 0
        %1635 = vmatprep.subr.bf16.mxu0 0
        %1636 = vmatpush1.bf16.msra.mxu0 0
        %1637 = vmatprep.subr.bf16.mxu0 0
        %1638 = vmatpush1.bf16.msra.mxu0 0
        %1639 = vmatprep.subr.bf16.mxu0 0
        %1640 = vmatpush1.bf16.msra.mxu0 0
        %1641 = vmatprep.subr.bf16.mxu0 0
        %1642 = vmatpush1.bf16.msra.mxu0 0
        %1643 = vmatprep.subr.bf16.mxu0 0
        %1644 = vmatpush1.bf16.msra.mxu0 0
        %1645 = vmatprep.subr.bf16.mxu0 0
        %1646 = vmatpush1.bf16.msra.mxu0 0
        %1647 = vmatprep.subr.bf16.mxu0 0
        %1648 = vmatpush1.bf16.msra.mxu0 0
        %1649 = vmatprep.subr.bf16.mxu0 0
        %1650 = vmatpush1.bf16.msra.mxu0 0
        %1651 = vmatprep.mubr.bf16.mxu0 0
        %1652 = vmatmul.mubr.bf16.gmra.mrb[0].mxu0 %v1105
        %v1653 = vpop.f32.mrb[0].mxu0
        %v1654 = vadd.f32 %v1589, %v1653
        %v1655 = vpop.f32.mrb[0].mxu0
        %v1656 = vpop.f32.mrb[0].mxu0
        %v1657 = vadd.f32 %v1592, %v1656
        %v1658 = vpop.f32.mrb[0].mxu0
        %1659 = vmatprep.mubr.bf16.mxu0 0
        %1660 = vmatmul.mubr.bf16.gmra.mrb[0].mxu0 %v1108
        %v1661 = vpop.f32.mrb[0].mxu0
        %v1662 = vadd.f32 %v1597, %v1661
        %v1663 = vpop.f32.mrb[0].mxu0
        %v1664 = vpop.f32.mrb[0].mxu0
        %v1665 = vadd.f32 %v1600, %v1664
        %v1666 = vpop.f32.mrb[0].mxu0
        %1667 = vmatprep.mubr.bf16.mxu0 0
        %1668 = vmatmul.mubr.bf16.gmra.mrb[0].mxu0 %v1111
        %v1669 = vpop.f32.mrb[0].mxu0
        %v1670 = vadd.f32 %v1605, %v1669
        %v1671 = vpop.f32.mrb[0].mxu0
        %v1672 = vpop.f32.mrb[0].mxu0
        %v1673 = vadd.f32 %v1608, %v1672
        %v1674 = vpop.f32.mrb[0].mxu0
        %1675 = vmatprep.mubr.bf16.mxu0 0
        %1676 = vmatmul.mubr.bf16.gmra.mrb[0].mxu0 %v1114
        %v1677 = vpop.f32.mrb[0].mxu0
        %v1678 = vadd.f32 %v1613, %v1677
        %v1679 = vpop.f32.mrb[0].mxu0
        %v1680 = vpop.f32.mrb[0].mxu0
        %v1681 = vadd.f32 %v1616, %v1680
        %v1682 = vpop.f32.mrb[0].mxu0
        %1683 = vdwg.mxu0
        %v1684 = vmax.f32 %v1224, 0.0
        %v1685 = vmax.f32 %v1226, 0.0
        %v1686 = vmax.f32 %v1370, 0.0
        %v1687 = vmax.f32 %v1372, 0.0
        %v1688 = vmax.f32 %v1516, 0.0
        %v1689 = vmax.f32 %v1518, 0.0
        %v1690 = vmax.f32 %v1654, 0.0
        %v1691 = vmax.f32 %v1228, 0.0
        %v1692 = vmax.f32 %v1230, 0.0
        %v1693 = vmax.f32 %v1374, 0.0
        %v1694 = vmax.f32 %v1376, 0.0
        %v1695 = vmax.f32 %v1520, 0.0
        %v1696 = vmax.f32 %v1522, 0.0
        %v1697 = vmax.f32 %v1657, 0.0
        %v1698 = vmax.f32 %v1234, 0.0
        %v1699 = vmax.f32 %v1236, 0.0
        %v1700 = vmax.f32 %v1380, 0.0
        %v1701 = vmax.f32 %v1382, 0.0
        %v1702 = vmax.f32 %v1526, 0.0
        %v1703 = vmax.f32 %v1528, 0.0
        %v1704 = vmax.f32 %v1662, 0.0
        %v1705 = vmax.f32 %v1238, 0.0
        %v1706 = vmax.f32 %v1240, 0.0
        %v1707 = vmax.f32 %v1384, 0.0
        %v1708 = vmax.f32 %v1386, 0.0
        %v1709 = vmax.f32 %v1530, 0.0
        %v1710 = vmax.f32 %v1532, 0.0
        %v1711 = vmax.f32 %v1665, 0.0
        %v1712 = vmax.f32 %v1244, 0.0
        %v1713 = vmax.f32 %v1246, 0.0
        %v1714 = vmax.f32 %v1390, 0.0
        %v1715 = vmax.f32 %v1392, 0.0
        %v1716 = vmax.f32 %v1536, 0.0
        %v1717 = vmax.f32 %v1538, 0.0
        %v1718 = vmax.f32 %v1670, 0.0
        %v1719 = vmax.f32 %v1248, 0.0
        %v1720 = vmax.f32 %v1250, 0.0
        %v1721 = vmax.f32 %v1394, 0.0
        %v1722 = vmax.f32 %v1396, 0.0
        %v1723 = vmax.f32 %v1540, 0.0
        %v1724 = vmax.f32 %v1542, 0.0
        %v1725 = vmax.f32 %v1673, 0.0
        %v1726 = vmax.f32 %v1254, 0.0
        %v1727 = vmax.f32 %v1256, 0.0
        %v1728 = vmax.f32 %v1400, 0.0
        %v1729 = vmax.f32 %v1402, 0.0
        %v1730 = vmax.f32 %v1546, 0.0
        %v1731 = vmax.f32 %v1548, 0.0
        %v1732 = vmax.f32 %v1678, 0.0
        %v1733 = vmax.f32 %v1258, 0.0
        %v1734 = vmax.f32 %v1260, 0.0
        %v1735 = vmax.f32 %v1404, 0.0
        %v1736 = vmax.f32 %v1406, 0.0
        %v1737 = vmax.f32 %v1550, 0.0
        %v1738 = vmax.f32 %v1552, 0.0
        %v1739 = vmax.f32 %v1681, 0.0
        %v1740 = vpack.c.bf16 %v1691, %v1684
        %v1741 = vpack.c.bf16 %v1692, %v1685
        %v1742 = vpack.c.bf16 %v1693, %v1686
        %v1743 = vpack.c.bf16 %v1694, %v1687
        %v1744 = vpack.c.bf16 %v1695, %v1688
        %v1745 = vpack.c.bf16 %v1696, %v1689
        %v1746 = vpack.c.bf16 %v1697, %v1690
        %v1747 = vpack.c.bf16 %v1705, %v1698
        %v1748 = vpack.c.bf16 %v1706, %v1699
        %v1749 = vpack.c.bf16 %v1707, %v1700
        %v1750 = vpack.c.bf16 %v1708, %v1701
        %v1751 = vpack.c.bf16 %v1709, %v1702
        %v1752 = vpack.c.bf16 %v1710, %v1703
        %v1753 = vpack.c.bf16 %v1711, %v1704
        %v1754 = vpack.c.bf16 %v1719, %v1712
        %v1755 = vpack.c.bf16 %v1720, %v1713
        %v1756 = vpack.c.bf16 %v1721, %v1714
        %v1757 = vpack.c.bf16 %v1722, %v1715
        %v1758 = vpack.c.bf16 %v1723, %v1716
        %v1759 = vpack.c.bf16 %v1724, %v1717
        %v1760 = vpack.c.bf16 %v1725, %v1718
        %v1761 = vpack.c.bf16 %v1733, %v1726
        %v1762 = vpack.c.bf16 %v1734, %v1727
        %v1763 = vpack.c.bf16 %v1735, %v1728
        %v1764 = vpack.c.bf16 %v1736, %v1729
        %v1765 = vpack.c.bf16 %v1737, %v1730
        %v1766 = vpack.c.bf16 %v1738, %v1731
        %v1767 = vpack.c.bf16 %v1739, %v1732
        %v1796 = vunpack.c.l.b16 %v1740
        %v1797 = vunpack.c.l.b16 %v1741
        %v1798 = vunpack.c.l.b16 %v1742
        %v1799 = vunpack.c.l.b16 %v1743
        %v1800 = vunpack.c.l.b16 %v1744
        %v1801 = vunpack.c.l.b16 %v1745
        %v1802 = vunpack.c.l.b16 %v1746
        %v1803 = vunpack.c.h.b16 %v1740
        %v1804 = vunpack.c.h.b16 %v1741
        %v1805 = vunpack.c.h.b16 %v1742
        %v1806 = vunpack.c.h.b16 %v1743
        %v1807 = vunpack.c.h.b16 %v1744
        %v1808 = vunpack.c.h.b16 %v1745
        %v1809 = vunpack.c.h.b16 %v1746
        %v1810 = vunpack.c.l.b16 %v1747
        %v1811 = vunpack.c.l.b16 %v1748
        %v1812 = vunpack.c.l.b16 %v1749
        %v1813 = vunpack.c.l.b16 %v1750
        %v1814 = vunpack.c.l.b16 %v1751
        %v1815 = vunpack.c.l.b16 %v1752
        %v1816 = vunpack.c.l.b16 %v1753
        %v1817 = vunpack.c.h.b16 %v1747
        %v1818 = vunpack.c.h.b16 %v1748
        %v1819 = vunpack.c.h.b16 %v1749
        %v1820 = vunpack.c.h.b16 %v1750
        %v1821 = vunpack.c.h.b16 %v1751
        %v1822 = vunpack.c.h.b16 %v1752
        %v1823 = vunpack.c.h.b16 %v1753
        %v1824 = vunpack.c.l.b16 %v1754
        %v1825 = vunpack.c.l.b16 %v1755
        %v1826 = vunpack.c.l.b16 %v1756
        %v1827 = vunpack.c.l.b16 %v1757
        %v1828 = vunpack.c.l.b16 %v1758
        %v1829 = vunpack.c.l.b16 %v1759
        %v1830 = vunpack.c.l.b16 %v1760
        %v1831 = vunpack.c.h.b16 %v1754
        %v1832 = vunpack.c.h.b16 %v1755
        %v1833 = vunpack.c.h.b16 %v1756
        %v1834 = vunpack.c.h.b16 %v1757
        %v1835 = vunpack.c.h.b16 %v1758
        %v1836 = vunpack.c.h.b16 %v1759
        %v1837 = vunpack.c.h.b16 %v1760
        %v1838 = vunpack.c.l.b16 %v1761
        %v1839 = vunpack.c.l.b16 %v1762
        %v1840 = vunpack.c.l.b16 %v1763
        %v1841 = vunpack.c.l.b16 %v1764
        %v1842 = vunpack.c.l.b16 %v1765
        %v1843 = vunpack.c.l.b16 %v1766
        %v1844 = vunpack.c.l.b16 %v1767
        %v1845 = vunpack.c.h.b16 %v1761
        %v1846 = vunpack.c.h.b16 %v1762
        %v1847 = vunpack.c.h.b16 %v1763
        %v1848 = vunpack.c.h.b16 %v1764
        %v1849 = vunpack.c.h.b16 %v1765
        %v1850 = vunpack.c.h.b16 %v1766
        %v1851 = vunpack.c.h.b16 %v1767
        %v1852 = vpack.c.b16 %v1797, %v1796
        %v1853 = vpack.c.b16 %v1799, %v1798
        %v1854 = vpack.c.b16 %v1801, %v1800
        %v1855 = vpack.c.b16 %v1802, %v1802
        %v1856 = vpack.c.b16 %v1804, %v1803
        %v1857 = vpack.c.b16 %v1806, %v1805
        %v1858 = vpack.c.b16 %v1808, %v1807
        %v1859 = vpack.c.b16 %v1809, %v1809
        %v1860 = vpack.c.b16 %v1811, %v1810
        %v1861 = vpack.c.b16 %v1813, %v1812
        %v1862 = vpack.c.b16 %v1815, %v1814
        %v1863 = vpack.c.b16 %v1816, %v1816
        %v1864 = vpack.c.b16 %v1818, %v1817
        %v1865 = vpack.c.b16 %v1820, %v1819
        %v1866 = vpack.c.b16 %v1822, %v1821
        %v1867 = vpack.c.b16 %v1823, %v1823
        %v1868 = vpack.c.b16 %v1825, %v1824
        %v1869 = vpack.c.b16 %v1827, %v1826
        %v1870 = vpack.c.b16 %v1829, %v1828
        %v1871 = vpack.c.b16 %v1830, %v1830
        %v1872 = vpack.c.b16 %v1832, %v1831
        %v1873 = vpack.c.b16 %v1834, %v1833
        %v1874 = vpack.c.b16 %v1836, %v1835
        %v1875 = vpack.c.b16 %v1837, %v1837
        %v1876 = vpack.c.b16 %v1839, %v1838
        %v1877 = vpack.c.b16 %v1841, %v1840
        %v1878 = vpack.c.b16 %v1843, %v1842
        %v1879 = vpack.c.b16 %v1844, %v1844
        %v1880 = vpack.c.b16 %v1846, %v1845
        %v1881 = vpack.c.b16 %v1848, %v1847
        %v1882 = vpack.c.b16 %v1850, %v1849
        %v1883 = vpack.c.b16 %v1851, %v1851
        %1916 = vst [vmem:[%s185] sm:$0xff] %v1852
        %1917 = vst [vmem:[%s185 + $0x8] sm:$0xff] %v1853
        %1918 = vst [vmem:[%s185 + $0x10] sm:$0xff] %v1854
        %vm1919 = vcmask 125952
        %1920 = vst.msk [vmem:[%s185 + $0x18] sm:$0xf] %vm1919, %v1855
        %1921 = vst [vmem:[%s185 + $0x1c] sm:$0xff] %v1856
        %1922 = vst [vmem:[%s185 + $0x24] sm:$0xff] %v1857
        %1923 = vst [vmem:[%s185 + $0x2c] sm:$0xff] %v1858
        %1924 = vst.msk [vmem:[%s185 + $0x34] sm:$0xf] %vm1919, %v1859
        %1925 = vst [vmem:[%s185 + $0x38] sm:$0xff] %v1860
        %1926 = vst [vmem:[%s185 + $0x40] sm:$0xff] %v1861
        %1927 = vst [vmem:[%s185 + $0x48] sm:$0xff] %v1862
        %1928 = vst.msk [vmem:[%s185 + $0x50] sm:$0xf] %vm1919, %v1863
        %1929 = vst [vmem:[%s185 + $0x54] sm:$0xff] %v1864
        %1930 = vst [vmem:[%s185 + $0x5c] sm:$0xff] %v1865
        %1931 = vst [vmem:[%s185 + $0x64] sm:$0xff] %v1866
        %1932 = vst.msk [vmem:[%s185 + $0x6c] sm:$0xf] %vm1919, %v1867
        %1933 = vst [vmem:[%s185 + $0x70] sm:$0xff] %v1868
        %1934 = vst [vmem:[%s185 + $0x78] sm:$0xff] %v1869
        %1935 = vst [vmem:[%s185 + $0x80] sm:$0xff] %v1870
        %1936 = vst.msk [vmem:[%s185 + $0x88] sm:$0xf] %vm1919, %v1871
        %1937 = vst [vmem:[%s185 + $0x8c] sm:$0xff] %v1872
        %1938 = vst [vmem:[%s185 + $0x94] sm:$0xff] %v1873
        %1939 = vst [vmem:[%s185 + $0x9c] sm:$0xff] %v1874
        %1940 = vst.msk [vmem:[%s185 + $0xa4] sm:$0xf] %vm1919, %v1875
        %1941 = vst [vmem:[%s185 + $0xa8] sm:$0xff] %v1876
        %1942 = vst [vmem:[%s185 + $0xb0] sm:$0xff] %v1877
        %1943 = vst [vmem:[%s185 + $0xb8] sm:$0xff] %v1878
        %1944 = vst.msk [vmem:[%s185 + $0xc0] sm:$0xf] %vm1919, %v1879
        %1945 = vst [vmem:[%s185 + $0xc4] sm:$0xff] %v1880
        %1946 = vst [vmem:[%s185 + $0xcc] sm:$0xff] %v1881
        %1947 = vst [vmem:[%s185 + $0xd4] sm:$0xff] %v1882
        %1948 = vst.msk [vmem:[%s185 + $0xdc] sm:$0xf] %vm1919, %v1883
        %p1949 = scmp.lt.s32.totalorder %s15, 1
        %s1950 = scalar_select %p1949, %s15, 1
        %s1951 = smul.addr %s1950, 56
        %s1952 = smul.addr %s1951, 4
        %s1953 = scalar_lea.vmem %s3, %s1952
        // Predicated region
        $region37: #{cnn_forward.5} parent=31 // pred_check
          %p1954 = pneg %p101
        $region38: #{cnn_forward.5} parent=31 // pred_check_branch
          %1956 = sbr.rel (%p1954) target = $region40
        $region39: #{cnn_forward.5} parent=31 // pred_region
          _
        $region40: #{cnn_forward.5} parent=31 // pred_fallthru
          _
      $region32: #{cnn_forward.5} parent=5 // pred_fallthru
        _
      %p1957 = scmp.le.s32.totalorder 2, %s10
      // Predicated region
      $region41: #{cnn_forward.5} parent=5 // pred_check
        %p1958 = pneg %p1957
      $region42: #{cnn_forward.5} parent=5 // pred_check_branch
        %1960 = sbr.rel (%p1958) target = $region44
      $region43: #{cnn_forward.5} parent=5 // pred_region
        %s1961 = ssub.s32 %s10, 2
        // Predicated region
        $region45: #{cnn_forward.5} parent=43 // pred_check
          %p1962 = pneg %p107
        $region46: #{cnn_forward.5} parent=43 // pred_check_branch
          %1964 = sbr.rel (%p1962) target = $region48
        $region47: #{cnn_forward.5} parent=43 // pred_region
          %p1965 = scmp.lt.s32.totalorder %s16, 1
          %s1966 = scalar_select %p1965, %s16, 1
          %s1967 = smul.addr %s1966, 56
          %s1968 = smul.addr %s1967, 4
          %s1969 = scalar_lea.vmem %s3, %s1968
        $region48: #{cnn_forward.5} parent=43 // pred_fallthru
          _
      $region44: #{cnn_forward.5} parent=5 // pred_fallthru
        _
    $region6: #{cnn_forward.5} parent=1 // loop_footer
      %s14 = sadd.s32 1, %s10
    $region7: #{cnn_forward.5} parent=1 // loop_footer_branch
      %9 = sbr.rel target = $region3
    $region8: #{cnn_forward.5} parent=1 // loop_exit
      _
    %1970 = vsyncpa [#allocation3], 1
    %s1971 = scalar_lea.sflag [#allocation3], 1
    %1972 = vsyncpa %s1971, 1

// kernel: cnn_forward.7
$region0: #{cnn_forward.7}
  #allocation0 [shape = 'u32[]', space=smem, size = 0x4, offset = 0x4, fixed_abs, tag = 'smem constant byte address 0x4 - core index']
  #allocation1 [shape = 'u32[144,128]{1,0:T(1,128)}', space=vmem, size = 0x12000, scoped, tag = 'internal scratch']
  %s0 = inlined_call_operand.vmem [shape: f32[2,256], index: 0, kind: input, shape index: {}]
  %s1 = inlined_call_operand.vmem [shape: f32[256,128], index: 1, kind: input, shape index: {}]
  %s2 = inlined_call_operand.vmem [shape: f32[1,128], index: 2, kind: input, shape index: {}]
  %s3 = inlined_call_operand.hbm [shape: f32[2,128], index: 3, kind: output, shape index: {}]
  %s4 = sld [smem:[#allocation0]]
  $region26: #{cnn_forward.7} parent=0
    _
  %s6 = ssub.s32 1, %s4
  %s7 = scalar_select 0, %s6, %s4
  $region1: #{cnn_forward.7} parent=0
    #allocation2 [shape = 'u8[1024]{0}', space=vmem, size = 0x400, scoped, tag = 'output window, operand 0, single buffered']
    #allocation3 [shape = 's32[1]{0}', space=sflag, size = 0x4, scoped, tag = 'scoped memory for cnn_forward.7']
    %8 = vsyncpa [#allocation3], 0
    // Predicated region
    $region2: #{cnn_forward.7} parent=1 // pred_check
      _
    $region3: #{cnn_forward.7} parent=1 // pred_check_branch
      %10 = sbr.rel (0) target = $region5
    $region4: #{cnn_forward.7} parent=1 // pred_region
      _
    $region5: #{cnn_forward.7} parent=1 // pred_fallthru
      _
    // Predicated region
    $region6: #{cnn_forward.7} parent=1 // pred_check
      _
    $region7: #{cnn_forward.7} parent=1 // pred_check_branch
      %12 = sbr.rel (0) target = $region9
    $region8: #{cnn_forward.7} parent=1 // pred_region
      _
    $region9: #{cnn_forward.7} parent=1 // pred_fallthru
      _
    // Predicated region
    $region10: #{cnn_forward.7} parent=1 // pred_check
      _
    $region11: #{cnn_forward.7} parent=1 // pred_check_branch
      %14 = sbr.rel (0) target = $region13
    $region12: #{cnn_forward.7} parent=1 // pred_region
      _
    $region13: #{cnn_forward.7} parent=1 // pred_fallthru
      _
    %p15 = scmp.eq.s32.totalorder 0, 0
    // Predicated region
    $region14: #{cnn_forward.7} parent=1 // pred_check
      %p16 = pneg %p15
    $region15: #{cnn_forward.7} parent=1 // pred_check_branch
      %18 = sbr.rel (%p16) target = $region17
    $region16: #{cnn_forward.7} parent=1 // pred_region
      %v19 = vld [vmem:[%s2] sm:$0x1]
      %v21 = vlaneseq
      %v22 = vshrl.u32 %v21, 7
      %v23 = vsub.s32 0, %v22
      %v24 = vrot.slane %v19, %v23
      %26 = vst [vmem:[#allocation2] sm:$0x3] %v24
    $region17: #{cnn_forward.7} parent=1 // pred_fallthru
      _
    %v27 = vld [vmem:[%s0] sm:$0xf]
    %v28 = vld [vmem:[%s1] sm:$0xff]
    %v29 = vld [vmem:[%s1 + $0x8] sm:$0xff]
    %v30 = vld [vmem:[%s1 + $0x10] sm:$0xff]
    %v31 = vld [vmem:[%s1 + $0x18] sm:$0xff]
    %v32 = vld [vmem:[%s1 + $0x20] sm:$0xff]
    %v33 = vld [vmem:[%s1 + $0x28] sm:$0xff]
    %v34 = vld [vmem:[%s1 + $0x30] sm:$0xff]
    %v35 = vld [vmem:[%s1 + $0x38] sm:$0xff]
    %v36 = vld [vmem:[%s1 + $0x40] sm:$0xff]
    %v37 = vld [vmem:[%s1 + $0x48] sm:$0xff]
    %v38 = vld [vmem:[%s1 + $0x50] sm:$0xff]
    %v39 = vld [vmem:[%s1 + $0x58] sm:$0xff]
    %v40 = vld [vmem:[%s1 + $0x60] sm:$0xff]
    %v41 = vld [vmem:[%s1 + $0x68] sm:$0xff]
    %v42 = vld [vmem:[%s1 + $0x70] sm:$0xff]
    %v43 = vld [vmem:[%s1 + $0x78] sm:$0xff]
    %v44 = vld [vmem:[%s1 + $0x80] sm:$0xff]
    %v45 = vld [vmem:[%s1 + $0x88] sm:$0xff]
    %v46 = vld [vmem:[%s1 + $0x90] sm:$0xff]
    %v47 = vld [vmem:[%s1 + $0x98] sm:$0xff]
    %v48 = vld [vmem:[%s1 + $0xa0] sm:$0xff]
    %v49 = vld [vmem:[%s1 + $0xa8] sm:$0xff]
    %v50 = vld [vmem:[%s1 + $0xb0] sm:$0xff]
    %v51 = vld [vmem:[%s1 + $0xb8] sm:$0xff]
    %v52 = vld [vmem:[%s1 + $0xc0] sm:$0xff]
    %v53 = vld [vmem:[%s1 + $0xc8] sm:$0xff]
    %v54 = vld [vmem:[%s1 + $0xd0] sm:$0xff]
    %v55 = vld [vmem:[%s1 + $0xd8] sm:$0xff]
    %v56 = vld [vmem:[%s1 + $0xe0] sm:$0xff]
    %v57 = vld [vmem:[%s1 + $0xe8] sm:$0xff]
    %v58 = vld [vmem:[%s1 + $0xf0] sm:$0xff]
    %v59 = vld [vmem:[%s1 + $0xf8] sm:$0xff]
    %v60 = vld [vmem:[#allocation2] sm:$0x3]
    %v63 = vunpack.c.l.s4 1983009808
    %v64 = vunpack.c.0.s8 %v63
    %v65 = vlaneseq
    %v66 = vshrl.u32 %v65, 7
    %v67 = vsub.s32 %v64, %v66
    %v68 = vrot.slane %v27, %v67
    %v69 = vcombine.high %v68, %v68
    %72 = vmatprep.subr.mxu0 0.0
    %73 = vmatpush1.msra.mxu0 %v28
    %74 = vmatprep.subr.mxu0 0.0
    %75 = vmatpush1.msra.mxu0 %v29
    %76 = vmatprep.subr.mxu0 0.0
    %77 = vmatpush1.msra.mxu0 %v30
    %78 = vmatprep.subr.mxu0 0.0
    %79 = vmatpush1.msra.mxu0 %v31
    %80 = vmatprep.subr.mxu0 0.0
    %81 = vmatpush1.msra.mxu0 %v32
    %82 = vmatprep.subr.mxu0 0.0
    %83 = vmatpush1.msra.mxu0 %v33
    %84 = vmatprep.subr.mxu0 0.0
    %85 = vmatpush1.msra.mxu0 %v34
    %86 = vmatprep.subr.mxu0 0.0
    %87 = vmatpush1.msra.mxu0 %v35
    %88 = vmatprep.subr.mxu0 0.0
    %89 = vmatpush1.msra.mxu0 %v36
    %90 = vmatprep.subr.mxu0 0.0
    %91 = vmatpush1.msra.mxu0 %v37
    %92 = vmatprep.subr.mxu0 0.0
    %93 = vmatpush1.msra.mxu0 %v38
    %94 = vmatprep.subr.mxu0 0.0
    %95 = vmatpush1.msra.mxu0 %v39
    %96 = vmatprep.subr.mxu0 0.0
    %97 = vmatpush1.msra.mxu0 %v40
    %98 = vmatprep.subr.mxu0 0.0
    %99 = vmatpush1.msra.mxu0 %v41
    %100 = vmatprep.subr.mxu0 0.0
    %101 = vmatpush1.msra.mxu0 %v42
    %102 = vmatprep.subr.mxu0 0.0
    %103 = vmatpush1.msra.mxu0 %v43
    %104 = vmatprep.subr.mxu0 0.0
    %105 = vmatpush1.msra.mxu0 %v44
    %106 = vmatprep.subr.mxu0 0.0
    %107 = vmatpush1.msra.mxu0 %v45
    %108 = vmatprep.subr.mxu0 0.0
    %109 = vmatpush1.msra.mxu0 %v46
    %110 = vmatprep.subr.mxu0 0.0
    %111 = vmatpush1.msra.mxu0 %v47
    %112 = vmatprep.subr.mxu0 0.0
    %113 = vmatpush1.msra.mxu0 %v48
    %114 = vmatprep.subr.mxu0 0.0
    %115 = vmatpush1.msra.mxu0 %v49
    %116 = vmatprep.subr.mxu0 0.0
    %117 = vmatpush1.msra.mxu0 %v50
    %118 = vmatprep.subr.mxu0 0.0
    %119 = vmatpush1.msra.mxu0 %v51
    %120 = vmatprep.subr.mxu0 0.0
    %121 = vmatpush1.msra.mxu0 %v52
    %122 = vmatprep.subr.mxu0 0.0
    %123 = vmatpush1.msra.mxu0 %v53
    %124 = vmatprep.subr.mxu0 0.0
    %125 = vmatpush1.msra.mxu0 %v54
    %126 = vmatprep.subr.mxu0 0.0
    %127 = vmatpush1.msra.mxu0 %v55
    %128 = vmatprep.subr.mxu0 0.0
    %129 = vmatpush1.msra.mxu0 %v56
    %130 = vmatprep.subr.mxu0 0.0
    %131 = vmatpush1.msra.mxu0 %v57
    %132 = vmatprep.subr.mxu0 0.0
    %133 = vmatpush1.msra.mxu0 %v58
    %134 = vmatprep.subr.mxu0 0.0
    %135 = vmatpush1.msra.mxu0 %v59
    %136 = vmatprep.mubr.f32.mxu0 %v69
    %137 = vmatmul.mubr.f32.gmra.mrb[0].mxu0 %v68
    %v138 = vpop.f32.mrb[0].mxu0
    %v139 = vadd.f32 0.0, %v138
    %v140 = vpop.f32.mrb[0].mxu0
    %141 = vdwg.mxu0
    %v142 = vadd.f32 %v60, %v139
    %143 = vst [vmem:[#allocation2] sm:$0x3] %v142
    // Predicated region
    $region18: #{cnn_forward.7} parent=1 // pred_check
      _
    $region19: #{cnn_forward.7} parent=1 // pred_check_branch
      %145 = sbr.rel (0) target = $region21
    $region20: #{cnn_forward.7} parent=1 // pred_region
      %s147 = ssub.s32 32, 32
      %148 = vsyncadd [#allocation3], %s147
      %s150 = sshll.u32 [#allocation2], 4
      %s151 = int_to_ptr.vmem [resolvable:$true] %s150
      %153 = dma.vmem_to_hbm [thread:$0]  %s151, 32, %s3, [#allocation3]
    $region21: #{cnn_forward.7} parent=1 // pred_fallthru
      _
    // Predicated region
    $region22: #{cnn_forward.7} parent=1 // pred_check
      _
    $region23: #{cnn_forward.7} parent=1 // pred_check_branch
      %155 = sbr.rel (0) target = $region25
    $region24: #{cnn_forward.7} parent=1 // pred_region
      %156 = dma.done [#allocation3], 32
    $region25: #{cnn_forward.7} parent=1 // pred_fallthru
      _
    %157 = vsyncpa [#allocation3], 1

// kernel: cnn_forward.6
$region0: #{cnn_forward.6}
  #allocation0 [shape = 'u32[]', space=smem, size = 0x4, offset = 0x4, fixed_abs, tag = 'smem constant byte address 0x4 - core index']
  #allocation1 [shape = 'u32[144,128]{1,0:T(1,128)}', space=vmem, size = 0x12000, scoped, tag = 'internal scratch']
  %s0 = inlined_call_operand.vmem [shape: bf16[2,50176], index: 0, kind: input, shape index: {}]
  %s1 = inlined_call_operand.hbm [shape: bf16[50176,256], index: 1, kind: input, shape index: {}]
  %s2 = inlined_call_operand.hbm [shape: f32[1,256], index: 2, kind: input, shape index: {}]
  %s3 = inlined_call_operand.vmem [shape: f32[2,256], index: 3, kind: output, shape index: {}]
  %s4 = sld [smem:[#allocation0]]
  $region61: #{cnn_forward.6} parent=0
    _
  %s6 = ssub.s32 1, %s4
  %s7 = scalar_select 0, %s6, %s4
  $region1: #{cnn_forward.6} parent=0
    #allocation2 [shape = 'u8[6422528]{0}', space=vmem, size = 0x620000, scoped, tag = 'input window, operand 1']
    #allocation3 [shape = 's32[2]{0}', space=sflag, size = 0x8, scoped, tag = 'scoped memory for cnn_forward.6']
    #allocation4 [shape = 'u8[1024]{0}', space=vmem, size = 0x400, scoped, tag = 'input window, operand 2']
    #allocation5 [shape = 's32[2]{0}', space=sflag, size = 0x8, scoped, tag = 'scoped memory for cnn_forward.6']
    %8 = vsyncpa [#allocation3], 0
    %s9 = scalar_lea.sflag [#allocation3], 1
    %10 = vsyncpa %s9, 0
    %11 = vsyncpa [#allocation5], 0
    %s12 = scalar_lea.sflag [#allocation5], 1
    %13 = vsyncpa %s12, 0
    loop: start=0, step=1, limit=10
    $region2: #{cnn_forward.6} parent=1 // loop_pre_header
      _
    $region3: #{cnn_forward.6} parent=1 // loop_header
      %s15 = sphi 0, %s19
      %p16 = scmp.ge.s32.totalorder %s15, 10
      %s22 = sphi 0, %s34
      %s23 = sphi 0, %s30
      %s24 = sphi 0, %s22
      %s25 = sphi 0, %s23
      %s26 = sphi 0, %s24
      %s27 = sphi 0, %s25
      %s37 = sphi 0, %s39
      %s40 = sphi 0, %s37
      %s41 = sphi 0, %s40
      %s57 = sphi 0, %s41
      %s65 = sphi 0, %s67
      %s68 = sphi 0, %s65
      %s69 = sphi 0, %s68
      %s85 = sphi 0, %s69
      %s91 = sphi 0, %s93
      %s94 = sphi 0, %s91
      %s95 = sphi 0, %s94
      %s111 = sphi 0, %s95
      %s117 = sphi 0, %s119
      %s120 = sphi 0, %s117
      %s121 = sphi 0, %s120
      %s137 = sphi 0, %s121
    $region4: #{cnn_forward.6} parent=1 // loop_header_branch
      %18 = sbr.rel (%p16) target = $region8
    $region5: #{cnn_forward.6} parent=1 // loop_body
      %s20 = ssub.s32 %s15, 1
      %s21 = ssub.s32 %s15, 2
      %s28 = sadd.s32 1, %s23
      %p29 = scmp.ge.s32.totalorder %s28, 4
      %s30 = scalar_select %p29, 0, %s28
      %s31 = sadd.s32 1, %s22
      %s32 = scalar_select %p29, %s31, %s22
      %p33 = scmp.ge.s32.totalorder %s32, 2
      %s34 = scalar_select %p33, 0, %s32
      %s35 = ssub.s32 %s23, %s30
      %p36 = scmp.eq.s32.totalorder %s35, 0
      %s38 = sadd.s32 %s37, 1
      %s39 = scalar_select %p36, %s37, %s38
      %p42 = pneg %p36
      %p43 = scmp.eq.s32.totalorder %s15, 7
      %p44 = por %p42, %p43
      %p45 = scmp.ne.s32.totalorder %s37, %s40
      %p46 = scmp.eq.s32.totalorder %s15, 0
      %p47 = por %p45, %p46
      %p48 = scmp.ne.s32.totalorder %s37, %s40
      %p49 = scmp.eq.s32.totalorder %s20, 7
      %p50 = por %p48, %p49
      %p51 = scmp.ne.s32.totalorder %s40, %s41
      %p52 = scmp.eq.s32.totalorder %s20, 0
      %p53 = por %p51, %p52
      %p54 = scmp.ne.s32.totalorder %s40, %s41
      %p55 = scmp.eq.s32.totalorder %s21, 7
      %p56 = por %p54, %p55
      %p58 = scmp.ne.s32.totalorder %s41, %s57
      %p59 = scmp.eq.s32.totalorder %s21, 0
      %p60 = por %p58, %p59
      %s61 = ssub.s32 %s23, %s30
      %s62 = ssub.s32 %s22, %s34
      %s63 = sor.u32 %s61, %s62
      %p64 = scmp.eq.s32.totalorder %s63, 0
      %s66 = sadd.s32 %s65, 1
      %s67 = scalar_select %p64, %s65, %s66
      %p70 = pneg %p64
      %p71 = scmp.eq.s32.totalorder %s15, 7
      %p72 = por %p70, %p71
      %p73 = scmp.ne.s32.totalorder %s65, %s68
      %p74 = scmp.eq.s32.totalorder %s15, 0
      %p75 = por %p73, %p74
      %p76 = scmp.ne.s32.totalorder %s65, %s68
      %p77 = scmp.eq.s32.totalorder %s20, 7
      %p78 = por %p76, %p77
      %p79 = scmp.ne.s32.totalorder %s68, %s69
      %p80 = scmp.eq.s32.totalorder %s20, 0
      %p81 = por %p79, %p80
      %p82 = scmp.ne.s32.totalorder %s68, %s69
      %p83 = scmp.eq.s32.totalorder %s21, 7
      %p84 = por %p82, %p83
      %p86 = scmp.ne.s32.totalorder %s69, %s85
      %p87 = scmp.eq.s32.totalorder %s21, 0
      %p88 = por %p86, %p87
      %s89 = ssub.s32 %s22, %s34
      %p90 = scmp.eq.s32.totalorder %s89, 0
      %s92 = sadd.s32 %s91, 1
      %s93 = scalar_select %p90, %s91, %s92
      %p96 = pneg %p90
      %p97 = scmp.eq.s32.totalorder %s15, 7
      %p98 = por %p96, %p97
      %p99 = scmp.ne.s32.totalorder %s91, %s94
      %p100 = scmp.eq.s32.totalorder %s15, 0
      %p101 = por %p99, %p100
      %p102 = scmp.ne.s32.totalorder %s91, %s94
      %p103 = scmp.eq.s32.totalorder %s20, 7
      %p104 = por %p102, %p103
      %p105 = scmp.ne.s32.totalorder %s94, %s95
      %p106 = scmp.eq.s32.totalorder %s20, 0
      %p107 = por %p105, %p106
      %p108 = scmp.ne.s32.totalorder %s94, %s95
      %p109 = scmp.eq.s32.totalorder %s21, 7
      %p110 = por %p108, %p109
      %p112 = scmp.ne.s32.totalorder %s95, %s111
      %p113 = scmp.eq.s32.totalorder %s21, 0
      %p114 = por %p112, %p113
      %s115 = ssub.s32 %s22, %s34
      %p116 = scmp.eq.s32.totalorder %s115, 0
      %s118 = sadd.s32 %s117, 1
      %s119 = scalar_select %p116, %s117, %s118
      %p122 = pneg %p116
      %p123 = scmp.eq.s32.totalorder %s15, 7
      %p124 = por %p122, %p123
      %p125 = scmp.ne.s32.totalorder %s117, %s120
      %p126 = scmp.eq.s32.totalorder %s15, 0
      %p127 = por %p125, %p126
      %p128 = scmp.ne.s32.totalorder %s117, %s120
      %p129 = scmp.eq.s32.totalorder %s20, 7
      %p130 = por %p128, %p129
      %p131 = scmp.ne.s32.totalorder %s120, %s121
      %p132 = scmp.eq.s32.totalorder %s20, 0
      %p133 = por %p131, %p132
      %p134 = scmp.ne.s32.totalorder %s120, %s121
      %p135 = scmp.eq.s32.totalorder %s21, 7
      %p136 = por %p134, %p135
      %p138 = scmp.ne.s32.totalorder %s121, %s137
      %p139 = scmp.eq.s32.totalorder %s21, 0
      %p140 = por %p138, %p139
      %p141 = scmp.le.s32.totalorder 1, %s15
      %p142 = scmp.lt.s32.totalorder %s15, 9
      %p143 = pnand %p141, %p142
      %p144 = pneg %p143
      // Predicated region
      $region9: #{cnn_forward.6} parent=5 // pred_check
        _
      $region10: #{cnn_forward.6} parent=5 // pred_check_branch
        %146 = sbr.rel (%p143) target = $region12
      $region11: #{cnn_forward.6} parent=5 // pred_region
        %s147 = ssub.s32 %s15, 1
      $region12: #{cnn_forward.6} parent=5 // pred_fallthru
        _
      %p148 = scmp.lt.s32.totalorder %s15, 8
      // Predicated region
      $region13: #{cnn_forward.6} parent=5 // pred_check
        %p149 = pneg %p148
      $region14: #{cnn_forward.6} parent=5 // pred_check_branch
        %151 = sbr.rel (%p149) target = $region16
      $region15: #{cnn_forward.6} parent=5 // pred_region
        // Predicated region
        $region17: #{cnn_forward.6} parent=15 // pred_check
          %p152 = pneg %p47
        $region18: #{cnn_forward.6} parent=15 // pred_check_branch
          %154 = sbr.rel (%p152) target = $region20
        $region19: #{cnn_forward.6} parent=15 // pred_region
          %s155 = smul.u32 98, %s23
          %p156 = scmp.lt.s32.totalorder %s155, 391
          %s157 = scalar_select %p156, %s155, 391
          %s158 = scalar_lea.vmem %s0, %s157
          %s159 = smul.u32 98, %s23
        $region20: #{cnn_forward.6} parent=15 // pred_fallthru
          _
        // Predicated region
        $region21: #{cnn_forward.6} parent=15 // pred_check
          %p160 = pneg %p75
        $region22: #{cnn_forward.6} parent=15 // pred_check_branch
          %162 = sbr.rel (%p160) target = $region24
        $region23: #{cnn_forward.6} parent=15 // pred_region
          %s163 = sand.u32 %s65, 1
          %s164 = scalar_lea.sflag [#allocation3], %s163
          %s165 = sand.u32 %s65, 1
          %s166 = smul.addr %s165, 6272
          %s167 = scalar_lea.vmem [#allocation2], %s166
          %s168 = smul.u32 1568, %s23
          %s170 = ssub.s32 100352, 100352
          %171 = vsyncadd %s164, %s170
          %s172 = smul.addr %s168, 2
          %s173 = sadd.s32 %s22, %s172
          %s174 = smul.addr %s173, 64
          %s175 = scalar_lea.hbm %s1, %s174
          %s176 = sshll.u32 %s167, 4
          %s177 = int_to_ptr.vmem [resolvable:$true] %s176
          %182 = dma.hbm_to_vmem [thread:$0]  %s175, 100352, %s177, %s164, 128, 64, 4
        $region24: #{cnn_forward.6} parent=15 // pred_fallthru
          _
        // Predicated region
        $region25: #{cnn_forward.6} parent=15 // pred_check
          %p183 = pneg %p101
        $region26: #{cnn_forward.6} parent=15 // pred_check_branch
          %185 = sbr.rel (%p183) target = $region28
        $region27: #{cnn_forward.6} parent=15 // pred_region
          %s186 = sand.u32 %s91, 1
          %s187 = scalar_lea.sflag [#allocation5], %s186
          %s188 = sand.u32 %s91, 1
          %s189 = scalar_lea.vmem [#allocation4], %s188
          %s191 = ssub.s32 16, 16
          %192 = vsyncadd %s187, %s191
          %s193 = smul.addr %s22, 16
          %s194 = scalar_lea.hbm %s2, %s193
          %s196 = sshll.u32 %s189, 4
          %s197 = int_to_ptr.vmem [resolvable:$true] %s196
          %199 = dma.hbm_to_vmem [thread:$0]  %s194, 16, %s197, %s187
        $region28: #{cnn_forward.6} parent=15 // pred_fallthru
          _
      $region16: #{cnn_forward.6} parent=5 // pred_fallthru
        _
      %p200 = scmp.le.s32.totalorder 1, %s15
      %p201 = scmp.lt.s32.totalorder %s15, 9
      %p202 = pnand %p200, %p201
      %p203 = pneg %p202
      // Predicated region
      $region29: #{cnn_forward.6} parent=5 // pred_check
        _
      $region30: #{cnn_forward.6} parent=5 // pred_check_branch
        %205 = sbr.rel (%p202) target = $region32
      $region31: #{cnn_forward.6} parent=5 // pred_region
        %s206 = ssub.s32 %s15, 1
        %s207 = sand.u32 %s68, 1
        %s208 = scalar_lea.sflag [#allocation3], %s207
        %s209 = sand.u32 %s68, 1
        %s210 = smul.addr %s209, 6272
        %s211 = scalar_lea.vmem [#allocation2], %s210
        // Predicated region
        $region33: #{cnn_forward.6} parent=31 // pred_check
          %p212 = pneg %p81
        $region34: #{cnn_forward.6} parent=31 // pred_check_branch
          %214 = sbr.rel (%p212) target = $region36
        $region35: #{cnn_forward.6} parent=31 // pred_region
          %215 = dma.done %s208, 100352
        $region36: #{cnn_forward.6} parent=31 // pred_fallthru
          _
        %s216 = sand.u32 %s94, 1
        %s217 = scalar_lea.sflag [#allocation5], %s216
        %s218 = sand.u32 %s94, 1
        %s219 = scalar_lea.vmem [#allocation4], %s218
        // Predicated region
        $region37: #{cnn_forward.6} parent=31 // pred_check
          %p220 = pneg %p107
        $region38: #{cnn_forward.6} parent=31 // pred_check_branch
          %222 = sbr.rel (%p220) target = $region40
        $region39: #{cnn_forward.6} parent=31 // pred_region
          %223 = dma.done %s217, 16
        $region40: #{cnn_forward.6} parent=31 // pred_fallthru
          _
        %s224 = smul.u32 98, %s25
        %p225 = scmp.lt.s32.totalorder %s224, 391
        %s226 = scalar_select %p225, %s224, 391
        %s227 = scalar_lea.vmem %s0, %s226
        %p228 = pneg %p53
        %p229 = pneg %p50
        %s230 = sand.u32 %s68, 1
        %s231 = scalar_lea.sflag [#allocation3], %s230
        %s232 = sand.u32 %s68, 1
        %s233 = smul.addr %s232, 6272
        %s234 = scalar_lea.vmem [#allocation2], %s233
        %p235 = pneg %p81
        %p236 = pneg %p78
        %s237 = sand.u32 %s94, 1
        %s238 = scalar_lea.sflag [#allocation5], %s237
        %s239 = sand.u32 %s94, 1
        %s240 = scalar_lea.vmem [#allocation4], %s239
        %p241 = pneg %p107
        %p242 = pneg %p104
        %p243 = pneg %p133
        %p244 = pneg %p130
        %p245 = scmp.lt.s32.totalorder %s24, 1
        %s246 = scalar_select %p245, %s24, 1
        %s247 = smul.addr %s246, 2
        %s248 = scalar_lea.vmem %s3, %s247
        %s249 = smul.u32 98, %s25
        %p250 = scmp.lt.s32.totalorder %s249, 391
        %s251 = scalar_select %p250, %s249, 391
        %s252 = scalar_lea.vmem %s0, %s251
        %s253 = smul.u32 98, %s25
        %s254 = smul.u32 1568, %s25
        %p255 = scmp.lt.s32.totalorder %s24, 1
        %s256 = scalar_select %p255, %s24, 1
        %s257 = smul.addr %s256, 2
        %s258 = scalar_lea.vmem %s3, %s257
        %p260 = scmp.eq.s32.totalorder %s25, 0
        // Predicated region
        $region41: #{cnn_forward.6} parent=31 // pred_check
          %p261 = pneg %p260
        $region42: #{cnn_forward.6} parent=31 // pred_check_branch
          %263 = sbr.rel (%p261) target = $region44
        $region43: #{cnn_forward.6} parent=31 // pred_region
          %v264 = vld [vmem:[%s219] sm:$0x1]
          %v266 = vlaneseq
          %v267 = vshrl.u32 %v266, 7
          %v268 = vsub.s32 0, %v267
          %v269 = vrot.slane %v264, %v268
          %271 = vst [vmem:[%s258] sm:$0x3] %v269
        $region44: #{cnn_forward.6} parent=31 // pred_fallthru
          _
        %v272 = vld [vmem:[%s252] sm:$0xff]
        %v273 = vld [vmem:[%s252 + $0x8] sm:$0xff]
        %v274 = vld [vmem:[%s252 + $0x10] sm:$0xff]
        %v275 = vld [vmem:[%s252 + $0x18] sm:$0xff]
        %v276 = vld [vmem:[%s252 + $0x20] sm:$0xff]
        %v277 = vld [vmem:[%s252 + $0x28] sm:$0xff]
        %v278 = vld [vmem:[%s252 + $0x30] sm:$0xff]
        %v279 = vld [vmem:[%s252 + $0x38] sm:$0xff]
        %v280 = vld [vmem:[%s252 + $0x40] sm:$0xff]
        %v281 = vld [vmem:[%s252 + $0x48] sm:$0xff]
        %v282 = vld [vmem:[%s252 + $0x50] sm:$0xff]
        %v283 = vld [vmem:[%s252 + $0x58] sm:$0xff]
        %v284 = vld [vmem:[%s252 + $0x60] sm:$0x3]
        %v285 = vld [vmem:[%s211] sm:$0xf]
        %v286 = vld [vmem:[%s211 + $0x4] sm:$0xf]
        %v287 = vld [vmem:[%s211 + $0x8] sm:$0xf]
        %v288 = vld [vmem:[%s211 + $0xc] sm:$0xf]
        %v289 = vld [vmem:[%s211 + $0x10] sm:$0xf]
        %v290 = vld [vmem:[%s211 + $0x14] sm:$0xf]
        %v291 = vld [vmem:[%s211 + $0x18] sm:$0xf]
        %v292 = vld [vmem:[%s211 + $0x1c] sm:$0xf]
        %v293 = vld [vmem:[%s211 + $0x20] sm:$0xf]
        %v294 = vld [vmem:[%s211 + $0x24] sm:$0xf]
        %v295 = vld [vmem:[%s211 + $0x28] sm:$0xf]
        %v296 = vld [vmem:[%s211 + $0x2c] sm:$0xf]
        %v297 = vld [vmem:[%s211 + $0x30] sm:$0xf]
        %v298 = vld [vmem:[%s211 + $0x34] sm:$0xf]
        %v299 = vld [vmem:[%s211 + $0x38] sm:$0xf]
        %v300 = vld [vmem:[%s211 + $0x3c] sm:$0xf]
        %v301 = vld [vmem:[%s211 + $0x40] sm:$0xf]
        %v302 = vld [vmem:[%s211 + $0x44] sm:$0xf]
        %v303 = vld [vmem:[%s211 + $0x48] sm:$0xf]
        %v304 = vld [vmem:[%s211 + $0x4c] sm:$0xf]
        %v305 = vld [vmem:[%s211 + $0x50] sm:$0xf]
        %v306 = vld [vmem:[%s211 + $0x54] sm:$0xf]
        %v307 = vld [vmem:[%s211 + $0x58] sm:$0xf]
        %v308 = vld [vmem:[%s211 + $0x5c] sm:$0xf]
        %v309 = vld [vmem:[%s211 + $0x60] sm:$0xf]
        %v310 = vld [vmem:[%s211 + $0x64] sm:$0xf]
        %v311 = vld [vmem:[%s211 + $0x68] sm:$0xf]
        %v312 = vld [vmem:[%s211 + $0x6c] sm:$0xf]
        %v313 = vld [vmem:[%s211 + $0x70] sm:$0xf]
        %v314 = vld [vmem:[%s211 + $0x74] sm:$0xf]
        %v315 = vld [vmem:[%s211 + $0x78] sm:$0xf]
        %v316 = vld [vmem:[%s211 + $0x7c] sm:$0xf]
        %v317 = vld [vmem:[%s211 + $0x80] sm:$0xf]
        %v318 = vld [vmem:[%s211 + $0x84] sm:$0xf]
        %v319 = vld [vmem:[%s211 + $0x88] sm:$0xf]
        %v320 = vld [vmem:[%s211 + $0x8c] sm:$0xf]
        %v321 = vld [vmem:[%s211 + $0x90] sm:$0xf]
        %v322 = vld [vmem:[%s211 + $0x94] sm:$0xf]
        %v323 = vld [vmem:[%s211 + $0x98] sm:$0xf]
        %v324 = vld [vmem:[%s211 + $0x9c] sm:$0xf]
        %v325 = vld [vmem:[%s211 + $0xa0] sm:$0xf]
        %v326 = vld [vmem:[%s211 + $0xa4] sm:$0xf]
        %v327 = vld [vmem:[%s211 + $0xa8] sm:$0xf]
        %v328 = vld [vmem:[%s211 + $0xac] sm:$0xf]
        %v329 = vld [vmem:[%s211 + $0xb0] sm:$0xf]
        %v330 = vld [vmem:[%s211 + $0xb4] sm:$0xf]
        %v331 = vld [vmem:[%s211 + $0xb8] sm:$0xf]
        %v332 = vld [vmem:[%s211 + $0xbc] sm:$0xf]
        %v333 = vld [vmem:[%s211 + $0xc0] sm:$0xf]
        %v334 = vld [vmem:[%s211 + $0xc4] sm:$0xf]
        %v335 = vld [vmem:[%s211 + $0xc8] sm:$0xf]
        %v336 = vld [vmem:[%s211 + $0xcc] sm:$0xf]
        %v337 = vld [vmem:[%s211 + $0xd0] sm:$0xf]
        %v338 = vld [vmem:[%s211 + $0xd4] sm:$0xf]
        %v339 = vld [vmem:[%s211 + $0xd8] sm:$0xf]
        %v340 = vld [vmem:[%s211 + $0xdc] sm:$0xf]
        %v341 = vld [vmem:[%s211 + $0xe0] sm:$0xf]
        %v342 = vld [vmem:[%s211 + $0xe4] sm:$0xf]
        %v343 = vld [vmem:[%s211 + $0xe8] sm:$0xf]
        %v344 = vld [vmem:[%s211 + $0xec] sm:$0xf]
        %v345 = vld [vmem:[%s211 + $0xf0] sm:$0xf]
        %v346 = vld [vmem:[%s211 + $0xf4] sm:$0xf]
        %v347 = vld [vmem:[%s211 + $0xf8] sm:$0xf]
        %v348 = vld [vmem:[%s211 + $0xfc] sm:$0xf]
        %v349 = vld [vmem:[%s211 + $0x100] sm:$0xf]
        %v350 = vld [vmem:[%s211 + $0x104] sm:$0xf]
        %v351 = vld [vmem:[%s211 + $0x108] sm:$0xf]
        %v352 = vld [vmem:[%s211 + $0x10c] sm:$0xf]
        %v353 = vld [vmem:[%s211 + $0x110] sm:$0xf]
        %v354 = vld [vmem:[%s211 + $0x114] sm:$0xf]
        %v355 = vld [vmem:[%s211 + $0x118] sm:$0xf]
        %v356 = vld [vmem:[%s211 + $0x11c] sm:$0xf]
        %v357 = vld [vmem:[%s211 + $0x120] sm:$0xf]
        %v358 = vld [vmem:[%s211 + $0x124] sm:$0xf]
        %v359 = vld [vmem:[%s211 + $0x128] sm:$0xf]
        %v360 = vld [vmem:[%s211 + $0x12c] sm:$0xf]
        %v361 = vld [vmem:[%s211 + $0x130] sm:$0xf]
        %v362 = vld [vmem:[%s211 + $0x134] sm:$0xf]
        %v363 = vld [vmem:[%s211 + $0x138] sm:$0xf]
        %v364 = vld [vmem:[%s211 + $0x13c] sm:$0xf]
        %v365 = vld [vmem:[%s211 + $0x140] sm:$0xf]
        %v366 = vld [vmem:[%s211 + $0x144] sm:$0xf]
        %v367 = vld [vmem:[%s211 + $0x148] sm:$0xf]
        %v368 = vld [vmem:[%s211 + $0x14c] sm:$0xf]
        %v369 = vld [vmem:[%s211 + $0x150] sm:$0xf]
        %v370 = vld [vmem:[%s211 + $0x154] sm:$0xf]
        %v371 = vld [vmem:[%s211 + $0x158] sm:$0xf]
        %v372 = vld [vmem:[%s211 + $0x15c] sm:$0xf]
        %v373 = vld [vmem:[%s211 + $0x160] sm:$0xf]
        %v374 = vld [vmem:[%s211 + $0x164] sm:$0xf]
        %v375 = vld [vmem:[%s211 + $0x168] sm:$0xf]
        %v376 = vld [vmem:[%s211 + $0x16c] sm:$0xf]
        %v377 = vld [vmem:[%s211 + $0x170] sm:$0xf]
        %v378 = vld [vmem:[%s211 + $0x174] sm:$0xf]
        %v379 = vld [vmem:[%s211 + $0x178] sm:$0xf]
        %v380 = vld [vmem:[%s211 + $0x17c] sm:$0xf]
        %v381 = vld [vmem:[%s211 + $0x180] sm:$0xf]
        %v382 = vld [vmem:[%s211 + $0x184] sm:$0xf]
        %v383 = vld [vmem:[%s211 + $0x188] sm:$0xf]
        %v384 = vld [vmem:[%s211 + $0x18c] sm:$0xf]
        %v385 = vld [vmem:[%s211 + $0x190] sm:$0xf]
        %v386 = vld [vmem:[%s211 + $0x194] sm:$0xf]
        %v387 = vld [vmem:[%s211 + $0x198] sm:$0xf]
        %v388 = vld [vmem:[%s211 + $0x19c] sm:$0xf]
        %v389 = vld [vmem:[%s211 + $0x1a0] sm:$0xf]
        %v390 = vld [vmem:[%s211 + $0x1a4] sm:$0xf]
        %v391 = vld [vmem:[%s211 + $0x1a8] sm:$0xf]
        %v392 = vld [vmem:[%s211 + $0x1ac] sm:$0xf]
        %v393 = vld [vmem:[%s211 + $0x1b0] sm:$0xf]
        %v394 = vld [vmem:[%s211 + $0x1b4] sm:$0xf]
        %v395 = vld [vmem:[%s211 + $0x1b8] sm:$0xf]
        %v396 = vld [vmem:[%s211 + $0x1bc] sm:$0xf]
        %v397 = vld [vmem:[%s211 + $0x1c0] sm:$0xf]
        %v398 = vld [vmem:[%s211 + $0x1c4] sm:$0xf]
        %v399 = vld [vmem:[%s211 + $0x1c8] sm:$0xf]
        %v400 = vld [vmem:[%s211 + $0x1cc] sm:$0xf]
        %v401 = vld [vmem:[%s211 + $0x1d0] sm:$0xf]
        %v402 = vld [vmem:[%s211 + $0x1d4] sm:$0xf]
        %v403 = vld [vmem:[%s211 + $0x1d8] sm:$0xf]
        %v404 = vld [vmem:[%s211 + $0x1dc] sm:$0xf]
        %v405 = vld [vmem:[%s211 + $0x1e0] sm:$0xf]
        %v406 = vld [vmem:[%s211 + $0x1e4] sm:$0xf]
        %v407 = vld [vmem:[%s211 + $0x1e8] sm:$0xf]
        %v408 = vld [vmem:[%s211 + $0x1ec] sm:$0xf]
        %v409 = vld [vmem:[%s211 + $0x1f0] sm:$0xf]
        %v410 = vld [vmem:[%s211 + $0x1f4] sm:$0xf]
        %v411 = vld [vmem:[%s211 + $0x1f8] sm:$0xf]
        %v412 = vld [vmem:[%s211 + $0x1fc] sm:$0xf]
        %v413 = vld [vmem:[%s211 + $0x200] sm:$0xf]
        %v414 = vld [vmem:[%s211 + $0x204] sm:$0xf]
        %v415 = vld [vmem:[%s211 + $0x208] sm:$0xf]
        %v416 = vld [vmem:[%s211 + $0x20c] sm:$0xf]
        %v417 = vld [vmem:[%s211 + $0x210] sm:$0xf]
        %v418 = vld [vmem:[%s211 + $0x214] sm:$0xf]
        %v419 = vld [vmem:[%s211 + $0x218] sm:$0xf]
        %v420 = vld [vmem:[%s211 + $0x21c] sm:$0xf]
        %v421 = vld [vmem:[%s211 + $0x220] sm:$0xf]
        %v422 = vld [vmem:[%s211 + $0x224] sm:$0xf]
        %v423 = vld [vmem:[%s211 + $0x228] sm:$0xf]
        %v424 = vld [vmem:[%s211 + $0x22c] sm:$0xf]
        %v425 = vld [vmem:[%s211 + $0x230] sm:$0xf]
        %v426 = vld [vmem:[%s211 + $0x234] sm:$0xf]
        %v427 = vld [vmem:[%s211 + $0x238] sm:$0xf]
        %v428 = vld [vmem:[%s211 + $0x23c] sm:$0xf]
        %v429 = vld [vmem:[%s211 + $0x240] sm:$0xf]
        %v430 = vld [vmem:[%s211 + $0x244] sm:$0xf]
        %v431 = vld [vmem:[%s211 + $0x248] sm:$0xf]
        %v432 = vld [vmem:[%s211 + $0x24c] sm:$0xf]
        %v433 = vld [vmem:[%s211 + $0x250] sm:$0xf]
        %v434 = vld [vmem:[%s211 + $0x254] sm:$0xf]
        %v435 = vld [vmem:[%s211 + $0x258] sm:$0xf]
        %v436 = vld [vmem:[%s211 + $0x25c] sm:$0xf]
        %v437 = vld [vmem:[%s211 + $0x260] sm:$0xf]
        %v438 = vld [vmem:[%s211 + $0x264] sm:$0xf]
        %v439 = vld [vmem:[%s211 + $0x268] sm:$0xf]
        %v440 = vld [vmem:[%s211 + $0x26c] sm:$0xf]
        %v441 = vld [vmem:[%s211 + $0x270] sm:$0xf]
        %v442 = vld [vmem:[%s211 + $0x274] sm:$0xf]
        %v443 = vld [vmem:[%s211 + $0x278] sm:$0xf]
        %v444 = vld [vmem:[%s211 + $0x27c] sm:$0xf]
        %v445 = vld [vmem:[%s211 + $0x280] sm:$0xf]
        %v446 = vld [vmem:[%s211 + $0x284] sm:$0xf]
        %v447 = vld [vmem:[%s211 + $0x288] sm:$0xf]
        %v448 = vld [vmem:[%s211 + $0x28c] sm:$0xf]
        %v449 = vld [vmem:[%s211 + $0x290] sm:$0xf]
        %v450 = vld [vmem:[%s211 + $0x294] sm:$0xf]
        %v451 = vld [vmem:[%s211 + $0x298] sm:$0xf]
        %v452 = vld [vmem:[%s211 + $0x29c] sm:$0xf]
        %v453 = vld [vmem:[%s211 + $0x2a0] sm:$0xf]
        %v454 = vld [vmem:[%s211 + $0x2a4] sm:$0xf]
        %v455 = vld [vmem:[%s211 + $0x2a8] sm:$0xf]
        %v456 = vld [vmem:[%s211 + $0x2ac] sm:$0xf]
        %v457 = vld [vmem:[%s211 + $0x2b0] sm:$0xf]
        %v458 = vld [vmem:[%s211 + $0x2b4] sm:$0xf]
        %v459 = vld [vmem:[%s211 + $0x2b8] sm:$0xf]
        %v460 = vld [vmem:[%s211 + $0x2bc] sm:$0xf]
        %v461 = vld [vmem:[%s211 + $0x2c0] sm:$0xf]
        %v462 = vld [vmem:[%s211 + $0x2c4] sm:$0xf]
        %v463 = vld [vmem:[%s211 + $0x2c8] sm:$0xf]
        %v464 = vld [vmem:[%s211 + $0x2cc] sm:$0xf]
        %v465 = vld [vmem:[%s211 + $0x2d0] sm:$0xf]
        %v466 = vld [vmem:[%s211 + $0x2d4] sm:$0xf]
        %v467 = vld [vmem:[%s211 + $0x2d8] sm:$0xf]
        %v468 = vld [vmem:[%s211 + $0x2dc] sm:$0xf]
        %v469 = vld [vmem:[%s211 + $0x2e0] sm:$0xf]
        %v470 = vld [vmem:[%s211 + $0x2e4] sm:$0xf]
        %v471 = vld [vmem:[%s211 + $0x2e8] sm:$0xf]
        %v472 = vld [vmem:[%s211 + $0x2ec] sm:$0xf]
        %v473 = vld [vmem:[%s211 + $0x2f0] sm:$0xf]
        %v474 = vld [vmem:[%s211 + $0x2f4] sm:$0xf]
        %v475 = vld [vmem:[%s211 + $0x2f8] sm:$0xf]
        %v476 = vld [vmem:[%s211 + $0x2fc] sm:$0xf]
        %v477 = vld [vmem:[%s211 + $0x300] sm:$0xf]
        %v478 = vld [vmem:[%s211 + $0x304] sm:$0xf]
        %v479 = vld [vmem:[%s211 + $0x308] sm:$0xf]
        %v480 = vld [vmem:[%s211 + $0x30c] sm:$0xf]
        %v481 = vld [vmem:[%s211 + $0x310] sm:$0xf]
        %v482 = vld [vmem:[%s211 + $0x314] sm:$0xf]
        %v483 = vld [vmem:[%s211 + $0x318] sm:$0xf]
        %v484 = vld [vmem:[%s211 + $0x31c] sm:$0xf]
        %v485 = vld [vmem:[%s211 + $0x320] sm:$0xf]
        %v486 = vld [vmem:[%s211 + $0x324] sm:$0xf]
        %v487 = vld [vmem:[%s211 + $0x328] sm:$0xf]
        %v488 = vld [vmem:[%s211 + $0x32c] sm:$0xf]
        %v489 = vld [vmem:[%s211 + $0x330] sm:$0xf]
        %v490 = vld [vmem:[%s211 + $0x334] sm:$0xf]
        %v491 = vld [vmem:[%s211 + $0x338] sm:$0xf]
        %v492 = vld [vmem:[%s211 + $0x33c] sm:$0xf]
        %v493 = vld [vmem:[%s211 + $0x340] sm:$0xf]
        %v494 = vld [vmem:[%s211 + $0x344] sm:$0xf]
        %v495 = vld [vmem:[%s211 + $0x348] sm:$0xf]
        %v496 = vld [vmem:[%s211 + $0x34c] sm:$0xf]
        %v497 = vld [vmem:[%s211 + $0x350] sm:$0xf]
        %v498 = vld [vmem:[%s211 + $0x354] sm:$0xf]
        %v499 = vld [vmem:[%s211 + $0x358] sm:$0xf]
        %v500 = vld [vmem:[%s211 + $0x35c] sm:$0xf]
        %v501 = vld [vmem:[%s211 + $0x360] sm:$0xf]
        %v502 = vld [vmem:[%s211 + $0x364] sm:$0xf]
        %v503 = vld [vmem:[%s211 + $0x368] sm:$0xf]
        %v504 = vld [vmem:[%s211 + $0x36c] sm:$0xf]
        %v505 = vld [vmem:[%s211 + $0x370] sm:$0xf]
        %v506 = vld [vmem:[%s211 + $0x374] sm:$0xf]
        %v507 = vld [vmem:[%s211 + $0x378] sm:$0xf]
        %v508 = vld [vmem:[%s211 + $0x37c] sm:$0xf]
        %v509 = vld [vmem:[%s211 + $0x380] sm:$0xf]
        %v510 = vld [vmem:[%s211 + $0x384] sm:$0xf]
        %v511 = vld [vmem:[%s211 + $0x388] sm:$0xf]
        %v512 = vld [vmem:[%s211 + $0x38c] sm:$0xf]
        %v513 = vld [vmem:[%s211 + $0x390] sm:$0xf]
        %v514 = vld [vmem:[%s211 + $0x394] sm:$0xf]
        %v515 = vld [vmem:[%s211 + $0x398] sm:$0xf]
        %v516 = vld [vmem:[%s211 + $0x39c] sm:$0xf]
        %v517 = vld [vmem:[%s211 + $0x3a0] sm:$0xf]
        %v518 = vld [vmem:[%s211 + $0x3a4] sm:$0xf]
        %v519 = vld [vmem:[%s211 + $0x3a8] sm:$0xf]
        %v520 = vld [vmem:[%s211 + $0x3ac] sm:$0xf]
        %v521 = vld [vmem:[%s211 + $0x3b0] sm:$0xf]
        %v522 = vld [vmem:[%s211 + $0x3b4] sm:$0xf]
        %v523 = vld [vmem:[%s211 + $0x3b8] sm:$0xf]
        %v524 = vld [vmem:[%s211 + $0x3bc] sm:$0xf]
        %v525 = vld [vmem:[%s211 + $0x3c0] sm:$0xf]
        %v526 = vld [vmem:[%s211 + $0x3c4] sm:$0xf]
        %v527 = vld [vmem:[%s211 + $0x3c8] sm:$0xf]
        %v528 = vld [vmem:[%s211 + $0x3cc] sm:$0xf]
        %v529 = vld [vmem:[%s211 + $0x3d0] sm:$0xf]
        %v530 = vld [vmem:[%s211 + $0x3d4] sm:$0xf]
        %v531 = vld [vmem:[%s211 + $0x3d8] sm:$0xf]
        %v532 = vld [vmem:[%s211 + $0x3dc] sm:$0xf]
        %v533 = vld [vmem:[%s211 + $0x3e0] sm:$0xf]
        %v534 = vld [vmem:[%s211 + $0x3e4] sm:$0xf]
        %v535 = vld [vmem:[%s211 + $0x3e8] sm:$0xf]
        %v536 = vld [vmem:[%s211 + $0x3ec] sm:$0xf]
        %v537 = vld [vmem:[%s211 + $0x3f0] sm:$0xf]
        %v538 = vld [vmem:[%s211 + $0x3f4] sm:$0xf]
        %v539 = vld [vmem:[%s211 + $0x3f8] sm:$0xf]
        %v540 = vld [vmem:[%s211 + $0x3fc] sm:$0xf]
        %v541 = vld [vmem:[%s211 + $0x400] sm:$0xf]
        %v542 = vld [vmem:[%s211 + $0x404] sm:$0xf]
        %v543 = vld [vmem:[%s211 + $0x408] sm:$0xf]
        %v544 = vld [vmem:[%s211 + $0x40c] sm:$0xf]
        %v545 = vld [vmem:[%s211 + $0x410] sm:$0xf]
        %v546 = vld [vmem:[%s211 + $0x414] sm:$0xf]
        %v547 = vld [vmem:[%s211 + $0x418] sm:$0xf]
        %v548 = vld [vmem:[%s211 + $0x41c] sm:$0xf]
        %v549 = vld [vmem:[%s211 + $0x420] sm:$0xf]
        %v550 = vld [vmem:[%s211 + $0x424] sm:$0xf]
        %v551 = vld [vmem:[%s211 + $0x428] sm:$0xf]
        %v552 = vld [vmem:[%s211 + $0x42c] sm:$0xf]
        %v553 = vld [vmem:[%s211 + $0x430] sm:$0xf]
        %v554 = vld [vmem:[%s211 + $0x434] sm:$0xf]
        %v555 = vld [vmem:[%s211 + $0x438] sm:$0xf]
        %v556 = vld [vmem:[%s211 + $0x43c] sm:$0xf]
        %v557 = vld [vmem:[%s211 + $0x440] sm:$0xf]
        %v558 = vld [vmem:[%s211 + $0x444] sm:$0xf]
        %v559 = vld [vmem:[%s211 + $0x448] sm:$0xf]
        %v560 = vld [vmem:[%s211 + $0x44c] sm:$0xf]
        %v561 = vld [vmem:[%s211 + $0x450] sm:$0xf]
        %v562 = vld [vmem:[%s211 + $0x454] sm:$0xf]
        %v563 = vld [vmem:[%s211 + $0x458] sm:$0xf]
        %v564 = vld [vmem:[%s211 + $0x45c] sm:$0xf]
        %v565 = vld [vmem:[%s211 + $0x460] sm:$0xf]
        %v566 = vld [vmem:[%s211 + $0x464] sm:$0xf]
        %v567 = vld [vmem:[%s211 + $0x468] sm:$0xf]
        %v568 = vld [vmem:[%s211 + $0x46c] sm:$0xf]
        %v569 = vld [vmem:[%s211 + $0x470] sm:$0xf]
        %v570 = vld [vmem:[%s211 + $0x474] sm:$0xf]
        %v571 = vld [vmem:[%s211 + $0x478] sm:$0xf]
        %v572 = vld [vmem:[%s211 + $0x47c] sm:$0xf]
        %v573 = vld [vmem:[%s211 + $0x480] sm:$0xf]
        %v574 = vld [vmem:[%s211 + $0x484] sm:$0xf]
        %v575 = vld [vmem:[%s211 + $0x488] sm:$0xf]
        %v576 = vld [vmem:[%s211 + $0x48c] sm:$0xf]
        %v577 = vld [vmem:[%s211 + $0x490] sm:$0xf]
        %v578 = vld [vmem:[%s211 + $0x494] sm:$0xf]
        %v579 = vld [vmem:[%s211 + $0x498] sm:$0xf]
        %v580 = vld [vmem:[%s211 + $0x49c] sm:$0xf]
        %v581 = vld [vmem:[%s211 + $0x4a0] sm:$0xf]
        %v582 = vld [vmem:[%s211 + $0x4a4] sm:$0xf]
        %v583 = vld [vmem:[%s211 + $0x4a8] sm:$0xf]
        %v584 = vld [vmem:[%s211 + $0x4ac] sm:$0xf]
        %v585 = vld [vmem:[%s211 + $0x4b0] sm:$0xf]
        %v586 = vld [vmem:[%s211 + $0x4b4] sm:$0xf]
        %v587 = vld [vmem:[%s211 + $0x4b8] sm:$0xf]
        %v588 = vld [vmem:[%s211 + $0x4bc] sm:$0xf]
        %v589 = vld [vmem:[%s211 + $0x4c0] sm:$0xf]
        %v590 = vld [vmem:[%s211 + $0x4c4] sm:$0xf]
        %v591 = vld [vmem:[%s211 + $0x4c8] sm:$0xf]
        %v592 = vld [vmem:[%s211 + $0x4cc] sm:$0xf]
        %v593 = vld [vmem:[%s211 + $0x4d0] sm:$0xf]
        %v594 = vld [vmem:[%s211 + $0x4d4] sm:$0xf]
        %v595 = vld [vmem:[%s211 + $0x4d8] sm:$0xf]
        %v596 = vld [vmem:[%s211 + $0x4dc] sm:$0xf]
        %v597 = vld [vmem:[%s211 + $0x4e0] sm:$0xf]
        %v598 = vld [vmem:[%s211 + $0x4e4] sm:$0xf]
        %v599 = vld [vmem:[%s211 + $0x4e8] sm:$0xf]
        %v600 = vld [vmem:[%s211 + $0x4ec] sm:$0xf]
        %v601 = vld [vmem:[%s211 + $0x4f0] sm:$0xf]
        %v602 = vld [vmem:[%s211 + $0x4f4] sm:$0xf]
        %v603 = vld [vmem:[%s211 + $0x4f8] sm:$0xf]
        %v604 = vld [vmem:[%s211 + $0x4fc] sm:$0xf]
        %v605 = vld [vmem:[%s211 + $0x500] sm:$0xf]
        %v606 = vld [vmem:[%s211 + $0x504] sm:$0xf]
        %v607 = vld [vmem:[%s211 + $0x508] sm:$0xf]
        %v608 = vld [vmem:[%s211 + $0x50c] sm:$0xf]
        %v609 = vld [vmem:[%s211 + $0x510] sm:$0xf]
        %v610 = vld [vmem:[%s211 + $0x514] sm:$0xf]
        %v611 = vld [vmem:[%s211 + $0x518] sm:$0xf]
        %v612 = vld [vmem:[%s211 + $0x51c] sm:$0xf]
        %v613 = vld [vmem:[%s211 + $0x520] sm:$0xf]
        %v614 = vld [vmem:[%s211 + $0x524] sm:$0xf]
        %v615 = vld [vmem:[%s211 + $0x528] sm:$0xf]
        %v616 = vld [vmem:[%s211 + $0x52c] sm:$0xf]
        %v617 = vld [vmem:[%s211 + $0x530] sm:$0xf]
        %v618 = vld [vmem:[%s211 + $0x534] sm:$0xf]
        %v619 = vld [vmem:[%s211 + $0x538] sm:$0xf]
        %v620 = vld [vmem:[%s211 + $0x53c] sm:$0xf]
        %v621 = vld [vmem:[%s211 + $0x540] sm:$0xf]
        %v622 = vld [vmem:[%s211 + $0x544] sm:$0xf]
        %v623 = vld [vmem:[%s211 + $0x548] sm:$0xf]
        %v624 = vld [vmem:[%s211 + $0x54c] sm:$0xf]
        %v625 = vld [vmem:[%s211 + $0x550] sm:$0xf]
        %v626 = vld [vmem:[%s211 + $0x554] sm:$0xf]
        %v627 = vld [vmem:[%s211 + $0x558] sm:$0xf]
        %v628 = vld [vmem:[%s211 + $0x55c] sm:$0xf]
        %v629 = vld [vmem:[%s211 + $0x560] sm:$0xf]
        %v630 = vld [vmem:[%s211 + $0x564] sm:$0xf]
        %v631 = vld [vmem:[%s211 + $0x568] sm:$0xf]
        %v632 = vld [vmem:[%s211 + $0x56c] sm:$0xf]
        %v633 = vld [vmem:[%s211 + $0x570] sm:$0xf]
        %v634 = vld [vmem:[%s211 + $0x574] sm:$0xf]
        %v635 = vld [vmem:[%s211 + $0x578] sm:$0xf]
        %v636 = vld [vmem:[%s211 + $0x57c] sm:$0xf]
        %v637 = vld [vmem:[%s211 + $0x580] sm:$0xf]
        %v638 = vld [vmem:[%s211 + $0x584] sm:$0xf]
        %v639 = vld [vmem:[%s211 + $0x588] sm:$0xf]
        %v640 = vld [vmem:[%s211 + $0x58c] sm:$0xf]
        %v641 = vld [vmem:[%s211 + $0x590] sm:$0xf]
        %v642 = vld [vmem:[%s211 + $0x594] sm:$0xf]
        %v643 = vld [vmem:[%s211 + $0x598] sm:$0xf]
        %v644 = vld [vmem:[%s211 + $0x59c] sm:$0xf]
        %v645 = vld [vmem:[%s211 + $0x5a0] sm:$0xf]
        %v646 = vld [vmem:[%s211 + $0x5a4] sm:$0xf]
        %v647 = vld [vmem:[%s211 + $0x5a8] sm:$0xf]
        %v648 = vld [vmem:[%s211 + $0x5ac] sm:$0xf]
        %v649 = vld [vmem:[%s211 + $0x5b0] sm:$0xf]
        %v650 = vld [vmem:[%s211 + $0x5b4] sm:$0xf]
        %v651 = vld [vmem:[%s211 + $0x5b8] sm:$0xf]
        %v652 = vld [vmem:[%s211 + $0x5bc] sm:$0xf]
        %v653 = vld [vmem:[%s211 + $0x5c0] sm:$0xf]
        %v654 = vld [vmem:[%s211 + $0x5c4] sm:$0xf]
        %v655 = vld [vmem:[%s211 + $0x5c8] sm:$0xf]
        %v656 = vld [vmem:[%s211 + $0x5cc] sm:$0xf]
        %v657 = vld [vmem:[%s211 + $0x5d0] sm:$0xf]
        %v658 = vld [vmem:[%s211 + $0x5d4] sm:$0xf]
        %v659 = vld [vmem:[%s211 + $0x5d8] sm:$0xf]
        %v660 = vld [vmem:[%s211 + $0x5dc] sm:$0xf]
        %v661 = vld [vmem:[%s211 + $0x5e0] sm:$0xf]
        %v662 = vld [vmem:[%s211 + $0x5e4] sm:$0xf]
        %v663 = vld [vmem:[%s211 + $0x5e8] sm:$0xf]
        %v664 = vld [vmem:[%s211 + $0x5ec] sm:$0xf]
        %v665 = vld [vmem:[%s211 + $0x5f0] sm:$0xf]
        %v666 = vld [vmem:[%s211 + $0x5f4] sm:$0xf]
        %v667 = vld [vmem:[%s211 + $0x5f8] sm:$0xf]
        %v668 = vld [vmem:[%s211 + $0x5fc] sm:$0xf]
        %v669 = vld [vmem:[%s211 + $0x600] sm:$0xf]
        %v670 = vld [vmem:[%s211 + $0x604] sm:$0xf]
        %v671 = vld [vmem:[%s211 + $0x608] sm:$0xf]
        %v672 = vld [vmem:[%s211 + $0x60c] sm:$0xf]
        %v673 = vld [vmem:[%s211 + $0x610] sm:$0xf]
        %v674 = vld [vmem:[%s211 + $0x614] sm:$0xf]
        %v675 = vld [vmem:[%s211 + $0x618] sm:$0xf]
        %v676 = vld [vmem:[%s211 + $0x61c] sm:$0xf]
        %v677 = vld [vmem:[%s211 + $0x620] sm:$0xf]
        %v678 = vld [vmem:[%s211 + $0x624] sm:$0xf]
        %v679 = vld [vmem:[%s211 + $0x628] sm:$0xf]
        %v680 = vld [vmem:[%s211 + $0x62c] sm:$0xf]
        %v681 = vld [vmem:[%s211 + $0x630] sm:$0xf]
        %v682 = vld [vmem:[%s211 + $0x634] sm:$0xf]
        %v683 = vld [vmem:[%s211 + $0x638] sm:$0xf]
        %v684 = vld [vmem:[%s211 + $0x63c] sm:$0xf]
        %v685 = vld [vmem:[%s211 + $0x640] sm:$0xf]
        %v686 = vld [vmem:[%s211 + $0x644] sm:$0xf]
        %v687 = vld [vmem:[%s211 + $0x648] sm:$0xf]
        %v688 = vld [vmem:[%s211 + $0x64c] sm:$0xf]
        %v689 = vld [vmem:[%s211 + $0x650] sm:$0xf]
        %v690 = vld [vmem:[%s211 + $0x654] sm:$0xf]
        %v691 = vld [vmem:[%s211 + $0x658] sm:$0xf]
        %v692 = vld [vmem:[%s211 + $0x65c] sm:$0xf]
        %v693 = vld [vmem:[%s211 + $0x660] sm:$0xf]
        %v694 = vld [vmem:[%s211 + $0x664] sm:$0xf]
        %v695 = vld [vmem:[%s211 + $0x668] sm:$0xf]
        %v696 = vld [vmem:[%s211 + $0x66c] sm:$0xf]
        %v697 = vld [vmem:[%s211 + $0x670] sm:$0xf]
        %v698 = vld [vmem:[%s211 + $0x674] sm:$0xf]
        %v699 = vld [vmem:[%s211 + $0x678] sm:$0xf]
        %v700 = vld [vmem:[%s211 + $0x67c] sm:$0xf]
        %v701 = vld [vmem:[%s211 + $0x680] sm:$0xf]
        %v702 = vld [vmem:[%s211 + $0x684] sm:$0xf]
        %v703 = vld [vmem:[%s211 + $0x688] sm:$0xf]
        %v704 = vld [vmem:[%s211 + $0x68c] sm:$0xf]
        %v705 = vld [vmem:[%s211 + $0x690] sm:$0xf]
        %v706 = vld [vmem:[%s211 + $0x694] sm:$0xf]
        %v707 = vld [vmem:[%s211 + $0x698] sm:$0xf]
        %v708 = vld [vmem:[%s211 + $0x69c] sm:$0xf]
        %v709 = vld [vmem:[%s211 + $0x6a0] sm:$0xf]
        %v710 = vld [vmem:[%s211 + $0x6a4] sm:$0xf]
        %v711 = vld [vmem:[%s211 + $0x6a8] sm:$0xf]
        %v712 = vld [vmem:[%s211 + $0x6ac] sm:$0xf]
        %v713 = vld [vmem:[%s211 + $0x6b0] sm:$0xf]
        %v714 = vld [vmem:[%s211 + $0x6b4] sm:$0xf]
        %v715 = vld [vmem:[%s211 + $0x6b8] sm:$0xf]
        %v716 = vld [vmem:[%s211 + $0x6bc] sm:$0xf]
        %v717 = vld [vmem:[%s211 + $0x6c0] sm:$0xf]
        %v718 = vld [vmem:[%s211 + $0x6c4] sm:$0xf]
        %v719 = vld [vmem:[%s211 + $0x6c8] sm:$0xf]
        %v720 = vld [vmem:[%s211 + $0x6cc] sm:$0xf]
        %v721 = vld [vmem:[%s211 + $0x6d0] sm:$0xf]
        %v722 = vld [vmem:[%s211 + $0x6d4] sm:$0xf]
        %v723 = vld [vmem:[%s211 + $0x6d8] sm:$0xf]
        %v724 = vld [vmem:[%s211 + $0x6dc] sm:$0xf]
        %v725 = vld [vmem:[%s211 + $0x6e0] sm:$0xf]
        %v726 = vld [vmem:[%s211 + $0x6e4] sm:$0xf]
        %v727 = vld [vmem:[%s211 + $0x6e8] sm:$0xf]
        %v728 = vld [vmem:[%s211 + $0x6ec] sm:$0xf]
        %v729 = vld [vmem:[%s211 + $0x6f0] sm:$0xf]
        %v730 = vld [vmem:[%s211 + $0x6f4] sm:$0xf]
        %v731 = vld [vmem:[%s211 + $0x6f8] sm:$0xf]
        %v732 = vld [vmem:[%s211 + $0x6fc] sm:$0xf]
        %v733 = vld [vmem:[%s211 + $0x700] sm:$0xf]
        %v734 = vld [vmem:[%s211 + $0x704] sm:$0xf]
        %v735 = vld [vmem:[%s211 + $0x708] sm:$0xf]
        %v736 = vld [vmem:[%s211 + $0x70c] sm:$0xf]
        %v737 = vld [vmem:[%s211 + $0x710] sm:$0xf]
        %v738 = vld [vmem:[%s211 + $0x714] sm:$0xf]
        %v739 = vld [vmem:[%s211 + $0x718] sm:$0xf]
        %v740 = vld [vmem:[%s211 + $0x71c] sm:$0xf]
        %v741 = vld [vmem:[%s211 + $0x720] sm:$0xf]
        %v742 = vld [vmem:[%s211 + $0x724] sm:$0xf]
        %v743 = vld [vmem:[%s211 + $0x728] sm:$0xf]
        %v744 = vld [vmem:[%s211 + $0x72c] sm:$0xf]
        %v745 = vld [vmem:[%s211 + $0x730] sm:$0xf]
        %v746 = vld [vmem:[%s211 + $0x734] sm:$0xf]
        %v747 = vld [vmem:[%s211 + $0x738] sm:$0xf]
        %v748 = vld [vmem:[%s211 + $0x73c] sm:$0xf]
        %v749 = vld [vmem:[%s211 + $0x740] sm:$0xf]
        %v750 = vld [vmem:[%s211 + $0x744] sm:$0xf]
        %v751 = vld [vmem:[%s211 + $0x748] sm:$0xf]
        %v752 = vld [vmem:[%s211 + $0x74c] sm:$0xf]
        %v753 = vld [vmem:[%s211 + $0x750] sm:$0xf]
        %v754 = vld [vmem:[%s211 + $0x754] sm:$0xf]
        %v755 = vld [vmem:[%s211 + $0x758] sm:$0xf]
        %v756 = vld [vmem:[%s211 + $0x75c] sm:$0xf]
        %v757 = vld [vmem:[%s211 + $0x760] sm:$0xf]
        %v758 = vld [vmem:[%s211 + $0x764] sm:$0xf]
        %v759 = vld [vmem:[%s211 + $0x768] sm:$0xf]
        %v760 = vld [vmem:[%s211 + $0x76c] sm:$0xf]
        %v761 = vld [vmem:[%s211 + $0x770] sm:$0xf]
        %v762 = vld [vmem:[%s211 + $0x774] sm:$0xf]
        %v763 = vld [vmem:[%s211 + $0x778] sm:$0xf]
        %v764 = vld [vmem:[%s211 + $0x77c] sm:$0xf]
        %v765 = vld [vmem:[%s211 + $0x780] sm:$0xf]
        %v766 = vld [vmem:[%s211 + $0x784] sm:$0xf]
        %v767 = vld [vmem:[%s211 + $0x788] sm:$0xf]
        %v768 = vld [vmem:[%s211 + $0x78c] sm:$0xf]
        %v769 = vld [vmem:[%s211 + $0x790] sm:$0xf]
        %v770 = vld [vmem:[%s211 + $0x794] sm:$0xf]
        %v771 = vld [vmem:[%s211 + $0x798] sm:$0xf]
        %v772 = vld [vmem:[%s211 + $0x79c] sm:$0xf]
        %v773 = vld [vmem:[%s211 + $0x7a0] sm:$0xf]
        %v774 = vld [vmem:[%s211 + $0x7a4] sm:$0xf]
        %v775 = vld [vmem:[%s211 + $0x7a8] sm:$0xf]
        %v776 = vld [vmem:[%s211 + $0x7ac] sm:$0xf]
        %v777 = vld [vmem:[%s211 + $0x7b0] sm:$0xf]
        %v778 = vld [vmem:[%s211 + $0x7b4] sm:$0xf]
        %v779 = vld [vmem:[%s211 + $0x7b8] sm:$0xf]
        %v780 = vld [vmem:[%s211 + $0x7bc] sm:$0xf]
        %v781 = vld [vmem:[%s211 + $0x7c0] sm:$0xf]
        %v782 = vld [vmem:[%s211 + $0x7c4] sm:$0xf]
        %v783 = vld [vmem:[%s211 + $0x7c8] sm:$0xf]
        %v784 = vld [vmem:[%s211 + $0x7cc] sm:$0xf]
        %v785 = vld [vmem:[%s211 + $0x7d0] sm:$0xf]
        %v786 = vld [vmem:[%s211 + $0x7d4] sm:$0xf]
        %v787 = vld [vmem:[%s211 + $0x7d8] sm:$0xf]
        %v788 = vld [vmem:[%s211 + $0x7dc] sm:$0xf]
        %v789 = vld [vmem:[%s211 + $0x7e0] sm:$0xf]
        %v790 = vld [vmem:[%s211 + $0x7e4] sm:$0xf]
        %v791 = vld [vmem:[%s211 + $0x7e8] sm:$0xf]
        %v792 = vld [vmem:[%s211 + $0x7ec] sm:$0xf]
        %v793 = vld [vmem:[%s211 + $0x7f0] sm:$0xf]
        %v794 = vld [vmem:[%s211 + $0x7f4] sm:$0xf]
        %v795 = vld [vmem:[%s211 + $0x7f8] sm:$0xf]
        %v796 = vld [vmem:[%s211 + $0x7fc] sm:$0xf]
        %v797 = vld [vmem:[%s211 + $0x800] sm:$0xf]
        %v798 = vld [vmem:[%s211 + $0x804] sm:$0xf]
        %v799 = vld [vmem:[%s211 + $0x808] sm:$0xf]
        %v800 = vld [vmem:[%s211 + $0x80c] sm:$0xf]
        %v801 = vld [vmem:[%s211 + $0x810] sm:$0xf]
        %v802 = vld [vmem:[%s211 + $0x814] sm:$0xf]
        %v803 = vld [vmem:[%s211 + $0x818] sm:$0xf]
        %v804 = vld [vmem:[%s211 + $0x81c] sm:$0xf]
        %v805 = vld [vmem:[%s211 + $0x820] sm:$0xf]
        %v806 = vld [vmem:[%s211 + $0x824] sm:$0xf]
        %v807 = vld [vmem:[%s211 + $0x828] sm:$0xf]
        %v808 = vld [vmem:[%s211 + $0x82c] sm:$0xf]
        %v809 = vld [vmem:[%s211 + $0x830] sm:$0xf]
        %v810 = vld [vmem:[%s211 + $0x834] sm:$0xf]
        %v811 = vld [vmem:[%s211 + $0x838] sm:$0xf]
        %v812 = vld [vmem:[%s211 + $0x83c] sm:$0xf]
        %v813 = vld [vmem:[%s211 + $0x840] sm:$0xf]
        %v814 = vld [vmem:[%s211 + $0x844] sm:$0xf]
        %v815 = vld [vmem:[%s211 + $0x848] sm:$0xf]
        %v816 = vld [vmem:[%s211 + $0x84c] sm:$0xf]
        %v817 = vld [vmem:[%s211 + $0x850] sm:$0xf]
        %v818 = vld [vmem:[%s211 + $0x854] sm:$0xf]
        %v819 = vld [vmem:[%s211 + $0x858] sm:$0xf]
        %v820 = vld [vmem:[%s211 + $0x85c] sm:$0xf]
        %v821 = vld [vmem:[%s211 + $0x860] sm:$0xf]
        %v822 = vld [vmem:[%s211 + $0x864] sm:$0xf]
        %v823 = vld [vmem:[%s211 + $0x868] sm:$0xf]
        %v824 = vld [vmem:[%s211 + $0x86c] sm:$0xf]
        %v825 = vld [vmem:[%s211 + $0x870] sm:$0xf]
        %v826 = vld [vmem:[%s211 + $0x874] sm:$0xf]
        %v827 = vld [vmem:[%s211 + $0x878] sm:$0xf]
        %v828 = vld [vmem:[%s211 + $0x87c] sm:$0xf]
        %v829 = vld [vmem:[%s211 + $0x880] sm:$0xf]
        %v830 = vld [vmem:[%s211 + $0x884] sm:$0xf]
        %v831 = vld [vmem:[%s211 + $0x888] sm:$0xf]
        %v832 = vld [vmem:[%s211 + $0x88c] sm:$0xf]
        %v833 = vld [vmem:[%s211 + $0x890] sm:$0xf]
        %v834 = vld [vmem:[%s211 + $0x894] sm:$0xf]
        %v835 = vld [vmem:[%s211 + $0x898] sm:$0xf]
        %v836 = vld [vmem:[%s211 + $0x89c] sm:$0xf]
        %v837 = vld [vmem:[%s211 + $0x8a0] sm:$0xf]
        %v838 = vld [vmem:[%s211 + $0x8a4] sm:$0xf]
        %v839 = vld [vmem:[%s211 + $0x8a8] sm:$0xf]
        %v840 = vld [vmem:[%s211 + $0x8ac] sm:$0xf]
        %v841 = vld [vmem:[%s211 + $0x8b0] sm:$0xf]
        %v842 = vld [vmem:[%s211 + $0x8b4] sm:$0xf]
        %v843 = vld [vmem:[%s211 + $0x8b8] sm:$0xf]
        %v844 = vld [vmem:[%s211 + $0x8bc] sm:$0xf]
        %v845 = vld [vmem:[%s211 + $0x8c0] sm:$0xf]
        %v846 = vld [vmem:[%s211 + $0x8c4] sm:$0xf]
        %v847 = vld [vmem:[%s211 + $0x8c8] sm:$0xf]
        %v848 = vld [vmem:[%s211 + $0x8cc] sm:$0xf]
        %v849 = vld [vmem:[%s211 + $0x8d0] sm:$0xf]
        %v850 = vld [vmem:[%s211 + $0x8d4] sm:$0xf]
        %v851 = vld [vmem:[%s211 + $0x8d8] sm:$0xf]
        %v852 = vld [vmem:[%s211 + $0x8dc] sm:$0xf]
        %v853 = vld [vmem:[%s211 + $0x8e0] sm:$0xf]
        %v854 = vld [vmem:[%s211 + $0x8e4] sm:$0xf]
        %v855 = vld [vmem:[%s211 + $0x8e8] sm:$0xf]
        %v856 = vld [vmem:[%s211 + $0x8ec] sm:$0xf]
        %v857 = vld [vmem:[%s211 + $0x8f0] sm:$0xf]
        %v858 = vld [vmem:[%s211 + $0x8f4] sm:$0xf]
        %v859 = vld [vmem:[%s211 + $0x8f8] sm:$0xf]
        %v860 = vld [vmem:[%s211 + $0x8fc] sm:$0xf]
        %v861 = vld [vmem:[%s211 + $0x900] sm:$0xf]
        %v862 = vld [vmem:[%s211 + $0x904] sm:$0xf]
        %v863 = vld [vmem:[%s211 + $0x908] sm:$0xf]
        %v864 = vld [vmem:[%s211 + $0x90c] sm:$0xf]
        %v865 = vld [vmem:[%s211 + $0x910] sm:$0xf]
        %v866 = vld [vmem:[%s211 + $0x914] sm:$0xf]
        %v867 = vld [vmem:[%s211 + $0x918] sm:$0xf]
        %v868 = vld [vmem:[%s211 + $0x91c] sm:$0xf]
        %v869 = vld [vmem:[%s211 + $0x920] sm:$0xf]
        %v870 = vld [vmem:[%s211 + $0x924] sm:$0xf]
        %v871 = vld [vmem:[%s211 + $0x928] sm:$0xf]
        %v872 = vld [vmem:[%s211 + $0x92c] sm:$0xf]
        %v873 = vld [vmem:[%s211 + $0x930] sm:$0xf]
        %v874 = vld [vmem:[%s211 + $0x934] sm:$0xf]
        %v875 = vld [vmem:[%s211 + $0x938] sm:$0xf]
        %v876 = vld [vmem:[%s211 + $0x93c] sm:$0xf]
        %v877 = vld [vmem:[%s211 + $0x940] sm:$0xf]
        %v878 = vld [vmem:[%s211 + $0x944] sm:$0xf]
        %v879 = vld [vmem:[%s211 + $0x948] sm:$0xf]
        %v880 = vld [vmem:[%s211 + $0x94c] sm:$0xf]
        %v881 = vld [vmem:[%s211 + $0x950] sm:$0xf]
        %v882 = vld [vmem:[%s211 + $0x954] sm:$0xf]
        %v883 = vld [vmem:[%s211 + $0x958] sm:$0xf]
        %v884 = vld [vmem:[%s211 + $0x95c] sm:$0xf]
        %v885 = vld [vmem:[%s211 + $0x960] sm:$0xf]
        %v886 = vld [vmem:[%s211 + $0x964] sm:$0xf]
        %v887 = vld [vmem:[%s211 + $0x968] sm:$0xf]
        %v888 = vld [vmem:[%s211 + $0x96c] sm:$0xf]
        %v889 = vld [vmem:[%s211 + $0x970] sm:$0xf]
        %v890 = vld [vmem:[%s211 + $0x974] sm:$0xf]
        %v891 = vld [vmem:[%s211 + $0x978] sm:$0xf]
        %v892 = vld [vmem:[%s211 + $0x97c] sm:$0xf]
        %v893 = vld [vmem:[%s211 + $0x980] sm:$0xf]
        %v894 = vld [vmem:[%s211 + $0x984] sm:$0xf]
        %v895 = vld [vmem:[%s211 + $0x988] sm:$0xf]
        %v896 = vld [vmem:[%s211 + $0x98c] sm:$0xf]
        %v897 = vld [vmem:[%s211 + $0x990] sm:$0xf]
        %v898 = vld [vmem:[%s211 + $0x994] sm:$0xf]
        %v899 = vld [vmem:[%s211 + $0x998] sm:$0xf]
        %v900 = vld [vmem:[%s211 + $0x99c] sm:$0xf]
        %v901 = vld [vmem:[%s211 + $0x9a0] sm:$0xf]
        %v902 = vld [vmem:[%s211 + $0x9a4] sm:$0xf]
        %v903 = vld [vmem:[%s211 + $0x9a8] sm:$0xf]
        %v904 = vld [vmem:[%s211 + $0x9ac] sm:$0xf]
        %v905 = vld [vmem:[%s211 + $0x9b0] sm:$0xf]
        %v906 = vld [vmem:[%s211 + $0x9b4] sm:$0xf]
        %v907 = vld [vmem:[%s211 + $0x9b8] sm:$0xf]
        %v908 = vld [vmem:[%s211 + $0x9bc] sm:$0xf]
        %v909 = vld [vmem:[%s211 + $0x9c0] sm:$0xf]
        %v910 = vld [vmem:[%s211 + $0x9c4] sm:$0xf]
        %v911 = vld [vmem:[%s211 + $0x9c8] sm:$0xf]
        %v912 = vld [vmem:[%s211 + $0x9cc] sm:$0xf]
        %v913 = vld [vmem:[%s211 + $0x9d0] sm:$0xf]
        %v914 = vld [vmem:[%s211 + $0x9d4] sm:$0xf]
        %v915 = vld [vmem:[%s211 + $0x9d8] sm:$0xf]
        %v916 = vld [vmem:[%s211 + $0x9dc] sm:$0xf]
        %v917 = vld [vmem:[%s211 + $0x9e0] sm:$0xf]
        %v918 = vld [vmem:[%s211 + $0x9e4] sm:$0xf]
        %v919 = vld [vmem:[%s211 + $0x9e8] sm:$0xf]
        %v920 = vld [vmem:[%s211 + $0x9ec] sm:$0xf]
        %v921 = vld [vmem:[%s211 + $0x9f0] sm:$0xf]
        %v922 = vld [vmem:[%s211 + $0x9f4] sm:$0xf]
        %v923 = vld [vmem:[%s211 + $0x9f8] sm:$0xf]
        %v924 = vld [vmem:[%s211 + $0x9fc] sm:$0xf]
        %v925 = vld [vmem:[%s211 + $0xa00] sm:$0xf]
        %v926 = vld [vmem:[%s211 + $0xa04] sm:$0xf]
        %v927 = vld [vmem:[%s211 + $0xa08] sm:$0xf]
        %v928 = vld [vmem:[%s211 + $0xa0c] sm:$0xf]
        %v929 = vld [vmem:[%s211 + $0xa10] sm:$0xf]
        %v930 = vld [vmem:[%s211 + $0xa14] sm:$0xf]
        %v931 = vld [vmem:[%s211 + $0xa18] sm:$0xf]
        %v932 = vld [vmem:[%s211 + $0xa1c] sm:$0xf]
        %v933 = vld [vmem:[%s211 + $0xa20] sm:$0xf]
        %v934 = vld [vmem:[%s211 + $0xa24] sm:$0xf]
        %v935 = vld [vmem:[%s211 + $0xa28] sm:$0xf]
        %v936 = vld [vmem:[%s211 + $0xa2c] sm:$0xf]
        %v937 = vld [vmem:[%s211 + $0xa30] sm:$0xf]
        %v938 = vld [vmem:[%s211 + $0xa34] sm:$0xf]
        %v939 = vld [vmem:[%s211 + $0xa38] sm:$0xf]
        %v940 = vld [vmem:[%s211 + $0xa3c] sm:$0xf]
        %v941 = vld [vmem:[%s211 + $0xa40] sm:$0xf]
        %v942 = vld [vmem:[%s211 + $0xa44] sm:$0xf]
        %v943 = vld [vmem:[%s211 + $0xa48] sm:$0xf]
        %v944 = vld [vmem:[%s211 + $0xa4c] sm:$0xf]
        %v945 = vld [vmem:[%s211 + $0xa50] sm:$0xf]
        %v946 = vld [vmem:[%s211 + $0xa54] sm:$0xf]
        %v947 = vld [vmem:[%s211 + $0xa58] sm:$0xf]
        %v948 = vld [vmem:[%s211 + $0xa5c] sm:$0xf]
        %v949 = vld [vmem:[%s211 + $0xa60] sm:$0xf]
        %v950 = vld [vmem:[%s211 + $0xa64] sm:$0xf]
        %v951 = vld [vmem:[%s211 + $0xa68] sm:$0xf]
        %v952 = vld [vmem:[%s211 + $0xa6c] sm:$0xf]
        %v953 = vld [vmem:[%s211 + $0xa70] sm:$0xf]
        %v954 = vld [vmem:[%s211 + $0xa74] sm:$0xf]
        %v955 = vld [vmem:[%s211 + $0xa78] sm:$0xf]
        %v956 = vld [vmem:[%s211 + $0xa7c] sm:$0xf]
        %v957 = vld [vmem:[%s211 + $0xa80] sm:$0xf]
        %v958 = vld [vmem:[%s211 + $0xa84] sm:$0xf]
        %v959 = vld [vmem:[%s211 + $0xa88] sm:$0xf]
        %v960 = vld [vmem:[%s211 + $0xa8c] sm:$0xf]
        %v961 = vld [vmem:[%s211 + $0xa90] sm:$0xf]
        %v962 = vld [vmem:[%s211 + $0xa94] sm:$0xf]
        %v963 = vld [vmem:[%s211 + $0xa98] sm:$0xf]
        %v964 = vld [vmem:[%s211 + $0xa9c] sm:$0xf]
        %v965 = vld [vmem:[%s211 + $0xaa0] sm:$0xf]
        %v966 = vld [vmem:[%s211 + $0xaa4] sm:$0xf]
        %v967 = vld [vmem:[%s211 + $0xaa8] sm:$0xf]
        %v968 = vld [vmem:[%s211 + $0xaac] sm:$0xf]
        %v969 = vld [vmem:[%s211 + $0xab0] sm:$0xf]
        %v970 = vld [vmem:[%s211 + $0xab4] sm:$0xf]
        %v971 = vld [vmem:[%s211 + $0xab8] sm:$0xf]
        %v972 = vld [vmem:[%s211 + $0xabc] sm:$0xf]
        %v973 = vld [vmem:[%s211 + $0xac0] sm:$0xf]
        %v974 = vld [vmem:[%s211 + $0xac4] sm:$0xf]
        %v975 = vld [vmem:[%s211 + $0xac8] sm:$0xf]
        %v976 = vld [vmem:[%s211 + $0xacc] sm:$0xf]
        %v977 = vld [vmem:[%s211 + $0xad0] sm:$0xf]
        %v978 = vld [vmem:[%s211 + $0xad4] sm:$0xf]
        %v979 = vld [vmem:[%s211 + $0xad8] sm:$0xf]
        %v980 = vld [vmem:[%s211 + $0xadc] sm:$0xf]
        %v981 = vld [vmem:[%s211 + $0xae0] sm:$0xf]
        %v982 = vld [vmem:[%s211 + $0xae4] sm:$0xf]
        %v983 = vld [vmem:[%s211 + $0xae8] sm:$0xf]
        %v984 = vld [vmem:[%s211 + $0xaec] sm:$0xf]
        %v985 = vld [vmem:[%s211 + $0xaf0] sm:$0xf]
        %v986 = vld [vmem:[%s211 + $0xaf4] sm:$0xf]
        %v987 = vld [vmem:[%s211 + $0xaf8] sm:$0xf]
        %v988 = vld [vmem:[%s211 + $0xafc] sm:$0xf]
        %v989 = vld [vmem:[%s211 + $0xb00] sm:$0xf]
        %v990 = vld [vmem:[%s211 + $0xb04] sm:$0xf]
        %v991 = vld [vmem:[%s211 + $0xb08] sm:$0xf]
        %v992 = vld [vmem:[%s211 + $0xb0c] sm:$0xf]
        %v993 = vld [vmem:[%s211 + $0xb10] sm:$0xf]
        %v994 = vld [vmem:[%s211 + $0xb14] sm:$0xf]
        %v995 = vld [vmem:[%s211 + $0xb18] sm:$0xf]
        %v996 = vld [vmem:[%s211 + $0xb1c] sm:$0xf]
        %v997 = vld [vmem:[%s211 + $0xb20] sm:$0xf]
        %v998 = vld [vmem:[%s211 + $0xb24] sm:$0xf]
        %v999 = vld [vmem:[%s211 + $0xb28] sm:$0xf]
        %v1000 = vld [vmem:[%s211 + $0xb2c] sm:$0xf]
        %v1001 = vld [vmem:[%s211 + $0xb30] sm:$0xf]
        %v1002 = vld [vmem:[%s211 + $0xb34] sm:$0xf]
        %v1003 = vld [vmem:[%s211 + $0xb38] sm:$0xf]
        %v1004 = vld [vmem:[%s211 + $0xb3c] sm:$0xf]
        %v1005 = vld [vmem:[%s211 + $0xb40] sm:$0xf]
        %v1006 = vld [vmem:[%s211 + $0xb44] sm:$0xf]
        %v1007 = vld [vmem:[%s211 + $0xb48] sm:$0xf]
        %v1008 = vld [vmem:[%s211 + $0xb4c] sm:$0xf]
        %v1009 = vld [vmem:[%s211 + $0xb50] sm:$0xf]
        %v1010 = vld [vmem:[%s211 + $0xb54] sm:$0xf]
        %v1011 = vld [vmem:[%s211 + $0xb58] sm:$0xf]
        %v1012 = vld [vmem:[%s211 + $0xb5c] sm:$0xf]
        %v1013 = vld [vmem:[%s211 + $0xb60] sm:$0xf]
        %v1014 = vld [vmem:[%s211 + $0xb64] sm:$0xf]
        %v1015 = vld [vmem:[%s211 + $0xb68] sm:$0xf]
        %v1016 = vld [vmem:[%s211 + $0xb6c] sm:$0xf]
        %v1017 = vld [vmem:[%s211 + $0xb70] sm:$0xf]
        %v1018 = vld [vmem:[%s211 + $0xb74] sm:$0xf]
        %v1019 = vld [vmem:[%s211 + $0xb78] sm:$0xf]
        %v1020 = vld [vmem:[%s211 + $0xb7c] sm:$0xf]
        %v1021 = vld [vmem:[%s211 + $0xb80] sm:$0xf]
        %v1022 = vld [vmem:[%s211 + $0xb84] sm:$0xf]
        %v1023 = vld [vmem:[%s211 + $0xb88] sm:$0xf]
        %v1024 = vld [vmem:[%s211 + $0xb8c] sm:$0xf]
        %v1025 = vld [vmem:[%s211 + $0xb90] sm:$0xf]
        %v1026 = vld [vmem:[%s211 + $0xb94] sm:$0xf]
        %v1027 = vld [vmem:[%s211 + $0xb98] sm:$0xf]
        %v1028 = vld [vmem:[%s211 + $0xb9c] sm:$0xf]
        %v1029 = vld [vmem:[%s211 + $0xba0] sm:$0xf]
        %v1030 = vld [vmem:[%s211 + $0xba4] sm:$0xf]
        %v1031 = vld [vmem:[%s211 + $0xba8] sm:$0xf]
        %v1032 = vld [vmem:[%s211 + $0xbac] sm:$0xf]
        %v1033 = vld [vmem:[%s211 + $0xbb0] sm:$0xf]
        %v1034 = vld [vmem:[%s211 + $0xbb4] sm:$0xf]
        %v1035 = vld [vmem:[%s211 + $0xbb8] sm:$0xf]
        %v1036 = vld [vmem:[%s211 + $0xbbc] sm:$0xf]
        %v1037 = vld [vmem:[%s211 + $0xbc0] sm:$0xf]
        %v1038 = vld [vmem:[%s211 + $0xbc4] sm:$0xf]
        %v1039 = vld [vmem:[%s211 + $0xbc8] sm:$0xf]
        %v1040 = vld [vmem:[%s211 + $0xbcc] sm:$0xf]
        %v1041 = vld [vmem:[%s211 + $0xbd0] sm:$0xf]
        %v1042 = vld [vmem:[%s211 + $0xbd4] sm:$0xf]
        %v1043 = vld [vmem:[%s211 + $0xbd8] sm:$0xf]
        %v1044 = vld [vmem:[%s211 + $0xbdc] sm:$0xf]
        %v1045 = vld [vmem:[%s211 + $0xbe0] sm:$0xf]
        %v1046 = vld [vmem:[%s211 + $0xbe4] sm:$0xf]
        %v1047 = vld [vmem:[%s211 + $0xbe8] sm:$0xf]
        %v1048 = vld [vmem:[%s211 + $0xbec] sm:$0xf]
        %v1049 = vld [vmem:[%s211 + $0xbf0] sm:$0xf]
        %v1050 = vld [vmem:[%s211 + $0xbf4] sm:$0xf]
        %v1051 = vld [vmem:[%s211 + $0xbf8] sm:$0xf]
        %v1052 = vld [vmem:[%s211 + $0xbfc] sm:$0xf]
        %v1053 = vld [vmem:[%s211 + $0xc00] sm:$0xf]
        %v1054 = vld [vmem:[%s211 + $0xc04] sm:$0xf]
        %v1055 = vld [vmem:[%s211 + $0xc08] sm:$0xf]
        %v1056 = vld [vmem:[%s211 + $0xc0c] sm:$0xf]
        %v1057 = vld [vmem:[%s211 + $0xc10] sm:$0xf]
        %v1058 = vld [vmem:[%s211 + $0xc14] sm:$0xf]
        %v1059 = vld [vmem:[%s211 + $0xc18] sm:$0xf]
        %v1060 = vld [vmem:[%s211 + $0xc1c] sm:$0xf]
        %v1061 = vld [vmem:[%s211 + $0xc20] sm:$0xf]
        %v1062 = vld [vmem:[%s211 + $0xc24] sm:$0xf]
        %v1063 = vld [vmem:[%s211 + $0xc28] sm:$0xf]
        %v1064 = vld [vmem:[%s211 + $0xc2c] sm:$0xf]
        %v1065 = vld [vmem:[%s211 + $0xc30] sm:$0xf]
        %v1066 = vld [vmem:[%s211 + $0xc34] sm:$0xf]
        %v1067 = vld [vmem:[%s211 + $0xc38] sm:$0xf]
        %v1068 = vld [vmem:[%s211 + $0xc3c] sm:$0xf]
        %v1069 = vld [vmem:[%s211 + $0xc40] sm:$0xf]
        %v1070 = vld [vmem:[%s211 + $0xc44] sm:$0xf]
        %v1071 = vld [vmem:[%s211 + $0xc48] sm:$0xf]
        %v1072 = vld [vmem:[%s211 + $0xc4c] sm:$0xf]
        %v1073 = vld [vmem:[%s211 + $0xc50] sm:$0xf]
        %v1074 = vld [vmem:[%s211 + $0xc54] sm:$0xf]
        %v1075 = vld [vmem:[%s211 + $0xc58] sm:$0xf]
        %v1076 = vld [vmem:[%s211 + $0xc5c] sm:$0xf]
        %v1077 = vld [vmem:[%s211 + $0xc60] sm:$0xf]
        %v1078 = vld [vmem:[%s211 + $0xc64] sm:$0xf]
        %v1079 = vld [vmem:[%s211 + $0xc68] sm:$0xf]
        %v1080 = vld [vmem:[%s211 + $0xc6c] sm:$0xf]
        %v1081 = vld [vmem:[%s211 + $0xc70] sm:$0xf]
        %v1082 = vld [vmem:[%s211 + $0xc74] sm:$0xf]
        %v1083 = vld [vmem:[%s211 + $0xc78] sm:$0xf]
        %v1084 = vld [vmem:[%s211 + $0xc7c] sm:$0xf]
        %v1085 = vld [vmem:[%s211 + $0xc80] sm:$0xf]
        %v1086 = vld [vmem:[%s211 + $0xc84] sm:$0xf]
        %v1087 = vld [vmem:[%s211 + $0xc88] sm:$0xf]
        %v1088 = vld [vmem:[%s211 + $0xc8c] sm:$0xf]
        %v1089 = vld [vmem:[%s211 + $0xc90] sm:$0xf]
        %v1090 = vld [vmem:[%s211 + $0xc94] sm:$0xf]
        %v1091 = vld [vmem:[%s211 + $0xc98] sm:$0xf]
        %v1092 = vld [vmem:[%s211 + $0xc9c] sm:$0xf]
        %v1093 = vld [vmem:[%s211 + $0xca0] sm:$0xf]
        %v1094 = vld [vmem:[%s211 + $0xca4] sm:$0xf]
        %v1095 = vld [vmem:[%s211 + $0xca8] sm:$0xf]
        %v1096 = vld [vmem:[%s211 + $0xcac] sm:$0xf]
        %v1097 = vld [vmem:[%s211 + $0xcb0] sm:$0xf]
        %v1098 = vld [vmem:[%s211 + $0xcb4] sm:$0xf]
        %v1099 = vld [vmem:[%s211 + $0xcb8] sm:$0xf]
        %v1100 = vld [vmem:[%s211 + $0xcbc] sm:$0xf]
        %v1101 = vld [vmem:[%s211 + $0xcc0] sm:$0xf]
        %v1102 = vld [vmem:[%s211 + $0xcc4] sm:$0xf]
        %v1103 = vld [vmem:[%s211 + $0xcc8] sm:$0xf]
        %v1104 = vld [vmem:[%s211 + $0xccc] sm:$0xf]
        %v1105 = vld [vmem:[%s211 + $0xcd0] sm:$0xf]
        %v1106 = vld [vmem:[%s211 + $0xcd4] sm:$0xf]
        %v1107 = vld [vmem:[%s211 + $0xcd8] sm:$0xf]
        %v1108 = vld [vmem:[%s211 + $0xcdc] sm:$0xf]
        %v1109 = vld [vmem:[%s211 + $0xce0] sm:$0xf]
        %v1110 = vld [vmem:[%s211 + $0xce4] sm:$0xf]
        %v1111 = vld [vmem:[%s211 + $0xce8] sm:$0xf]
        %v1112 = vld [vmem:[%s211 + $0xcec] sm:$0xf]
        %v1113 = vld [vmem:[%s211 + $0xcf0] sm:$0xf]
        %v1114 = vld [vmem:[%s211 + $0xcf4] sm:$0xf]
        %v1115 = vld [vmem:[%s211 + $0xcf8] sm:$0xf]
        %v1116 = vld [vmem:[%s211 + $0xcfc] sm:$0xf]
        %v1117 = vld [vmem:[%s211 + $0xd00] sm:$0xf]
        %v1118 = vld [vmem:[%s211 + $0xd04] sm:$0xf]
        %v1119 = vld [vmem:[%s211 + $0xd08] sm:$0xf]
        %v1120 = vld [vmem:[%s211 + $0xd0c] sm:$0xf]
        %v1121 = vld [vmem:[%s211 + $0xd10] sm:$0xf]
        %v1122 = vld [vmem:[%s211 + $0xd14] sm:$0xf]
        %v1123 = vld [vmem:[%s211 + $0xd18] sm:$0xf]
        %v1124 = vld [vmem:[%s211 + $0xd1c] sm:$0xf]
        %v1125 = vld [vmem:[%s211 + $0xd20] sm:$0xf]
        %v1126 = vld [vmem:[%s211 + $0xd24] sm:$0xf]
        %v1127 = vld [vmem:[%s211 + $0xd28] sm:$0xf]
        %v1128 = vld [vmem:[%s211 + $0xd2c] sm:$0xf]
        %v1129 = vld [vmem:[%s211 + $0xd30] sm:$0xf]
        %v1130 = vld [vmem:[%s211 + $0xd34] sm:$0xf]
        %v1131 = vld [vmem:[%s211 + $0xd38] sm:$0xf]
        %v1132 = vld [vmem:[%s211 + $0xd3c] sm:$0xf]
        %v1133 = vld [vmem:[%s211 + $0xd40] sm:$0xf]
        %v1134 = vld [vmem:[%s211 + $0xd44] sm:$0xf]
        %v1135 = vld [vmem:[%s211 + $0xd48] sm:$0xf]
        %v1136 = vld [vmem:[%s211 + $0xd4c] sm:$0xf]
        %v1137 = vld [vmem:[%s211 + $0xd50] sm:$0xf]
        %v1138 = vld [vmem:[%s211 + $0xd54] sm:$0xf]
        %v1139 = vld [vmem:[%s211 + $0xd58] sm:$0xf]
        %v1140 = vld [vmem:[%s211 + $0xd5c] sm:$0xf]
        %v1141 = vld [vmem:[%s211 + $0xd60] sm:$0xf]
        %v1142 = vld [vmem:[%s211 + $0xd64] sm:$0xf]
        %v1143 = vld [vmem:[%s211 + $0xd68] sm:$0xf]
        %v1144 = vld [vmem:[%s211 + $0xd6c] sm:$0xf]
        %v1145 = vld [vmem:[%s211 + $0xd70] sm:$0xf]
        %v1146 = vld [vmem:[%s211 + $0xd74] sm:$0xf]
        %v1147 = vld [vmem:[%s211 + $0xd78] sm:$0xf]
        %v1148 = vld [vmem:[%s211 + $0xd7c] sm:$0xf]
        %v1149 = vld [vmem:[%s211 + $0xd80] sm:$0xf]
        %v1150 = vld [vmem:[%s211 + $0xd84] sm:$0xf]
        %v1151 = vld [vmem:[%s211 + $0xd88] sm:$0xf]
        %v1152 = vld [vmem:[%s211 + $0xd8c] sm:$0xf]
        %v1153 = vld [vmem:[%s211 + $0xd90] sm:$0xf]
        %v1154 = vld [vmem:[%s211 + $0xd94] sm:$0xf]
        %v1155 = vld [vmem:[%s211 + $0xd98] sm:$0xf]
        %v1156 = vld [vmem:[%s211 + $0xd9c] sm:$0xf]
        %v1157 = vld [vmem:[%s211 + $0xda0] sm:$0xf]
        %v1158 = vld [vmem:[%s211 + $0xda4] sm:$0xf]
        %v1159 = vld [vmem:[%s211 + $0xda8] sm:$0xf]
        %v1160 = vld [vmem:[%s211 + $0xdac] sm:$0xf]
        %v1161 = vld [vmem:[%s211 + $0xdb0] sm:$0xf]
        %v1162 = vld [vmem:[%s211 + $0xdb4] sm:$0xf]
        %v1163 = vld [vmem:[%s211 + $0xdb8] sm:$0xf]
        %v1164 = vld [vmem:[%s211 + $0xdbc] sm:$0xf]
        %v1165 = vld [vmem:[%s211 + $0xdc0] sm:$0xf]
        %v1166 = vld [vmem:[%s211 + $0xdc4] sm:$0xf]
        %v1167 = vld [vmem:[%s211 + $0xdc8] sm:$0xf]
        %v1168 = vld [vmem:[%s211 + $0xdcc] sm:$0xf]
        %v1169 = vld [vmem:[%s211 + $0xdd0] sm:$0xf]
        %v1170 = vld [vmem:[%s211 + $0xdd4] sm:$0xf]
        %v1171 = vld [vmem:[%s211 + $0xdd8] sm:$0xf]
        %v1172 = vld [vmem:[%s211 + $0xddc] sm:$0xf]
        %v1173 = vld [vmem:[%s211 + $0xde0] sm:$0xf]
        %v1174 = vld [vmem:[%s211 + $0xde4] sm:$0xf]
        %v1175 = vld [vmem:[%s211 + $0xde8] sm:$0xf]
        %v1176 = vld [vmem:[%s211 + $0xdec] sm:$0xf]
        %v1177 = vld [vmem:[%s211 + $0xdf0] sm:$0xf]
        %v1178 = vld [vmem:[%s211 + $0xdf4] sm:$0xf]
        %v1179 = vld [vmem:[%s211 + $0xdf8] sm:$0xf]
        %v1180 = vld [vmem:[%s211 + $0xdfc] sm:$0xf]
        %v1181 = vld [vmem:[%s211 + $0xe00] sm:$0xf]
        %v1182 = vld [vmem:[%s211 + $0xe04] sm:$0xf]
        %v1183 = vld [vmem:[%s211 + $0xe08] sm:$0xf]
        %v1184 = vld [vmem:[%s211 + $0xe0c] sm:$0xf]
        %v1185 = vld [vmem:[%s211 + $0xe10] sm:$0xf]
        %v1186 = vld [vmem:[%s211 + $0xe14] sm:$0xf]
        %v1187 = vld [vmem:[%s211 + $0xe18] sm:$0xf]
        %v1188 = vld [vmem:[%s211 + $0xe1c] sm:$0xf]
        %v1189 = vld [vmem:[%s211 + $0xe20] sm:$0xf]
        %v1190 = vld [vmem:[%s211 + $0xe24] sm:$0xf]
        %v1191 = vld [vmem:[%s211 + $0xe28] sm:$0xf]
        %v1192 = vld [vmem:[%s211 + $0xe2c] sm:$0xf]
        %v1193 = vld [vmem:[%s211 + $0xe30] sm:$0xf]
        %v1194 = vld [vmem:[%s211 + $0xe34] sm:$0xf]
        %v1195 = vld [vmem:[%s211 + $0xe38] sm:$0xf]
        %v1196 = vld [vmem:[%s211 + $0xe3c] sm:$0xf]
        %v1197 = vld [vmem:[%s211 + $0xe40] sm:$0xf]
        %v1198 = vld [vmem:[%s211 + $0xe44] sm:$0xf]
        %v1199 = vld [vmem:[%s211 + $0xe48] sm:$0xf]
        %v1200 = vld [vmem:[%s211 + $0xe4c] sm:$0xf]
        %v1201 = vld [vmem:[%s211 + $0xe50] sm:$0xf]
        %v1202 = vld [vmem:[%s211 + $0xe54] sm:$0xf]
        %v1203 = vld [vmem:[%s211 + $0xe58] sm:$0xf]
        %v1204 = vld [vmem:[%s211 + $0xe5c] sm:$0xf]
        %v1205 = vld [vmem:[%s211 + $0xe60] sm:$0xf]
        %v1206 = vld [vmem:[%s211 + $0xe64] sm:$0xf]
        %v1207 = vld [vmem:[%s211 + $0xe68] sm:$0xf]
        %v1208 = vld [vmem:[%s211 + $0xe6c] sm:$0xf]
        %v1209 = vld [vmem:[%s211 + $0xe70] sm:$0xf]
        %v1210 = vld [vmem:[%s211 + $0xe74] sm:$0xf]
        %v1211 = vld [vmem:[%s211 + $0xe78] sm:$0xf]
        %v1212 = vld [vmem:[%s211 + $0xe7c] sm:$0xf]
        %v1213 = vld [vmem:[%s211 + $0xe80] sm:$0xf]
        %v1214 = vld [vmem:[%s211 + $0xe84] sm:$0xf]
        %v1215 = vld [vmem:[%s211 + $0xe88] sm:$0xf]
        %v1216 = vld [vmem:[%s211 + $0xe8c] sm:$0xf]
        %v1217 = vld [vmem:[%s211 + $0xe90] sm:$0xf]
        %v1218 = vld [vmem:[%s211 + $0xe94] sm:$0xf]
        %v1219 = vld [vmem:[%s211 + $0xe98] sm:$0xf]
        %v1220 = vld [vmem:[%s211 + $0xe9c] sm:$0xf]
        %v1221 = vld [vmem:[%s211 + $0xea0] sm:$0xf]
        %v1222 = vld [vmem:[%s211 + $0xea4] sm:$0xf]
        %v1223 = vld [vmem:[%s211 + $0xea8] sm:$0xf]
        %v1224 = vld [vmem:[%s211 + $0xeac] sm:$0xf]
        %v1225 = vld [vmem:[%s211 + $0xeb0] sm:$0xf]
        %v1226 = vld [vmem:[%s211 + $0xeb4] sm:$0xf]
        %v1227 = vld [vmem:[%s211 + $0xeb8] sm:$0xf]
        %v1228 = vld [vmem:[%s211 + $0xebc] sm:$0xf]
        %v1229 = vld [vmem:[%s211 + $0xec0] sm:$0xf]
        %v1230 = vld [vmem:[%s211 + $0xec4] sm:$0xf]
        %v1231 = vld [vmem:[%s211 + $0xec8] sm:$0xf]
        %v1232 = vld [vmem:[%s211 + $0xecc] sm:$0xf]
        %v1233 = vld [vmem:[%s211 + $0xed0] sm:$0xf]
        %v1234 = vld [vmem:[%s211 + $0xed4] sm:$0xf]
        %v1235 = vld [vmem:[%s211 + $0xed8] sm:$0xf]
        %v1236 = vld [vmem:[%s211 + $0xedc] sm:$0xf]
        %v1237 = vld [vmem:[%s211 + $0xee0] sm:$0xf]
        %v1238 = vld [vmem:[%s211 + $0xee4] sm:$0xf]
        %v1239 = vld [vmem:[%s211 + $0xee8] sm:$0xf]
        %v1240 = vld [vmem:[%s211 + $0xeec] sm:$0xf]
        %v1241 = vld [vmem:[%s211 + $0xef0] sm:$0xf]
        %v1242 = vld [vmem:[%s211 + $0xef4] sm:$0xf]
        %v1243 = vld [vmem:[%s211 + $0xef8] sm:$0xf]
        %v1244 = vld [vmem:[%s211 + $0xefc] sm:$0xf]
        %v1245 = vld [vmem:[%s211 + $0xf00] sm:$0xf]
        %v1246 = vld [vmem:[%s211 + $0xf04] sm:$0xf]
        %v1247 = vld [vmem:[%s211 + $0xf08] sm:$0xf]
        %v1248 = vld [vmem:[%s211 + $0xf0c] sm:$0xf]
        %v1249 = vld [vmem:[%s211 + $0xf10] sm:$0xf]
        %v1250 = vld [vmem:[%s211 + $0xf14] sm:$0xf]
        %v1251 = vld [vmem:[%s211 + $0xf18] sm:$0xf]
        %v1252 = vld [vmem:[%s211 + $0xf1c] sm:$0xf]
        %v1253 = vld [vmem:[%s211 + $0xf20] sm:$0xf]
        %v1254 = vld [vmem:[%s211 + $0xf24] sm:$0xf]
        %v1255 = vld [vmem:[%s211 + $0xf28] sm:$0xf]
        %v1256 = vld [vmem:[%s211 + $0xf2c] sm:$0xf]
        %v1257 = vld [vmem:[%s211 + $0xf30] sm:$0xf]
        %v1258 = vld [vmem:[%s211 + $0xf34] sm:$0xf]
        %v1259 = vld [vmem:[%s211 + $0xf38] sm:$0xf]
        %v1260 = vld [vmem:[%s211 + $0xf3c] sm:$0xf]
        %v1261 = vld [vmem:[%s211 + $0xf40] sm:$0xf]
        %v1262 = vld [vmem:[%s211 + $0xf44] sm:$0xf]
        %v1263 = vld [vmem:[%s211 + $0xf48] sm:$0xf]
        %v1264 = vld [vmem:[%s211 + $0xf4c] sm:$0xf]
        %v1265 = vld [vmem:[%s211 + $0xf50] sm:$0xf]
        %v1266 = vld [vmem:[%s211 + $0xf54] sm:$0xf]
        %v1267 = vld [vmem:[%s211 + $0xf58] sm:$0xf]
        %v1268 = vld [vmem:[%s211 + $0xf5c] sm:$0xf]
        %v1269 = vld [vmem:[%s211 + $0xf60] sm:$0xf]
        %v1270 = vld [vmem:[%s211 + $0xf64] sm:$0xf]
        %v1271 = vld [vmem:[%s211 + $0xf68] sm:$0xf]
        %v1272 = vld [vmem:[%s211 + $0xf6c] sm:$0xf]
        %v1273 = vld [vmem:[%s211 + $0xf70] sm:$0xf]
        %v1274 = vld [vmem:[%s211 + $0xf74] sm:$0xf]
        %v1275 = vld [vmem:[%s211 + $0xf78] sm:$0xf]
        %v1276 = vld [vmem:[%s211 + $0xf7c] sm:$0xf]
        %v1277 = vld [vmem:[%s211 + $0xf80] sm:$0xf]
        %v1278 = vld [vmem:[%s211 + $0xf84] sm:$0xf]
        %v1279 = vld [vmem:[%s211 + $0xf88] sm:$0xf]
        %v1280 = vld [vmem:[%s211 + $0xf8c] sm:$0xf]
        %v1281 = vld [vmem:[%s211 + $0xf90] sm:$0xf]
        %v1282 = vld [vmem:[%s211 + $0xf94] sm:$0xf]
        %v1283 = vld [vmem:[%s211 + $0xf98] sm:$0xf]
        %v1284 = vld [vmem:[%s211 + $0xf9c] sm:$0xf]
        %v1285 = vld [vmem:[%s211 + $0xfa0] sm:$0xf]
        %v1286 = vld [vmem:[%s211 + $0xfa4] sm:$0xf]
        %v1287 = vld [vmem:[%s211 + $0xfa8] sm:$0xf]
        %v1288 = vld [vmem:[%s211 + $0xfac] sm:$0xf]
        %v1289 = vld [vmem:[%s211 + $0xfb0] sm:$0xf]
        %v1290 = vld [vmem:[%s211 + $0xfb4] sm:$0xf]
        %v1291 = vld [vmem:[%s211 + $0xfb8] sm:$0xf]
        %v1292 = vld [vmem:[%s211 + $0xfbc] sm:$0xf]
        %v1293 = vld [vmem:[%s211 + $0xfc0] sm:$0xf]
        %v1294 = vld [vmem:[%s211 + $0xfc4] sm:$0xf]
        %v1295 = vld [vmem:[%s211 + $0xfc8] sm:$0xf]
        %v1296 = vld [vmem:[%s211 + $0xfcc] sm:$0xf]
        %v1297 = vld [vmem:[%s211 + $0xfd0] sm:$0xf]
        %v1298 = vld [vmem:[%s211 + $0xfd4] sm:$0xf]
        %v1299 = vld [vmem:[%s211 + $0xfd8] sm:$0xf]
        %v1300 = vld [vmem:[%s211 + $0xfdc] sm:$0xf]
        %v1301 = vld [vmem:[%s211 + $0xfe0] sm:$0xf]
        %v1302 = vld [vmem:[%s211 + $0xfe4] sm:$0xf]
        %v1303 = vld [vmem:[%s211 + $0xfe8] sm:$0xf]
        %v1304 = vld [vmem:[%s211 + $0xfec] sm:$0xf]
        %v1305 = vld [vmem:[%s211 + $0xff0] sm:$0xf]
        %v1306 = vld [vmem:[%s211 + $0xff4] sm:$0xf]
        %v1307 = vld [vmem:[%s211 + $0xff8] sm:$0xf]
        %v1308 = vld [vmem:[%s211 + $0xffc] sm:$0xf]
        %v1309 = vld [vmem:[%s211 + $0x1000] sm:$0xf]
        %v1310 = vld [vmem:[%s211 + $0x1004] sm:$0xf]
        %v1311 = vld [vmem:[%s211 + $0x1008] sm:$0xf]
        %v1312 = vld [vmem:[%s211 + $0x100c] sm:$0xf]
        %v1313 = vld [vmem:[%s211 + $0x1010] sm:$0xf]
        %v1314 = vld [vmem:[%s211 + $0x1014] sm:$0xf]
        %v1315 = vld [vmem:[%s211 + $0x1018] sm:$0xf]
        %v1316 = vld [vmem:[%s211 + $0x101c] sm:$0xf]
        %v1317 = vld [vmem:[%s211 + $0x1020] sm:$0xf]
        %v1318 = vld [vmem:[%s211 + $0x1024] sm:$0xf]
        %v1319 = vld [vmem:[%s211 + $0x1028] sm:$0xf]
        %v1320 = vld [vmem:[%s211 + $0x102c] sm:$0xf]
        %v1321 = vld [vmem:[%s211 + $0x1030] sm:$0xf]
        %v1322 = vld [vmem:[%s211 + $0x1034] sm:$0xf]
        %v1323 = vld [vmem:[%s211 + $0x1038] sm:$0xf]
        %v1324 = vld [vmem:[%s211 + $0x103c] sm:$0xf]
        %v1325 = vld [vmem:[%s211 + $0x1040] sm:$0xf]
        %v1326 = vld [vmem:[%s211 + $0x1044] sm:$0xf]
        %v1327 = vld [vmem:[%s211 + $0x1048] sm:$0xf]
        %v1328 = vld [vmem:[%s211 + $0x104c] sm:$0xf]
        %v1329 = vld [vmem:[%s211 + $0x1050] sm:$0xf]
        %v1330 = vld [vmem:[%s211 + $0x1054] sm:$0xf]
        %v1331 = vld [vmem:[%s211 + $0x1058] sm:$0xf]
        %v1332 = vld [vmem:[%s211 + $0x105c] sm:$0xf]
        %v1333 = vld [vmem:[%s211 + $0x1060] sm:$0xf]
        %v1334 = vld [vmem:[%s211 + $0x1064] sm:$0xf]
        %v1335 = vld [vmem:[%s211 + $0x1068] sm:$0xf]
        %v1336 = vld [vmem:[%s211 + $0x106c] sm:$0xf]
        %v1337 = vld [vmem:[%s211 + $0x1070] sm:$0xf]
        %v1338 = vld [vmem:[%s211 + $0x1074] sm:$0xf]
        %v1339 = vld [vmem:[%s211 + $0x1078] sm:$0xf]
        %v1340 = vld [vmem:[%s211 + $0x107c] sm:$0xf]
        %v1341 = vld [vmem:[%s211 + $0x1080] sm:$0xf]
        %v1342 = vld [vmem:[%s211 + $0x1084] sm:$0xf]
        %v1343 = vld [vmem:[%s211 + $0x1088] sm:$0xf]
        %v1344 = vld [vmem:[%s211 + $0x108c] sm:$0xf]
        %v1345 = vld [vmem:[%s211 + $0x1090] sm:$0xf]
        %v1346 = vld [vmem:[%s211 + $0x1094] sm:$0xf]
        %v1347 = vld [vmem:[%s211 + $0x1098] sm:$0xf]
        %v1348 = vld [vmem:[%s211 + $0x109c] sm:$0xf]
        %v1349 = vld [vmem:[%s211 + $0x10a0] sm:$0xf]
        %v1350 = vld [vmem:[%s211 + $0x10a4] sm:$0xf]
        %v1351 = vld [vmem:[%s211 + $0x10a8] sm:$0xf]
        %v1352 = vld [vmem:[%s211 + $0x10ac] sm:$0xf]
        %v1353 = vld [vmem:[%s211 + $0x10b0] sm:$0xf]
        %v1354 = vld [vmem:[%s211 + $0x10b4] sm:$0xf]
        %v1355 = vld [vmem:[%s211 + $0x10b8] sm:$0xf]
        %v1356 = vld [vmem:[%s211 + $0x10bc] sm:$0xf]
        %v1357 = vld [vmem:[%s211 + $0x10c0] sm:$0xf]
        %v1358 = vld [vmem:[%s211 + $0x10c4] sm:$0xf]
        %v1359 = vld [vmem:[%s211 + $0x10c8] sm:$0xf]
        %v1360 = vld [vmem:[%s211 + $0x10cc] sm:$0xf]
        %v1361 = vld [vmem:[%s211 + $0x10d0] sm:$0xf]
        %v1362 = vld [vmem:[%s211 + $0x10d4] sm:$0xf]
        %v1363 = vld [vmem:[%s211 + $0x10d8] sm:$0xf]
        %v1364 = vld [vmem:[%s211 + $0x10dc] sm:$0xf]
        %v1365 = vld [vmem:[%s211 + $0x10e0] sm:$0xf]
        %v1366 = vld [vmem:[%s211 + $0x10e4] sm:$0xf]
        %v1367 = vld [vmem:[%s211 + $0x10e8] sm:$0xf]
        %v1368 = vld [vmem:[%s211 + $0x10ec] sm:$0xf]
        %v1369 = vld [vmem:[%s211 + $0x10f0] sm:$0xf]
        %v1370 = vld [vmem:[%s211 + $0x10f4] sm:$0xf]
        %v1371 = vld [vmem:[%s211 + $0x10f8] sm:$0xf]
        %v1372 = vld [vmem:[%s211 + $0x10fc] sm:$0xf]
        %v1373 = vld [vmem:[%s211 + $0x1100] sm:$0xf]
        %v1374 = vld [vmem:[%s211 + $0x1104] sm:$0xf]
        %v1375 = vld [vmem:[%s211 + $0x1108] sm:$0xf]
        %v1376 = vld [vmem:[%s211 + $0x110c] sm:$0xf]
        %v1377 = vld [vmem:[%s211 + $0x1110] sm:$0xf]
        %v1378 = vld [vmem:[%s211 + $0x1114] sm:$0xf]
        %v1379 = vld [vmem:[%s211 + $0x1118] sm:$0xf]
        %v1380 = vld [vmem:[%s211 + $0x111c] sm:$0xf]
        %v1381 = vld [vmem:[%s211 + $0x1120] sm:$0xf]
        %v1382 = vld [vmem:[%s211 + $0x1124] sm:$0xf]
        %v1383 = vld [vmem:[%s211 + $0x1128] sm:$0xf]
        %v1384 = vld [vmem:[%s211 + $0x112c] sm:$0xf]
        %v1385 = vld [vmem:[%s211 + $0x1130] sm:$0xf]
        %v1386 = vld [vmem:[%s211 + $0x1134] sm:$0xf]
        %v1387 = vld [vmem:[%s211 + $0x1138] sm:$0xf]
        %v1388 = vld [vmem:[%s211 + $0x113c] sm:$0xf]
        %v1389 = vld [vmem:[%s211 + $0x1140] sm:$0xf]
        %v1390 = vld [vmem:[%s211 + $0x1144] sm:$0xf]
        %v1391 = vld [vmem:[%s211 + $0x1148] sm:$0xf]
        %v1392 = vld [vmem:[%s211 + $0x114c] sm:$0xf]
        %v1393 = vld [vmem:[%s211 + $0x1150] sm:$0xf]
        %v1394 = vld [vmem:[%s211 + $0x1154] sm:$0xf]
        %v1395 = vld [vmem:[%s211 + $0x1158] sm:$0xf]
        %v1396 = vld [vmem:[%s211 + $0x115c] sm:$0xf]
        %v1397 = vld [vmem:[%s211 + $0x1160] sm:$0xf]
        %v1398 = vld [vmem:[%s211 + $0x1164] sm:$0xf]
        %v1399 = vld [vmem:[%s211 + $0x1168] sm:$0xf]
        %v1400 = vld [vmem:[%s211 + $0x116c] sm:$0xf]
        %v1401 = vld [vmem:[%s211 + $0x1170] sm:$0xf]
        %v1402 = vld [vmem:[%s211 + $0x1174] sm:$0xf]
        %v1403 = vld [vmem:[%s211 + $0x1178] sm:$0xf]
        %v1404 = vld [vmem:[%s211 + $0x117c] sm:$0xf]
        %v1405 = vld [vmem:[%s211 + $0x1180] sm:$0xf]
        %v1406 = vld [vmem:[%s211 + $0x1184] sm:$0xf]
        %v1407 = vld [vmem:[%s211 + $0x1188] sm:$0xf]
        %v1408 = vld [vmem:[%s211 + $0x118c] sm:$0xf]
        %v1409 = vld [vmem:[%s211 + $0x1190] sm:$0xf]
        %v1410 = vld [vmem:[%s211 + $0x1194] sm:$0xf]
        %v1411 = vld [vmem:[%s211 + $0x1198] sm:$0xf]
        %v1412 = vld [vmem:[%s211 + $0x119c] sm:$0xf]
        %v1413 = vld [vmem:[%s211 + $0x11a0] sm:$0xf]
        %v1414 = vld [vmem:[%s211 + $0x11a4] sm:$0xf]
        %v1415 = vld [vmem:[%s211 + $0x11a8] sm:$0xf]
        %v1416 = vld [vmem:[%s211 + $0x11ac] sm:$0xf]
        %v1417 = vld [vmem:[%s211 + $0x11b0] sm:$0xf]
        %v1418 = vld [vmem:[%s211 + $0x11b4] sm:$0xf]
        %v1419 = vld [vmem:[%s211 + $0x11b8] sm:$0xf]
        %v1420 = vld [vmem:[%s211 + $0x11bc] sm:$0xf]
        %v1421 = vld [vmem:[%s211 + $0x11c0] sm:$0xf]
        %v1422 = vld [vmem:[%s211 + $0x11c4] sm:$0xf]
        %v1423 = vld [vmem:[%s211 + $0x11c8] sm:$0xf]
        %v1424 = vld [vmem:[%s211 + $0x11cc] sm:$0xf]
        %v1425 = vld [vmem:[%s211 + $0x11d0] sm:$0xf]
        %v1426 = vld [vmem:[%s211 + $0x11d4] sm:$0xf]
        %v1427 = vld [vmem:[%s211 + $0x11d8] sm:$0xf]
        %v1428 = vld [vmem:[%s211 + $0x11dc] sm:$0xf]
        %v1429 = vld [vmem:[%s211 + $0x11e0] sm:$0xf]
        %v1430 = vld [vmem:[%s211 + $0x11e4] sm:$0xf]
        %v1431 = vld [vmem:[%s211 + $0x11e8] sm:$0xf]
        %v1432 = vld [vmem:[%s211 + $0x11ec] sm:$0xf]
        %v1433 = vld [vmem:[%s211 + $0x11f0] sm:$0xf]
        %v1434 = vld [vmem:[%s211 + $0x11f4] sm:$0xf]
        %v1435 = vld [vmem:[%s211 + $0x11f8] sm:$0xf]
        %v1436 = vld [vmem:[%s211 + $0x11fc] sm:$0xf]
        %v1437 = vld [vmem:[%s211 + $0x1200] sm:$0xf]
        %v1438 = vld [vmem:[%s211 + $0x1204] sm:$0xf]
        %v1439 = vld [vmem:[%s211 + $0x1208] sm:$0xf]
        %v1440 = vld [vmem:[%s211 + $0x120c] sm:$0xf]
        %v1441 = vld [vmem:[%s211 + $0x1210] sm:$0xf]
        %v1442 = vld [vmem:[%s211 + $0x1214] sm:$0xf]
        %v1443 = vld [vmem:[%s211 + $0x1218] sm:$0xf]
        %v1444 = vld [vmem:[%s211 + $0x121c] sm:$0xf]
        %v1445 = vld [vmem:[%s211 + $0x1220] sm:$0xf]
        %v1446 = vld [vmem:[%s211 + $0x1224] sm:$0xf]
        %v1447 = vld [vmem:[%s211 + $0x1228] sm:$0xf]
        %v1448 = vld [vmem:[%s211 + $0x122c] sm:$0xf]
        %v1449 = vld [vmem:[%s211 + $0x1230] sm:$0xf]
        %v1450 = vld [vmem:[%s211 + $0x1234] sm:$0xf]
        %v1451 = vld [vmem:[%s211 + $0x1238] sm:$0xf]
        %v1452 = vld [vmem:[%s211 + $0x123c] sm:$0xf]
        %v1453 = vld [vmem:[%s211 + $0x1240] sm:$0xf]
        %v1454 = vld [vmem:[%s211 + $0x1244] sm:$0xf]
        %v1455 = vld [vmem:[%s211 + $0x1248] sm:$0xf]
        %v1456 = vld [vmem:[%s211 + $0x124c] sm:$0xf]
        %v1457 = vld [vmem:[%s211 + $0x1250] sm:$0xf]
        %v1458 = vld [vmem:[%s211 + $0x1254] sm:$0xf]
        %v1459 = vld [vmem:[%s211 + $0x1258] sm:$0xf]
        %v1460 = vld [vmem:[%s211 + $0x125c] sm:$0xf]
        %v1461 = vld [vmem:[%s211 + $0x1260] sm:$0xf]
        %v1462 = vld [vmem:[%s211 + $0x1264] sm:$0xf]
        %v1463 = vld [vmem:[%s211 + $0x1268] sm:$0xf]
        %v1464 = vld [vmem:[%s211 + $0x126c] sm:$0xf]
        %v1465 = vld [vmem:[%s211 + $0x1270] sm:$0xf]
        %v1466 = vld [vmem:[%s211 + $0x1274] sm:$0xf]
        %v1467 = vld [vmem:[%s211 + $0x1278] sm:$0xf]
        %v1468 = vld [vmem:[%s211 + $0x127c] sm:$0xf]
        %v1469 = vld [vmem:[%s211 + $0x1280] sm:$0xf]
        %v1470 = vld [vmem:[%s211 + $0x1284] sm:$0xf]
        %v1471 = vld [vmem:[%s211 + $0x1288] sm:$0xf]
        %v1472 = vld [vmem:[%s211 + $0x128c] sm:$0xf]
        %v1473 = vld [vmem:[%s211 + $0x1290] sm:$0xf]
        %v1474 = vld [vmem:[%s211 + $0x1294] sm:$0xf]
        %v1475 = vld [vmem:[%s211 + $0x1298] sm:$0xf]
        %v1476 = vld [vmem:[%s211 + $0x129c] sm:$0xf]
        %v1477 = vld [vmem:[%s211 + $0x12a0] sm:$0xf]
        %v1478 = vld [vmem:[%s211 + $0x12a4] sm:$0xf]
        %v1479 = vld [vmem:[%s211 + $0x12a8] sm:$0xf]
        %v1480 = vld [vmem:[%s211 + $0x12ac] sm:$0xf]
        %v1481 = vld [vmem:[%s211 + $0x12b0] sm:$0xf]
        %v1482 = vld [vmem:[%s211 + $0x12b4] sm:$0xf]
        %v1483 = vld [vmem:[%s211 + $0x12b8] sm:$0xf]
        %v1484 = vld [vmem:[%s211 + $0x12bc] sm:$0xf]
        %v1485 = vld [vmem:[%s211 + $0x12c0] sm:$0xf]
        %v1486 = vld [vmem:[%s211 + $0x12c4] sm:$0xf]
        %v1487 = vld [vmem:[%s211 + $0x12c8] sm:$0xf]
        %v1488 = vld [vmem:[%s211 + $0x12cc] sm:$0xf]
        %v1489 = vld [vmem:[%s211 + $0x12d0] sm:$0xf]
        %v1490 = vld [vmem:[%s211 + $0x12d4] sm:$0xf]
        %v1491 = vld [vmem:[%s211 + $0x12d8] sm:$0xf]
        %v1492 = vld [vmem:[%s211 + $0x12dc] sm:$0xf]
        %v1493 = vld [vmem:[%s211 + $0x12e0] sm:$0xf]
        %v1494 = vld [vmem:[%s211 + $0x12e4] sm:$0xf]
        %v1495 = vld [vmem:[%s211 + $0x12e8] sm:$0xf]
        %v1496 = vld [vmem:[%s211 + $0x12ec] sm:$0xf]
        %v1497 = vld [vmem:[%s211 + $0x12f0] sm:$0xf]
        %v1498 = vld [vmem:[%s211 + $0x12f4] sm:$0xf]
        %v1499 = vld [vmem:[%s211 + $0x12f8] sm:$0xf]
        %v1500 = vld [vmem:[%s211 + $0x12fc] sm:$0xf]
        %v1501 = vld [vmem:[%s211 + $0x1300] sm:$0xf]
        %v1502 = vld [vmem:[%s211 + $0x1304] sm:$0xf]
        %v1503 = vld [vmem:[%s211 + $0x1308] sm:$0xf]
        %v1504 = vld [vmem:[%s211 + $0x130c] sm:$0xf]
        %v1505 = vld [vmem:[%s211 + $0x1310] sm:$0xf]
        %v1506 = vld [vmem:[%s211 + $0x1314] sm:$0xf]
        %v1507 = vld [vmem:[%s211 + $0x1318] sm:$0xf]
        %v1508 = vld [vmem:[%s211 + $0x131c] sm:$0xf]
        %v1509 = vld [vmem:[%s211 + $0x1320] sm:$0xf]
        %v1510 = vld [vmem:[%s211 + $0x1324] sm:$0xf]
        %v1511 = vld [vmem:[%s211 + $0x1328] sm:$0xf]
        %v1512 = vld [vmem:[%s211 + $0x132c] sm:$0xf]
        %v1513 = vld [vmem:[%s211 + $0x1330] sm:$0xf]
        %v1514 = vld [vmem:[%s211 + $0x1334] sm:$0xf]
        %v1515 = vld [vmem:[%s211 + $0x1338] sm:$0xf]
        %v1516 = vld [vmem:[%s211 + $0x133c] sm:$0xf]
        %v1517 = vld [vmem:[%s211 + $0x1340] sm:$0xf]
        %v1518 = vld [vmem:[%s211 + $0x1344] sm:$0xf]
        %v1519 = vld [vmem:[%s211 + $0x1348] sm:$0xf]
        %v1520 = vld [vmem:[%s211 + $0x134c] sm:$0xf]
        %v1521 = vld [vmem:[%s211 + $0x1350] sm:$0xf]
        %v1522 = vld [vmem:[%s211 + $0x1354] sm:$0xf]
        %v1523 = vld [vmem:[%s211 + $0x1358] sm:$0xf]
        %v1524 = vld [vmem:[%s211 + $0x135c] sm:$0xf]
        %v1525 = vld [vmem:[%s211 + $0x1360] sm:$0xf]
        %v1526 = vld [vmem:[%s211 + $0x1364] sm:$0xf]
        %v1527 = vld [vmem:[%s211 + $0x1368] sm:$0xf]
        %v1528 = vld [vmem:[%s211 + $0x136c] sm:$0xf]
        %v1529 = vld [vmem:[%s211 + $0x1370] sm:$0xf]
        %v1530 = vld [vmem:[%s211 + $0x1374] sm:$0xf]
        %v1531 = vld [vmem:[%s211 + $0x1378] sm:$0xf]
        %v1532 = vld [vmem:[%s211 + $0x137c] sm:$0xf]
        %v1533 = vld [vmem:[%s211 + $0x1380] sm:$0xf]
        %v1534 = vld [vmem:[%s211 + $0x1384] sm:$0xf]
        %v1535 = vld [vmem:[%s211 + $0x1388] sm:$0xf]
        %v1536 = vld [vmem:[%s211 + $0x138c] sm:$0xf]
        %v1537 = vld [vmem:[%s211 + $0x1390] sm:$0xf]
        %v1538 = vld [vmem:[%s211 + $0x1394] sm:$0xf]
        %v1539 = vld [vmem:[%s211 + $0x1398] sm:$0xf]
        %v1540 = vld [vmem:[%s211 + $0x139c] sm:$0xf]
        %v1541 = vld [vmem:[%s211 + $0x13a0] sm:$0xf]
        %v1542 = vld [vmem:[%s211 + $0x13a4] sm:$0xf]
        %v1543 = vld [vmem:[%s211 + $0x13a8] sm:$0xf]
        %v1544 = vld [vmem:[%s211 + $0x13ac] sm:$0xf]
        %v1545 = vld [vmem:[%s211 + $0x13b0] sm:$0xf]
        %v1546 = vld [vmem:[%s211 + $0x13b4] sm:$0xf]
        %v1547 = vld [vmem:[%s211 + $0x13b8] sm:$0xf]
        %v1548 = vld [vmem:[%s211 + $0x13bc] sm:$0xf]
        %v1549 = vld [vmem:[%s211 + $0x13c0] sm:$0xf]
        %v1550 = vld [vmem:[%s211 + $0x13c4] sm:$0xf]
        %v1551 = vld [vmem:[%s211 + $0x13c8] sm:$0xf]
        %v1552 = vld [vmem:[%s211 + $0x13cc] sm:$0xf]
        %v1553 = vld [vmem:[%s211 + $0x13d0] sm:$0xf]
        %v1554 = vld [vmem:[%s211 + $0x13d4] sm:$0xf]
        %v1555 = vld [vmem:[%s211 + $0x13d8] sm:$0xf]
        %v1556 = vld [vmem:[%s211 + $0x13dc] sm:$0xf]
        %v1557 = vld [vmem:[%s211 + $0x13e0] sm:$0xf]
        %v1558 = vld [vmem:[%s211 + $0x13e4] sm:$0xf]
        %v1559 = vld [vmem:[%s211 + $0x13e8] sm:$0xf]
        %v1560 = vld [vmem:[%s211 + $0x13ec] sm:$0xf]
        %v1561 = vld [vmem:[%s211 + $0x13f0] sm:$0xf]
        %v1562 = vld [vmem:[%s211 + $0x13f4] sm:$0xf]
        %v1563 = vld [vmem:[%s211 + $0x13f8] sm:$0xf]
        %v1564 = vld [vmem:[%s211 + $0x13fc] sm:$0xf]
        %v1565 = vld [vmem:[%s211 + $0x1400] sm:$0xf]
        %v1566 = vld [vmem:[%s211 + $0x1404] sm:$0xf]
        %v1567 = vld [vmem:[%s211 + $0x1408] sm:$0xf]
        %v1568 = vld [vmem:[%s211 + $0x140c] sm:$0xf]
        %v1569 = vld [vmem:[%s211 + $0x1410] sm:$0xf]
        %v1570 = vld [vmem:[%s211 + $0x1414] sm:$0xf]
        %v1571 = vld [vmem:[%s211 + $0x1418] sm:$0xf]
        %v1572 = vld [vmem:[%s211 + $0x141c] sm:$0xf]
        %v1573 = vld [vmem:[%s211 + $0x1420] sm:$0xf]
        %v1574 = vld [vmem:[%s211 + $0x1424] sm:$0xf]
        %v1575 = vld [vmem:[%s211 + $0x1428] sm:$0xf]
        %v1576 = vld [vmem:[%s211 + $0x142c] sm:$0xf]
        %v1577 = vld [vmem:[%s211 + $0x1430] sm:$0xf]
        %v1578 = vld [vmem:[%s211 + $0x1434] sm:$0xf]
        %v1579 = vld [vmem:[%s211 + $0x1438] sm:$0xf]
        %v1580 = vld [vmem:[%s211 + $0x143c] sm:$0xf]
        %v1581 = vld [vmem:[%s211 + $0x1440] sm:$0xf]
        %v1582 = vld [vmem:[%s211 + $0x1444] sm:$0xf]
        %v1583 = vld [vmem:[%s211 + $0x1448] sm:$0xf]
        %v1584 = vld [vmem:[%s211 + $0x144c] sm:$0xf]
        %v1585 = vld [vmem:[%s211 + $0x1450] sm:$0xf]
        %v1586 = vld [vmem:[%s211 + $0x1454] sm:$0xf]
        %v1587 = vld [vmem:[%s211 + $0x1458] sm:$0xf]
        %v1588 = vld [vmem:[%s211 + $0x145c] sm:$0xf]
        %v1589 = vld [vmem:[%s211 + $0x1460] sm:$0xf]
        %v1590 = vld [vmem:[%s211 + $0x1464] sm:$0xf]
        %v1591 = vld [vmem:[%s211 + $0x1468] sm:$0xf]
        %v1592 = vld [vmem:[%s211 + $0x146c] sm:$0xf]
        %v1593 = vld [vmem:[%s211 + $0x1470] sm:$0xf]
        %v1594 = vld [vmem:[%s211 + $0x1474] sm:$0xf]
        %v1595 = vld [vmem:[%s211 + $0x1478] sm:$0xf]
        %v1596 = vld [vmem:[%s211 + $0x147c] sm:$0xf]
        %v1597 = vld [vmem:[%s211 + $0x1480] sm:$0xf]
        %v1598 = vld [vmem:[%s211 + $0x1484] sm:$0xf]
        %v1599 = vld [vmem:[%s211 + $0x1488] sm:$0xf]
        %v1600 = vld [vmem:[%s211 + $0x148c] sm:$0xf]
        %v1601 = vld [vmem:[%s211 + $0x1490] sm:$0xf]
        %v1602 = vld [vmem:[%s211 + $0x1494] sm:$0xf]
        %v1603 = vld [vmem:[%s211 + $0x1498] sm:$0xf]
        %v1604 = vld [vmem:[%s211 + $0x149c] sm:$0xf]
        %v1605 = vld [vmem:[%s211 + $0x14a0] sm:$0xf]
        %v1606 = vld [vmem:[%s211 + $0x14a4] sm:$0xf]
        %v1607 = vld [vmem:[%s211 + $0x14a8] sm:$0xf]
        %v1608 = vld [vmem:[%s211 + $0x14ac] sm:$0xf]
        %v1609 = vld [vmem:[%s211 + $0x14b0] sm:$0xf]
        %v1610 = vld [vmem:[%s211 + $0x14b4] sm:$0xf]
        %v1611 = vld [vmem:[%s211 + $0x14b8] sm:$0xf]
        %v1612 = vld [vmem:[%s211 + $0x14bc] sm:$0xf]
        %v1613 = vld [vmem:[%s211 + $0x14c0] sm:$0xf]
        %v1614 = vld [vmem:[%s211 + $0x14c4] sm:$0xf]
        %v1615 = vld [vmem:[%s211 + $0x14c8] sm:$0xf]
        %v1616 = vld [vmem:[%s211 + $0x14cc] sm:$0xf]
        %v1617 = vld [vmem:[%s211 + $0x14d0] sm:$0xf]
        %v1618 = vld [vmem:[%s211 + $0x14d4] sm:$0xf]
        %v1619 = vld [vmem:[%s211 + $0x14d8] sm:$0xf]
        %v1620 = vld [vmem:[%s211 + $0x14dc] sm:$0xf]
        %v1621 = vld [vmem:[%s211 + $0x14e0] sm:$0xf]
        %v1622 = vld [vmem:[%s211 + $0x14e4] sm:$0xf]
        %v1623 = vld [vmem:[%s211 + $0x14e8] sm:$0xf]
        %v1624 = vld [vmem:[%s211 + $0x14ec] sm:$0xf]
        %v1625 = vld [vmem:[%s211 + $0x14f0] sm:$0xf]
        %v1626 = vld [vmem:[%s211 + $0x14f4] sm:$0xf]
        %v1627 = vld [vmem:[%s211 + $0x14f8] sm:$0xf]
        %v1628 = vld [vmem:[%s211 + $0x14fc] sm:$0xf]
        %v1629 = vld [vmem:[%s211 + $0x1500] sm:$0xf]
        %v1630 = vld [vmem:[%s211 + $0x1504] sm:$0xf]
        %v1631 = vld [vmem:[%s211 + $0x1508] sm:$0xf]
        %v1632 = vld [vmem:[%s211 + $0x150c] sm:$0xf]
        %v1633 = vld [vmem:[%s211 + $0x1510] sm:$0xf]
        %v1634 = vld [vmem:[%s211 + $0x1514] sm:$0xf]
        %v1635 = vld [vmem:[%s211 + $0x1518] sm:$0xf]
        %v1636 = vld [vmem:[%s211 + $0x151c] sm:$0xf]
        %v1637 = vld [vmem:[%s211 + $0x1520] sm:$0xf]
        %v1638 = vld [vmem:[%s211 + $0x1524] sm:$0xf]
        %v1639 = vld [vmem:[%s211 + $0x1528] sm:$0xf]
        %v1640 = vld [vmem:[%s211 + $0x152c] sm:$0xf]
        %v1641 = vld [vmem:[%s211 + $0x1530] sm:$0xf]
        %v1642 = vld [vmem:[%s211 + $0x1534] sm:$0xf]
        %v1643 = vld [vmem:[%s211 + $0x1538] sm:$0xf]
        %v1644 = vld [vmem:[%s211 + $0x153c] sm:$0xf]
        %v1645 = vld [vmem:[%s211 + $0x1540] sm:$0xf]
        %v1646 = vld [vmem:[%s211 + $0x1544] sm:$0xf]
        %v1647 = vld [vmem:[%s211 + $0x1548] sm:$0xf]
        %v1648 = vld [vmem:[%s211 + $0x154c] sm:$0xf]
        %v1649 = vld [vmem:[%s211 + $0x1550] sm:$0xf]
        %v1650 = vld [vmem:[%s211 + $0x1554] sm:$0xf]
        %v1651 = vld [vmem:[%s211 + $0x1558] sm:$0xf]
        %v1652 = vld [vmem:[%s211 + $0x155c] sm:$0xf]
        %v1653 = vld [vmem:[%s211 + $0x1560] sm:$0xf]
        %v1654 = vld [vmem:[%s211 + $0x1564] sm:$0xf]
        %v1655 = vld [vmem:[%s211 + $0x1568] sm:$0xf]
        %v1656 = vld [vmem:[%s211 + $0x156c] sm:$0xf]
        %v1657 = vld [vmem:[%s211 + $0x1570] sm:$0xf]
        %v1658 = vld [vmem:[%s211 + $0x1574] sm:$0xf]
        %v1659 = vld [vmem:[%s211 + $0x1578] sm:$0xf]
        %v1660 = vld [vmem:[%s211 + $0x157c] sm:$0xf]
        %v1661 = vld [vmem:[%s211 + $0x1580] sm:$0xf]
        %v1662 = vld [vmem:[%s211 + $0x1584] sm:$0xf]
        %v1663 = vld [vmem:[%s211 + $0x1588] sm:$0xf]
        %v1664 = vld [vmem:[%s211 + $0x158c] sm:$0xf]
        %v1665 = vld [vmem:[%s211 + $0x1590] sm:$0xf]
        %v1666 = vld [vmem:[%s211 + $0x1594] sm:$0xf]
        %v1667 = vld [vmem:[%s211 + $0x1598] sm:$0xf]
        %v1668 = vld [vmem:[%s211 + $0x159c] sm:$0xf]
        %v1669 = vld [vmem:[%s211 + $0x15a0] sm:$0xf]
        %v1670 = vld [vmem:[%s211 + $0x15a4] sm:$0xf]
        %v1671 = vld [vmem:[%s211 + $0x15a8] sm:$0xf]
        %v1672 = vld [vmem:[%s211 + $0x15ac] sm:$0xf]
        %v1673 = vld [vmem:[%s211 + $0x15b0] sm:$0xf]
        %v1674 = vld [vmem:[%s211 + $0x15b4] sm:$0xf]
        %v1675 = vld [vmem:[%s211 + $0x15b8] sm:$0xf]
        %v1676 = vld [vmem:[%s211 + $0x15bc] sm:$0xf]
        %v1677 = vld [vmem:[%s211 + $0x15c0] sm:$0xf]
        %v1678 = vld [vmem:[%s211 + $0x15c4] sm:$0xf]
        %v1679 = vld [vmem:[%s211 + $0x15c8] sm:$0xf]
        %v1680 = vld [vmem:[%s211 + $0x15cc] sm:$0xf]
        %v1681 = vld [vmem:[%s211 + $0x15d0] sm:$0xf]
        %v1682 = vld [vmem:[%s211 + $0x15d4] sm:$0xf]
        %v1683 = vld [vmem:[%s211 + $0x15d8] sm:$0xf]
        %v1684 = vld [vmem:[%s211 + $0x15dc] sm:$0xf]
        %v1685 = vld [vmem:[%s211 + $0x15e0] sm:$0xf]
        %v1686 = vld [vmem:[%s211 + $0x15e4] sm:$0xf]
        %v1687 = vld [vmem:[%s211 + $0x15e8] sm:$0xf]
        %v1688 = vld [vmem:[%s211 + $0x15ec] sm:$0xf]
        %v1689 = vld [vmem:[%s211 + $0x15f0] sm:$0xf]
        %v1690 = vld [vmem:[%s211 + $0x15f4] sm:$0xf]
        %v1691 = vld [vmem:[%s211 + $0x15f8] sm:$0xf]
        %v1692 = vld [vmem:[%s211 + $0x15fc] sm:$0xf]
        %v1693 = vld [vmem:[%s211 + $0x1600] sm:$0xf]
        %v1694 = vld [vmem:[%s211 + $0x1604] sm:$0xf]
        %v1695 = vld [vmem:[%s211 + $0x1608] sm:$0xf]
        %v1696 = vld [vmem:[%s211 + $0x160c] sm:$0xf]
        %v1697 = vld [vmem:[%s211 + $0x1610] sm:$0xf]
        %v1698 = vld [vmem:[%s211 + $0x1614] sm:$0xf]
        %v1699 = vld [vmem:[%s211 + $0x1618] sm:$0xf]
        %v1700 = vld [vmem:[%s211 + $0x161c] sm:$0xf]
        %v1701 = vld [vmem:[%s211 + $0x1620] sm:$0xf]
        %v1702 = vld [vmem:[%s211 + $0x1624] sm:$0xf]
        %v1703 = vld [vmem:[%s211 + $0x1628] sm:$0xf]
        %v1704 = vld [vmem:[%s211 + $0x162c] sm:$0xf]
        %v1705 = vld [vmem:[%s211 + $0x1630] sm:$0xf]
        %v1706 = vld [vmem:[%s211 + $0x1634] sm:$0xf]
        %v1707 = vld [vmem:[%s211 + $0x1638] sm:$0xf]
        %v1708 = vld [vmem:[%s211 + $0x163c] sm:$0xf]
        %v1709 = vld [vmem:[%s211 + $0x1640] sm:$0xf]
        %v1710 = vld [vmem:[%s211 + $0x1644] sm:$0xf]
        %v1711 = vld [vmem:[%s211 + $0x1648] sm:$0xf]
        %v1712 = vld [vmem:[%s211 + $0x164c] sm:$0xf]
        %v1713 = vld [vmem:[%s211 + $0x1650] sm:$0xf]
        %v1714 = vld [vmem:[%s211 + $0x1654] sm:$0xf]
        %v1715 = vld [vmem:[%s211 + $0x1658] sm:$0xf]
        %v1716 = vld [vmem:[%s211 + $0x165c] sm:$0xf]
        %v1717 = vld [vmem:[%s211 + $0x1660] sm:$0xf]
        %v1718 = vld [vmem:[%s211 + $0x1664] sm:$0xf]
        %v1719 = vld [vmem:[%s211 + $0x1668] sm:$0xf]
        %v1720 = vld [vmem:[%s211 + $0x166c] sm:$0xf]
        %v1721 = vld [vmem:[%s211 + $0x1670] sm:$0xf]
        %v1722 = vld [vmem:[%s211 + $0x1674] sm:$0xf]
        %v1723 = vld [vmem:[%s211 + $0x1678] sm:$0xf]
        %v1724 = vld [vmem:[%s211 + $0x167c] sm:$0xf]
        %v1725 = vld [vmem:[%s211 + $0x1680] sm:$0xf]
        %v1726 = vld [vmem:[%s211 + $0x1684] sm:$0xf]
        %v1727 = vld [vmem:[%s211 + $0x1688] sm:$0xf]
        %v1728 = vld [vmem:[%s211 + $0x168c] sm:$0xf]
        %v1729 = vld [vmem:[%s211 + $0x1690] sm:$0xf]
        %v1730 = vld [vmem:[%s211 + $0x1694] sm:$0xf]
        %v1731 = vld [vmem:[%s211 + $0x1698] sm:$0xf]
        %v1732 = vld [vmem:[%s211 + $0x169c] sm:$0xf]
        %v1733 = vld [vmem:[%s211 + $0x16a0] sm:$0xf]
        %v1734 = vld [vmem:[%s211 + $0x16a4] sm:$0xf]
        %v1735 = vld [vmem:[%s211 + $0x16a8] sm:$0xf]
        %v1736 = vld [vmem:[%s211 + $0x16ac] sm:$0xf]
        %v1737 = vld [vmem:[%s211 + $0x16b0] sm:$0xf]
        %v1738 = vld [vmem:[%s211 + $0x16b4] sm:$0xf]
        %v1739 = vld [vmem:[%s211 + $0x16b8] sm:$0xf]
        %v1740 = vld [vmem:[%s211 + $0x16bc] sm:$0xf]
        %v1741 = vld [vmem:[%s211 + $0x16c0] sm:$0xf]
        %v1742 = vld [vmem:[%s211 + $0x16c4] sm:$0xf]
        %v1743 = vld [vmem:[%s211 + $0x16c8] sm:$0xf]
        %v1744 = vld [vmem:[%s211 + $0x16cc] sm:$0xf]
        %v1745 = vld [vmem:[%s211 + $0x16d0] sm:$0xf]
        %v1746 = vld [vmem:[%s211 + $0x16d4] sm:$0xf]
        %v1747 = vld [vmem:[%s211 + $0x16d8] sm:$0xf]
        %v1748 = vld [vmem:[%s211 + $0x16dc] sm:$0xf]
        %v1749 = vld [vmem:[%s211 + $0x16e0] sm:$0xf]
        %v1750 = vld [vmem:[%s211 + $0x16e4] sm:$0xf]
        %v1751 = vld [vmem:[%s211 + $0x16e8] sm:$0xf]
        %v1752 = vld [vmem:[%s211 + $0x16ec] sm:$0xf]
        %v1753 = vld [vmem:[%s211 + $0x16f0] sm:$0xf]
        %v1754 = vld [vmem:[%s211 + $0x16f4] sm:$0xf]
        %v1755 = vld [vmem:[%s211 + $0x16f8] sm:$0xf]
        %v1756 = vld [vmem:[%s211 + $0x16fc] sm:$0xf]
        %v1757 = vld [vmem:[%s211 + $0x1700] sm:$0xf]
        %v1758 = vld [vmem:[%s211 + $0x1704] sm:$0xf]
        %v1759 = vld [vmem:[%s211 + $0x1708] sm:$0xf]
        %v1760 = vld [vmem:[%s211 + $0x170c] sm:$0xf]
        %v1761 = vld [vmem:[%s211 + $0x1710] sm:$0xf]
        %v1762 = vld [vmem:[%s211 + $0x1714] sm:$0xf]
        %v1763 = vld [vmem:[%s211 + $0x1718] sm:$0xf]
        %v1764 = vld [vmem:[%s211 + $0x171c] sm:$0xf]
        %v1765 = vld [vmem:[%s211 + $0x1720] sm:$0xf]
        %v1766 = vld [vmem:[%s211 + $0x1724] sm:$0xf]
        %v1767 = vld [vmem:[%s211 + $0x1728] sm:$0xf]
        %v1768 = vld [vmem:[%s211 + $0x172c] sm:$0xf]
        %v1769 = vld [vmem:[%s211 + $0x1730] sm:$0xf]
        %v1770 = vld [vmem:[%s211 + $0x1734] sm:$0xf]
        %v1771 = vld [vmem:[%s211 + $0x1738] sm:$0xf]
        %v1772 = vld [vmem:[%s211 + $0x173c] sm:$0xf]
        %v1773 = vld [vmem:[%s211 + $0x1740] sm:$0xf]
        %v1774 = vld [vmem:[%s211 + $0x1744] sm:$0xf]
        %v1775 = vld [vmem:[%s211 + $0x1748] sm:$0xf]
        %v1776 = vld [vmem:[%s211 + $0x174c] sm:$0xf]
        %v1777 = vld [vmem:[%s211 + $0x1750] sm:$0xf]
        %v1778 = vld [vmem:[%s211 + $0x1754] sm:$0xf]
        %v1779 = vld [vmem:[%s211 + $0x1758] sm:$0xf]
        %v1780 = vld [vmem:[%s211 + $0x175c] sm:$0xf]
        %v1781 = vld [vmem:[%s211 + $0x1760] sm:$0xf]
        %v1782 = vld [vmem:[%s211 + $0x1764] sm:$0xf]
        %v1783 = vld [vmem:[%s211 + $0x1768] sm:$0xf]
        %v1784 = vld [vmem:[%s211 + $0x176c] sm:$0xf]
        %v1785 = vld [vmem:[%s211 + $0x1770] sm:$0xf]
        %v1786 = vld [vmem:[%s211 + $0x1774] sm:$0xf]
        %v1787 = vld [vmem:[%s211 + $0x1778] sm:$0xf]
        %v1788 = vld [vmem:[%s211 + $0x177c] sm:$0xf]
        %v1789 = vld [vmem:[%s211 + $0x1780] sm:$0xf]
        %v1790 = vld [vmem:[%s211 + $0x1784] sm:$0xf]
        %v1791 = vld [vmem:[%s211 + $0x1788] sm:$0xf]
        %v1792 = vld [vmem:[%s211 + $0x178c] sm:$0xf]
        %v1793 = vld [vmem:[%s211 + $0x1790] sm:$0xf]
        %v1794 = vld [vmem:[%s211 + $0x1794] sm:$0xf]
        %v1795 = vld [vmem:[%s211 + $0x1798] sm:$0xf]
        %v1796 = vld [vmem:[%s211 + $0x179c] sm:$0xf]
        %v1797 = vld [vmem:[%s211 + $0x17a0] sm:$0xf]
        %v1798 = vld [vmem:[%s211 + $0x17a4] sm:$0xf]
        %v1799 = vld [vmem:[%s211 + $0x17a8] sm:$0xf]
        %v1800 = vld [vmem:[%s211 + $0x17ac] sm:$0xf]
        %v1801 = vld [vmem:[%s211 + $0x17b0] sm:$0xf]
        %v1802 = vld [vmem:[%s211 + $0x17b4] sm:$0xf]
        %v1803 = vld [vmem:[%s211 + $0x17b8] sm:$0xf]
        %v1804 = vld [vmem:[%s211 + $0x17bc] sm:$0xf]
        %v1805 = vld [vmem:[%s211 + $0x17c0] sm:$0xf]
        %v1806 = vld [vmem:[%s211 + $0x17c4] sm:$0xf]
        %v1807 = vld [vmem:[%s211 + $0x17c8] sm:$0xf]
        %v1808 = vld [vmem:[%s211 + $0x17cc] sm:$0xf]
        %v1809 = vld [vmem:[%s211 + $0x17d0] sm:$0xf]
        %v1810 = vld [vmem:[%s211 + $0x17d4] sm:$0xf]
        %v1811 = vld [vmem:[%s211 + $0x17d8] sm:$0xf]
        %v1812 = vld [vmem:[%s211 + $0x17dc] sm:$0xf]
        %v1813 = vld [vmem:[%s211 + $0x17e0] sm:$0xf]
        %v1814 = vld [vmem:[%s211 + $0x17e4] sm:$0xf]
        %v1815 = vld [vmem:[%s211 + $0x17e8] sm:$0xf]
        %v1816 = vld [vmem:[%s211 + $0x17ec] sm:$0xf]
        %v1817 = vld [vmem:[%s211 + $0x17f0] sm:$0xf]
        %v1818 = vld [vmem:[%s211 + $0x17f4] sm:$0xf]
        %v1819 = vld [vmem:[%s211 + $0x17f8] sm:$0xf]
        %v1820 = vld [vmem:[%s211 + $0x17fc] sm:$0xf]
        %v1821 = vld [vmem:[%s211 + $0x1800] sm:$0xf]
        %v1822 = vld [vmem:[%s211 + $0x1804] sm:$0xf]
        %v1823 = vld [vmem:[%s211 + $0x1808] sm:$0xf]
        %v1824 = vld [vmem:[%s211 + $0x180c] sm:$0xf]
        %v1825 = vld [vmem:[%s211 + $0x1810] sm:$0xf]
        %v1826 = vld [vmem:[%s211 + $0x1814] sm:$0xf]
        %v1827 = vld [vmem:[%s211 + $0x1818] sm:$0xf]
        %v1828 = vld [vmem:[%s211 + $0x181c] sm:$0xf]
        %v1829 = vld [vmem:[%s211 + $0x1820] sm:$0xf]
        %v1830 = vld [vmem:[%s211 + $0x1824] sm:$0xf]
        %v1831 = vld [vmem:[%s211 + $0x1828] sm:$0xf]
        %v1832 = vld [vmem:[%s211 + $0x182c] sm:$0xf]
        %v1833 = vld [vmem:[%s211 + $0x1830] sm:$0xf]
        %v1834 = vld [vmem:[%s211 + $0x1834] sm:$0xf]
        %v1835 = vld [vmem:[%s211 + $0x1838] sm:$0xf]
        %v1836 = vld [vmem:[%s211 + $0x183c] sm:$0xf]
        %v1837 = vld [vmem:[%s211 + $0x1840] sm:$0xf]
        %v1838 = vld [vmem:[%s211 + $0x1844] sm:$0xf]
        %v1839 = vld [vmem:[%s211 + $0x1848] sm:$0xf]
        %v1840 = vld [vmem:[%s211 + $0x184c] sm:$0xf]
        %v1841 = vld [vmem:[%s211 + $0x1850] sm:$0xf]
        %v1842 = vld [vmem:[%s211 + $0x1854] sm:$0xf]
        %v1843 = vld [vmem:[%s211 + $0x1858] sm:$0xf]
        %v1844 = vld [vmem:[%s211 + $0x185c] sm:$0xf]
        %v1845 = vld [vmem:[%s211 + $0x1860] sm:$0xf]
        %v1846 = vld [vmem:[%s211 + $0x1864] sm:$0xf]
        %v1847 = vld [vmem:[%s211 + $0x1868] sm:$0xf]
        %v1848 = vld [vmem:[%s211 + $0x186c] sm:$0xf]
        %v1849 = vld [vmem:[%s211 + $0x1870] sm:$0xf]
        %v1850 = vld [vmem:[%s211 + $0x1874] sm:$0xf]
        %v1851 = vld [vmem:[%s211 + $0x1878] sm:$0xf]
        %v1852 = vld [vmem:[%s211 + $0x187c] sm:$0xf]
        %v1853 = vld [vmem:[%s258] sm:$0x3]
        %v1867 = vcombine.high %v272, %v272
        %v1869 = vunpack.c.l.s4 1966171168
        %v1870 = vunpack.c.0.s8 %v1869
        %v1871 = vlaneseq
        %v1872 = vshrl.u32 %v1871, 7
        %v1873 = vsub.s32 %v1870, %v1872
        %v1874 = vrot.slane %v272, %v1873
        %v1876 = vunpack.c.l.s4 1966171168
        %v1877 = vunpack.c.0.s8 %v1876
        %v1878 = vlaneseq
        %v1879 = vshrl.u32 %v1878, 7
        %v1880 = vsub.s32 %v1877, %v1879
        %v1881 = vrot.slane %v1867, %v1880
        %v1882 = vcombine.high %v1874, %v1874
        %v1883 = vcombine.high %v1881, %v1881
        %v1885 = vunpack.c.l.s4 1966171168
        %v1886 = vunpack.c.0.s8 %v1885
        %v1887 = vlaneseq
        %v1888 = vshrl.u32 %v1887, 7
        %v1889 = vsub.s32 %v1886, %v1888
        %v1890 = vrot.slane %v1874, %v1889
        %v1892 = vunpack.c.l.s4 1966171168
        %v1893 = vunpack.c.0.s8 %v1892
        %v1894 = vlaneseq
        %v1895 = vshrl.u32 %v1894, 7
        %v1896 = vsub.s32 %v1893, %v1895
        %v1897 = vrot.slane %v1881, %v1896
        %v1899 = vunpack.c.l.s4 1966171168
        %v1900 = vunpack.c.0.s8 %v1899
        %v1901 = vlaneseq
        %v1902 = vshrl.u32 %v1901, 7
        %v1903 = vsub.s32 %v1900, %v1902
        %v1904 = vrot.slane %v1882, %v1903
        %v1906 = vunpack.c.l.s4 1966171168
        %v1907 = vunpack.c.0.s8 %v1906
        %v1908 = vlaneseq
        %v1909 = vshrl.u32 %v1908, 7
        %v1910 = vsub.s32 %v1907, %v1909
        %v1911 = vrot.slane %v1883, %v1910
        %v1912 = vcombine.high %v1890, %v1890
        %v1913 = vcombine.high %v1897, %v1897
        %v1914 = vcombine.high %v1904, %v1904
        %v1915 = vcombine.high %v1911, %v1911
        %v1916 = vcombine.high %v273, %v273
        %v1918 = vunpack.c.l.s4 1966171168
        %v1919 = vunpack.c.0.s8 %v1918
        %v1920 = vlaneseq
        %v1921 = vshrl.u32 %v1920, 7
        %v1922 = vsub.s32 %v1919, %v1921
        %v1923 = vrot.slane %v273, %v1922
        %v1925 = vunpack.c.l.s4 1966171168
        %v1926 = vunpack.c.0.s8 %v1925
        %v1927 = vlaneseq
        %v1928 = vshrl.u32 %v1927, 7
        %v1929 = vsub.s32 %v1926, %v1928
        %v1930 = vrot.slane %v1916, %v1929
        %v1931 = vcombine.high %v1923, %v1923
        %v1932 = vcombine.high %v1930, %v1930
        %v1934 = vunpack.c.l.s4 1966171168
        %v1935 = vunpack.c.0.s8 %v1934
        %v1936 = vlaneseq
        %v1937 = vshrl.u32 %v1936, 7
        %v1938 = vsub.s32 %v1935, %v1937
        %v1939 = vrot.slane %v1923, %v1938
        %v1941 = vunpack.c.l.s4 1966171168
        %v1942 = vunpack.c.0.s8 %v1941
        %v1943 = vlaneseq
        %v1944 = vshrl.u32 %v1943, 7
        %v1945 = vsub.s32 %v1942, %v1944
        %v1946 = vrot.slane %v1930, %v1945
        %v1948 = vunpack.c.l.s4 1966171168
        %v1949 = vunpack.c.0.s8 %v1948
        %v1950 = vlaneseq
        %v1951 = vshrl.u32 %v1950, 7
        %v1952 = vsub.s32 %v1949, %v1951
        %v1953 = vrot.slane %v1931, %v1952
        %v1955 = vunpack.c.l.s4 1966171168
        %v1956 = vunpack.c.0.s8 %v1955
        %v1957 = vlaneseq
        %v1958 = vshrl.u32 %v1957, 7
        %v1959 = vsub.s32 %v1956, %v1958
        %v1960 = vrot.slane %v1932, %v1959
        %v1961 = vcombine.high %v1939, %v1939
        %v1962 = vcombine.high %v1946, %v1946
        %v1963 = vcombine.high %v1953, %v1953
        %v1964 = vcombine.high %v1960, %v1960
        %v1965 = vcombine.high %v274, %v274
        %v1967 = vunpack.c.l.s4 1966171168
        %v1968 = vunpack.c.0.s8 %v1967
        %v1969 = vlaneseq
        %v1970 = vshrl.u32 %v1969, 7
        %v1971 = vsub.s32 %v1968, %v1970
        %v1972 = vrot.slane %v274, %v1971
        %v1974 = vunpack.c.l.s4 1966171168
        %v1975 = vunpack.c.0.s8 %v1974
        %v1976 = vlaneseq
        %v1977 = vshrl.u32 %v1976, 7
        %v1978 = vsub.s32 %v1975, %v1977
        %v1979 = vrot.slane %v1965, %v1978
        %v1980 = vcombine.high %v1972, %v1972
        %v1981 = vcombine.high %v1979, %v1979
        %v1983 = vunpack.c.l.s4 1966171168
        %v1984 = vunpack.c.0.s8 %v1983
        %v1985 = vlaneseq
        %v1986 = vshrl.u32 %v1985, 7
        %v1987 = vsub.s32 %v1984, %v1986
        %v1988 = vrot.slane %v1972, %v1987
        %v1990 = vunpack.c.l.s4 1966171168
        %v1991 = vunpack.c.0.s8 %v1990
        %v1992 = vlaneseq
        %v1993 = vshrl.u32 %v1992, 7
        %v1994 = vsub.s32 %v1991, %v1993
        %v1995 = vrot.slane %v1979, %v1994
        %v1997 = vunpack.c.l.s4 1966171168
        %v1998 = vunpack.c.0.s8 %v1997
        %v1999 = vlaneseq
        %v2000 = vshrl.u32 %v1999, 7
        %v2001 = vsub.s32 %v1998, %v2000
        %v2002 = vrot.slane %v1980, %v2001
        %v2004 = vunpack.c.l.s4 1966171168
        %v2005 = vunpack.c.0.s8 %v2004
        %v2006 = vlaneseq
        %v2007 = vshrl.u32 %v2006, 7
        %v2008 = vsub.s32 %v2005, %v2007
        %v2009 = vrot.slane %v1981, %v2008
        %v2010 = vcombine.high %v1988, %v1988
        %v2011 = vcombine.high %v1995, %v1995
        %v2012 = vcombine.high %v2002, %v2002
        %v2013 = vcombine.high %v2009, %v2009
        %v2014 = vcombine.high %v275, %v275
        %v2016 = vunpack.c.l.s4 1966171168
        %v2017 = vunpack.c.0.s8 %v2016
        %v2018 = vlaneseq
        %v2019 = vshrl.u32 %v2018, 7
        %v2020 = vsub.s32 %v2017, %v2019
        %v2021 = vrot.slane %v275, %v2020
        %v2023 = vunpack.c.l.s4 1966171168
        %v2024 = vunpack.c.0.s8 %v2023
        %v2025 = vlaneseq
        %v2026 = vshrl.u32 %v2025, 7
        %v2027 = vsub.s32 %v2024, %v2026
        %v2028 = vrot.slane %v2014, %v2027
        %v2029 = vcombine.high %v2021, %v2021
        %v2030 = vcombine.high %v2028, %v2028
        %v2032 = vunpack.c.l.s4 1966171168
        %v2033 = vunpack.c.0.s8 %v2032
        %v2034 = vlaneseq
        %v2035 = vshrl.u32 %v2034, 7
        %v2036 = vsub.s32 %v2033, %v2035
        %v2037 = vrot.slane %v2021, %v2036
        %v2039 = vunpack.c.l.s4 1966171168
        %v2040 = vunpack.c.0.s8 %v2039
        %v2041 = vlaneseq
        %v2042 = vshrl.u32 %v2041, 7
        %v2043 = vsub.s32 %v2040, %v2042
        %v2044 = vrot.slane %v2028, %v2043
        %v2046 = vunpack.c.l.s4 1966171168
        %v2047 = vunpack.c.0.s8 %v2046
        %v2048 = vlaneseq
        %v2049 = vshrl.u32 %v2048, 7
        %v2050 = vsub.s32 %v2047, %v2049
        %v2051 = vrot.slane %v2029, %v2050
        %v2053 = vunpack.c.l.s4 1966171168
        %v2054 = vunpack.c.0.s8 %v2053
        %v2055 = vlaneseq
        %v2056 = vshrl.u32 %v2055, 7
        %v2057 = vsub.s32 %v2054, %v2056
        %v2058 = vrot.slane %v2030, %v2057
        %v2059 = vcombine.high %v2037, %v2037
        %v2060 = vcombine.high %v2044, %v2044
        %v2061 = vcombine.high %v2051, %v2051
        %v2062 = vcombine.high %v2058, %v2058
        %v2063 = vcombine.high %v276, %v276
        %v2065 = vunpack.c.l.s4 1966171168
        %v2066 = vunpack.c.0.s8 %v2065
        %v2067 = vlaneseq
        %v2068 = vshrl.u32 %v2067, 7
        %v2069 = vsub.s32 %v2066, %v2068
        %v2070 = vrot.slane %v276, %v2069
        %v2072 = vunpack.c.l.s4 1966171168
        %v2073 = vunpack.c.0.s8 %v2072
        %v2074 = vlaneseq
        %v2075 = vshrl.u32 %v2074, 7
        %v2076 = vsub.s32 %v2073, %v2075
        %v2077 = vrot.slane %v2063, %v2076
        %v2078 = vcombine.high %v2070, %v2070
        %v2079 = vcombine.high %v2077, %v2077
        %v2081 = vunpack.c.l.s4 1966171168
        %v2082 = vunpack.c.0.s8 %v2081
        %v2083 = vlaneseq
        %v2084 = vshrl.u32 %v2083, 7
        %v2085 = vsub.s32 %v2082, %v2084
        %v2086 = vrot.slane %v2070, %v2085
        %v2088 = vunpack.c.l.s4 1966171168
        %v2089 = vunpack.c.0.s8 %v2088
        %v2090 = vlaneseq
        %v2091 = vshrl.u32 %v2090, 7
        %v2092 = vsub.s32 %v2089, %v2091
        %v2093 = vrot.slane %v2077, %v2092
        %v2095 = vunpack.c.l.s4 1966171168
        %v2096 = vunpack.c.0.s8 %v2095
        %v2097 = vlaneseq
        %v2098 = vshrl.u32 %v2097, 7
        %v2099 = vsub.s32 %v2096, %v2098
        %v2100 = vrot.slane %v2078, %v2099
        %v2102 = vunpack.c.l.s4 1966171168
        %v2103 = vunpack.c.0.s8 %v2102
        %v2104 = vlaneseq
        %v2105 = vshrl.u32 %v2104, 7
        %v2106 = vsub.s32 %v2103, %v2105
        %v2107 = vrot.slane %v2079, %v2106
        %v2108 = vcombine.high %v2086, %v2086
        %v2109 = vcombine.high %v2093, %v2093
        %v2110 = vcombine.high %v2100, %v2100
        %v2111 = vcombine.high %v2107, %v2107
        %v2112 = vcombine.high %v277, %v277
        %v2114 = vunpack.c.l.s4 1966171168
        %v2115 = vunpack.c.0.s8 %v2114
        %v2116 = vlaneseq
        %v2117 = vshrl.u32 %v2116, 7
        %v2118 = vsub.s32 %v2115, %v2117
        %v2119 = vrot.slane %v277, %v2118
        %v2121 = vunpack.c.l.s4 1966171168
        %v2122 = vunpack.c.0.s8 %v2121
        %v2123 = vlaneseq
        %v2124 = vshrl.u32 %v2123, 7
        %v2125 = vsub.s32 %v2122, %v2124
        %v2126 = vrot.slane %v2112, %v2125
        %v2127 = vcombine.high %v2119, %v2119
        %v2128 = vcombine.high %v2126, %v2126
        %v2130 = vunpack.c.l.s4 1966171168
        %v2131 = vunpack.c.0.s8 %v2130
        %v2132 = vlaneseq
        %v2133 = vshrl.u32 %v2132, 7
        %v2134 = vsub.s32 %v2131, %v2133
        %v2135 = vrot.slane %v2119, %v2134
        %v2137 = vunpack.c.l.s4 1966171168
        %v2138 = vunpack.c.0.s8 %v2137
        %v2139 = vlaneseq
        %v2140 = vshrl.u32 %v2139, 7
        %v2141 = vsub.s32 %v2138, %v2140
        %v2142 = vrot.slane %v2126, %v2141
        %v2144 = vunpack.c.l.s4 1966171168
        %v2145 = vunpack.c.0.s8 %v2144
        %v2146 = vlaneseq
        %v2147 = vshrl.u32 %v2146, 7
        %v2148 = vsub.s32 %v2145, %v2147
        %v2149 = vrot.slane %v2127, %v2148
        %v2151 = vunpack.c.l.s4 1966171168
        %v2152 = vunpack.c.0.s8 %v2151
        %v2153 = vlaneseq
        %v2154 = vshrl.u32 %v2153, 7
        %v2155 = vsub.s32 %v2152, %v2154
        %v2156 = vrot.slane %v2128, %v2155
        %v2157 = vcombine.high %v2135, %v2135
        %v2158 = vcombine.high %v2142, %v2142
        %v2159 = vcombine.high %v2149, %v2149
        %v2160 = vcombine.high %v2156, %v2156
        %v2161 = vcombine.high %v278, %v278
        %v2163 = vunpack.c.l.s4 1966171168
        %v2164 = vunpack.c.0.s8 %v2163
        %v2165 = vlaneseq
        %v2166 = vshrl.u32 %v2165, 7
        %v2167 = vsub.s32 %v2164, %v2166
        %v2168 = vrot.slane %v278, %v2167
        %v2170 = vunpack.c.l.s4 1966171168
        %v2171 = vunpack.c.0.s8 %v2170
        %v2172 = vlaneseq
        %v2173 = vshrl.u32 %v2172, 7
        %v2174 = vsub.s32 %v2171, %v2173
        %v2175 = vrot.slane %v2161, %v2174
        %v2176 = vcombine.high %v2168, %v2168
        %v2177 = vcombine.high %v2175, %v2175
        %v2179 = vunpack.c.l.s4 1966171168
        %v2180 = vunpack.c.0.s8 %v2179
        %v2181 = vlaneseq
        %v2182 = vshrl.u32 %v2181, 7
        %v2183 = vsub.s32 %v2180, %v2182
        %v2184 = vrot.slane %v2168, %v2183
        %v2186 = vunpack.c.l.s4 1966171168
        %v2187 = vunpack.c.0.s8 %v2186
        %v2188 = vlaneseq
        %v2189 = vshrl.u32 %v2188, 7
        %v2190 = vsub.s32 %v2187, %v2189
        %v2191 = vrot.slane %v2175, %v2190
        %v2193 = vunpack.c.l.s4 1966171168
        %v2194 = vunpack.c.0.s8 %v2193
        %v2195 = vlaneseq
        %v2196 = vshrl.u32 %v2195, 7
        %v2197 = vsub.s32 %v2194, %v2196
        %v2198 = vrot.slane %v2176, %v2197
        %v2200 = vunpack.c.l.s4 1966171168
        %v2201 = vunpack.c.0.s8 %v2200
        %v2202 = vlaneseq
        %v2203 = vshrl.u32 %v2202, 7
        %v2204 = vsub.s32 %v2201, %v2203
        %v2205 = vrot.slane %v2177, %v2204
        %v2206 = vcombine.high %v2184, %v2184
        %v2207 = vcombine.high %v2191, %v2191
        %v2208 = vcombine.high %v2198, %v2198
        %v2209 = vcombine.high %v2205, %v2205
        %v2210 = vcombine.high %v279, %v279
        %v2212 = vunpack.c.l.s4 1966171168
        %v2213 = vunpack.c.0.s8 %v2212
        %v2214 = vlaneseq
        %v2215 = vshrl.u32 %v2214, 7
        %v2216 = vsub.s32 %v2213, %v2215
        %v2217 = vrot.slane %v279, %v2216
        %v2219 = vunpack.c.l.s4 1966171168
        %v2220 = vunpack.c.0.s8 %v2219
        %v2221 = vlaneseq
        %v2222 = vshrl.u32 %v2221, 7
        %v2223 = vsub.s32 %v2220, %v2222
        %v2224 = vrot.slane %v2210, %v2223
        %v2225 = vcombine.high %v2217, %v2217
        %v2226 = vcombine.high %v2224, %v2224
        %v2228 = vunpack.c.l.s4 1966171168
        %v2229 = vunpack.c.0.s8 %v2228
        %v2230 = vlaneseq
        %v2231 = vshrl.u32 %v2230, 7
        %v2232 = vsub.s32 %v2229, %v2231
        %v2233 = vrot.slane %v2217, %v2232
        %v2235 = vunpack.c.l.s4 1966171168
        %v2236 = vunpack.c.0.s8 %v2235
        %v2237 = vlaneseq
        %v2238 = vshrl.u32 %v2237, 7
        %v2239 = vsub.s32 %v2236, %v2238
        %v2240 = vrot.slane %v2224, %v2239
        %v2242 = vunpack.c.l.s4 1966171168
        %v2243 = vunpack.c.0.s8 %v2242
        %v2244 = vlaneseq
        %v2245 = vshrl.u32 %v2244, 7
        %v2246 = vsub.s32 %v2243, %v2245
        %v2247 = vrot.slane %v2225, %v2246
        %v2249 = vunpack.c.l.s4 1966171168
        %v2250 = vunpack.c.0.s8 %v2249
        %v2251 = vlaneseq
        %v2252 = vshrl.u32 %v2251, 7
        %v2253 = vsub.s32 %v2250, %v2252
        %v2254 = vrot.slane %v2226, %v2253
        %v2255 = vcombine.high %v2233, %v2233
        %v2256 = vcombine.high %v2240, %v2240
        %v2257 = vcombine.high %v2247, %v2247
        %v2258 = vcombine.high %v2254, %v2254
        %v2259 = vcombine.high %v280, %v280
        %v2261 = vunpack.c.l.s4 1966171168
        %v2262 = vunpack.c.0.s8 %v2261
        %v2263 = vlaneseq
        %v2264 = vshrl.u32 %v2263, 7
        %v2265 = vsub.s32 %v2262, %v2264
        %v2266 = vrot.slane %v280, %v2265
        %v2268 = vunpack.c.l.s4 1966171168
        %v2269 = vunpack.c.0.s8 %v2268
        %v2270 = vlaneseq
        %v2271 = vshrl.u32 %v2270, 7
        %v2272 = vsub.s32 %v2269, %v2271
        %v2273 = vrot.slane %v2259, %v2272
        %v2274 = vcombine.high %v2266, %v2266
        %v2275 = vcombine.high %v2273, %v2273
        %v2277 = vunpack.c.l.s4 1966171168
        %v2278 = vunpack.c.0.s8 %v2277
        %v2279 = vlaneseq
        %v2280 = vshrl.u32 %v2279, 7
        %v2281 = vsub.s32 %v2278, %v2280
        %v2282 = vrot.slane %v2266, %v2281
        %v2284 = vunpack.c.l.s4 1966171168
        %v2285 = vunpack.c.0.s8 %v2284
        %v2286 = vlaneseq
        %v2287 = vshrl.u32 %v2286, 7
        %v2288 = vsub.s32 %v2285, %v2287
        %v2289 = vrot.slane %v2273, %v2288
        %v2291 = vunpack.c.l.s4 1966171168
        %v2292 = vunpack.c.0.s8 %v2291
        %v2293 = vlaneseq
        %v2294 = vshrl.u32 %v2293, 7
        %v2295 = vsub.s32 %v2292, %v2294
        %v2296 = vrot.slane %v2274, %v2295
        %v2298 = vunpack.c.l.s4 1966171168
        %v2299 = vunpack.c.0.s8 %v2298
        %v2300 = vlaneseq
        %v2301 = vshrl.u32 %v2300, 7
        %v2302 = vsub.s32 %v2299, %v2301
        %v2303 = vrot.slane %v2275, %v2302
        %v2304 = vcombine.high %v2282, %v2282
        %v2305 = vcombine.high %v2289, %v2289
        %v2306 = vcombine.high %v2296, %v2296
        %v2307 = vcombine.high %v2303, %v2303
        %v2308 = vcombine.high %v281, %v281
        %v2310 = vunpack.c.l.s4 1966171168
        %v2311 = vunpack.c.0.s8 %v2310
        %v2312 = vlaneseq
        %v2313 = vshrl.u32 %v2312, 7
        %v2314 = vsub.s32 %v2311, %v2313
        %v2315 = vrot.slane %v281, %v2314
        %v2317 = vunpack.c.l.s4 1966171168
        %v2318 = vunpack.c.0.s8 %v2317
        %v2319 = vlaneseq
        %v2320 = vshrl.u32 %v2319, 7
        %v2321 = vsub.s32 %v2318, %v2320
        %v2322 = vrot.slane %v2308, %v2321
        %v2323 = vcombine.high %v2315, %v2315
        %v2324 = vcombine.high %v2322, %v2322
        %v2326 = vunpack.c.l.s4 1966171168
        %v2327 = vunpack.c.0.s8 %v2326
        %v2328 = vlaneseq
        %v2329 = vshrl.u32 %v2328, 7
        %v2330 = vsub.s32 %v2327, %v2329
        %v2331 = vrot.slane %v2315, %v2330
        %v2333 = vunpack.c.l.s4 1966171168
        %v2334 = vunpack.c.0.s8 %v2333
        %v2335 = vlaneseq
        %v2336 = vshrl.u32 %v2335, 7
        %v2337 = vsub.s32 %v2334, %v2336
        %v2338 = vrot.slane %v2322, %v2337
        %v2340 = vunpack.c.l.s4 1966171168
        %v2341 = vunpack.c.0.s8 %v2340
        %v2342 = vlaneseq
        %v2343 = vshrl.u32 %v2342, 7
        %v2344 = vsub.s32 %v2341, %v2343
        %v2345 = vrot.slane %v2323, %v2344
        %v2347 = vunpack.c.l.s4 1966171168
        %v2348 = vunpack.c.0.s8 %v2347
        %v2349 = vlaneseq
        %v2350 = vshrl.u32 %v2349, 7
        %v2351 = vsub.s32 %v2348, %v2350
        %v2352 = vrot.slane %v2324, %v2351
        %v2353 = vcombine.high %v2331, %v2331
        %v2354 = vcombine.high %v2338, %v2338
        %v2355 = vcombine.high %v2345, %v2345
        %v2356 = vcombine.high %v2352, %v2352
        %v2357 = vcombine.high %v282, %v282
        %v2359 = vunpack.c.l.s4 1966171168
        %v2360 = vunpack.c.0.s8 %v2359
        %v2361 = vlaneseq
        %v2362 = vshrl.u32 %v2361, 7
        %v2363 = vsub.s32 %v2360, %v2362
        %v2364 = vrot.slane %v282, %v2363
        %v2366 = vunpack.c.l.s4 1966171168
        %v2367 = vunpack.c.0.s8 %v2366
        %v2368 = vlaneseq
        %v2369 = vshrl.u32 %v2368, 7
        %v2370 = vsub.s32 %v2367, %v2369
        %v2371 = vrot.slane %v2357, %v2370
        %v2372 = vcombine.high %v2364, %v2364
        %v2373 = vcombine.high %v2371, %v2371
        %v2375 = vunpack.c.l.s4 1966171168
        %v2376 = vunpack.c.0.s8 %v2375
        %v2377 = vlaneseq
        %v2378 = vshrl.u32 %v2377, 7
        %v2379 = vsub.s32 %v2376, %v2378
        %v2380 = vrot.slane %v2364, %v2379
        %v2382 = vunpack.c.l.s4 1966171168
        %v2383 = vunpack.c.0.s8 %v2382
        %v2384 = vlaneseq
        %v2385 = vshrl.u32 %v2384, 7
        %v2386 = vsub.s32 %v2383, %v2385
        %v2387 = vrot.slane %v2371, %v2386
        %v2389 = vunpack.c.l.s4 1966171168
        %v2390 = vunpack.c.0.s8 %v2389
        %v2391 = vlaneseq
        %v2392 = vshrl.u32 %v2391, 7
        %v2393 = vsub.s32 %v2390, %v2392
        %v2394 = vrot.slane %v2372, %v2393
        %v2396 = vunpack.c.l.s4 1966171168
        %v2397 = vunpack.c.0.s8 %v2396
        %v2398 = vlaneseq
        %v2399 = vshrl.u32 %v2398, 7
        %v2400 = vsub.s32 %v2397, %v2399
        %v2401 = vrot.slane %v2373, %v2400
        %v2402 = vcombine.high %v2380, %v2380
        %v2403 = vcombine.high %v2387, %v2387
        %v2404 = vcombine.high %v2394, %v2394
        %v2405 = vcombine.high %v2401, %v2401
        %v2406 = vcombine.high %v283, %v283
        %v2408 = vunpack.c.l.s4 1966171168
        %v2409 = vunpack.c.0.s8 %v2408
        %v2410 = vlaneseq
        %v2411 = vshrl.u32 %v2410, 7
        %v2412 = vsub.s32 %v2409, %v2411
        %v2413 = vrot.slane %v283, %v2412
        %v2415 = vunpack.c.l.s4 1966171168
        %v2416 = vunpack.c.0.s8 %v2415
        %v2417 = vlaneseq
        %v2418 = vshrl.u32 %v2417, 7
        %v2419 = vsub.s32 %v2416, %v2418
        %v2420 = vrot.slane %v2406, %v2419
        %v2421 = vcombine.high %v2413, %v2413
        %v2422 = vcombine.high %v2420, %v2420
        %v2424 = vunpack.c.l.s4 1966171168
        %v2425 = vunpack.c.0.s8 %v2424
        %v2426 = vlaneseq
        %v2427 = vshrl.u32 %v2426, 7
        %v2428 = vsub.s32 %v2425, %v2427
        %v2429 = vrot.slane %v2413, %v2428
        %v2431 = vunpack.c.l.s4 1966171168
        %v2432 = vunpack.c.0.s8 %v2431
        %v2433 = vlaneseq
        %v2434 = vshrl.u32 %v2433, 7
        %v2435 = vsub.s32 %v2432, %v2434
        %v2436 = vrot.slane %v2420, %v2435
        %v2438 = vunpack.c.l.s4 1966171168
        %v2439 = vunpack.c.0.s8 %v2438
        %v2440 = vlaneseq
        %v2441 = vshrl.u32 %v2440, 7
        %v2442 = vsub.s32 %v2439, %v2441
        %v2443 = vrot.slane %v2421, %v2442
        %v2445 = vunpack.c.l.s4 1966171168
        %v2446 = vunpack.c.0.s8 %v2445
        %v2447 = vlaneseq
        %v2448 = vshrl.u32 %v2447, 7
        %v2449 = vsub.s32 %v2446, %v2448
        %v2450 = vrot.slane %v2422, %v2449
        %v2451 = vcombine.high %v2429, %v2429
        %v2452 = vcombine.high %v2436, %v2436
        %v2453 = vcombine.high %v2443, %v2443
        %v2454 = vcombine.high %v2450, %v2450
        %v2456 = vunpack.c.l.s4 1966171168
        %v2457 = vunpack.c.0.s8 %v2456
        %v2458 = vlaneseq
        %v2459 = vshrl.u32 %v2458, 7
        %v2460 = vsub.s32 %v2457, %v2459
        %v2461 = vrot.slane %v284, %v2460
        %v2462 = vcombine.high %v2461, %v2461
        %v2464 = vunpack.c.l.s4 1966171168
        %v2465 = vunpack.c.0.s8 %v2464
        %v2466 = vlaneseq
        %v2467 = vshrl.u32 %v2466, 7
        %v2468 = vsub.s32 %v2465, %v2467
        %v2469 = vrot.slane %v2461, %v2468
        %v2471 = vunpack.c.l.s4 1966171168
        %v2472 = vunpack.c.0.s8 %v2471
        %v2473 = vlaneseq
        %v2474 = vshrl.u32 %v2473, 7
        %v2475 = vsub.s32 %v2472, %v2474
        %v2476 = vrot.slane %v2462, %v2475
        %v4143 = vunpack.c.l.b16 %v285
        %v4144 = vunpack.c.l.b16 %v286
        %v4145 = vunpack.c.l.b16 %v287
        %v4146 = vunpack.c.l.b16 %v288
        %v4147 = vunpack.c.l.b16 %v289
        %v4148 = vunpack.c.l.b16 %v290
        %v4149 = vunpack.c.l.b16 %v291
        %v4150 = vunpack.c.l.b16 %v292
        %v4151 = vunpack.c.l.b16 %v293
        %v4152 = vunpack.c.l.b16 %v294
        %v4153 = vunpack.c.l.b16 %v295
        %v4154 = vunpack.c.l.b16 %v296
        %v4155 = vunpack.c.l.b16 %v297
        %v4156 = vunpack.c.l.b16 %v298
        %v4157 = vunpack.c.l.b16 %v299
        %v4158 = vunpack.c.l.b16 %v300
        %v4159 = vunpack.c.l.b16 %v301
        %v4160 = vunpack.c.l.b16 %v302
        %v4161 = vunpack.c.l.b16 %v303
        %v4162 = vunpack.c.l.b16 %v304
        %v4163 = vunpack.c.l.b16 %v305
        %v4164 = vunpack.c.l.b16 %v306
        %v4165 = vunpack.c.l.b16 %v307
        %v4166 = vunpack.c.l.b16 %v308
        %v4167 = vunpack.c.l.b16 %v309
        %v4168 = vunpack.c.l.b16 %v310
        %v4169 = vunpack.c.l.b16 %v311
        %v4170 = vunpack.c.l.b16 %v312
        %v4171 = vunpack.c.l.b16 %v313
        %v4172 = vunpack.c.l.b16 %v314
        %v4173 = vunpack.c.l.b16 %v315
        %v4174 = vunpack.c.l.b16 %v316
        %v4175 = vunpack.c.l.b16 %v317
        %v4176 = vunpack.c.l.b16 %v318
        %v4177 = vunpack.c.l.b16 %v319
        %v4178 = vunpack.c.l.b16 %v320
        %v4179 = vunpack.c.l.b16 %v321
        %v4180 = vunpack.c.l.b16 %v322
        %v4181 = vunpack.c.l.b16 %v323
        %v4182 = vunpack.c.l.b16 %v324
        %v4183 = vunpack.c.l.b16 %v325
        %v4184 = vunpack.c.l.b16 %v326
        %v4185 = vunpack.c.l.b16 %v327
        %v4186 = vunpack.c.l.b16 %v328
        %v4187 = vunpack.c.l.b16 %v329
        %v4188 = vunpack.c.l.b16 %v330
        %v4189 = vunpack.c.l.b16 %v331
        %v4190 = vunpack.c.l.b16 %v332
        %v4191 = vunpack.c.l.b16 %v333
        %v4192 = vunpack.c.l.b16 %v334
        %v4193 = vunpack.c.l.b16 %v335
        %v4194 = vunpack.c.l.b16 %v336
        %v4195 = vunpack.c.l.b16 %v337
        %v4196 = vunpack.c.l.b16 %v338
        %v4197 = vunpack.c.l.b16 %v339
        %v4198 = vunpack.c.l.b16 %v340
        %v4199 = vunpack.c.l.b16 %v341
        %v4200 = vunpack.c.l.b16 %v342
        %v4201 = vunpack.c.l.b16 %v343
        %v4202 = vunpack.c.l.b16 %v344
        %v4203 = vunpack.c.l.b16 %v345
        %v4204 = vunpack.c.l.b16 %v346
        %v4205 = vunpack.c.l.b16 %v347
        %v4206 = vunpack.c.l.b16 %v348
        %v4207 = vunpack.c.l.b16 %v349
        %v4208 = vunpack.c.l.b16 %v350
        %v4209 = vunpack.c.l.b16 %v351
        %v4210 = vunpack.c.l.b16 %v352
        %v4211 = vunpack.c.l.b16 %v353
        %v4212 = vunpack.c.l.b16 %v354
        %v4213 = vunpack.c.l.b16 %v355
        %v4214 = vunpack.c.l.b16 %v356
        %v4215 = vunpack.c.l.b16 %v357
        %v4216 = vunpack.c.l.b16 %v358
        %v4217 = vunpack.c.l.b16 %v359
        %v4218 = vunpack.c.l.b16 %v360
        %v4219 = vunpack.c.l.b16 %v361
        %v4220 = vunpack.c.l.b16 %v362
        %v4221 = vunpack.c.l.b16 %v363
        %v4222 = vunpack.c.l.b16 %v364
        %v4223 = vunpack.c.l.b16 %v365
        %v4224 = vunpack.c.l.b16 %v366
        %v4225 = vunpack.c.l.b16 %v367
        %v4226 = vunpack.c.l.b16 %v368
        %v4227 = vunpack.c.l.b16 %v369
        %v4228 = vunpack.c.l.b16 %v370
        %v4229 = vunpack.c.l.b16 %v371
        %v4230 = vunpack.c.l.b16 %v372
        %v4231 = vunpack.c.l.b16 %v373
        %v4232 = vunpack.c.l.b16 %v374
        %v4233 = vunpack.c.l.b16 %v375
        %v4234 = vunpack.c.l.b16 %v376
        %v4235 = vunpack.c.l.b16 %v377
        %v4236 = vunpack.c.l.b16 %v378
        %v4237 = vunpack.c.l.b16 %v379
        %v4238 = vunpack.c.l.b16 %v380
        %v4239 = vunpack.c.l.b16 %v381
        %v4240 = vunpack.c.l.b16 %v382
        %v4241 = vunpack.c.l.b16 %v383
        %v4242 = vunpack.c.l.b16 %v384
        %v4243 = vunpack.c.l.b16 %v385
        %v4244 = vunpack.c.l.b16 %v386
        %v4245 = vunpack.c.l.b16 %v387
        %v4246 = vunpack.c.l.b16 %v388
        %v4247 = vunpack.c.l.b16 %v389
        %v4248 = vunpack.c.l.b16 %v390
        %v4249 = vunpack.c.l.b16 %v391
        %v4250 = vunpack.c.l.b16 %v392
        %v4251 = vunpack.c.l.b16 %v393
        %v4252 = vunpack.c.l.b16 %v394
        %v4253 = vunpack.c.l.b16 %v395
        %v4254 = vunpack.c.l.b16 %v396
        %v4255 = vunpack.c.l.b16 %v397
        %v4256 = vunpack.c.l.b16 %v398
        %v4257 = vunpack.c.l.b16 %v399
        %v4258 = vunpack.c.l.b16 %v400
        %v4259 = vunpack.c.l.b16 %v401
        %v4260 = vunpack.c.l.b16 %v402
        %v4261 = vunpack.c.l.b16 %v403
        %v4262 = vunpack.c.l.b16 %v404
        %v4263 = vunpack.c.l.b16 %v405
        %v4264 = vunpack.c.l.b16 %v406
        %v4265 = vunpack.c.l.b16 %v407
        %v4266 = vunpack.c.l.b16 %v408
        %v4267 = vunpack.c.l.b16 %v409
        %v4268 = vunpack.c.l.b16 %v410
        %v4269 = vunpack.c.l.b16 %v411
        %v4270 = vunpack.c.l.b16 %v412
        %v4271 = vunpack.c.l.b16 %v413
        %v4272 = vunpack.c.l.b16 %v414
        %v4273 = vunpack.c.l.b16 %v415
        %v4274 = vunpack.c.l.b16 %v416
        %v4275 = vunpack.c.l.b16 %v417
        %v4276 = vunpack.c.l.b16 %v418
        %v4277 = vunpack.c.l.b16 %v419
        %v4278 = vunpack.c.l.b16 %v420
        %v4279 = vunpack.c.l.b16 %v421
        %v4280 = vunpack.c.l.b16 %v422
        %v4281 = vunpack.c.l.b16 %v423
        %v4282 = vunpack.c.l.b16 %v424
        %v4283 = vunpack.c.l.b16 %v425
        %v4284 = vunpack.c.l.b16 %v426
        %v4285 = vunpack.c.l.b16 %v427
        %v4286 = vunpack.c.l.b16 %v428
        %v4287 = vunpack.c.l.b16 %v429
        %v4288 = vunpack.c.l.b16 %v430
        %v4289 = vunpack.c.l.b16 %v431
        %v4290 = vunpack.c.l.b16 %v432
        %v4291 = vunpack.c.l.b16 %v433
        %v4292 = vunpack.c.l.b16 %v434
        %v4293 = vunpack.c.l.b16 %v435
        %v4294 = vunpack.c.l.b16 %v436
        %v4295 = vunpack.c.l.b16 %v437
        %v4296 = vunpack.c.l.b16 %v438
        %v4297 = vunpack.c.l.b16 %v439
        %v4298 = vunpack.c.l.b16 %v440
        %v4299 = vunpack.c.l.b16 %v441
        %v4300 = vunpack.c.l.b16 %v442
        %v4301 = vunpack.c.l.b16 %v443
        %v4302 = vunpack.c.l.b16 %v444
        %v4303 = vunpack.c.l.b16 %v445
        %v4304 = vunpack.c.l.b16 %v446
        %v4305 = vunpack.c.l.b16 %v447
        %v4306 = vunpack.c.l.b16 %v448
        %v4307 = vunpack.c.l.b16 %v449
        %v4308 = vunpack.c.l.b16 %v450
        %v4309 = vunpack.c.l.b16 %v451
        %v4310 = vunpack.c.l.b16 %v452
        %v4311 = vunpack.c.l.b16 %v453
        %v4312 = vunpack.c.l.b16 %v454
        %v4313 = vunpack.c.l.b16 %v455
        %v4314 = vunpack.c.l.b16 %v456
        %v4315 = vunpack.c.l.b16 %v457
        %v4316 = vunpack.c.l.b16 %v458
        %v4317 = vunpack.c.l.b16 %v459
        %v4318 = vunpack.c.l.b16 %v460
        %v4319 = vunpack.c.l.b16 %v461
        %v4320 = vunpack.c.l.b16 %v462
        %v4321 = vunpack.c.l.b16 %v463
        %v4322 = vunpack.c.l.b16 %v464
        %v4323 = vunpack.c.l.b16 %v465
        %v4324 = vunpack.c.l.b16 %v466
        %v4325 = vunpack.c.l.b16 %v467
        %v4326 = vunpack.c.l.b16 %v468
        %v4327 = vunpack.c.l.b16 %v469
        %v4328 = vunpack.c.l.b16 %v470
        %v4329 = vunpack.c.l.b16 %v471
        %v4330 = vunpack.c.l.b16 %v472
        %v4331 = vunpack.c.l.b16 %v473
        %v4332 = vunpack.c.l.b16 %v474
        %v4333 = vunpack.c.l.b16 %v475
        %v4334 = vunpack.c.l.b16 %v476
        %v4335 = vunpack.c.l.b16 %v477
        %v4336 = vunpack.c.l.b16 %v478
        %v4337 = vunpack.c.l.b16 %v479
        %v4338 = vunpack.c.l.b16 %v480
        %v4339 = vunpack.c.l.b16 %v481
        %v4340 = vunpack.c.l.b16 %v482
        %v4341 = vunpack.c.l.b16 %v483
        %v4342 = vunpack.c.l.b16 %v484
        %v4343 = vunpack.c.l.b16 %v485
        %v4344 = vunpack.c.l.b16 %v486
        %v4345 = vunpack.c.l.b16 %v487
        %v4346 = vunpack.c.l.b16 %v488
        %v4347 = vunpack.c.l.b16 %v489
        %v4348 = vunpack.c.l.b16 %v490
        %v4349 = vunpack.c.l.b16 %v491
        %v4350 = vunpack.c.l.b16 %v492
        %v4351 = vunpack.c.l.b16 %v493
        %v4352 = vunpack.c.l.b16 %v494
        %v4353 = vunpack.c.l.b16 %v495
        %v4354 = vunpack.c.l.b16 %v496
        %v4355 = vunpack.c.l.b16 %v497
        %v4356 = vunpack.c.l.b16 %v498
        %v4357 = vunpack.c.l.b16 %v499
        %v4358 = vunpack.c.l.b16 %v500
        %v4359 = vunpack.c.l.b16 %v501
        %v4360 = vunpack.c.l.b16 %v502
        %v4361 = vunpack.c.l.b16 %v503
        %v4362 = vunpack.c.l.b16 %v504
        %v4363 = vunpack.c.l.b16 %v505
        %v4364 = vunpack.c.l.b16 %v506
        %v4365 = vunpack.c.l.b16 %v507
        %v4366 = vunpack.c.l.b16 %v508
        %v4367 = vunpack.c.l.b16 %v509
        %v4368 = vunpack.c.l.b16 %v510
        %v4369 = vunpack.c.l.b16 %v511
        %v4370 = vunpack.c.l.b16 %v512
        %v4371 = vunpack.c.l.b16 %v513
        %v4372 = vunpack.c.l.b16 %v514
        %v4373 = vunpack.c.l.b16 %v515
        %v4374 = vunpack.c.l.b16 %v516
        %v4375 = vunpack.c.l.b16 %v517
        %v4376 = vunpack.c.l.b16 %v518
        %v4377 = vunpack.c.l.b16 %v519
        %v4378 = vunpack.c.l.b16 %v520
        %v4379 = vunpack.c.l.b16 %v521
        %v4380 = vunpack.c.l.b16 %v522
        %v4381 = vunpack.c.l.b16 %v523
        %v4382 = vunpack.c.l.b16 %v524
        %v4383 = vunpack.c.l.b16 %v525
        %v4384 = vunpack.c.l.b16 %v526
        %v4385 = vunpack.c.l.b16 %v527
        %v4386 = vunpack.c.l.b16 %v528
        %v4387 = vunpack.c.l.b16 %v529
        %v4388 = vunpack.c.l.b16 %v530
        %v4389 = vunpack.c.l.b16 %v531
        %v4390 = vunpack.c.l.b16 %v532
        %v4391 = vunpack.c.l.b16 %v533
        %v4392 = vunpack.c.l.b16 %v534
        %v4393 = vunpack.c.l.b16 %v535
        %v4394 = vunpack.c.l.b16 %v536
        %v4395 = vunpack.c.l.b16 %v537
        %v4396 = vunpack.c.l.b16 %v538
        %v4397 = vunpack.c.l.b16 %v539
        %v4398 = vunpack.c.l.b16 %v540
        %v4399 = vunpack.c.l.b16 %v541
        %v4400 = vunpack.c.l.b16 %v542
        %v4401 = vunpack.c.l.b16 %v543
        %v4402 = vunpack.c.l.b16 %v544
        %v4403 = vunpack.c.l.b16 %v545
        %v4404 = vunpack.c.l.b16 %v546
        %v4405 = vunpack.c.l.b16 %v547
        %v4406 = vunpack.c.l.b16 %v548
        %v4407 = vunpack.c.l.b16 %v549
        %v4408 = vunpack.c.l.b16 %v550
        %v4409 = vunpack.c.l.b16 %v551
        %v4410 = vunpack.c.l.b16 %v552
        %v4411 = vunpack.c.l.b16 %v553
        %v4412 = vunpack.c.l.b16 %v554
        %v4413 = vunpack.c.l.b16 %v555
        %v4414 = vunpack.c.l.b16 %v556
        %v4415 = vunpack.c.l.b16 %v557
        %v4416 = vunpack.c.l.b16 %v558
        %v4417 = vunpack.c.l.b16 %v559
        %v4418 = vunpack.c.l.b16 %v560
        %v4419 = vunpack.c.l.b16 %v561
        %v4420 = vunpack.c.l.b16 %v562
        %v4421 = vunpack.c.l.b16 %v563
        %v4422 = vunpack.c.l.b16 %v564
        %v4423 = vunpack.c.l.b16 %v565
        %v4424 = vunpack.c.l.b16 %v566
        %v4425 = vunpack.c.l.b16 %v567
        %v4426 = vunpack.c.l.b16 %v568
        %v4427 = vunpack.c.l.b16 %v569
        %v4428 = vunpack.c.l.b16 %v570
        %v4429 = vunpack.c.l.b16 %v571
        %v4430 = vunpack.c.l.b16 %v572
        %v4431 = vunpack.c.l.b16 %v573
        %v4432 = vunpack.c.l.b16 %v574
        %v4433 = vunpack.c.l.b16 %v575
        %v4434 = vunpack.c.l.b16 %v576
        %v4435 = vunpack.c.l.b16 %v577
        %v4436 = vunpack.c.l.b16 %v578
        %v4437 = vunpack.c.l.b16 %v579
        %v4438 = vunpack.c.l.b16 %v580
        %v4439 = vunpack.c.l.b16 %v581
        %v4440 = vunpack.c.l.b16 %v582
        %v4441 = vunpack.c.l.b16 %v583
        %v4442 = vunpack.c.l.b16 %v584
        %v4443 = vunpack.c.l.b16 %v585
        %v4444 = vunpack.c.l.b16 %v586
        %v4445 = vunpack.c.l.b16 %v587
        %v4446 = vunpack.c.l.b16 %v588
        %v4447 = vunpack.c.l.b16 %v589
        %v4448 = vunpack.c.l.b16 %v590
        %v4449 = vunpack.c.l.b16 %v591
        %v4450 = vunpack.c.l.b16 %v592
        %v4451 = vunpack.c.l.b16 %v593
        %v4452 = vunpack.c.l.b16 %v594
        %v4453 = vunpack.c.l.b16 %v595
        %v4454 = vunpack.c.l.b16 %v596
        %v4455 = vunpack.c.l.b16 %v597
        %v4456 = vunpack.c.l.b16 %v598
        %v4457 = vunpack.c.l.b16 %v599
        %v4458 = vunpack.c.l.b16 %v600
        %v4459 = vunpack.c.l.b16 %v601
        %v4460 = vunpack.c.l.b16 %v602
        %v4461 = vunpack.c.l.b16 %v603
        %v4462 = vunpack.c.l.b16 %v604
        %v4463 = vunpack.c.l.b16 %v605
        %v4464 = vunpack.c.l.b16 %v606
        %v4465 = vunpack.c.l.b16 %v607
        %v4466 = vunpack.c.l.b16 %v608
        %v4467 = vunpack.c.l.b16 %v609
        %v4468 = vunpack.c.l.b16 %v610
        %v4469 = vunpack.c.l.b16 %v611
        %v4470 = vunpack.c.l.b16 %v612
        %v4471 = vunpack.c.l.b16 %v613
        %v4472 = vunpack.c.l.b16 %v614
        %v4473 = vunpack.c.l.b16 %v615
        %v4474 = vunpack.c.l.b16 %v616
        %v4475 = vunpack.c.l.b16 %v617
        %v4476 = vunpack.c.l.b16 %v618
        %v4477 = vunpack.c.l.b16 %v619
        %v4478 = vunpack.c.l.b16 %v620
        %v4479 = vunpack.c.l.b16 %v621
        %v4480 = vunpack.c.l.b16 %v622
        %v4481 = vunpack.c.l.b16 %v623
        %v4482 = vunpack.c.l.b16 %v624
        %v4483 = vunpack.c.l.b16 %v625
        %v4484 = vunpack.c.l.b16 %v626
        %v4485 = vunpack.c.l.b16 %v627
        %v4486 = vunpack.c.l.b16 %v628
        %v4487 = vunpack.c.l.b16 %v629
        %v4488 = vunpack.c.l.b16 %v630
        %v4489 = vunpack.c.l.b16 %v631
        %v4490 = vunpack.c.l.b16 %v632
        %v4491 = vunpack.c.l.b16 %v633
        %v4492 = vunpack.c.l.b16 %v634
        %v4493 = vunpack.c.l.b16 %v635
        %v4494 = vunpack.c.l.b16 %v636
        %v4495 = vunpack.c.l.b16 %v637
        %v4496 = vunpack.c.l.b16 %v638
        %v4497 = vunpack.c.l.b16 %v639
        %v4498 = vunpack.c.l.b16 %v640
        %v4499 = vunpack.c.l.b16 %v641
        %v4500 = vunpack.c.l.b16 %v642
        %v4501 = vunpack.c.l.b16 %v643
        %v4502 = vunpack.c.l.b16 %v644
        %v4503 = vunpack.c.l.b16 %v645
        %v4504 = vunpack.c.l.b16 %v646
        %v4505 = vunpack.c.l.b16 %v647
        %v4506 = vunpack.c.l.b16 %v648
        %v4507 = vunpack.c.l.b16 %v649
        %v4508 = vunpack.c.l.b16 %v650
        %v4509 = vunpack.c.l.b16 %v651
        %v4510 = vunpack.c.l.b16 %v652
        %v4511 = vunpack.c.l.b16 %v653
        %v4512 = vunpack.c.l.b16 %v654
        %v4513 = vunpack.c.l.b16 %v655
        %v4514 = vunpack.c.l.b16 %v656
        %v4515 = vunpack.c.l.b16 %v657
        %v4516 = vunpack.c.l.b16 %v658
        %v4517 = vunpack.c.l.b16 %v659
        %v4518 = vunpack.c.l.b16 %v660
        %v4519 = vunpack.c.l.b16 %v661
        %v4520 = vunpack.c.l.b16 %v662
        %v4521 = vunpack.c.l.b16 %v663
        %v4522 = vunpack.c.l.b16 %v664
        %v4523 = vunpack.c.l.b16 %v665
        %v4524 = vunpack.c.l.b16 %v666
        %v4525 = vunpack.c.l.b16 %v667
        %v4526 = vunpack.c.l.b16 %v668
        %v4527 = vunpack.c.l.b16 %v669
        %v4528 = vunpack.c.l.b16 %v670
        %v4529 = vunpack.c.l.b16 %v671
        %v4530 = vunpack.c.l.b16 %v672
        %v4531 = vunpack.c.l.b16 %v673
        %v4532 = vunpack.c.l.b16 %v674
        %v4533 = vunpack.c.l.b16 %v675
        %v4534 = vunpack.c.l.b16 %v676
        %v4535 = vunpack.c.l.b16 %v677
        %v4536 = vunpack.c.l.b16 %v678
        %v4537 = vunpack.c.l.b16 %v679
        %v4538 = vunpack.c.l.b16 %v680
        %v4539 = vunpack.c.l.b16 %v681
        %v4540 = vunpack.c.l.b16 %v682
        %v4541 = vunpack.c.l.b16 %v683
        %v4542 = vunpack.c.l.b16 %v684
        %v4543 = vunpack.c.l.b16 %v685
        %v4544 = vunpack.c.l.b16 %v686
        %v4545 = vunpack.c.l.b16 %v687
        %v4546 = vunpack.c.l.b16 %v688
        %v4547 = vunpack.c.l.b16 %v689
        %v4548 = vunpack.c.l.b16 %v690
        %v4549 = vunpack.c.l.b16 %v691
        %v4550 = vunpack.c.l.b16 %v692
        %v4551 = vunpack.c.l.b16 %v693
        %v4552 = vunpack.c.l.b16 %v694
        %v4553 = vunpack.c.l.b16 %v695
        %v4554 = vunpack.c.l.b16 %v696
        %v4555 = vunpack.c.l.b16 %v697
        %v4556 = vunpack.c.l.b16 %v698
        %v4557 = vunpack.c.l.b16 %v699
        %v4558 = vunpack.c.l.b16 %v700
        %v4559 = vunpack.c.l.b16 %v701
        %v4560 = vunpack.c.l.b16 %v702
        %v4561 = vunpack.c.l.b16 %v703
        %v4562 = vunpack.c.l.b16 %v704
        %v4563 = vunpack.c.l.b16 %v705
        %v4564 = vunpack.c.l.b16 %v706
        %v4565 = vunpack.c.l.b16 %v707
        %v4566 = vunpack.c.l.b16 %v708
        %v4567 = vunpack.c.l.b16 %v709
        %v4568 = vunpack.c.l.b16 %v710
        %v4569 = vunpack.c.l.b16 %v711
        %v4570 = vunpack.c.l.b16 %v712
        %v4571 = vunpack.c.l.b16 %v713
        %v4572 = vunpack.c.l.b16 %v714
        %v4573 = vunpack.c.l.b16 %v715
        %v4574 = vunpack.c.l.b16 %v716
        %v4575 = vunpack.c.l.b16 %v717
        %v4576 = vunpack.c.l.b16 %v718
        %v4577 = vunpack.c.l.b16 %v719
        %v4578 = vunpack.c.l.b16 %v720
        %v4579 = vunpack.c.l.b16 %v721
        %v4580 = vunpack.c.l.b16 %v722
        %v4581 = vunpack.c.l.b16 %v723
        %v4582 = vunpack.c.l.b16 %v724
        %v4583 = vunpack.c.l.b16 %v725
        %v4584 = vunpack.c.l.b16 %v726
        %v4585 = vunpack.c.l.b16 %v727
        %v4586 = vunpack.c.l.b16 %v728
        %v4587 = vunpack.c.l.b16 %v729
        %v4588 = vunpack.c.l.b16 %v730
        %v4589 = vunpack.c.l.b16 %v731
        %v4590 = vunpack.c.l.b16 %v732
        %v4591 = vunpack.c.l.b16 %v733
        %v4592 = vunpack.c.l.b16 %v734
        %v4593 = vunpack.c.l.b16 %v735
        %v4594 = vunpack.c.l.b16 %v736
        %v4595 = vunpack.c.l.b16 %v737
        %v4596 = vunpack.c.l.b16 %v738
        %v4597 = vunpack.c.l.b16 %v739
        %v4598 = vunpack.c.l.b16 %v740
        %v4599 = vunpack.c.l.b16 %v741
        %v4600 = vunpack.c.l.b16 %v742
        %v4601 = vunpack.c.l.b16 %v743
        %v4602 = vunpack.c.l.b16 %v744
        %v4603 = vunpack.c.l.b16 %v745
        %v4604 = vunpack.c.l.b16 %v746
        %v4605 = vunpack.c.l.b16 %v747
        %v4606 = vunpack.c.l.b16 %v748
        %v4607 = vunpack.c.l.b16 %v749
        %v4608 = vunpack.c.l.b16 %v750
        %v4609 = vunpack.c.l.b16 %v751
        %v4610 = vunpack.c.l.b16 %v752
        %v4611 = vunpack.c.l.b16 %v753
        %v4612 = vunpack.c.l.b16 %v754
        %v4613 = vunpack.c.l.b16 %v755
        %v4614 = vunpack.c.l.b16 %v756
        %v4615 = vunpack.c.l.b16 %v757
        %v4616 = vunpack.c.l.b16 %v758
        %v4617 = vunpack.c.l.b16 %v759
        %v4618 = vunpack.c.l.b16 %v760
        %v4619 = vunpack.c.l.b16 %v761
        %v4620 = vunpack.c.l.b16 %v762
        %v4621 = vunpack.c.l.b16 %v763
        %v4622 = vunpack.c.l.b16 %v764
        %v4623 = vunpack.c.l.b16 %v765
        %v4624 = vunpack.c.l.b16 %v766
        %v4625 = vunpack.c.l.b16 %v767
        %v4626 = vunpack.c.l.b16 %v768
        %v4627 = vunpack.c.l.b16 %v769
        %v4628 = vunpack.c.l.b16 %v770
        %v4629 = vunpack.c.l.b16 %v771
        %v4630 = vunpack.c.l.b16 %v772
        %v4631 = vunpack.c.l.b16 %v773
        %v4632 = vunpack.c.l.b16 %v774
        %v4633 = vunpack.c.l.b16 %v775
        %v4634 = vunpack.c.l.b16 %v776
        %v4635 = vunpack.c.l.b16 %v777
        %v4636 = vunpack.c.l.b16 %v778
        %v4637 = vunpack.c.l.b16 %v779
        %v4638 = vunpack.c.l.b16 %v780
        %v4639 = vunpack.c.l.b16 %v781
        %v4640 = vunpack.c.l.b16 %v782
        %v4641 = vunpack.c.l.b16 %v783
        %v4642 = vunpack.c.l.b16 %v784
        %v4643 = vunpack.c.l.b16 %v785
        %v4644 = vunpack.c.l.b16 %v786
        %v4645 = vunpack.c.l.b16 %v787
        %v4646 = vunpack.c.l.b16 %v788
        %v4647 = vunpack.c.l.b16 %v789
        %v4648 = vunpack.c.l.b16 %v790
        %v4649 = vunpack.c.l.b16 %v791
        %v4650 = vunpack.c.l.b16 %v792
        %v4651 = vunpack.c.l.b16 %v793
        %v4652 = vunpack.c.l.b16 %v794
        %v4653 = vunpack.c.l.b16 %v795
        %v4654 = vunpack.c.l.b16 %v796
        %v4655 = vunpack.c.l.b16 %v797
        %v4656 = vunpack.c.l.b16 %v798
        %v4657 = vunpack.c.l.b16 %v799
        %v4658 = vunpack.c.l.b16 %v800
        %v4659 = vunpack.c.l.b16 %v801
        %v4660 = vunpack.c.l.b16 %v802
        %v4661 = vunpack.c.l.b16 %v803
        %v4662 = vunpack.c.l.b16 %v804
        %v4663 = vunpack.c.l.b16 %v805
        %v4664 = vunpack.c.l.b16 %v806
        %v4665 = vunpack.c.l.b16 %v807
        %v4666 = vunpack.c.l.b16 %v808
        %v4667 = vunpack.c.l.b16 %v809
        %v4668 = vunpack.c.l.b16 %v810
        %v4669 = vunpack.c.l.b16 %v811
        %v4670 = vunpack.c.l.b16 %v812
        %v4671 = vunpack.c.l.b16 %v813
        %v4672 = vunpack.c.l.b16 %v814
        %v4673 = vunpack.c.l.b16 %v815
        %v4674 = vunpack.c.l.b16 %v816
        %v4675 = vunpack.c.l.b16 %v817
        %v4676 = vunpack.c.l.b16 %v818
        %v4677 = vunpack.c.l.b16 %v819
        %v4678 = vunpack.c.l.b16 %v820
        %v4679 = vunpack.c.l.b16 %v821
        %v4680 = vunpack.c.l.b16 %v822
        %v4681 = vunpack.c.l.b16 %v823
        %v4682 = vunpack.c.l.b16 %v824
        %v4683 = vunpack.c.l.b16 %v825
        %v4684 = vunpack.c.l.b16 %v826
        %v4685 = vunpack.c.l.b16 %v827
        %v4686 = vunpack.c.l.b16 %v828
        %v4687 = vunpack.c.l.b16 %v829
        %v4688 = vunpack.c.l.b16 %v830
        %v4689 = vunpack.c.l.b16 %v831
        %v4690 = vunpack.c.l.b16 %v832
        %v4691 = vunpack.c.l.b16 %v833
        %v4692 = vunpack.c.l.b16 %v834
        %v4693 = vunpack.c.l.b16 %v835
        %v4694 = vunpack.c.l.b16 %v836
        %v4695 = vunpack.c.l.b16 %v837
        %v4696 = vunpack.c.l.b16 %v838
        %v4697 = vunpack.c.l.b16 %v839
        %v4698 = vunpack.c.l.b16 %v840
        %v4699 = vunpack.c.l.b16 %v841
        %v4700 = vunpack.c.l.b16 %v842
        %v4701 = vunpack.c.l.b16 %v843
        %v4702 = vunpack.c.l.b16 %v844
        %v4703 = vunpack.c.l.b16 %v845
        %v4704 = vunpack.c.l.b16 %v846
        %v4705 = vunpack.c.l.b16 %v847
        %v4706 = vunpack.c.l.b16 %v848
        %v4707 = vunpack.c.l.b16 %v849
        %v4708 = vunpack.c.l.b16 %v850
        %v4709 = vunpack.c.l.b16 %v851
        %v4710 = vunpack.c.l.b16 %v852
        %v4711 = vunpack.c.l.b16 %v853
        %v4712 = vunpack.c.l.b16 %v854
        %v4713 = vunpack.c.l.b16 %v855
        %v4714 = vunpack.c.l.b16 %v856
        %v4715 = vunpack.c.l.b16 %v857
        %v4716 = vunpack.c.l.b16 %v858
        %v4717 = vunpack.c.l.b16 %v859
        %v4718 = vunpack.c.l.b16 %v860
        %v4719 = vunpack.c.l.b16 %v861
        %v4720 = vunpack.c.l.b16 %v862
        %v4721 = vunpack.c.l.b16 %v863
        %v4722 = vunpack.c.l.b16 %v864
        %v4723 = vunpack.c.l.b16 %v865
        %v4724 = vunpack.c.l.b16 %v866
        %v4725 = vunpack.c.l.b16 %v867
        %v4726 = vunpack.c.l.b16 %v868
        %v4727 = vunpack.c.l.b16 %v869
        %v4728 = vunpack.c.l.b16 %v870
        %v4729 = vunpack.c.l.b16 %v871
        %v4730 = vunpack.c.l.b16 %v872
        %v4731 = vunpack.c.l.b16 %v873
        %v4732 = vunpack.c.l.b16 %v874
        %v4733 = vunpack.c.l.b16 %v875
        %v4734 = vunpack.c.l.b16 %v876
        %v4735 = vunpack.c.l.b16 %v877
        %v4736 = vunpack.c.l.b16 %v878
        %v4737 = vunpack.c.l.b16 %v879
        %v4738 = vunpack.c.l.b16 %v880
        %v4739 = vunpack.c.l.b16 %v881
        %v4740 = vunpack.c.l.b16 %v882
        %v4741 = vunpack.c.l.b16 %v883
        %v4742 = vunpack.c.l.b16 %v884
        %v4743 = vunpack.c.l.b16 %v885
        %v4744 = vunpack.c.l.b16 %v886
        %v4745 = vunpack.c.l.b16 %v887
        %v4746 = vunpack.c.l.b16 %v888
        %v4747 = vunpack.c.l.b16 %v889
        %v4748 = vunpack.c.l.b16 %v890
        %v4749 = vunpack.c.l.b16 %v891
        %v4750 = vunpack.c.l.b16 %v892
        %v4751 = vunpack.c.l.b16 %v893
        %v4752 = vunpack.c.l.b16 %v894
        %v4753 = vunpack.c.l.b16 %v895
        %v4754 = vunpack.c.l.b16 %v896
        %v4755 = vunpack.c.l.b16 %v897
        %v4756 = vunpack.c.l.b16 %v898
        %v4757 = vunpack.c.l.b16 %v899
        %v4758 = vunpack.c.l.b16 %v900
        %v4759 = vunpack.c.l.b16 %v901
        %v4760 = vunpack.c.l.b16 %v902
        %v4761 = vunpack.c.l.b16 %v903
        %v4762 = vunpack.c.l.b16 %v904
        %v4763 = vunpack.c.l.b16 %v905
        %v4764 = vunpack.c.l.b16 %v906
        %v4765 = vunpack.c.l.b16 %v907
        %v4766 = vunpack.c.l.b16 %v908
        %v4767 = vunpack.c.l.b16 %v909
        %v4768 = vunpack.c.l.b16 %v910
        %v4769 = vunpack.c.l.b16 %v911
        %v4770 = vunpack.c.l.b16 %v912
        %v4771 = vunpack.c.l.b16 %v913
        %v4772 = vunpack.c.l.b16 %v914
        %v4773 = vunpack.c.l.b16 %v915
        %v4774 = vunpack.c.l.b16 %v916
        %v4775 = vunpack.c.l.b16 %v917
        %v4776 = vunpack.c.l.b16 %v918
        %v4777 = vunpack.c.l.b16 %v919
        %v4778 = vunpack.c.l.b16 %v920
        %v4779 = vunpack.c.l.b16 %v921
        %v4780 = vunpack.c.l.b16 %v922
        %v4781 = vunpack.c.l.b16 %v923
        %v4782 = vunpack.c.l.b16 %v924
        %v4783 = vunpack.c.l.b16 %v925
        %v4784 = vunpack.c.l.b16 %v926
        %v4785 = vunpack.c.l.b16 %v927
        %v4786 = vunpack.c.l.b16 %v928
        %v4787 = vunpack.c.l.b16 %v929
        %v4788 = vunpack.c.l.b16 %v930
        %v4789 = vunpack.c.l.b16 %v931
        %v4790 = vunpack.c.l.b16 %v932
        %v4791 = vunpack.c.l.b16 %v933
        %v4792 = vunpack.c.l.b16 %v934
        %v4793 = vunpack.c.l.b16 %v935
        %v4794 = vunpack.c.l.b16 %v936
        %v4795 = vunpack.c.l.b16 %v937
        %v4796 = vunpack.c.l.b16 %v938
        %v4797 = vunpack.c.l.b16 %v939
        %v4798 = vunpack.c.l.b16 %v940
        %v4799 = vunpack.c.l.b16 %v941
        %v4800 = vunpack.c.l.b16 %v942
        %v4801 = vunpack.c.l.b16 %v943
        %v4802 = vunpack.c.l.b16 %v944
        %v4803 = vunpack.c.l.b16 %v945
        %v4804 = vunpack.c.l.b16 %v946
        %v4805 = vunpack.c.l.b16 %v947
        %v4806 = vunpack.c.l.b16 %v948
        %v4807 = vunpack.c.l.b16 %v949
        %v4808 = vunpack.c.l.b16 %v950
        %v4809 = vunpack.c.l.b16 %v951
        %v4810 = vunpack.c.l.b16 %v952
        %v4811 = vunpack.c.l.b16 %v953
        %v4812 = vunpack.c.l.b16 %v954
        %v4813 = vunpack.c.l.b16 %v955
        %v4814 = vunpack.c.l.b16 %v956
        %v4815 = vunpack.c.l.b16 %v957
        %v4816 = vunpack.c.l.b16 %v958
        %v4817 = vunpack.c.l.b16 %v959
        %v4818 = vunpack.c.l.b16 %v960
        %v4819 = vunpack.c.l.b16 %v961
        %v4820 = vunpack.c.l.b16 %v962
        %v4821 = vunpack.c.l.b16 %v963
        %v4822 = vunpack.c.l.b16 %v964
        %v4823 = vunpack.c.l.b16 %v965
        %v4824 = vunpack.c.l.b16 %v966
        %v4825 = vunpack.c.l.b16 %v967
        %v4826 = vunpack.c.l.b16 %v968
        %v4827 = vunpack.c.l.b16 %v969
        %v4828 = vunpack.c.l.b16 %v970
        %v4829 = vunpack.c.l.b16 %v971
        %v4830 = vunpack.c.l.b16 %v972
        %v4831 = vunpack.c.l.b16 %v973
        %v4832 = vunpack.c.l.b16 %v974
        %v4833 = vunpack.c.l.b16 %v975
        %v4834 = vunpack.c.l.b16 %v976
        %v4835 = vunpack.c.l.b16 %v977
        %v4836 = vunpack.c.l.b16 %v978
        %v4837 = vunpack.c.l.b16 %v979
        %v4838 = vunpack.c.l.b16 %v980
        %v4839 = vunpack.c.l.b16 %v981
        %v4840 = vunpack.c.l.b16 %v982
        %v4841 = vunpack.c.l.b16 %v983
        %v4842 = vunpack.c.l.b16 %v984
        %v4843 = vunpack.c.l.b16 %v985
        %v4844 = vunpack.c.l.b16 %v986
        %v4845 = vunpack.c.l.b16 %v987
        %v4846 = vunpack.c.l.b16 %v988
        %v4847 = vunpack.c.l.b16 %v989
        %v4848 = vunpack.c.l.b16 %v990
        %v4849 = vunpack.c.l.b16 %v991
        %v4850 = vunpack.c.l.b16 %v992
        %v4851 = vunpack.c.l.b16 %v993
        %v4852 = vunpack.c.l.b16 %v994
        %v4853 = vunpack.c.l.b16 %v995
        %v4854 = vunpack.c.l.b16 %v996
        %v4855 = vunpack.c.l.b16 %v997
        %v4856 = vunpack.c.l.b16 %v998
        %v4857 = vunpack.c.l.b16 %v999
        %v4858 = vunpack.c.l.b16 %v1000
        %v4859 = vunpack.c.l.b16 %v1001
        %v4860 = vunpack.c.l.b16 %v1002
        %v4861 = vunpack.c.l.b16 %v1003
        %v4862 = vunpack.c.l.b16 %v1004
        %v4863 = vunpack.c.l.b16 %v1005
        %v4864 = vunpack.c.l.b16 %v1006
        %v4865 = vunpack.c.l.b16 %v1007
        %v4866 = vunpack.c.l.b16 %v1008
        %v4867 = vunpack.c.l.b16 %v1009
        %v4868 = vunpack.c.l.b16 %v1010
        %v4869 = vunpack.c.l.b16 %v1011
        %v4870 = vunpack.c.l.b16 %v1012
        %v4871 = vunpack.c.l.b16 %v1013
        %v4872 = vunpack.c.l.b16 %v1014
        %v4873 = vunpack.c.l.b16 %v1015
        %v4874 = vunpack.c.l.b16 %v1016
        %v4875 = vunpack.c.l.b16 %v1017
        %v4876 = vunpack.c.l.b16 %v1018
        %v4877 = vunpack.c.l.b16 %v1019
        %v4878 = vunpack.c.l.b16 %v1020
        %v4879 = vunpack.c.l.b16 %v1021
        %v4880 = vunpack.c.l.b16 %v1022
        %v4881 = vunpack.c.l.b16 %v1023
        %v4882 = vunpack.c.l.b16 %v1024
        %v4883 = vunpack.c.l.b16 %v1025
        %v4884 = vunpack.c.l.b16 %v1026
        %v4885 = vunpack.c.l.b16 %v1027
        %v4886 = vunpack.c.l.b16 %v1028
        %v4887 = vunpack.c.l.b16 %v1029
        %v4888 = vunpack.c.l.b16 %v1030
        %v4889 = vunpack.c.l.b16 %v1031
        %v4890 = vunpack.c.l.b16 %v1032
        %v4891 = vunpack.c.l.b16 %v1033
        %v4892 = vunpack.c.l.b16 %v1034
        %v4893 = vunpack.c.l.b16 %v1035
        %v4894 = vunpack.c.l.b16 %v1036
        %v4895 = vunpack.c.l.b16 %v1037
        %v4896 = vunpack.c.l.b16 %v1038
        %v4897 = vunpack.c.l.b16 %v1039
        %v4898 = vunpack.c.l.b16 %v1040
        %v4899 = vunpack.c.l.b16 %v1041
        %v4900 = vunpack.c.l.b16 %v1042
        %v4901 = vunpack.c.l.b16 %v1043
        %v4902 = vunpack.c.l.b16 %v1044
        %v4903 = vunpack.c.l.b16 %v1045
        %v4904 = vunpack.c.l.b16 %v1046
        %v4905 = vunpack.c.l.b16 %v1047
        %v4906 = vunpack.c.l.b16 %v1048
        %v4907 = vunpack.c.l.b16 %v1049
        %v4908 = vunpack.c.l.b16 %v1050
        %v4909 = vunpack.c.l.b16 %v1051
        %v4910 = vunpack.c.l.b16 %v1052
        %v4911 = vunpack.c.l.b16 %v1053
        %v4912 = vunpack.c.l.b16 %v1054
        %v4913 = vunpack.c.l.b16 %v1055
        %v4914 = vunpack.c.l.b16 %v1056
        %v4915 = vunpack.c.l.b16 %v1057
        %v4916 = vunpack.c.l.b16 %v1058
        %v4917 = vunpack.c.l.b16 %v1059
        %v4918 = vunpack.c.l.b16 %v1060
        %v4919 = vunpack.c.l.b16 %v1061
        %v4920 = vunpack.c.l.b16 %v1062
        %v4921 = vunpack.c.l.b16 %v1063
        %v4922 = vunpack.c.l.b16 %v1064
        %v4923 = vunpack.c.l.b16 %v1065
        %v4924 = vunpack.c.l.b16 %v1066
        %v4925 = vunpack.c.l.b16 %v1067
        %v4926 = vunpack.c.l.b16 %v1068
        %v4927 = vunpack.c.l.b16 %v1069
        %v4928 = vunpack.c.l.b16 %v1070
        %v4929 = vunpack.c.l.b16 %v1071
        %v4930 = vunpack.c.l.b16 %v1072
        %v4931 = vunpack.c.l.b16 %v1073
        %v4932 = vunpack.c.l.b16 %v1074
        %v4933 = vunpack.c.l.b16 %v1075
        %v4934 = vunpack.c.l.b16 %v1076
        %v4935 = vunpack.c.l.b16 %v1077
        %v4936 = vunpack.c.l.b16 %v1078
        %v4937 = vunpack.c.l.b16 %v1079
        %v4938 = vunpack.c.l.b16 %v1080
        %v4939 = vunpack.c.l.b16 %v1081
        %v4940 = vunpack.c.l.b16 %v1082
        %v4941 = vunpack.c.l.b16 %v1083
        %v4942 = vunpack.c.l.b16 %v1084
        %v4943 = vunpack.c.l.b16 %v1085
        %v4944 = vunpack.c.l.b16 %v1086
        %v4945 = vunpack.c.l.b16 %v1087
        %v4946 = vunpack.c.l.b16 %v1088
        %v4947 = vunpack.c.l.b16 %v1089
        %v4948 = vunpack.c.l.b16 %v1090
        %v4949 = vunpack.c.l.b16 %v1091
        %v4950 = vunpack.c.l.b16 %v1092
        %v4951 = vunpack.c.l.b16 %v1093
        %v4952 = vunpack.c.l.b16 %v1094
        %v4953 = vunpack.c.l.b16 %v1095
        %v4954 = vunpack.c.l.b16 %v1096
        %v4955 = vunpack.c.l.b16 %v1097
        %v4956 = vunpack.c.l.b16 %v1098
        %v4957 = vunpack.c.l.b16 %v1099
        %v4958 = vunpack.c.l.b16 %v1100
        %v4959 = vunpack.c.l.b16 %v1101
        %v4960 = vunpack.c.l.b16 %v1102
        %v4961 = vunpack.c.l.b16 %v1103
        %v4962 = vunpack.c.l.b16 %v1104
        %v4963 = vunpack.c.l.b16 %v1105
        %v4964 = vunpack.c.l.b16 %v1106
        %v4965 = vunpack.c.l.b16 %v1107
        %v4966 = vunpack.c.l.b16 %v1108
        %v4967 = vunpack.c.l.b16 %v1109
        %v4968 = vunpack.c.l.b16 %v1110
        %v4969 = vunpack.c.l.b16 %v1111
        %v4970 = vunpack.c.l.b16 %v1112
        %v4971 = vunpack.c.l.b16 %v1113
        %v4972 = vunpack.c.l.b16 %v1114
        %v4973 = vunpack.c.l.b16 %v1115
        %v4974 = vunpack.c.l.b16 %v1116
        %v4975 = vunpack.c.l.b16 %v1117
        %v4976 = vunpack.c.l.b16 %v1118
        %v4977 = vunpack.c.l.b16 %v1119
        %v4978 = vunpack.c.l.b16 %v1120
        %v4979 = vunpack.c.l.b16 %v1121
        %v4980 = vunpack.c.l.b16 %v1122
        %v4981 = vunpack.c.l.b16 %v1123
        %v4982 = vunpack.c.l.b16 %v1124
        %v4983 = vunpack.c.l.b16 %v1125
        %v4984 = vunpack.c.l.b16 %v1126
        %v4985 = vunpack.c.l.b16 %v1127
        %v4986 = vunpack.c.l.b16 %v1128
        %v4987 = vunpack.c.l.b16 %v1129
        %v4988 = vunpack.c.l.b16 %v1130
        %v4989 = vunpack.c.l.b16 %v1131
        %v4990 = vunpack.c.l.b16 %v1132
        %v4991 = vunpack.c.l.b16 %v1133
        %v4992 = vunpack.c.l.b16 %v1134
        %v4993 = vunpack.c.l.b16 %v1135
        %v4994 = vunpack.c.l.b16 %v1136
        %v4995 = vunpack.c.l.b16 %v1137
        %v4996 = vunpack.c.l.b16 %v1138
        %v4997 = vunpack.c.l.b16 %v1139
        %v4998 = vunpack.c.l.b16 %v1140
        %v4999 = vunpack.c.l.b16 %v1141
        %v5000 = vunpack.c.l.b16 %v1142
        %v5001 = vunpack.c.l.b16 %v1143
        %v5002 = vunpack.c.l.b16 %v1144
        %v5003 = vunpack.c.l.b16 %v1145
        %v5004 = vunpack.c.l.b16 %v1146
        %v5005 = vunpack.c.l.b16 %v1147
        %v5006 = vunpack.c.l.b16 %v1148
        %v5007 = vunpack.c.l.b16 %v1149
        %v5008 = vunpack.c.l.b16 %v1150
        %v5009 = vunpack.c.l.b16 %v1151
        %v5010 = vunpack.c.l.b16 %v1152
        %v5011 = vunpack.c.l.b16 %v1153
        %v5012 = vunpack.c.l.b16 %v1154
        %v5013 = vunpack.c.l.b16 %v1155
        %v5014 = vunpack.c.l.b16 %v1156
        %v5015 = vunpack.c.l.b16 %v1157
        %v5016 = vunpack.c.l.b16 %v1158
        %v5017 = vunpack.c.l.b16 %v1159
        %v5018 = vunpack.c.l.b16 %v1160
        %v5019 = vunpack.c.l.b16 %v1161
        %v5020 = vunpack.c.l.b16 %v1162
        %v5021 = vunpack.c.l.b16 %v1163
        %v5022 = vunpack.c.l.b16 %v1164
        %v5023 = vunpack.c.l.b16 %v1165
        %v5024 = vunpack.c.l.b16 %v1166
        %v5025 = vunpack.c.l.b16 %v1167
        %v5026 = vunpack.c.l.b16 %v1168
        %v5027 = vunpack.c.l.b16 %v1169
        %v5028 = vunpack.c.l.b16 %v1170
        %v5029 = vunpack.c.l.b16 %v1171
        %v5030 = vunpack.c.l.b16 %v1172
        %v5031 = vunpack.c.l.b16 %v1173
        %v5032 = vunpack.c.l.b16 %v1174
        %v5033 = vunpack.c.l.b16 %v1175
        %v5034 = vunpack.c.l.b16 %v1176
        %v5035 = vunpack.c.l.b16 %v1177
        %v5036 = vunpack.c.l.b16 %v1178
        %v5037 = vunpack.c.l.b16 %v1179
        %v5038 = vunpack.c.l.b16 %v1180
        %v5039 = vunpack.c.l.b16 %v1181
        %v5040 = vunpack.c.l.b16 %v1182
        %v5041 = vunpack.c.l.b16 %v1183
        %v5042 = vunpack.c.l.b16 %v1184
        %v5043 = vunpack.c.l.b16 %v1185
        %v5044 = vunpack.c.l.b16 %v1186
        %v5045 = vunpack.c.l.b16 %v1187
        %v5046 = vunpack.c.l.b16 %v1188
        %v5047 = vunpack.c.l.b16 %v1189
        %v5048 = vunpack.c.l.b16 %v1190
        %v5049 = vunpack.c.l.b16 %v1191
        %v5050 = vunpack.c.l.b16 %v1192
        %v5051 = vunpack.c.l.b16 %v1193
        %v5052 = vunpack.c.l.b16 %v1194
        %v5053 = vunpack.c.l.b16 %v1195
        %v5054 = vunpack.c.l.b16 %v1196
        %v5055 = vunpack.c.l.b16 %v1197
        %v5056 = vunpack.c.l.b16 %v1198
        %v5057 = vunpack.c.l.b16 %v1199
        %v5058 = vunpack.c.l.b16 %v1200
        %v5059 = vunpack.c.l.b16 %v1201
        %v5060 = vunpack.c.l.b16 %v1202
        %v5061 = vunpack.c.l.b16 %v1203
        %v5062 = vunpack.c.l.b16 %v1204
        %v5063 = vunpack.c.l.b16 %v1205
        %v5064 = vunpack.c.l.b16 %v1206
        %v5065 = vunpack.c.l.b16 %v1207
        %v5066 = vunpack.c.l.b16 %v1208
        %v5067 = vunpack.c.l.b16 %v1209
        %v5068 = vunpack.c.l.b16 %v1210
        %v5069 = vunpack.c.l.b16 %v1211
        %v5070 = vunpack.c.l.b16 %v1212
        %v5071 = vunpack.c.l.b16 %v1213
        %v5072 = vunpack.c.l.b16 %v1214
        %v5073 = vunpack.c.l.b16 %v1215
        %v5074 = vunpack.c.l.b16 %v1216
        %v5075 = vunpack.c.l.b16 %v1217
        %v5076 = vunpack.c.l.b16 %v1218
        %v5077 = vunpack.c.l.b16 %v1219
        %v5078 = vunpack.c.l.b16 %v1220
        %v5079 = vunpack.c.l.b16 %v1221
        %v5080 = vunpack.c.l.b16 %v1222
        %v5081 = vunpack.c.l.b16 %v1223
        %v5082 = vunpack.c.l.b16 %v1224
        %v5083 = vunpack.c.l.b16 %v1225
        %v5084 = vunpack.c.l.b16 %v1226
        %v5085 = vunpack.c.l.b16 %v1227
        %v5086 = vunpack.c.l.b16 %v1228
        %v5087 = vunpack.c.l.b16 %v1229
        %v5088 = vunpack.c.l.b16 %v1230
        %v5089 = vunpack.c.l.b16 %v1231
        %v5090 = vunpack.c.l.b16 %v1232
        %v5091 = vunpack.c.l.b16 %v1233
        %v5092 = vunpack.c.l.b16 %v1234
        %v5093 = vunpack.c.l.b16 %v1235
        %v5094 = vunpack.c.l.b16 %v1236
        %v5095 = vunpack.c.l.b16 %v1237
        %v5096 = vunpack.c.l.b16 %v1238
        %v5097 = vunpack.c.l.b16 %v1239
        %v5098 = vunpack.c.l.b16 %v1240
        %v5099 = vunpack.c.l.b16 %v1241
        %v5100 = vunpack.c.l.b16 %v1242
        %v5101 = vunpack.c.l.b16 %v1243
        %v5102 = vunpack.c.l.b16 %v1244
        %v5103 = vunpack.c.l.b16 %v1245
        %v5104 = vunpack.c.l.b16 %v1246
        %v5105 = vunpack.c.l.b16 %v1247
        %v5106 = vunpack.c.l.b16 %v1248
        %v5107 = vunpack.c.l.b16 %v1249
        %v5108 = vunpack.c.l.b16 %v1250
        %v5109 = vunpack.c.l.b16 %v1251
        %v5110 = vunpack.c.l.b16 %v1252
        %v5111 = vunpack.c.l.b16 %v1253
        %v5112 = vunpack.c.l.b16 %v1254
        %v5113 = vunpack.c.l.b16 %v1255
        %v5114 = vunpack.c.l.b16 %v1256
        %v5115 = vunpack.c.l.b16 %v1257
        %v5116 = vunpack.c.l.b16 %v1258
        %v5117 = vunpack.c.l.b16 %v1259
        %v5118 = vunpack.c.l.b16 %v1260
        %v5119 = vunpack.c.l.b16 %v1261
        %v5120 = vunpack.c.l.b16 %v1262
        %v5121 = vunpack.c.l.b16 %v1263
        %v5122 = vunpack.c.l.b16 %v1264
        %v5123 = vunpack.c.l.b16 %v1265
        %v5124 = vunpack.c.l.b16 %v1266
        %v5125 = vunpack.c.l.b16 %v1267
        %v5126 = vunpack.c.l.b16 %v1268
        %v5127 = vunpack.c.l.b16 %v1269
        %v5128 = vunpack.c.l.b16 %v1270
        %v5129 = vunpack.c.l.b16 %v1271
        %v5130 = vunpack.c.l.b16 %v1272
        %v5131 = vunpack.c.l.b16 %v1273
        %v5132 = vunpack.c.l.b16 %v1274
        %v5133 = vunpack.c.l.b16 %v1275
        %v5134 = vunpack.c.l.b16 %v1276
        %v5135 = vunpack.c.l.b16 %v1277
        %v5136 = vunpack.c.l.b16 %v1278
        %v5137 = vunpack.c.l.b16 %v1279
        %v5138 = vunpack.c.l.b16 %v1280
        %v5139 = vunpack.c.l.b16 %v1281
        %v5140 = vunpack.c.l.b16 %v1282
        %v5141 = vunpack.c.l.b16 %v1283
        %v5142 = vunpack.c.l.b16 %v1284
        %v5143 = vunpack.c.l.b16 %v1285
        %v5144 = vunpack.c.l.b16 %v1286
        %v5145 = vunpack.c.l.b16 %v1287
        %v5146 = vunpack.c.l.b16 %v1288
        %v5147 = vunpack.c.l.b16 %v1289
        %v5148 = vunpack.c.l.b16 %v1290
        %v5149 = vunpack.c.l.b16 %v1291
        %v5150 = vunpack.c.l.b16 %v1292
        %v5151 = vunpack.c.l.b16 %v1293
        %v5152 = vunpack.c.l.b16 %v1294
        %v5153 = vunpack.c.l.b16 %v1295
        %v5154 = vunpack.c.l.b16 %v1296
        %v5155 = vunpack.c.l.b16 %v1297
        %v5156 = vunpack.c.l.b16 %v1298
        %v5157 = vunpack.c.l.b16 %v1299
        %v5158 = vunpack.c.l.b16 %v1300
        %v5159 = vunpack.c.l.b16 %v1301
        %v5160 = vunpack.c.l.b16 %v1302
        %v5161 = vunpack.c.l.b16 %v1303
        %v5162 = vunpack.c.l.b16 %v1304
        %v5163 = vunpack.c.l.b16 %v1305
        %v5164 = vunpack.c.l.b16 %v1306
        %v5165 = vunpack.c.l.b16 %v1307
        %v5166 = vunpack.c.l.b16 %v1308
        %v5167 = vunpack.c.l.b16 %v1309
        %v5168 = vunpack.c.l.b16 %v1310
        %v5169 = vunpack.c.l.b16 %v1311
        %v5170 = vunpack.c.l.b16 %v1312
        %v5171 = vunpack.c.l.b16 %v1313
        %v5172 = vunpack.c.l.b16 %v1314
        %v5173 = vunpack.c.l.b16 %v1315
        %v5174 = vunpack.c.l.b16 %v1316
        %v5175 = vunpack.c.l.b16 %v1317
        %v5176 = vunpack.c.l.b16 %v1318
        %v5177 = vunpack.c.l.b16 %v1319
        %v5178 = vunpack.c.l.b16 %v1320
        %v5179 = vunpack.c.l.b16 %v1321
        %v5180 = vunpack.c.l.b16 %v1322
        %v5181 = vunpack.c.l.b16 %v1323
        %v5182 = vunpack.c.l.b16 %v1324
        %v5183 = vunpack.c.l.b16 %v1325
        %v5184 = vunpack.c.l.b16 %v1326
        %v5185 = vunpack.c.l.b16 %v1327
        %v5186 = vunpack.c.l.b16 %v1328
        %v5187 = vunpack.c.l.b16 %v1329
        %v5188 = vunpack.c.l.b16 %v1330
        %v5189 = vunpack.c.l.b16 %v1331
        %v5190 = vunpack.c.l.b16 %v1332
        %v5191 = vunpack.c.l.b16 %v1333
        %v5192 = vunpack.c.l.b16 %v1334
        %v5193 = vunpack.c.l.b16 %v1335
        %v5194 = vunpack.c.l.b16 %v1336
        %v5195 = vunpack.c.l.b16 %v1337
        %v5196 = vunpack.c.l.b16 %v1338
        %v5197 = vunpack.c.l.b16 %v1339
        %v5198 = vunpack.c.l.b16 %v1340
        %v5199 = vunpack.c.l.b16 %v1341
        %v5200 = vunpack.c.l.b16 %v1342
        %v5201 = vunpack.c.l.b16 %v1343
        %v5202 = vunpack.c.l.b16 %v1344
        %v5203 = vunpack.c.l.b16 %v1345
        %v5204 = vunpack.c.l.b16 %v1346
        %v5205 = vunpack.c.l.b16 %v1347
        %v5206 = vunpack.c.l.b16 %v1348
        %v5207 = vunpack.c.l.b16 %v1349
        %v5208 = vunpack.c.l.b16 %v1350
        %v5209 = vunpack.c.l.b16 %v1351
        %v5210 = vunpack.c.l.b16 %v1352
        %v5211 = vunpack.c.l.b16 %v1353
        %v5212 = vunpack.c.l.b16 %v1354
        %v5213 = vunpack.c.l.b16 %v1355
        %v5214 = vunpack.c.l.b16 %v1356
        %v5215 = vunpack.c.l.b16 %v1357
        %v5216 = vunpack.c.l.b16 %v1358
        %v5217 = vunpack.c.l.b16 %v1359
        %v5218 = vunpack.c.l.b16 %v1360
        %v5219 = vunpack.c.l.b16 %v1361
        %v5220 = vunpack.c.l.b16 %v1362
        %v5221 = vunpack.c.l.b16 %v1363
        %v5222 = vunpack.c.l.b16 %v1364
        %v5223 = vunpack.c.l.b16 %v1365
        %v5224 = vunpack.c.l.b16 %v1366
        %v5225 = vunpack.c.l.b16 %v1367
        %v5226 = vunpack.c.l.b16 %v1368
        %v5227 = vunpack.c.l.b16 %v1369
        %v5228 = vunpack.c.l.b16 %v1370
        %v5229 = vunpack.c.l.b16 %v1371
        %v5230 = vunpack.c.l.b16 %v1372
        %v5231 = vunpack.c.l.b16 %v1373
        %v5232 = vunpack.c.l.b16 %v1374
        %v5233 = vunpack.c.l.b16 %v1375
        %v5234 = vunpack.c.l.b16 %v1376
        %v5235 = vunpack.c.l.b16 %v1377
        %v5236 = vunpack.c.l.b16 %v1378
        %v5237 = vunpack.c.l.b16 %v1379
        %v5238 = vunpack.c.l.b16 %v1380
        %v5239 = vunpack.c.l.b16 %v1381
        %v5240 = vunpack.c.l.b16 %v1382
        %v5241 = vunpack.c.l.b16 %v1383
        %v5242 = vunpack.c.l.b16 %v1384
        %v5243 = vunpack.c.l.b16 %v1385
        %v5244 = vunpack.c.l.b16 %v1386
        %v5245 = vunpack.c.l.b16 %v1387
        %v5246 = vunpack.c.l.b16 %v1388
        %v5247 = vunpack.c.l.b16 %v1389
        %v5248 = vunpack.c.l.b16 %v1390
        %v5249 = vunpack.c.l.b16 %v1391
        %v5250 = vunpack.c.l.b16 %v1392
        %v5251 = vunpack.c.l.b16 %v1393
        %v5252 = vunpack.c.l.b16 %v1394
        %v5253 = vunpack.c.l.b16 %v1395
        %v5254 = vunpack.c.l.b16 %v1396
        %v5255 = vunpack.c.l.b16 %v1397
        %v5256 = vunpack.c.l.b16 %v1398
        %v5257 = vunpack.c.l.b16 %v1399
        %v5258 = vunpack.c.l.b16 %v1400
        %v5259 = vunpack.c.l.b16 %v1401
        %v5260 = vunpack.c.l.b16 %v1402
        %v5261 = vunpack.c.l.b16 %v1403
        %v5262 = vunpack.c.l.b16 %v1404
        %v5263 = vunpack.c.l.b16 %v1405
        %v5264 = vunpack.c.l.b16 %v1406
        %v5265 = vunpack.c.l.b16 %v1407
        %v5266 = vunpack.c.l.b16 %v1408
        %v5267 = vunpack.c.l.b16 %v1409
        %v5268 = vunpack.c.l.b16 %v1410
        %v5269 = vunpack.c.l.b16 %v1411
        %v5270 = vunpack.c.l.b16 %v1412
        %v5271 = vunpack.c.l.b16 %v1413
        %v5272 = vunpack.c.l.b16 %v1414
        %v5273 = vunpack.c.l.b16 %v1415
        %v5274 = vunpack.c.l.b16 %v1416
        %v5275 = vunpack.c.l.b16 %v1417
        %v5276 = vunpack.c.l.b16 %v1418
        %v5277 = vunpack.c.l.b16 %v1419
        %v5278 = vunpack.c.l.b16 %v1420
        %v5279 = vunpack.c.l.b16 %v1421
        %v5280 = vunpack.c.l.b16 %v1422
        %v5281 = vunpack.c.l.b16 %v1423
        %v5282 = vunpack.c.l.b16 %v1424
        %v5283 = vunpack.c.l.b16 %v1425
        %v5284 = vunpack.c.l.b16 %v1426
        %v5285 = vunpack.c.l.b16 %v1427
        %v5286 = vunpack.c.l.b16 %v1428
        %v5287 = vunpack.c.l.b16 %v1429
        %v5288 = vunpack.c.l.b16 %v1430
        %v5289 = vunpack.c.l.b16 %v1431
        %v5290 = vunpack.c.l.b16 %v1432
        %v5291 = vunpack.c.l.b16 %v1433
        %v5292 = vunpack.c.l.b16 %v1434
        %v5293 = vunpack.c.l.b16 %v1435
        %v5294 = vunpack.c.l.b16 %v1436
        %v5295 = vunpack.c.l.b16 %v1437
        %v5296 = vunpack.c.l.b16 %v1438
        %v5297 = vunpack.c.l.b16 %v1439
        %v5298 = vunpack.c.l.b16 %v1440
        %v5299 = vunpack.c.l.b16 %v1441
        %v5300 = vunpack.c.l.b16 %v1442
        %v5301 = vunpack.c.l.b16 %v1443
        %v5302 = vunpack.c.l.b16 %v1444
        %v5303 = vunpack.c.l.b16 %v1445
        %v5304 = vunpack.c.l.b16 %v1446
        %v5305 = vunpack.c.l.b16 %v1447
        %v5306 = vunpack.c.l.b16 %v1448
        %v5307 = vunpack.c.l.b16 %v1449
        %v5308 = vunpack.c.l.b16 %v1450
        %v5309 = vunpack.c.l.b16 %v1451
        %v5310 = vunpack.c.l.b16 %v1452
        %v5311 = vunpack.c.l.b16 %v1453
        %v5312 = vunpack.c.l.b16 %v1454
        %v5313 = vunpack.c.l.b16 %v1455
        %v5314 = vunpack.c.l.b16 %v1456
        %v5315 = vunpack.c.l.b16 %v1457
        %v5316 = vunpack.c.l.b16 %v1458
        %v5317 = vunpack.c.l.b16 %v1459
        %v5318 = vunpack.c.l.b16 %v1460
        %v5319 = vunpack.c.l.b16 %v1461
        %v5320 = vunpack.c.l.b16 %v1462
        %v5321 = vunpack.c.l.b16 %v1463
        %v5322 = vunpack.c.l.b16 %v1464
        %v5323 = vunpack.c.l.b16 %v1465
        %v5324 = vunpack.c.l.b16 %v1466
        %v5325 = vunpack.c.l.b16 %v1467
        %v5326 = vunpack.c.l.b16 %v1468
        %v5327 = vunpack.c.l.b16 %v1469
        %v5328 = vunpack.c.l.b16 %v1470
        %v5329 = vunpack.c.l.b16 %v1471
        %v5330 = vunpack.c.l.b16 %v1472
        %v5331 = vunpack.c.l.b16 %v1473
        %v5332 = vunpack.c.l.b16 %v1474
        %v5333 = vunpack.c.l.b16 %v1475
        %v5334 = vunpack.c.l.b16 %v1476
        %v5335 = vunpack.c.l.b16 %v1477
        %v5336 = vunpack.c.l.b16 %v1478
        %v5337 = vunpack.c.l.b16 %v1479
        %v5338 = vunpack.c.l.b16 %v1480
        %v5339 = vunpack.c.l.b16 %v1481
        %v5340 = vunpack.c.l.b16 %v1482
        %v5341 = vunpack.c.l.b16 %v1483
        %v5342 = vunpack.c.l.b16 %v1484
        %v5343 = vunpack.c.l.b16 %v1485
        %v5344 = vunpack.c.l.b16 %v1486
        %v5345 = vunpack.c.l.b16 %v1487
        %v5346 = vunpack.c.l.b16 %v1488
        %v5347 = vunpack.c.l.b16 %v1489
        %v5348 = vunpack.c.l.b16 %v1490
        %v5349 = vunpack.c.l.b16 %v1491
        %v5350 = vunpack.c.l.b16 %v1492
        %v5351 = vunpack.c.l.b16 %v1493
        %v5352 = vunpack.c.l.b16 %v1494
        %v5353 = vunpack.c.l.b16 %v1495
        %v5354 = vunpack.c.l.b16 %v1496
        %v5355 = vunpack.c.l.b16 %v1497
        %v5356 = vunpack.c.l.b16 %v1498
        %v5357 = vunpack.c.l.b16 %v1499
        %v5358 = vunpack.c.l.b16 %v1500
        %v5359 = vunpack.c.l.b16 %v1501
        %v5360 = vunpack.c.l.b16 %v1502
        %v5361 = vunpack.c.l.b16 %v1503
        %v5362 = vunpack.c.l.b16 %v1504
        %v5363 = vunpack.c.l.b16 %v1505
        %v5364 = vunpack.c.l.b16 %v1506
        %v5365 = vunpack.c.l.b16 %v1507
        %v5366 = vunpack.c.l.b16 %v1508
        %v5367 = vunpack.c.l.b16 %v1509
        %v5368 = vunpack.c.l.b16 %v1510
        %v5369 = vunpack.c.l.b16 %v1511
        %v5370 = vunpack.c.l.b16 %v1512
        %v5371 = vunpack.c.l.b16 %v1513
        %v5372 = vunpack.c.l.b16 %v1514
        %v5373 = vunpack.c.l.b16 %v1515
        %v5374 = vunpack.c.l.b16 %v1516
        %v5375 = vunpack.c.l.b16 %v1517
        %v5376 = vunpack.c.l.b16 %v1518
        %v5377 = vunpack.c.l.b16 %v1519
        %v5378 = vunpack.c.l.b16 %v1520
        %v5379 = vunpack.c.l.b16 %v1521
        %v5380 = vunpack.c.l.b16 %v1522
        %v5381 = vunpack.c.l.b16 %v1523
        %v5382 = vunpack.c.l.b16 %v1524
        %v5383 = vunpack.c.l.b16 %v1525
        %v5384 = vunpack.c.l.b16 %v1526
        %v5385 = vunpack.c.l.b16 %v1527
        %v5386 = vunpack.c.l.b16 %v1528
        %v5387 = vunpack.c.l.b16 %v1529
        %v5388 = vunpack.c.l.b16 %v1530
        %v5389 = vunpack.c.l.b16 %v1531
        %v5390 = vunpack.c.l.b16 %v1532
        %v5391 = vunpack.c.l.b16 %v1533
        %v5392 = vunpack.c.l.b16 %v1534
        %v5393 = vunpack.c.l.b16 %v1535
        %v5394 = vunpack.c.l.b16 %v1536
        %v5395 = vunpack.c.l.b16 %v1537
        %v5396 = vunpack.c.l.b16 %v1538
        %v5397 = vunpack.c.l.b16 %v1539
        %v5398 = vunpack.c.l.b16 %v1540
        %v5399 = vunpack.c.l.b16 %v1541
        %v5400 = vunpack.c.l.b16 %v1542
        %v5401 = vunpack.c.l.b16 %v1543
        %v5402 = vunpack.c.l.b16 %v1544
        %v5403 = vunpack.c.l.b16 %v1545
        %v5404 = vunpack.c.l.b16 %v1546
        %v5405 = vunpack.c.l.b16 %v1547
        %v5406 = vunpack.c.l.b16 %v1548
        %v5407 = vunpack.c.l.b16 %v1549
        %v5408 = vunpack.c.l.b16 %v1550
        %v5409 = vunpack.c.l.b16 %v1551
        %v5410 = vunpack.c.l.b16 %v1552
        %v5411 = vunpack.c.l.b16 %v1553
        %v5412 = vunpack.c.l.b16 %v1554
        %v5413 = vunpack.c.l.b16 %v1555
        %v5414 = vunpack.c.l.b16 %v1556
        %v5415 = vunpack.c.l.b16 %v1557
        %v5416 = vunpack.c.l.b16 %v1558
        %v5417 = vunpack.c.l.b16 %v1559
        %v5418 = vunpack.c.l.b16 %v1560
        %v5419 = vunpack.c.l.b16 %v1561
        %v5420 = vunpack.c.l.b16 %v1562
        %v5421 = vunpack.c.l.b16 %v1563
        %v5422 = vunpack.c.l.b16 %v1564
        %v5423 = vunpack.c.l.b16 %v1565
        %v5424 = vunpack.c.l.b16 %v1566
        %v5425 = vunpack.c.l.b16 %v1567
        %v5426 = vunpack.c.l.b16 %v1568
        %v5427 = vunpack.c.l.b16 %v1569
        %v5428 = vunpack.c.l.b16 %v1570
        %v5429 = vunpack.c.l.b16 %v1571
        %v5430 = vunpack.c.l.b16 %v1572
        %v5431 = vunpack.c.l.b16 %v1573
        %v5432 = vunpack.c.l.b16 %v1574
        %v5433 = vunpack.c.l.b16 %v1575
        %v5434 = vunpack.c.l.b16 %v1576
        %v5435 = vunpack.c.l.b16 %v1577
        %v5436 = vunpack.c.l.b16 %v1578
        %v5437 = vunpack.c.l.b16 %v1579
        %v5438 = vunpack.c.l.b16 %v1580
        %v5439 = vunpack.c.l.b16 %v1581
        %v5440 = vunpack.c.l.b16 %v1582
        %v5441 = vunpack.c.l.b16 %v1583
        %v5442 = vunpack.c.l.b16 %v1584
        %v5443 = vunpack.c.l.b16 %v1585
        %v5444 = vunpack.c.l.b16 %v1586
        %v5445 = vunpack.c.l.b16 %v1587
        %v5446 = vunpack.c.l.b16 %v1588
        %v5447 = vunpack.c.l.b16 %v1589
        %v5448 = vunpack.c.l.b16 %v1590
        %v5449 = vunpack.c.l.b16 %v1591
        %v5450 = vunpack.c.l.b16 %v1592
        %v5451 = vunpack.c.l.b16 %v1593
        %v5452 = vunpack.c.l.b16 %v1594
        %v5453 = vunpack.c.l.b16 %v1595
        %v5454 = vunpack.c.l.b16 %v1596
        %v5455 = vunpack.c.l.b16 %v1597
        %v5456 = vunpack.c.l.b16 %v1598
        %v5457 = vunpack.c.l.b16 %v1599
        %v5458 = vunpack.c.l.b16 %v1600
        %v5459 = vunpack.c.l.b16 %v1601
        %v5460 = vunpack.c.l.b16 %v1602
        %v5461 = vunpack.c.l.b16 %v1603
        %v5462 = vunpack.c.l.b16 %v1604
        %v5463 = vunpack.c.l.b16 %v1605
        %v5464 = vunpack.c.l.b16 %v1606
        %v5465 = vunpack.c.l.b16 %v1607
        %v5466 = vunpack.c.l.b16 %v1608
        %v5467 = vunpack.c.l.b16 %v1609
        %v5468 = vunpack.c.l.b16 %v1610
        %v5469 = vunpack.c.l.b16 %v1611
        %v5470 = vunpack.c.l.b16 %v1612
        %v5471 = vunpack.c.l.b16 %v1613
        %v5472 = vunpack.c.l.b16 %v1614
        %v5473 = vunpack.c.l.b16 %v1615
        %v5474 = vunpack.c.l.b16 %v1616
        %v5475 = vunpack.c.l.b16 %v1617
        %v5476 = vunpack.c.l.b16 %v1618
        %v5477 = vunpack.c.l.b16 %v1619
        %v5478 = vunpack.c.l.b16 %v1620
        %v5479 = vunpack.c.l.b16 %v1621
        %v5480 = vunpack.c.l.b16 %v1622
        %v5481 = vunpack.c.l.b16 %v1623
        %v5482 = vunpack.c.l.b16 %v1624
        %v5483 = vunpack.c.l.b16 %v1625
        %v5484 = vunpack.c.l.b16 %v1626
        %v5485 = vunpack.c.l.b16 %v1627
        %v5486 = vunpack.c.l.b16 %v1628
        %v5487 = vunpack.c.l.b16 %v1629
        %v5488 = vunpack.c.l.b16 %v1630
        %v5489 = vunpack.c.l.b16 %v1631
        %v5490 = vunpack.c.l.b16 %v1632
        %v5491 = vunpack.c.l.b16 %v1633
        %v5492 = vunpack.c.l.b16 %v1634
        %v5493 = vunpack.c.l.b16 %v1635
        %v5494 = vunpack.c.l.b16 %v1636
        %v5495 = vunpack.c.l.b16 %v1637
        %v5496 = vunpack.c.l.b16 %v1638
        %v5497 = vunpack.c.l.b16 %v1639
        %v5498 = vunpack.c.l.b16 %v1640
        %v5499 = vunpack.c.l.b16 %v1641
        %v5500 = vunpack.c.l.b16 %v1642
        %v5501 = vunpack.c.l.b16 %v1643
        %v5502 = vunpack.c.l.b16 %v1644
        %v5503 = vunpack.c.l.b16 %v1645
        %v5504 = vunpack.c.l.b16 %v1646
        %v5505 = vunpack.c.l.b16 %v1647
        %v5506 = vunpack.c.l.b16 %v1648
        %v5507 = vunpack.c.l.b16 %v1649
        %v5508 = vunpack.c.l.b16 %v1650
        %v5509 = vunpack.c.l.b16 %v1651
        %v5510 = vunpack.c.l.b16 %v1652
        %v5511 = vunpack.c.l.b16 %v1653
        %v5512 = vunpack.c.l.b16 %v1654
        %v5513 = vunpack.c.l.b16 %v1655
        %v5514 = vunpack.c.l.b16 %v1656
        %v5515 = vunpack.c.l.b16 %v1657
        %v5516 = vunpack.c.l.b16 %v1658
        %v5517 = vunpack.c.l.b16 %v1659
        %v5518 = vunpack.c.l.b16 %v1660
        %v5519 = vunpack.c.l.b16 %v1661
        %v5520 = vunpack.c.l.b16 %v1662
        %v5521 = vunpack.c.l.b16 %v1663
        %v5522 = vunpack.c.l.b16 %v1664
        %v5523 = vunpack.c.l.b16 %v1665
        %v5524 = vunpack.c.l.b16 %v1666
        %v5525 = vunpack.c.l.b16 %v1667
        %v5526 = vunpack.c.l.b16 %v1668
        %v5527 = vunpack.c.l.b16 %v1669
        %v5528 = vunpack.c.l.b16 %v1670
        %v5529 = vunpack.c.l.b16 %v1671
        %v5530 = vunpack.c.l.b16 %v1672
        %v5531 = vunpack.c.l.b16 %v1673
        %v5532 = vunpack.c.l.b16 %v1674
        %v5533 = vunpack.c.l.b16 %v1675
        %v5534 = vunpack.c.l.b16 %v1676
        %v5535 = vunpack.c.l.b16 %v1677
        %v5536 = vunpack.c.l.b16 %v1678
        %v5537 = vunpack.c.l.b16 %v1679
        %v5538 = vunpack.c.l.b16 %v1680
        %v5539 = vunpack.c.l.b16 %v1681
        %v5540 = vunpack.c.l.b16 %v1682
        %v5541 = vunpack.c.l.b16 %v1683
        %v5542 = vunpack.c.l.b16 %v1684
        %v5543 = vunpack.c.l.b16 %v1685
        %v5544 = vunpack.c.l.b16 %v1686
        %v5545 = vunpack.c.l.b16 %v1687
        %v5546 = vunpack.c.l.b16 %v1688
        %v5547 = vunpack.c.l.b16 %v1689
        %v5548 = vunpack.c.l.b16 %v1690
        %v5549 = vunpack.c.l.b16 %v1691
        %v5550 = vunpack.c.l.b16 %v1692
        %v5551 = vunpack.c.l.b16 %v1693
        %v5552 = vunpack.c.l.b16 %v1694
        %v5553 = vunpack.c.l.b16 %v1695
        %v5554 = vunpack.c.l.b16 %v1696
        %v5555 = vunpack.c.l.b16 %v1697
        %v5556 = vunpack.c.l.b16 %v1698
        %v5557 = vunpack.c.l.b16 %v1699
        %v5558 = vunpack.c.l.b16 %v1700
        %v5559 = vunpack.c.l.b16 %v1701
        %v5560 = vunpack.c.l.b16 %v1702
        %v5561 = vunpack.c.l.b16 %v1703
        %v5562 = vunpack.c.l.b16 %v1704
        %v5563 = vunpack.c.l.b16 %v1705
        %v5564 = vunpack.c.l.b16 %v1706
        %v5565 = vunpack.c.l.b16 %v1707
        %v5566 = vunpack.c.l.b16 %v1708
        %v5567 = vunpack.c.l.b16 %v1709
        %v5568 = vunpack.c.l.b16 %v1710
        %v5569 = vunpack.c.l.b16 %v1711
        %v5570 = vunpack.c.l.b16 %v1712
        %v5571 = vunpack.c.l.b16 %v1713
        %v5572 = vunpack.c.l.b16 %v1714
        %v5573 = vunpack.c.l.b16 %v1715
        %v5574 = vunpack.c.l.b16 %v1716
        %v5575 = vunpack.c.l.b16 %v1717
        %v5576 = vunpack.c.l.b16 %v1718
        %v5577 = vunpack.c.l.b16 %v1719
        %v5578 = vunpack.c.l.b16 %v1720
        %v5579 = vunpack.c.l.b16 %v1721
        %v5580 = vunpack.c.l.b16 %v1722
        %v5581 = vunpack.c.l.b16 %v1723
        %v5582 = vunpack.c.l.b16 %v1724
        %v5583 = vunpack.c.l.b16 %v1725
        %v5584 = vunpack.c.l.b16 %v1726
        %v5585 = vunpack.c.l.b16 %v1727
        %v5586 = vunpack.c.l.b16 %v1728
        %v5587 = vunpack.c.l.b16 %v1729
        %v5588 = vunpack.c.l.b16 %v1730
        %v5589 = vunpack.c.l.b16 %v1731
        %v5590 = vunpack.c.l.b16 %v1732
        %v5591 = vunpack.c.l.b16 %v1733
        %v5592 = vunpack.c.l.b16 %v1734
        %v5593 = vunpack.c.l.b16 %v1735
        %v5594 = vunpack.c.l.b16 %v1736
        %v5595 = vunpack.c.l.b16 %v1737
        %v5596 = vunpack.c.l.b16 %v1738
        %v5597 = vunpack.c.l.b16 %v1739
        %v5598 = vunpack.c.l.b16 %v1740
        %v5599 = vunpack.c.l.b16 %v1741
        %v5600 = vunpack.c.l.b16 %v1742
        %v5601 = vunpack.c.l.b16 %v1743
        %v5602 = vunpack.c.l.b16 %v1744
        %v5603 = vunpack.c.l.b16 %v1745
        %v5604 = vunpack.c.l.b16 %v1746
        %v5605 = vunpack.c.l.b16 %v1747
        %v5606 = vunpack.c.l.b16 %v1748
        %v5607 = vunpack.c.l.b16 %v1749
        %v5608 = vunpack.c.l.b16 %v1750
        %v5609 = vunpack.c.l.b16 %v1751
        %v5610 = vunpack.c.l.b16 %v1752
        %v5611 = vunpack.c.l.b16 %v1753
        %v5612 = vunpack.c.l.b16 %v1754
        %v5613 = vunpack.c.l.b16 %v1755
        %v5614 = vunpack.c.l.b16 %v1756
        %v5615 = vunpack.c.l.b16 %v1757
        %v5616 = vunpack.c.l.b16 %v1758
        %v5617 = vunpack.c.l.b16 %v1759
        %v5618 = vunpack.c.l.b16 %v1760
        %v5619 = vunpack.c.l.b16 %v1761
        %v5620 = vunpack.c.l.b16 %v1762
        %v5621 = vunpack.c.l.b16 %v1763
        %v5622 = vunpack.c.l.b16 %v1764
        %v5623 = vunpack.c.l.b16 %v1765
        %v5624 = vunpack.c.l.b16 %v1766
        %v5625 = vunpack.c.l.b16 %v1767
        %v5626 = vunpack.c.l.b16 %v1768
        %v5627 = vunpack.c.l.b16 %v1769
        %v5628 = vunpack.c.l.b16 %v1770
        %v5629 = vunpack.c.l.b16 %v1771
        %v5630 = vunpack.c.l.b16 %v1772
        %v5631 = vunpack.c.l.b16 %v1773
        %v5632 = vunpack.c.l.b16 %v1774
        %v5633 = vunpack.c.l.b16 %v1775
        %v5634 = vunpack.c.l.b16 %v1776
        %v5635 = vunpack.c.l.b16 %v1777
        %v5636 = vunpack.c.l.b16 %v1778
        %v5637 = vunpack.c.l.b16 %v1779
        %v5638 = vunpack.c.l.b16 %v1780
        %v5639 = vunpack.c.l.b16 %v1781
        %v5640 = vunpack.c.l.b16 %v1782
        %v5641 = vunpack.c.l.b16 %v1783
        %v5642 = vunpack.c.l.b16 %v1784
        %v5643 = vunpack.c.l.b16 %v1785
        %v5644 = vunpack.c.l.b16 %v1786
        %v5645 = vunpack.c.l.b16 %v1787
        %v5646 = vunpack.c.l.b16 %v1788
        %v5647 = vunpack.c.l.b16 %v1789
        %v5648 = vunpack.c.l.b16 %v1790
        %v5649 = vunpack.c.l.b16 %v1791
        %v5650 = vunpack.c.l.b16 %v1792
        %v5651 = vunpack.c.l.b16 %v1793
        %v5652 = vunpack.c.l.b16 %v1794
        %v5653 = vunpack.c.l.b16 %v1795
        %v5654 = vunpack.c.l.b16 %v1796
        %v5655 = vunpack.c.l.b16 %v1797
        %v5656 = vunpack.c.l.b16 %v1798
        %v5657 = vunpack.c.l.b16 %v1799
        %v5658 = vunpack.c.l.b16 %v1800
        %v5659 = vunpack.c.l.b16 %v1801
        %v5660 = vunpack.c.l.b16 %v1802
        %v5661 = vunpack.c.l.b16 %v1803
        %v5662 = vunpack.c.l.b16 %v1804
        %v5663 = vunpack.c.l.b16 %v1805
        %v5664 = vunpack.c.l.b16 %v1806
        %v5665 = vunpack.c.l.b16 %v1807
        %v5666 = vunpack.c.l.b16 %v1808
        %v5667 = vunpack.c.l.b16 %v1809
        %v5668 = vunpack.c.l.b16 %v1810
        %v5669 = vunpack.c.l.b16 %v1811
        %v5670 = vunpack.c.l.b16 %v1812
        %v5671 = vunpack.c.l.b16 %v1813
        %v5672 = vunpack.c.l.b16 %v1814
        %v5673 = vunpack.c.l.b16 %v1815
        %v5674 = vunpack.c.l.b16 %v1816
        %v5675 = vunpack.c.l.b16 %v1817
        %v5676 = vunpack.c.l.b16 %v1818
        %v5677 = vunpack.c.l.b16 %v1819
        %v5678 = vunpack.c.l.b16 %v1820
        %v5679 = vunpack.c.l.b16 %v1821
        %v5680 = vunpack.c.l.b16 %v1822
        %v5681 = vunpack.c.l.b16 %v1823
        %v5682 = vunpack.c.l.b16 %v1824
        %v5683 = vunpack.c.l.b16 %v1825
        %v5684 = vunpack.c.l.b16 %v1826
        %v5685 = vunpack.c.l.b16 %v1827
        %v5686 = vunpack.c.l.b16 %v1828
        %v5687 = vunpack.c.l.b16 %v1829
        %v5688 = vunpack.c.l.b16 %v1830
        %v5689 = vunpack.c.l.b16 %v1831
        %v5690 = vunpack.c.l.b16 %v1832
        %v5691 = vunpack.c.l.b16 %v1833
        %v5692 = vunpack.c.l.b16 %v1834
        %v5693 = vunpack.c.l.b16 %v1835
        %v5694 = vunpack.c.l.b16 %v1836
        %v5695 = vunpack.c.l.b16 %v1837
        %v5696 = vunpack.c.l.b16 %v1838
        %v5697 = vunpack.c.l.b16 %v1839
        %v5698 = vunpack.c.l.b16 %v1840
        %v5699 = vunpack.c.l.b16 %v1841
        %v5700 = vunpack.c.l.b16 %v1842
        %v5701 = vunpack.c.l.b16 %v1843
        %v5702 = vunpack.c.l.b16 %v1844
        %v5703 = vunpack.c.l.b16 %v1845
        %v5704 = vunpack.c.l.b16 %v1846
        %v5705 = vunpack.c.l.b16 %v1847
        %v5706 = vunpack.c.l.b16 %v1848
        %v5707 = vunpack.c.l.b16 %v1849
        %v5708 = vunpack.c.l.b16 %v1850
        %v5709 = vunpack.c.l.b16 %v1851
        %v5710 = vunpack.c.l.b16 %v1852
        %v5711 = vpack.c.b16 %v4144, %v4143
        %v5712 = vpack.c.b16 %v4146, %v4145
        %v5713 = vpack.c.b16 %v4148, %v4147
        %v5714 = vpack.c.b16 %v4150, %v4149
        %v5715 = vpack.c.b16 %v4152, %v4151
        %v5716 = vpack.c.b16 %v4154, %v4153
        %v5717 = vpack.c.b16 %v4156, %v4155
        %v5718 = vpack.c.b16 %v4158, %v4157
        %v5719 = vpack.c.b16 %v4160, %v4159
        %v5720 = vpack.c.b16 %v4162, %v4161
        %v5721 = vpack.c.b16 %v4164, %v4163
        %v5722 = vpack.c.b16 %v4166, %v4165
        %v5723 = vpack.c.b16 %v4168, %v4167
        %v5724 = vpack.c.b16 %v4170, %v4169
        %v5725 = vpack.c.b16 %v4172, %v4171
        %v5726 = vpack.c.b16 %v4174, %v4173
        %v5727 = vpack.c.b16 %v4176, %v4175
        %v5728 = vpack.c.b16 %v4178, %v4177
        %v5729 = vpack.c.b16 %v4180, %v4179
        %v5730 = vpack.c.b16 %v4182, %v4181
        %v5731 = vpack.c.b16 %v4184, %v4183
        %v5732 = vpack.c.b16 %v4186, %v4185
        %v5733 = vpack.c.b16 %v4188, %v4187
        %v5734 = vpack.c.b16 %v4190, %v4189
        %v5735 = vpack.c.b16 %v4192, %v4191
        %v5736 = vpack.c.b16 %v4194, %v4193
        %v5737 = vpack.c.b16 %v4196, %v4195
        %v5738 = vpack.c.b16 %v4198, %v4197
        %v5739 = vpack.c.b16 %v4200, %v4199
        %v5740 = vpack.c.b16 %v4202, %v4201
        %v5741 = vpack.c.b16 %v4204, %v4203
        %v5742 = vpack.c.b16 %v4206, %v4205
        %v5743 = vpack.c.b16 %v4208, %v4207
        %v5744 = vpack.c.b16 %v4210, %v4209
        %v5745 = vpack.c.b16 %v4212, %v4211
        %v5746 = vpack.c.b16 %v4214, %v4213
        %v5747 = vpack.c.b16 %v4216, %v4215
        %v5748 = vpack.c.b16 %v4218, %v4217
        %v5749 = vpack.c.b16 %v4220, %v4219
        %v5750 = vpack.c.b16 %v4222, %v4221
        %v5751 = vpack.c.b16 %v4224, %v4223
        %v5752 = vpack.c.b16 %v4226, %v4225
        %v5753 = vpack.c.b16 %v4228, %v4227
        %v5754 = vpack.c.b16 %v4230, %v4229
        %v5755 = vpack.c.b16 %v4232, %v4231
        %v5756 = vpack.c.b16 %v4234, %v4233
        %v5757 = vpack.c.b16 %v4236, %v4235
        %v5758 = vpack.c.b16 %v4238, %v4237
        %v5759 = vpack.c.b16 %v4240, %v4239
        %v5760 = vpack.c.b16 %v4242, %v4241
        %v5761 = vpack.c.b16 %v4244, %v4243
        %v5762 = vpack.c.b16 %v4246, %v4245
        %v5763 = vpack.c.b16 %v4248, %v4247
        %v5764 = vpack.c.b16 %v4250, %v4249
        %v5765 = vpack.c.b16 %v4252, %v4251
        %v5766 = vpack.c.b16 %v4254, %v4253
        %v5767 = vpack.c.b16 %v4256, %v4255
        %v5768 = vpack.c.b16 %v4258, %v4257
        %v5769 = vpack.c.b16 %v4260, %v4259
        %v5770 = vpack.c.b16 %v4262, %v4261
        %v5771 = vpack.c.b16 %v4264, %v4263
        %v5772 = vpack.c.b16 %v4266, %v4265
        %v5773 = vpack.c.b16 %v4268, %v4267
        %v5774 = vpack.c.b16 %v4270, %v4269
        %v5775 = vpack.c.b16 %v4272, %v4271
        %v5776 = vpack.c.b16 %v4274, %v4273
        %v5777 = vpack.c.b16 %v4276, %v4275
        %v5778 = vpack.c.b16 %v4278, %v4277
        %v5779 = vpack.c.b16 %v4280, %v4279
        %v5780 = vpack.c.b16 %v4282, %v4281
        %v5781 = vpack.c.b16 %v4284, %v4283
        %v5782 = vpack.c.b16 %v4286, %v4285
        %v5783 = vpack.c.b16 %v4288, %v4287
        %v5784 = vpack.c.b16 %v4290, %v4289
        %v5785 = vpack.c.b16 %v4292, %v4291
        %v5786 = vpack.c.b16 %v4294, %v4293
        %v5787 = vpack.c.b16 %v4296, %v4295
        %v5788 = vpack.c.b16 %v4298, %v4297
        %v5789 = vpack.c.b16 %v4300, %v4299
        %v5790 = vpack.c.b16 %v4302, %v4301
        %v5791 = vpack.c.b16 %v4304, %v4303
        %v5792 = vpack.c.b16 %v4306, %v4305
        %v5793 = vpack.c.b16 %v4308, %v4307
        %v5794 = vpack.c.b16 %v4310, %v4309
        %v5795 = vpack.c.b16 %v4312, %v4311
        %v5796 = vpack.c.b16 %v4314, %v4313
        %v5797 = vpack.c.b16 %v4316, %v4315
        %v5798 = vpack.c.b16 %v4318, %v4317
        %v5799 = vpack.c.b16 %v4320, %v4319
        %v5800 = vpack.c.b16 %v4322, %v4321
        %v5801 = vpack.c.b16 %v4324, %v4323
        %v5802 = vpack.c.b16 %v4326, %v4325
        %v5803 = vpack.c.b16 %v4328, %v4327
        %v5804 = vpack.c.b16 %v4330, %v4329
        %v5805 = vpack.c.b16 %v4332, %v4331
        %v5806 = vpack.c.b16 %v4334, %v4333
        %v5807 = vpack.c.b16 %v4336, %v4335
        %v5808 = vpack.c.b16 %v4338, %v4337
        %v5809 = vpack.c.b16 %v4340, %v4339
        %v5810 = vpack.c.b16 %v4342, %v4341
        %v5811 = vpack.c.b16 %v4344, %v4343
        %v5812 = vpack.c.b16 %v4346, %v4345
        %v5813 = vpack.c.b16 %v4348, %v4347
        %v5814 = vpack.c.b16 %v4350, %v4349
        %v5815 = vpack.c.b16 %v4352, %v4351
        %v5816 = vpack.c.b16 %v4354, %v4353
        %v5817 = vpack.c.b16 %v4356, %v4355
        %v5818 = vpack.c.b16 %v4358, %v4357
        %v5819 = vpack.c.b16 %v4360, %v4359
        %v5820 = vpack.c.b16 %v4362, %v4361
        %v5821 = vpack.c.b16 %v4364, %v4363
        %v5822 = vpack.c.b16 %v4366, %v4365
        %v5823 = vpack.c.b16 %v4368, %v4367
        %v5824 = vpack.c.b16 %v4370, %v4369
        %v5825 = vpack.c.b16 %v4372, %v4371
        %v5826 = vpack.c.b16 %v4374, %v4373
        %v5827 = vpack.c.b16 %v4376, %v4375
        %v5828 = vpack.c.b16 %v4378, %v4377
        %v5829 = vpack.c.b16 %v4380, %v4379
        %v5830 = vpack.c.b16 %v4382, %v4381
        %v5831 = vpack.c.b16 %v4384, %v4383
        %v5832 = vpack.c.b16 %v4386, %v4385
        %v5833 = vpack.c.b16 %v4388, %v4387
        %v5834 = vpack.c.b16 %v4390, %v4389
        %v5835 = vpack.c.b16 %v4392, %v4391
        %v5836 = vpack.c.b16 %v4394, %v4393
        %v5837 = vpack.c.b16 %v4396, %v4395
        %v5838 = vpack.c.b16 %v4398, %v4397
        %v5839 = vpack.c.b16 %v4400, %v4399
        %v5840 = vpack.c.b16 %v4402, %v4401
        %v5841 = vpack.c.b16 %v4404, %v4403
        %v5842 = vpack.c.b16 %v4406, %v4405
        %v5843 = vpack.c.b16 %v4408, %v4407
        %v5844 = vpack.c.b16 %v4410, %v4409
        %v5845 = vpack.c.b16 %v4412, %v4411
        %v5846 = vpack.c.b16 %v4414, %v4413
        %v5847 = vpack.c.b16 %v4416, %v4415
        %v5848 = vpack.c.b16 %v4418, %v4417
        %v5849 = vpack.c.b16 %v4420, %v4419
        %v5850 = vpack.c.b16 %v4422, %v4421
        %v5851 = vpack.c.b16 %v4424, %v4423
        %v5852 = vpack.c.b16 %v4426, %v4425
        %v5853 = vpack.c.b16 %v4428, %v4427
        %v5854 = vpack.c.b16 %v4430, %v4429
        %v5855 = vpack.c.b16 %v4432, %v4431
        %v5856 = vpack.c.b16 %v4434, %v4433
        %v5857 = vpack.c.b16 %v4436, %v4435
        %v5858 = vpack.c.b16 %v4438, %v4437
        %v5859 = vpack.c.b16 %v4440, %v4439
        %v5860 = vpack.c.b16 %v4442, %v4441
        %v5861 = vpack.c.b16 %v4444, %v4443
        %v5862 = vpack.c.b16 %v4446, %v4445
        %v5863 = vpack.c.b16 %v4448, %v4447
        %v5864 = vpack.c.b16 %v4450, %v4449
        %v5865 = vpack.c.b16 %v4452, %v4451
        %v5866 = vpack.c.b16 %v4454, %v4453
        %v5867 = vpack.c.b16 %v4456, %v4455
        %v5868 = vpack.c.b16 %v4458, %v4457
        %v5869 = vpack.c.b16 %v4460, %v4459
        %v5870 = vpack.c.b16 %v4462, %v4461
        %v5871 = vpack.c.b16 %v4464, %v4463
        %v5872 = vpack.c.b16 %v4466, %v4465
        %v5873 = vpack.c.b16 %v4468, %v4467
        %v5874 = vpack.c.b16 %v4470, %v4469
        %v5875 = vpack.c.b16 %v4472, %v4471
        %v5876 = vpack.c.b16 %v4474, %v4473
        %v5877 = vpack.c.b16 %v4476, %v4475
        %v5878 = vpack.c.b16 %v4478, %v4477
        %v5879 = vpack.c.b16 %v4480, %v4479
        %v5880 = vpack.c.b16 %v4482, %v4481
        %v5881 = vpack.c.b16 %v4484, %v4483
        %v5882 = vpack.c.b16 %v4486, %v4485
        %v5883 = vpack.c.b16 %v4488, %v4487
        %v5884 = vpack.c.b16 %v4490, %v4489
        %v5885 = vpack.c.b16 %v4492, %v4491
        %v5886 = vpack.c.b16 %v4494, %v4493
        %v5887 = vpack.c.b16 %v4496, %v4495
        %v5888 = vpack.c.b16 %v4498, %v4497
        %v5889 = vpack.c.b16 %v4500, %v4499
        %v5890 = vpack.c.b16 %v4502, %v4501
        %v5891 = vpack.c.b16 %v4504, %v4503
        %v5892 = vpack.c.b16 %v4506, %v4505
        %v5893 = vpack.c.b16 %v4508, %v4507
        %v5894 = vpack.c.b16 %v4510, %v4509
        %v5895 = vpack.c.b16 %v4512, %v4511
        %v5896 = vpack.c.b16 %v4514, %v4513
        %v5897 = vpack.c.b16 %v4516, %v4515
        %v5898 = vpack.c.b16 %v4518, %v4517
        %v5899 = vpack.c.b16 %v4520, %v4519
        %v5900 = vpack.c.b16 %v4522, %v4521
        %v5901 = vpack.c.b16 %v4524, %v4523
        %v5902 = vpack.c.b16 %v4526, %v4525
        %v5903 = vpack.c.b16 %v4528, %v4527
        %v5904 = vpack.c.b16 %v4530, %v4529
        %v5905 = vpack.c.b16 %v4532, %v4531
        %v5906 = vpack.c.b16 %v4534, %v4533
        %v5907 = vpack.c.b16 %v4536, %v4535
        %v5908 = vpack.c.b16 %v4538, %v4537
        %v5909 = vpack.c.b16 %v4540, %v4539
        %v5910 = vpack.c.b16 %v4542, %v4541
        %v5911 = vpack.c.b16 %v4544, %v4543
        %v5912 = vpack.c.b16 %v4546, %v4545
        %v5913 = vpack.c.b16 %v4548, %v4547
        %v5914 = vpack.c.b16 %v4550, %v4549
        %v5915 = vpack.c.b16 %v4552, %v4551
        %v5916 = vpack.c.b16 %v4554, %v4553
        %v5917 = vpack.c.b16 %v4556, %v4555
        %v5918 = vpack.c.b16 %v4558, %v4557
        %v5919 = vpack.c.b16 %v4560, %v4559
        %v5920 = vpack.c.b16 %v4562, %v4561
        %v5921 = vpack.c.b16 %v4564, %v4563
        %v5922 = vpack.c.b16 %v4566, %v4565
        %v5923 = vpack.c.b16 %v4568, %v4567
        %v5924 = vpack.c.b16 %v4570, %v4569
        %v5925 = vpack.c.b16 %v4572, %v4571
        %v5926 = vpack.c.b16 %v4574, %v4573
        %v5927 = vpack.c.b16 %v4576, %v4575
        %v5928 = vpack.c.b16 %v4578, %v4577
        %v5929 = vpack.c.b16 %v4580, %v4579
        %v5930 = vpack.c.b16 %v4582, %v4581
        %v5931 = vpack.c.b16 %v4584, %v4583
        %v5932 = vpack.c.b16 %v4586, %v4585
        %v5933 = vpack.c.b16 %v4588, %v4587
        %v5934 = vpack.c.b16 %v4590, %v4589
        %v5935 = vpack.c.b16 %v4592, %v4591
        %v5936 = vpack.c.b16 %v4594, %v4593
        %v5937 = vpack.c.b16 %v4596, %v4595
        %v5938 = vpack.c.b16 %v4598, %v4597
        %v5939 = vpack.c.b16 %v4600, %v4599
        %v5940 = vpack.c.b16 %v4602, %v4601
        %v5941 = vpack.c.b16 %v4604, %v4603
        %v5942 = vpack.c.b16 %v4606, %v4605
        %v5943 = vpack.c.b16 %v4608, %v4607
        %v5944 = vpack.c.b16 %v4610, %v4609
        %v5945 = vpack.c.b16 %v4612, %v4611
        %v5946 = vpack.c.b16 %v4614, %v4613
        %v5947 = vpack.c.b16 %v4616, %v4615
        %v5948 = vpack.c.b16 %v4618, %v4617
        %v5949 = vpack.c.b16 %v4620, %v4619
        %v5950 = vpack.c.b16 %v4622, %v4621
        %v5951 = vpack.c.b16 %v4624, %v4623
        %v5952 = vpack.c.b16 %v4626, %v4625
        %v5953 = vpack.c.b16 %v4628, %v4627
        %v5954 = vpack.c.b16 %v4630, %v4629
        %v5955 = vpack.c.b16 %v4632, %v4631
        %v5956 = vpack.c.b16 %v4634, %v4633
        %v5957 = vpack.c.b16 %v4636, %v4635
        %v5958 = vpack.c.b16 %v4638, %v4637
        %v5959 = vpack.c.b16 %v4640, %v4639
        %v5960 = vpack.c.b16 %v4642, %v4641
        %v5961 = vpack.c.b16 %v4644, %v4643
        %v5962 = vpack.c.b16 %v4646, %v4645
        %v5963 = vpack.c.b16 %v4648, %v4647
        %v5964 = vpack.c.b16 %v4650, %v4649
        %v5965 = vpack.c.b16 %v4652, %v4651
        %v5966 = vpack.c.b16 %v4654, %v4653
        %v5967 = vpack.c.b16 %v4656, %v4655
        %v5968 = vpack.c.b16 %v4658, %v4657
        %v5969 = vpack.c.b16 %v4660, %v4659
        %v5970 = vpack.c.b16 %v4662, %v4661
        %v5971 = vpack.c.b16 %v4664, %v4663
        %v5972 = vpack.c.b16 %v4666, %v4665
        %v5973 = vpack.c.b16 %v4668, %v4667
        %v5974 = vpack.c.b16 %v4670, %v4669
        %v5975 = vpack.c.b16 %v4672, %v4671
        %v5976 = vpack.c.b16 %v4674, %v4673
        %v5977 = vpack.c.b16 %v4676, %v4675
        %v5978 = vpack.c.b16 %v4678, %v4677
        %v5979 = vpack.c.b16 %v4680, %v4679
        %v5980 = vpack.c.b16 %v4682, %v4681
        %v5981 = vpack.c.b16 %v4684, %v4683
        %v5982 = vpack.c.b16 %v4686, %v4685
        %v5983 = vpack.c.b16 %v4688, %v4687
        %v5984 = vpack.c.b16 %v4690, %v4689
        %v5985 = vpack.c.b16 %v4692, %v4691
        %v5986 = vpack.c.b16 %v4694, %v4693
        %v5987 = vpack.c.b16 %v4696, %v4695
        %v5988 = vpack.c.b16 %v4698, %v4697
        %v5989 = vpack.c.b16 %v4700, %v4699
        %v5990 = vpack.c.b16 %v4702, %v4701
        %v5991 = vpack.c.b16 %v4704, %v4703
        %v5992 = vpack.c.b16 %v4706, %v4705
        %v5993 = vpack.c.b16 %v4708, %v4707
        %v5994 = vpack.c.b16 %v4710, %v4709
        %v5995 = vpack.c.b16 %v4712, %v4711
        %v5996 = vpack.c.b16 %v4714, %v4713
        %v5997 = vpack.c.b16 %v4716, %v4715
        %v5998 = vpack.c.b16 %v4718, %v4717
        %v5999 = vpack.c.b16 %v4720, %v4719
        %v6000 = vpack.c.b16 %v4722, %v4721
        %v6001 = vpack.c.b16 %v4724, %v4723
        %v6002 = vpack.c.b16 %v4726, %v4725
        %v6003 = vpack.c.b16 %v4728, %v4727
        %v6004 = vpack.c.b16 %v4730, %v4729
        %v6005 = vpack.c.b16 %v4732, %v4731
        %v6006 = vpack.c.b16 %v4734, %v4733
        %v6007 = vpack.c.b16 %v4736, %v4735
        %v6008 = vpack.c.b16 %v4738, %v4737
        %v6009 = vpack.c.b16 %v4740, %v4739
        %v6010 = vpack.c.b16 %v4742, %v4741
        %v6011 = vpack.c.b16 %v4744, %v4743
        %v6012 = vpack.c.b16 %v4746, %v4745
        %v6013 = vpack.c.b16 %v4748, %v4747
        %v6014 = vpack.c.b16 %v4750, %v4749
        %v6015 = vpack.c.b16 %v4752, %v4751
        %v6016 = vpack.c.b16 %v4754, %v4753
        %v6017 = vpack.c.b16 %v4756, %v4755
        %v6018 = vpack.c.b16 %v4758, %v4757
        %v6019 = vpack.c.b16 %v4760, %v4759
        %v6020 = vpack.c.b16 %v4762, %v4761
        %v6021 = vpack.c.b16 %v4764, %v4763
        %v6022 = vpack.c.b16 %v4766, %v4765
        %v6023 = vpack.c.b16 %v4768, %v4767
        %v6024 = vpack.c.b16 %v4770, %v4769
        %v6025 = vpack.c.b16 %v4772, %v4771
        %v6026 = vpack.c.b16 %v4774, %v4773
        %v6027 = vpack.c.b16 %v4776, %v4775
        %v6028 = vpack.c.b16 %v4778, %v4777
        %v6029 = vpack.c.b16 %v4780, %v4779
        %v6030 = vpack.c.b16 %v4782, %v4781
        %v6031 = vpack.c.b16 %v4784, %v4783
        %v6032 = vpack.c.b16 %v4786, %v4785
        %v6033 = vpack.c.b16 %v4788, %v4787
        %v6034 = vpack.c.b16 %v4790, %v4789
        %v6035 = vpack.c.b16 %v4792, %v4791
        %v6036 = vpack.c.b16 %v4794, %v4793
        %v6037 = vpack.c.b16 %v4796, %v4795
        %v6038 = vpack.c.b16 %v4798, %v4797
        %v6039 = vpack.c.b16 %v4800, %v4799
        %v6040 = vpack.c.b16 %v4802, %v4801
        %v6041 = vpack.c.b16 %v4804, %v4803
        %v6042 = vpack.c.b16 %v4806, %v4805
        %v6043 = vpack.c.b16 %v4808, %v4807
        %v6044 = vpack.c.b16 %v4810, %v4809
        %v6045 = vpack.c.b16 %v4812, %v4811
        %v6046 = vpack.c.b16 %v4814, %v4813
        %v6047 = vpack.c.b16 %v4816, %v4815
        %v6048 = vpack.c.b16 %v4818, %v4817
        %v6049 = vpack.c.b16 %v4820, %v4819
        %v6050 = vpack.c.b16 %v4822, %v4821
        %v6051 = vpack.c.b16 %v4824, %v4823
        %v6052 = vpack.c.b16 %v4826, %v4825
        %v6053 = vpack.c.b16 %v4828, %v4827
        %v6054 = vpack.c.b16 %v4830, %v4829
        %v6055 = vpack.c.b16 %v4832, %v4831
        %v6056 = vpack.c.b16 %v4834, %v4833
        %v6057 = vpack.c.b16 %v4836, %v4835
        %v6058 = vpack.c.b16 %v4838, %v4837
        %v6059 = vpack.c.b16 %v4840, %v4839
        %v6060 = vpack.c.b16 %v4842, %v4841
        %v6061 = vpack.c.b16 %v4844, %v4843
        %v6062 = vpack.c.b16 %v4846, %v4845
        %v6063 = vpack.c.b16 %v4848, %v4847
        %v6064 = vpack.c.b16 %v4850, %v4849
        %v6065 = vpack.c.b16 %v4852, %v4851
        %v6066 = vpack.c.b16 %v4854, %v4853
        %v6067 = vpack.c.b16 %v4856, %v4855
        %v6068 = vpack.c.b16 %v4858, %v4857
        %v6069 = vpack.c.b16 %v4860, %v4859
        %v6070 = vpack.c.b16 %v4862, %v4861
        %v6071 = vpack.c.b16 %v4864, %v4863
        %v6072 = vpack.c.b16 %v4866, %v4865
        %v6073 = vpack.c.b16 %v4868, %v4867
        %v6074 = vpack.c.b16 %v4870, %v4869
        %v6075 = vpack.c.b16 %v4872, %v4871
        %v6076 = vpack.c.b16 %v4874, %v4873
        %v6077 = vpack.c.b16 %v4876, %v4875
        %v6078 = vpack.c.b16 %v4878, %v4877
        %v6079 = vpack.c.b16 %v4880, %v4879
        %v6080 = vpack.c.b16 %v4882, %v4881
        %v6081 = vpack.c.b16 %v4884, %v4883
        %v6082 = vpack.c.b16 %v4886, %v4885
        %v6083 = vpack.c.b16 %v4888, %v4887
        %v6084 = vpack.c.b16 %v4890, %v4889
        %v6085 = vpack.c.b16 %v4892, %v4891
        %v6086 = vpack.c.b16 %v4894, %v4893
        %v6087 = vpack.c.b16 %v4896, %v4895
        %v6088 = vpack.c.b16 %v4898, %v4897
        %v6089 = vpack.c.b16 %v4900, %v4899
        %v6090 = vpack.c.b16 %v4902, %v4901
        %v6091 = vpack.c.b16 %v4904, %v4903
        %v6092 = vpack.c.b16 %v4906, %v4905
        %v6093 = vpack.c.b16 %v4908, %v4907
        %v6094 = vpack.c.b16 %v4910, %v4909
        %v6095 = vpack.c.b16 %v4912, %v4911
        %v6096 = vpack.c.b16 %v4914, %v4913
        %v6097 = vpack.c.b16 %v4916, %v4915
        %v6098 = vpack.c.b16 %v4918, %v4917
        %v6099 = vpack.c.b16 %v4920, %v4919
        %v6100 = vpack.c.b16 %v4922, %v4921
        %v6101 = vpack.c.b16 %v4924, %v4923
        %v6102 = vpack.c.b16 %v4926, %v4925
        %v6103 = vpack.c.b16 %v4928, %v4927
        %v6104 = vpack.c.b16 %v4930, %v4929
        %v6105 = vpack.c.b16 %v4932, %v4931
        %v6106 = vpack.c.b16 %v4934, %v4933
        %v6107 = vpack.c.b16 %v4936, %v4935
        %v6108 = vpack.c.b16 %v4938, %v4937
        %v6109 = vpack.c.b16 %v4940, %v4939
        %v6110 = vpack.c.b16 %v4942, %v4941
        %v6111 = vpack.c.b16 %v4944, %v4943
        %v6112 = vpack.c.b16 %v4946, %v4945
        %v6113 = vpack.c.b16 %v4948, %v4947
        %v6114 = vpack.c.b16 %v4950, %v4949
        %v6115 = vpack.c.b16 %v4952, %v4951
        %v6116 = vpack.c.b16 %v4954, %v4953
        %v6117 = vpack.c.b16 %v4956, %v4955
        %v6118 = vpack.c.b16 %v4958, %v4957
        %v6119 = vpack.c.b16 %v4960, %v4959
        %v6120 = vpack.c.b16 %v4962, %v4961
        %v6121 = vpack.c.b16 %v4964, %v4963
        %v6122 = vpack.c.b16 %v4966, %v4965
        %v6123 = vpack.c.b16 %v4968, %v4967
        %v6124 = vpack.c.b16 %v4970, %v4969
        %v6125 = vpack.c.b16 %v4972, %v4971
        %v6126 = vpack.c.b16 %v4974, %v4973
        %v6127 = vpack.c.b16 %v4976, %v4975
        %v6128 = vpack.c.b16 %v4978, %v4977
        %v6129 = vpack.c.b16 %v4980, %v4979
        %v6130 = vpack.c.b16 %v4982, %v4981
        %v6131 = vpack.c.b16 %v4984, %v4983
        %v6132 = vpack.c.b16 %v4986, %v4985
        %v6133 = vpack.c.b16 %v4988, %v4987
        %v6134 = vpack.c.b16 %v4990, %v4989
        %v6135 = vpack.c.b16 %v4992, %v4991
        %v6136 = vpack.c.b16 %v4994, %v4993
        %v6137 = vpack.c.b16 %v4996, %v4995
        %v6138 = vpack.c.b16 %v4998, %v4997
        %v6139 = vpack.c.b16 %v5000, %v4999
        %v6140 = vpack.c.b16 %v5002, %v5001
        %v6141 = vpack.c.b16 %v5004, %v5003
        %v6142 = vpack.c.b16 %v5006, %v5005
        %v6143 = vpack.c.b16 %v5008, %v5007
        %v6144 = vpack.c.b16 %v5010, %v5009
        %v6145 = vpack.c.b16 %v5012, %v5011
        %v6146 = vpack.c.b16 %v5014, %v5013
        %v6147 = vpack.c.b16 %v5016, %v5015
        %v6148 = vpack.c.b16 %v5018, %v5017
        %v6149 = vpack.c.b16 %v5020, %v5019
        %v6150 = vpack.c.b16 %v5022, %v5021
        %v6151 = vpack.c.b16 %v5024, %v5023
        %v6152 = vpack.c.b16 %v5026, %v5025
        %v6153 = vpack.c.b16 %v5028, %v5027
        %v6154 = vpack.c.b16 %v5030, %v5029
        %v6155 = vpack.c.b16 %v5032, %v5031
        %v6156 = vpack.c.b16 %v5034, %v5033
        %v6157 = vpack.c.b16 %v5036, %v5035
        %v6158 = vpack.c.b16 %v5038, %v5037
        %v6159 = vpack.c.b16 %v5040, %v5039
        %v6160 = vpack.c.b16 %v5042, %v5041
        %v6161 = vpack.c.b16 %v5044, %v5043
        %v6162 = vpack.c.b16 %v5046, %v5045
        %v6163 = vpack.c.b16 %v5048, %v5047
        %v6164 = vpack.c.b16 %v5050, %v5049
        %v6165 = vpack.c.b16 %v5052, %v5051
        %v6166 = vpack.c.b16 %v5054, %v5053
        %v6167 = vpack.c.b16 %v5056, %v5055
        %v6168 = vpack.c.b16 %v5058, %v5057
        %v6169 = vpack.c.b16 %v5060, %v5059
        %v6170 = vpack.c.b16 %v5062, %v5061
        %v6171 = vpack.c.b16 %v5064, %v5063
        %v6172 = vpack.c.b16 %v5066, %v5065
        %v6173 = vpack.c.b16 %v5068, %v5067
        %v6174 = vpack.c.b16 %v5070, %v5069
        %v6175 = vpack.c.b16 %v5072, %v5071
        %v6176 = vpack.c.b16 %v5074, %v5073
        %v6177 = vpack.c.b16 %v5076, %v5075
        %v6178 = vpack.c.b16 %v5078, %v5077
        %v6179 = vpack.c.b16 %v5080, %v5079
        %v6180 = vpack.c.b16 %v5082, %v5081
        %v6181 = vpack.c.b16 %v5084, %v5083
        %v6182 = vpack.c.b16 %v5086, %v5085
        %v6183 = vpack.c.b16 %v5088, %v5087
        %v6184 = vpack.c.b16 %v5090, %v5089
        %v6185 = vpack.c.b16 %v5092, %v5091
        %v6186 = vpack.c.b16 %v5094, %v5093
        %v6187 = vpack.c.b16 %v5096, %v5095
        %v6188 = vpack.c.b16 %v5098, %v5097
        %v6189 = vpack.c.b16 %v5100, %v5099
        %v6190 = vpack.c.b16 %v5102, %v5101
        %v6191 = vpack.c.b16 %v5104, %v5103
        %v6192 = vpack.c.b16 %v5106, %v5105
        %v6193 = vpack.c.b16 %v5108, %v5107
        %v6194 = vpack.c.b16 %v5110, %v5109
        %v6195 = vpack.c.b16 %v5112, %v5111
        %v6196 = vpack.c.b16 %v5114, %v5113
        %v6197 = vpack.c.b16 %v5116, %v5115
        %v6198 = vpack.c.b16 %v5118, %v5117
        %v6199 = vpack.c.b16 %v5120, %v5119
        %v6200 = vpack.c.b16 %v5122, %v5121
        %v6201 = vpack.c.b16 %v5124, %v5123
        %v6202 = vpack.c.b16 %v5126, %v5125
        %v6203 = vpack.c.b16 %v5128, %v5127
        %v6204 = vpack.c.b16 %v5130, %v5129
        %v6205 = vpack.c.b16 %v5132, %v5131
        %v6206 = vpack.c.b16 %v5134, %v5133
        %v6207 = vpack.c.b16 %v5136, %v5135
        %v6208 = vpack.c.b16 %v5138, %v5137
        %v6209 = vpack.c.b16 %v5140, %v5139
        %v6210 = vpack.c.b16 %v5142, %v5141
        %v6211 = vpack.c.b16 %v5144, %v5143
        %v6212 = vpack.c.b16 %v5146, %v5145
        %v6213 = vpack.c.b16 %v5148, %v5147
        %v6214 = vpack.c.b16 %v5150, %v5149
        %v6215 = vpack.c.b16 %v5152, %v5151
        %v6216 = vpack.c.b16 %v5154, %v5153
        %v6217 = vpack.c.b16 %v5156, %v5155
        %v6218 = vpack.c.b16 %v5158, %v5157
        %v6219 = vpack.c.b16 %v5160, %v5159
        %v6220 = vpack.c.b16 %v5162, %v5161
        %v6221 = vpack.c.b16 %v5164, %v5163
        %v6222 = vpack.c.b16 %v5166, %v5165
        %v6223 = vpack.c.b16 %v5168, %v5167
        %v6224 = vpack.c.b16 %v5170, %v5169
        %v6225 = vpack.c.b16 %v5172, %v5171
        %v6226 = vpack.c.b16 %v5174, %v5173
        %v6227 = vpack.c.b16 %v5176, %v5175
        %v6228 = vpack.c.b16 %v5178, %v5177
        %v6229 = vpack.c.b16 %v5180, %v5179
        %v6230 = vpack.c.b16 %v5182, %v5181
        %v6231 = vpack.c.b16 %v5184, %v5183
        %v6232 = vpack.c.b16 %v5186, %v5185
        %v6233 = vpack.c.b16 %v5188, %v5187
        %v6234 = vpack.c.b16 %v5190, %v5189
        %v6235 = vpack.c.b16 %v5192, %v5191
        %v6236 = vpack.c.b16 %v5194, %v5193
        %v6237 = vpack.c.b16 %v5196, %v5195
        %v6238 = vpack.c.b16 %v5198, %v5197
        %v6239 = vpack.c.b16 %v5200, %v5199
        %v6240 = vpack.c.b16 %v5202, %v5201
        %v6241 = vpack.c.b16 %v5204, %v5203
        %v6242 = vpack.c.b16 %v5206, %v5205
        %v6243 = vpack.c.b16 %v5208, %v5207
        %v6244 = vpack.c.b16 %v5210, %v5209
        %v6245 = vpack.c.b16 %v5212, %v5211
        %v6246 = vpack.c.b16 %v5214, %v5213
        %v6247 = vpack.c.b16 %v5216, %v5215
        %v6248 = vpack.c.b16 %v5218, %v5217
        %v6249 = vpack.c.b16 %v5220, %v5219
        %v6250 = vpack.c.b16 %v5222, %v5221
        %v6251 = vpack.c.b16 %v5224, %v5223
        %v6252 = vpack.c.b16 %v5226, %v5225
        %v6253 = vpack.c.b16 %v5228, %v5227
        %v6254 = vpack.c.b16 %v5230, %v5229
        %v6255 = vpack.c.b16 %v5232, %v5231
        %v6256 = vpack.c.b16 %v5234, %v5233
        %v6257 = vpack.c.b16 %v5236, %v5235
        %v6258 = vpack.c.b16 %v5238, %v5237
        %v6259 = vpack.c.b16 %v5240, %v5239
        %v6260 = vpack.c.b16 %v5242, %v5241
        %v6261 = vpack.c.b16 %v5244, %v5243
        %v6262 = vpack.c.b16 %v5246, %v5245
        %v6263 = vpack.c.b16 %v5248, %v5247
        %v6264 = vpack.c.b16 %v5250, %v5249
        %v6265 = vpack.c.b16 %v5252, %v5251
        %v6266 = vpack.c.b16 %v5254, %v5253
        %v6267 = vpack.c.b16 %v5256, %v5255
        %v6268 = vpack.c.b16 %v5258, %v5257
        %v6269 = vpack.c.b16 %v5260, %v5259
        %v6270 = vpack.c.b16 %v5262, %v5261
        %v6271 = vpack.c.b16 %v5264, %v5263
        %v6272 = vpack.c.b16 %v5266, %v5265
        %v6273 = vpack.c.b16 %v5268, %v5267
        %v6274 = vpack.c.b16 %v5270, %v5269
        %v6275 = vpack.c.b16 %v5272, %v5271
        %v6276 = vpack.c.b16 %v5274, %v5273
        %v6277 = vpack.c.b16 %v5276, %v5275
        %v6278 = vpack.c.b16 %v5278, %v5277
        %v6279 = vpack.c.b16 %v5280, %v5279
        %v6280 = vpack.c.b16 %v5282, %v5281
        %v6281 = vpack.c.b16 %v5284, %v5283
        %v6282 = vpack.c.b16 %v5286, %v5285
        %v6283 = vpack.c.b16 %v5288, %v5287
        %v6284 = vpack.c.b16 %v5290, %v5289
        %v6285 = vpack.c.b16 %v5292, %v5291
        %v6286 = vpack.c.b16 %v5294, %v5293
        %v6287 = vpack.c.b16 %v5296, %v5295
        %v6288 = vpack.c.b16 %v5298, %v5297
        %v6289 = vpack.c.b16 %v5300, %v5299
        %v6290 = vpack.c.b16 %v5302, %v5301
        %v6291 = vpack.c.b16 %v5304, %v5303
        %v6292 = vpack.c.b16 %v5306, %v5305
        %v6293 = vpack.c.b16 %v5308, %v5307
        %v6294 = vpack.c.b16 %v5310, %v5309
        %v6295 = vpack.c.b16 %v5312, %v5311
        %v6296 = vpack.c.b16 %v5314, %v5313
        %v6297 = vpack.c.b16 %v5316, %v5315
        %v6298 = vpack.c.b16 %v5318, %v5317
        %v6299 = vpack.c.b16 %v5320, %v5319
        %v6300 = vpack.c.b16 %v5322, %v5321
        %v6301 = vpack.c.b16 %v5324, %v5323
        %v6302 = vpack.c.b16 %v5326, %v5325
        %v6303 = vpack.c.b16 %v5328, %v5327
        %v6304 = vpack.c.b16 %v5330, %v5329
        %v6305 = vpack.c.b16 %v5332, %v5331
        %v6306 = vpack.c.b16 %v5334, %v5333
        %v6307 = vpack.c.b16 %v5336, %v5335
        %v6308 = vpack.c.b16 %v5338, %v5337
        %v6309 = vpack.c.b16 %v5340, %v5339
        %v6310 = vpack.c.b16 %v5342, %v5341
        %v6311 = vpack.c.b16 %v5344, %v5343
        %v6312 = vpack.c.b16 %v5346, %v5345
        %v6313 = vpack.c.b16 %v5348, %v5347
        %v6314 = vpack.c.b16 %v5350, %v5349
        %v6315 = vpack.c.b16 %v5352, %v5351
        %v6316 = vpack.c.b16 %v5354, %v5353
        %v6317 = vpack.c.b16 %v5356, %v5355
        %v6318 = vpack.c.b16 %v5358, %v5357
        %v6319 = vpack.c.b16 %v5360, %v5359
        %v6320 = vpack.c.b16 %v5362, %v5361
        %v6321 = vpack.c.b16 %v5364, %v5363
        %v6322 = vpack.c.b16 %v5366, %v5365
        %v6323 = vpack.c.b16 %v5368, %v5367
        %v6324 = vpack.c.b16 %v5370, %v5369
        %v6325 = vpack.c.b16 %v5372, %v5371
        %v6326 = vpack.c.b16 %v5374, %v5373
        %v6327 = vpack.c.b16 %v5376, %v5375
        %v6328 = vpack.c.b16 %v5378, %v5377
        %v6329 = vpack.c.b16 %v5380, %v5379
        %v6330 = vpack.c.b16 %v5382, %v5381
        %v6331 = vpack.c.b16 %v5384, %v5383
        %v6332 = vpack.c.b16 %v5386, %v5385
        %v6333 = vpack.c.b16 %v5388, %v5387
        %v6334 = vpack.c.b16 %v5390, %v5389
        %v6335 = vpack.c.b16 %v5392, %v5391
        %v6336 = vpack.c.b16 %v5394, %v5393
        %v6337 = vpack.c.b16 %v5396, %v5395
        %v6338 = vpack.c.b16 %v5398, %v5397
        %v6339 = vpack.c.b16 %v5400, %v5399
        %v6340 = vpack.c.b16 %v5402, %v5401
        %v6341 = vpack.c.b16 %v5404, %v5403
        %v6342 = vpack.c.b16 %v5406, %v5405
        %v6343 = vpack.c.b16 %v5408, %v5407
        %v6344 = vpack.c.b16 %v5410, %v5409
        %v6345 = vpack.c.b16 %v5412, %v5411
        %v6346 = vpack.c.b16 %v5414, %v5413
        %v6347 = vpack.c.b16 %v5416, %v5415
        %v6348 = vpack.c.b16 %v5418, %v5417
        %v6349 = vpack.c.b16 %v5420, %v5419
        %v6350 = vpack.c.b16 %v5422, %v5421
        %v6351 = vpack.c.b16 %v5424, %v5423
        %v6352 = vpack.c.b16 %v5426, %v5425
        %v6353 = vpack.c.b16 %v5428, %v5427
        %v6354 = vpack.c.b16 %v5430, %v5429
        %v6355 = vpack.c.b16 %v5432, %v5431
        %v6356 = vpack.c.b16 %v5434, %v5433
        %v6357 = vpack.c.b16 %v5436, %v5435
        %v6358 = vpack.c.b16 %v5438, %v5437
        %v6359 = vpack.c.b16 %v5440, %v5439
        %v6360 = vpack.c.b16 %v5442, %v5441
        %v6361 = vpack.c.b16 %v5444, %v5443
        %v6362 = vpack.c.b16 %v5446, %v5445
        %v6363 = vpack.c.b16 %v5448, %v5447
        %v6364 = vpack.c.b16 %v5450, %v5449
        %v6365 = vpack.c.b16 %v5452, %v5451
        %v6366 = vpack.c.b16 %v5454, %v5453
        %v6367 = vpack.c.b16 %v5456, %v5455
        %v6368 = vpack.c.b16 %v5458, %v5457
        %v6369 = vpack.c.b16 %v5460, %v5459
        %v6370 = vpack.c.b16 %v5462, %v5461
        %v6371 = vpack.c.b16 %v5464, %v5463
        %v6372 = vpack.c.b16 %v5466, %v5465
        %v6373 = vpack.c.b16 %v5468, %v5467
        %v6374 = vpack.c.b16 %v5470, %v5469
        %v6375 = vpack.c.b16 %v5472, %v5471
        %v6376 = vpack.c.b16 %v5474, %v5473
        %v6377 = vpack.c.b16 %v5476, %v5475
        %v6378 = vpack.c.b16 %v5478, %v5477
        %v6379 = vpack.c.b16 %v5480, %v5479
        %v6380 = vpack.c.b16 %v5482, %v5481
        %v6381 = vpack.c.b16 %v5484, %v5483
        %v6382 = vpack.c.b16 %v5486, %v5485
        %v6383 = vpack.c.b16 %v5488, %v5487
        %v6384 = vpack.c.b16 %v5490, %v5489
        %v6385 = vpack.c.b16 %v5492, %v5491
        %v6386 = vpack.c.b16 %v5494, %v5493
        %v6387 = vpack.c.b16 %v5496, %v5495
        %v6388 = vpack.c.b16 %v5498, %v5497
        %v6389 = vpack.c.b16 %v5500, %v5499
        %v6390 = vpack.c.b16 %v5502, %v5501
        %v6391 = vpack.c.b16 %v5504, %v5503
        %v6392 = vpack.c.b16 %v5506, %v5505
        %v6393 = vpack.c.b16 %v5508, %v5507
        %v6394 = vpack.c.b16 %v5510, %v5509
        %v6395 = vpack.c.b16 %v5512, %v5511
        %v6396 = vpack.c.b16 %v5514, %v5513
        %v6397 = vpack.c.b16 %v5516, %v5515
        %v6398 = vpack.c.b16 %v5518, %v5517
        %v6399 = vpack.c.b16 %v5520, %v5519
        %v6400 = vpack.c.b16 %v5522, %v5521
        %v6401 = vpack.c.b16 %v5524, %v5523
        %v6402 = vpack.c.b16 %v5526, %v5525
        %v6403 = vpack.c.b16 %v5528, %v5527
        %v6404 = vpack.c.b16 %v5530, %v5529
        %v6405 = vpack.c.b16 %v5532, %v5531
        %v6406 = vpack.c.b16 %v5534, %v5533
        %v6407 = vpack.c.b16 %v5536, %v5535
        %v6408 = vpack.c.b16 %v5538, %v5537
        %v6409 = vpack.c.b16 %v5540, %v5539
        %v6410 = vpack.c.b16 %v5542, %v5541
        %v6411 = vpack.c.b16 %v5544, %v5543
        %v6412 = vpack.c.b16 %v5546, %v5545
        %v6413 = vpack.c.b16 %v5548, %v5547
        %v6414 = vpack.c.b16 %v5550, %v5549
        %v6415 = vpack.c.b16 %v5552, %v5551
        %v6416 = vpack.c.b16 %v5554, %v5553
        %v6417 = vpack.c.b16 %v5556, %v5555
        %v6418 = vpack.c.b16 %v5558, %v5557
        %v6419 = vpack.c.b16 %v5560, %v5559
        %v6420 = vpack.c.b16 %v5562, %v5561
        %v6421 = vpack.c.b16 %v5564, %v5563
        %v6422 = vpack.c.b16 %v5566, %v5565
        %v6423 = vpack.c.b16 %v5568, %v5567
        %v6424 = vpack.c.b16 %v5570, %v5569
        %v6425 = vpack.c.b16 %v5572, %v5571
        %v6426 = vpack.c.b16 %v5574, %v5573
        %v6427 = vpack.c.b16 %v5576, %v5575
        %v6428 = vpack.c.b16 %v5578, %v5577
        %v6429 = vpack.c.b16 %v5580, %v5579
        %v6430 = vpack.c.b16 %v5582, %v5581
        %v6431 = vpack.c.b16 %v5584, %v5583
        %v6432 = vpack.c.b16 %v5586, %v5585
        %v6433 = vpack.c.b16 %v5588, %v5587
        %v6434 = vpack.c.b16 %v5590, %v5589
        %v6435 = vpack.c.b16 %v5592, %v5591
        %v6436 = vpack.c.b16 %v5594, %v5593
        %v6437 = vpack.c.b16 %v5596, %v5595
        %v6438 = vpack.c.b16 %v5598, %v5597
        %v6439 = vpack.c.b16 %v5600, %v5599
        %v6440 = vpack.c.b16 %v5602, %v5601
        %v6441 = vpack.c.b16 %v5604, %v5603
        %v6442 = vpack.c.b16 %v5606, %v5605
        %v6443 = vpack.c.b16 %v5608, %v5607
        %v6444 = vpack.c.b16 %v5610, %v5609
        %v6445 = vpack.c.b16 %v5612, %v5611
        %v6446 = vpack.c.b16 %v5614, %v5613
        %v6447 = vpack.c.b16 %v5616, %v5615
        %v6448 = vpack.c.b16 %v5618, %v5617
        %v6449 = vpack.c.b16 %v5620, %v5619
        %v6450 = vpack.c.b16 %v5622, %v5621
        %v6451 = vpack.c.b16 %v5624, %v5623
        %v6452 = vpack.c.b16 %v5626, %v5625
        %v6453 = vpack.c.b16 %v5628, %v5627
        %v6454 = vpack.c.b16 %v5630, %v5629
        %v6455 = vpack.c.b16 %v5632, %v5631
        %v6456 = vpack.c.b16 %v5634, %v5633
        %v6457 = vpack.c.b16 %v5636, %v5635
        %v6458 = vpack.c.b16 %v5638, %v5637
        %v6459 = vpack.c.b16 %v5640, %v5639
        %v6460 = vpack.c.b16 %v5642, %v5641
        %v6461 = vpack.c.b16 %v5644, %v5643
        %v6462 = vpack.c.b16 %v5646, %v5645
        %v6463 = vpack.c.b16 %v5648, %v5647
        %v6464 = vpack.c.b16 %v5650, %v5649
        %v6465 = vpack.c.b16 %v5652, %v5651
        %v6466 = vpack.c.b16 %v5654, %v5653
        %v6467 = vpack.c.b16 %v5656, %v5655
        %v6468 = vpack.c.b16 %v5658, %v5657
        %v6469 = vpack.c.b16 %v5660, %v5659
        %v6470 = vpack.c.b16 %v5662, %v5661
        %v6471 = vpack.c.b16 %v5664, %v5663
        %v6472 = vpack.c.b16 %v5666, %v5665
        %v6473 = vpack.c.b16 %v5668, %v5667
        %v6474 = vpack.c.b16 %v5670, %v5669
        %v6475 = vpack.c.b16 %v5672, %v5671
        %v6476 = vpack.c.b16 %v5674, %v5673
        %v6477 = vpack.c.b16 %v5676, %v5675
        %v6478 = vpack.c.b16 %v5678, %v5677
        %v6479 = vpack.c.b16 %v5680, %v5679
        %v6480 = vpack.c.b16 %v5682, %v5681
        %v6481 = vpack.c.b16 %v5684, %v5683
        %v6482 = vpack.c.b16 %v5686, %v5685
        %v6483 = vpack.c.b16 %v5688, %v5687
        %v6484 = vpack.c.b16 %v5690, %v5689
        %v6485 = vpack.c.b16 %v5692, %v5691
        %v6486 = vpack.c.b16 %v5694, %v5693
        %v6487 = vpack.c.b16 %v5696, %v5695
        %v6488 = vpack.c.b16 %v5698, %v5697
        %v6489 = vpack.c.b16 %v5700, %v5699
        %v6490 = vpack.c.b16 %v5702, %v5701
        %v6491 = vpack.c.b16 %v5704, %v5703
        %v6492 = vpack.c.b16 %v5706, %v5705
        %v6493 = vpack.c.b16 %v5708, %v5707
        %v6494 = vpack.c.b16 %v5710, %v5709
        %7279 = vmatprep.subr.bf16.mxu0 0
        %7280 = vmatpush1.bf16.msra.mxu0 %v5711
        %7281 = vmatprep.subr.bf16.mxu0 0
        %7282 = vmatpush1.bf16.msra.mxu0 %v5712
        %7283 = vmatprep.subr.bf16.mxu0 0
        %7284 = vmatpush1.bf16.msra.mxu0 %v5713
        %7285 = vmatprep.subr.bf16.mxu0 0
        %7286 = vmatpush1.bf16.msra.mxu0 %v5714
        %7287 = vmatprep.subr.bf16.mxu0 0
        %7288 = vmatpush1.bf16.msra.mxu0 %v5715
        %7289 = vmatprep.subr.bf16.mxu0 0
        %7290 = vmatpush1.bf16.msra.mxu0 %v5716
        %7291 = vmatprep.subr.bf16.mxu0 0
        %7292 = vmatpush1.bf16.msra.mxu0 %v5717
        %7293 = vmatprep.subr.bf16.mxu0 0
        %7294 = vmatpush1.bf16.msra.mxu0 %v5718
        %7295 = vmatprep.subr.bf16.mxu0 0
        %7296 = vmatpush1.bf16.msra.mxu0 %v5719
        %7297 = vmatprep.subr.bf16.mxu0 0
        %7298 = vmatpush1.bf16.msra.mxu0 %v5720
        %7299 = vmatprep.subr.bf16.mxu0 0
        %7300 = vmatpush1.bf16.msra.mxu0 %v5721
        %7301 = vmatprep.subr.bf16.mxu0 0
        %7302 = vmatpush1.bf16.msra.mxu0 %v5722
        %7303 = vmatprep.subr.bf16.mxu0 0
        %7304 = vmatpush1.bf16.msra.mxu0 %v5723
        %7305 = vmatprep.subr.bf16.mxu0 0
        %7306 = vmatpush1.bf16.msra.mxu0 %v5724
        %7307 = vmatprep.subr.bf16.mxu0 0
        %7308 = vmatpush1.bf16.msra.mxu0 %v5725
        %7309 = vmatprep.subr.bf16.mxu0 0
        %7310 = vmatpush1.bf16.msra.mxu0 %v5726
        %7311 = vmatprep.mubr.bf16.mxu0 %v1904
        %7312 = vmatmul.mubr.bf16.gmra.mrb[0].mxu0 %v1890
        %v7313 = vpop.f32.mrb[0].mxu0
        %v7314 = vadd.f32 0.0, %v7313
        %v7315 = vpop.f32.mrb[0].mxu0
        %v7316 = vpop.f32.mrb[0].mxu0
        %v7317 = vpop.f32.mrb[0].mxu0
        %7318 = vdwg.mxu0
        %7319 = vmatprep.subr.bf16.mxu0 0
        %7320 = vmatpush1.bf16.msra.mxu0 %v5727
        %7321 = vmatprep.subr.bf16.mxu0 0
        %7322 = vmatpush1.bf16.msra.mxu0 %v5728
        %7323 = vmatprep.subr.bf16.mxu0 0
        %7324 = vmatpush1.bf16.msra.mxu0 %v5729
        %7325 = vmatprep.subr.bf16.mxu0 0
        %7326 = vmatpush1.bf16.msra.mxu0 %v5730
        %7327 = vmatprep.subr.bf16.mxu0 0
        %7328 = vmatpush1.bf16.msra.mxu0 %v5731
        %7329 = vmatprep.subr.bf16.mxu0 0
        %7330 = vmatpush1.bf16.msra.mxu0 %v5732
        %7331 = vmatprep.subr.bf16.mxu0 0
        %7332 = vmatpush1.bf16.msra.mxu0 %v5733
        %7333 = vmatprep.subr.bf16.mxu0 0
        %7334 = vmatpush1.bf16.msra.mxu0 %v5734
        %7335 = vmatprep.subr.bf16.mxu0 0
        %7336 = vmatpush1.bf16.msra.mxu0 %v5735
        %7337 = vmatprep.subr.bf16.mxu0 0
        %7338 = vmatpush1.bf16.msra.mxu0 %v5736
        %7339 = vmatprep.subr.bf16.mxu0 0
        %7340 = vmatpush1.bf16.msra.mxu0 %v5737
        %7341 = vmatprep.subr.bf16.mxu0 0
        %7342 = vmatpush1.bf16.msra.mxu0 %v5738
        %7343 = vmatprep.subr.bf16.mxu0 0
        %7344 = vmatpush1.bf16.msra.mxu0 %v5739
        %7345 = vmatprep.subr.bf16.mxu0 0
        %7346 = vmatpush1.bf16.msra.mxu0 %v5740
        %7347 = vmatprep.subr.bf16.mxu0 0
        %7348 = vmatpush1.bf16.msra.mxu0 %v5741
        %7349 = vmatprep.subr.bf16.mxu0 0
        %7350 = vmatpush1.bf16.msra.mxu0 %v5742
        %7351 = vmatprep.mubr.bf16.mxu0 %v1914
        %7352 = vmatmul.mubr.bf16.gmra.mrb[0].mxu0 %v1912
        %v7353 = vpop.f32.mrb[0].mxu0
        %v7354 = vadd.f32 %v7314, %v7353
        %v7355 = vpop.f32.mrb[0].mxu0
        %v7356 = vpop.f32.mrb[0].mxu0
        %v7357 = vpop.f32.mrb[0].mxu0
        %7358 = vdwg.mxu0
        %7359 = vmatprep.subr.bf16.mxu0 0
        %7360 = vmatpush1.bf16.msra.mxu0 %v5743
        %7361 = vmatprep.subr.bf16.mxu0 0
        %7362 = vmatpush1.bf16.msra.mxu0 %v5744
        %7363 = vmatprep.subr.bf16.mxu0 0
        %7364 = vmatpush1.bf16.msra.mxu0 %v5745
        %7365 = vmatprep.subr.bf16.mxu0 0
        %7366 = vmatpush1.bf16.msra.mxu0 %v5746
        %7367 = vmatprep.subr.bf16.mxu0 0
        %7368 = vmatpush1.bf16.msra.mxu0 %v5747
        %7369 = vmatprep.subr.bf16.mxu0 0
        %7370 = vmatpush1.bf16.msra.mxu0 %v5748
        %7371 = vmatprep.subr.bf16.mxu0 0
        %7372 = vmatpush1.bf16.msra.mxu0 %v5749
        %7373 = vmatprep.subr.bf16.mxu0 0
        %7374 = vmatpush1.bf16.msra.mxu0 %v5750
        %7375 = vmatprep.subr.bf16.mxu0 0
        %7376 = vmatpush1.bf16.msra.mxu0 %v5751
        %7377 = vmatprep.subr.bf16.mxu0 0
        %7378 = vmatpush1.bf16.msra.mxu0 %v5752
        %7379 = vmatprep.subr.bf16.mxu0 0
        %7380 = vmatpush1.bf16.msra.mxu0 %v5753
        %7381 = vmatprep.subr.bf16.mxu0 0
        %7382 = vmatpush1.bf16.msra.mxu0 %v5754
        %7383 = vmatprep.subr.bf16.mxu0 0
        %7384 = vmatpush1.bf16.msra.mxu0 %v5755
        %7385 = vmatprep.subr.bf16.mxu0 0
        %7386 = vmatpush1.bf16.msra.mxu0 %v5756
        %7387 = vmatprep.subr.bf16.mxu0 0
        %7388 = vmatpush1.bf16.msra.mxu0 %v5757
        %7389 = vmatprep.subr.bf16.mxu0 0
        %7390 = vmatpush1.bf16.msra.mxu0 %v5758
        %7391 = vmatprep.mubr.bf16.mxu0 %v1911
        %7392 = vmatmul.mubr.bf16.gmra.mrb[0].mxu0 %v1897
        %v7393 = vpop.f32.mrb[0].mxu0
        %v7394 = vadd.f32 %v7354, %v7393
        %v7395 = vpop.f32.mrb[0].mxu0
        %v7396 = vpop.f32.mrb[0].mxu0
        %v7397 = vpop.f32.mrb[0].mxu0
        %7398 = vdwg.mxu0
        %7399 = vmatprep.subr.bf16.mxu0 0
        %7400 = vmatpush1.bf16.msra.mxu0 %v5759
        %7401 = vmatprep.subr.bf16.mxu0 0
        %7402 = vmatpush1.bf16.msra.mxu0 %v5760
        %7403 = vmatprep.subr.bf16.mxu0 0
        %7404 = vmatpush1.bf16.msra.mxu0 %v5761
        %7405 = vmatprep.subr.bf16.mxu0 0
        %7406 = vmatpush1.bf16.msra.mxu0 %v5762
        %7407 = vmatprep.subr.bf16.mxu0 0
        %7408 = vmatpush1.bf16.msra.mxu0 %v5763
        %7409 = vmatprep.subr.bf16.mxu0 0
        %7410 = vmatpush1.bf16.msra.mxu0 %v5764
        %7411 = vmatprep.subr.bf16.mxu0 0
        %7412 = vmatpush1.bf16.msra.mxu0 %v5765
        %7413 = vmatprep.subr.bf16.mxu0 0
        %7414 = vmatpush1.bf16.msra.mxu0 %v5766
        %7415 = vmatprep.subr.bf16.mxu0 0
        %7416 = vmatpush1.bf16.msra.mxu0 %v5767
        %7417 = vmatprep.subr.bf16.mxu0 0
        %7418 = vmatpush1.bf16.msra.mxu0 %v5768
        %7419 = vmatprep.subr.bf16.mxu0 0
        %7420 = vmatpush1.bf16.msra.mxu0 %v5769
        %7421 = vmatprep.subr.bf16.mxu0 0
        %7422 = vmatpush1.bf16.msra.mxu0 %v5770
        %7423 = vmatprep.subr.bf16.mxu0 0
        %7424 = vmatpush1.bf16.msra.mxu0 %v5771
        %7425 = vmatprep.subr.bf16.mxu0 0
        %7426 = vmatpush1.bf16.msra.mxu0 %v5772
        %7427 = vmatprep.subr.bf16.mxu0 0
        %7428 = vmatpush1.bf16.msra.mxu0 %v5773
        %7429 = vmatprep.subr.bf16.mxu0 0
        %7430 = vmatpush1.bf16.msra.mxu0 %v5774
        %7431 = vmatprep.mubr.bf16.mxu0 %v1915
        %7432 = vmatmul.mubr.bf16.gmra.mrb[0].mxu0 %v1913
        %v7433 = vpop.f32.mrb[0].mxu0
        %v7434 = vadd.f32 %v7394, %v7433
        %v7435 = vpop.f32.mrb[0].mxu0
        %v7436 = vpop.f32.mrb[0].mxu0
        %v7437 = vpop.f32.mrb[0].mxu0
        %7438 = vdwg.mxu0
        %7439 = vmatprep.subr.bf16.mxu0 0
        %7440 = vmatpush1.bf16.msra.mxu0 %v5775
        %7441 = vmatprep.subr.bf16.mxu0 0
        %7442 = vmatpush1.bf16.msra.mxu0 %v5776
        %7443 = vmatprep.subr.bf16.mxu0 0
        %7444 = vmatpush1.bf16.msra.mxu0 %v5777
        %7445 = vmatprep.subr.bf16.mxu0 0
        %7446 = vmatpush1.bf16.msra.mxu0 %v5778
        %7447 = vmatprep.subr.bf16.mxu0 0
        %7448 = vmatpush1.bf16.msra.mxu0 %v5779
        %7449 = vmatprep.subr.bf16.mxu0 0
        %7450 = vmatpush1.bf16.msra.mxu0 %v5780
        %7451 = vmatprep.subr.bf16.mxu0 0
        %7452 = vmatpush1.bf16.msra.mxu0 %v5781
        %7453 = vmatprep.subr.bf16.mxu0 0
        %7454 = vmatpush1.bf16.msra.mxu0 %v5782
        %7455 = vmatprep.subr.bf16.mxu0 0
        %7456 = vmatpush1.bf16.msra.mxu0 %v5783
        %7457 = vmatprep.subr.bf16.mxu0 0
        %7458 = vmatpush1.bf16.msra.mxu0 %v5784
        %7459 = vmatprep.subr.bf16.mxu0 0
        %7460 = vmatpush1.bf16.msra.mxu0 %v5785
        %7461 = vmatprep.subr.bf16.mxu0 0
        %7462 = vmatpush1.bf16.msra.mxu0 %v5786
        %7463 = vmatprep.subr.bf16.mxu0 0
        %7464 = vmatpush1.bf16.msra.mxu0 %v5787
        %7465 = vmatprep.subr.bf16.mxu0 0
        %7466 = vmatpush1.bf16.msra.mxu0 %v5788
        %7467 = vmatprep.subr.bf16.mxu0 0
        %7468 = vmatpush1.bf16.msra.mxu0 %v5789
        %7469 = vmatprep.subr.bf16.mxu0 0
        %7470 = vmatpush1.bf16.msra.mxu0 %v5790
        %7471 = vmatprep.mubr.bf16.mxu0 %v1953
        %7472 = vmatmul.mubr.bf16.gmra.mrb[0].mxu0 %v1939
        %v7473 = vpop.f32.mrb[0].mxu0
        %v7474 = vadd.f32 %v7434, %v7473
        %v7475 = vpop.f32.mrb[0].mxu0
        %v7476 = vpop.f32.mrb[0].mxu0
        %v7477 = vpop.f32.mrb[0].mxu0
        %7478 = vdwg.mxu0
        %7479 = vmatprep.subr.bf16.mxu0 0
        %7480 = vmatpush1.bf16.msra.mxu0 %v5791
        %7481 = vmatprep.subr.bf16.mxu0 0
        %7482 = vmatpush1.bf16.msra.mxu0 %v5792
        %7483 = vmatprep.subr.bf16.mxu0 0
        %7484 = vmatpush1.bf16.msra.mxu0 %v5793
        %7485 = vmatprep.subr.bf16.mxu0 0
        %7486 = vmatpush1.bf16.msra.mxu0 %v5794
        %7487 = vmatprep.subr.bf16.mxu0 0
        %7488 = vmatpush1.bf16.msra.mxu0 %v5795
        %7489 = vmatprep.subr.bf16.mxu0 0
        %7490 = vmatpush1.bf16.msra.mxu0 %v5796
        %7491 = vmatprep.subr.bf16.mxu0 0
        %7492 = vmatpush1.bf16.msra.mxu0 %v5797
        %7493 = vmatprep.subr.bf16.mxu0 0
        %7494 = vmatpush1.bf16.msra.mxu0 %v5798
        %7495 = vmatprep.subr.bf16.mxu0 0
        %7496 = vmatpush1.bf16.msra.mxu0 %v5799
        %7497 = vmatprep.subr.bf16.mxu0 0
        %7498 = vmatpush1.bf16.msra.mxu0 %v5800
        %7499 = vmatprep.subr.bf16.mxu0 0
        %7500 = vmatpush1.bf16.msra.mxu0 %v5801
        %7501 = vmatprep.subr.bf16.mxu0 0
        %7502 = vmatpush1.bf16.msra.mxu0 %v5802
        %7503 = vmatprep.subr.bf16.mxu0 0
        %7504 = vmatpush1.bf16.msra.mxu0 %v5803
        %7505 = vmatprep.subr.bf16.mxu0 0
        %7506 = vmatpush1.bf16.msra.mxu0 %v5804
        %7507 = vmatprep.subr.bf16.mxu0 0
        %7508 = vmatpush1.bf16.msra.mxu0 %v5805
        %7509 = vmatprep.subr.bf16.mxu0 0
        %7510 = vmatpush1.bf16.msra.mxu0 %v5806
        %7511 = vmatprep.mubr.bf16.mxu0 %v1963
        %7512 = vmatmul.mubr.bf16.gmra.mrb[0].mxu0 %v1961
        %v7513 = vpop.f32.mrb[0].mxu0
        %v7514 = vadd.f32 %v7474, %v7513
        %v7515 = vpop.f32.mrb[0].mxu0
        %v7516 = vpop.f32.mrb[0].mxu0
        %v7517 = vpop.f32.mrb[0].mxu0
        %7518 = vdwg.mxu0
        %7519 = vmatprep.subr.bf16.mxu0 0
        %7520 = vmatpush1.bf16.msra.mxu0 %v5807
        %7521 = vmatprep.subr.bf16.mxu0 0
        %7522 = vmatpush1.bf16.msra.mxu0 %v5808
        %7523 = vmatprep.subr.bf16.mxu0 0
        %7524 = vmatpush1.bf16.msra.mxu0 %v5809
        %7525 = vmatprep.subr.bf16.mxu0 0
        %7526 = vmatpush1.bf16.msra.mxu0 %v5810
        %7527 = vmatprep.subr.bf16.mxu0 0
        %7528 = vmatpush1.bf16.msra.mxu0 %v5811
        %7529 = vmatprep.subr.bf16.mxu0 0
        %7530 = vmatpush1.bf16.msra.mxu0 %v5812
        %7531 = vmatprep.subr.bf16.mxu0 0
        %7532 = vmatpush1.bf16.msra.mxu0 %v5813
        %7533 = vmatprep.subr.bf16.mxu0 0
        %7534 = vmatpush1.bf16.msra.mxu0 %v5814
        %7535 = vmatprep.subr.bf16.mxu0 0
        %7536 = vmatpush1.bf16.msra.mxu0 %v5815
        %7537 = vmatprep.subr.bf16.mxu0 0
        %7538 = vmatpush1.bf16.msra.mxu0 %v5816
        %7539 = vmatprep.subr.bf16.mxu0 0
        %7540 = vmatpush1.bf16.msra.mxu0 %v5817
        %7541 = vmatprep.subr.bf16.mxu0 0
        %7542 = vmatpush1.bf16.msra.mxu0 %v5818
        %7543 = vmatprep.subr.bf16.mxu0 0
        %7544 = vmatpush1.bf16.msra.mxu0 %v5819
        %7545 = vmatprep.subr.bf16.mxu0 0
        %7546 = vmatpush1.bf16.msra.mxu0 %v5820
        %7547 = vmatprep.subr.bf16.mxu0 0
        %7548 = vmatpush1.bf16.msra.mxu0 %v5821
        %7549 = vmatprep.subr.bf16.mxu0 0
        %7550 = vmatpush1.bf16.msra.mxu0 %v5822
        %7551 = vmatprep.mubr.bf16.mxu0 %v1960
        %7552 = vmatmul.mubr.bf16.gmra.mrb[0].mxu0 %v1946
        %v7553 = vpop.f32.mrb[0].mxu0
        %v7554 = vadd.f32 %v7514, %v7553
        %v7555 = vpop.f32.mrb[0].mxu0
        %v7556 = vpop.f32.mrb[0].mxu0
        %v7557 = vpop.f32.mrb[0].mxu0
        %7558 = vdwg.mxu0
        %7559 = vmatprep.subr.bf16.mxu0 0
        %7560 = vmatpush1.bf16.msra.mxu0 %v5823
        %7561 = vmatprep.subr.bf16.mxu0 0
        %7562 = vmatpush1.bf16.msra.mxu0 %v5824
        %7563 = vmatprep.subr.bf16.mxu0 0
        %7564 = vmatpush1.bf16.msra.mxu0 %v5825
        %7565 = vmatprep.subr.bf16.mxu0 0
        %7566 = vmatpush1.bf16.msra.mxu0 %v5826
        %7567 = vmatprep.subr.bf16.mxu0 0
        %7568 = vmatpush1.bf16.msra.mxu0 %v5827
        %7569 = vmatprep.subr.bf16.mxu0 0
        %7570 = vmatpush1.bf16.msra.mxu0 %v5828
        %7571 = vmatprep.subr.bf16.mxu0 0
        %7572 = vmatpush1.bf16.msra.mxu0 %v5829
        %7573 = vmatprep.subr.bf16.mxu0 0
        %7574 = vmatpush1.bf16.msra.mxu0 %v5830
        %7575 = vmatprep.subr.bf16.mxu0 0
        %7576 = vmatpush1.bf16.msra.mxu0 %v5831
        %7577 = vmatprep.subr.bf16.mxu0 0
        %7578 = vmatpush1.bf16.msra.mxu0 %v5832
        %7579 = vmatprep.subr.bf16.mxu0 0
        %7580 = vmatpush1.bf16.msra.mxu0 %v5833
        %7581 = vmatprep.subr.bf16.mxu0 0
        %7582 = vmatpush1.bf16.msra.mxu0 %v5834
        %7583 = vmatprep.subr.bf16.mxu0 0
        %7584 = vmatpush1.bf16.msra.mxu0 %v5835
        %7585 = vmatprep.subr.bf16.mxu0 0
        %7586 = vmatpush1.bf16.msra.mxu0 %v5836
        %7587 = vmatprep.subr.bf16.mxu0 0
        %7588 = vmatpush1.bf16.msra.mxu0 %v5837
        %7589 = vmatprep.subr.bf16.mxu0 0
        %7590 = vmatpush1.bf16.msra.mxu0 %v5838
        %7591 = vmatprep.mubr.bf16.mxu0 %v1964
        %7592 = vmatmul.mubr.bf16.gmra.mrb[0].mxu0 %v1962
        %v7593 = vpop.f32.mrb[0].mxu0
        %v7594 = vadd.f32 %v7554, %v7593
        %v7595 = vpop.f32.mrb[0].mxu0
        %v7596 = vpop.f32.mrb[0].mxu0
        %v7597 = vpop.f32.mrb[0].mxu0
        %7598 = vdwg.mxu0
        %7599 = vmatprep.subr.bf16.mxu0 0
        %7600 = vmatpush1.bf16.msra.mxu0 %v5839
        %7601 = vmatprep.subr.bf16.mxu0 0
        %7602 = vmatpush1.bf16.msra.mxu0 %v5840
        %7603 = vmatprep.subr.bf16.mxu0 0
        %7604 = vmatpush1.bf16.msra.mxu0 %v5841
        %7605 = vmatprep.subr.bf16.mxu0 0
        %7606 = vmatpush1.bf16.msra.mxu0 %v5842
        %7607 = vmatprep.subr.bf16.mxu0 0
        %7608 = vmatpush1.bf16.msra.mxu0 %v5843
        %7609 = vmatprep.subr.bf16.mxu0 0
        %7610 = vmatpush1.bf16.msra.mxu0 %v5844
        %7611 = vmatprep.subr.bf16.mxu0 0
        %7612 = vmatpush1.bf16.msra.mxu0 %v5845
        %7613 = vmatprep.subr.bf16.mxu0 0
        %7614 = vmatpush1.bf16.msra.mxu0 %v5846
        %7615 = vmatprep.subr.bf16.mxu0 0
        %7616 = vmatpush1.bf16.msra.mxu0 %v5847
        %7617 = vmatprep.subr.bf16.mxu0 0
        %7618 = vmatpush1.bf16.msra.mxu0 %v5848
        %7619 = vmatprep.subr.bf16.mxu0 0
        %7620 = vmatpush1.bf16.msra.mxu0 %v5849
        %7621 = vmatprep.subr.bf16.mxu0 0
        %7622 = vmatpush1.bf16.msra.mxu0 %v5850
        %7623 = vmatprep.subr.bf16.mxu0 0
        %7624 = vmatpush1.bf16.msra.mxu0 %v5851
        %7625 = vmatprep.subr.bf16.mxu0 0
        %7626 = vmatpush1.bf16.msra.mxu0 %v5852
        %7627 = vmatprep.subr.bf16.mxu0 0
        %7628 = vmatpush1.bf16.msra.mxu0 %v5853
        %7629 = vmatprep.subr.bf16.mxu0 0
        %7630 = vmatpush1.bf16.msra.mxu0 %v5854
        %7631 = vmatprep.mubr.bf16.mxu0 %v2002
        %7632 = vmatmul.mubr.bf16.gmra.mrb[0].mxu0 %v1988
        %v7633 = vpop.f32.mrb[0].mxu0
        %v7634 = vadd.f32 %v7594, %v7633
        %v7635 = vpop.f32.mrb[0].mxu0
        %v7636 = vpop.f32.mrb[0].mxu0
        %v7637 = vpop.f32.mrb[0].mxu0
        %7638 = vdwg.mxu0
        %7639 = vmatprep.subr.bf16.mxu0 0
        %7640 = vmatpush1.bf16.msra.mxu0 %v5855
        %7641 = vmatprep.subr.bf16.mxu0 0
        %7642 = vmatpush1.bf16.msra.mxu0 %v5856
        %7643 = vmatprep.subr.bf16.mxu0 0
        %7644 = vmatpush1.bf16.msra.mxu0 %v5857
        %7645 = vmatprep.subr.bf16.mxu0 0
        %7646 = vmatpush1.bf16.msra.mxu0 %v5858
        %7647 = vmatprep.subr.bf16.mxu0 0
        %7648 = vmatpush1.bf16.msra.mxu0 %v5859
        %7649 = vmatprep.subr.bf16.mxu0 0
        %7650 = vmatpush1.bf16.msra.mxu0 %v5860
        %7651 = vmatprep.subr.bf16.mxu0 0
        %7652 = vmatpush1.bf16.msra.mxu0 %v5861
        %7653 = vmatprep.subr.bf16.mxu0 0
        %7654 = vmatpush1.bf16.msra.mxu0 %v5862
        %7655 = vmatprep.subr.bf16.mxu0 0
        %7656 = vmatpush1.bf16.msra.mxu0 %v5863
        %7657 = vmatprep.subr.bf16.mxu0 0
        %7658 = vmatpush1.bf16.msra.mxu0 %v5864
        %7659 = vmatprep.subr.bf16.mxu0 0
        %7660 = vmatpush1.bf16.msra.mxu0 %v5865
        %7661 = vmatprep.subr.bf16.mxu0 0
        %7662 = vmatpush1.bf16.msra.mxu0 %v5866
        %7663 = vmatprep.subr.bf16.mxu0 0
        %7664 = vmatpush1.bf16.msra.mxu0 %v5867
        %7665 = vmatprep.subr.bf16.mxu0 0
        %7666 = vmatpush1.bf16.msra.mxu0 %v5868
        %7667 = vmatprep.subr.bf16.mxu0 0
        %7668 = vmatpush1.bf16.msra.mxu0 %v5869
        %7669 = vmatprep.subr.bf16.mxu0 0
        %7670 = vmatpush1.bf16.msra.mxu0 %v5870
        %7671 = vmatprep.mubr.bf16.mxu0 %v2012
        %7672 = vmatmul.mubr.bf16.gmra.mrb[0].mxu0 %v2010
        %v7673 = vpop.f32.mrb[0].mxu0
        %v7674 = vadd.f32 %v7634, %v7673
        %v7675 = vpop.f32.mrb[0].mxu0
        %v7676 = vpop.f32.mrb[0].mxu0
        %v7677 = vpop.f32.mrb[0].mxu0
        %7678 = vdwg.mxu0
        %7679 = vmatprep.subr.bf16.mxu0 0
        %7680 = vmatpush1.bf16.msra.mxu0 %v5871
        %7681 = vmatprep.subr.bf16.mxu0 0
        %7682 = vmatpush1.bf16.msra.mxu0 %v5872
        %7683 = vmatprep.subr.bf16.mxu0 0
        %7684 = vmatpush1.bf16.msra.mxu0 %v5873
        %7685 = vmatprep.subr.bf16.mxu0 0
        %7686 = vmatpush1.bf16.msra.mxu0 %v5874
        %7687 = vmatprep.subr.bf16.mxu0 0
        %7688 = vmatpush1.bf16.msra.mxu0 %v5875
        %7689 = vmatprep.subr.bf16.mxu0 0
        %7690 = vmatpush1.bf16.msra.mxu0 %v5876
        %7691 = vmatprep.subr.bf16.mxu0 0
        %7692 = vmatpush1.bf16.msra.mxu0 %v5877
        %7693 = vmatprep.subr.bf16.mxu0 0
        %7694 = vmatpush1.bf16.msra.mxu0 %v5878
        %7695 = vmatprep.subr.bf16.mxu0 0
        %7696 = vmatpush1.bf16.msra.mxu0 %v5879
        %7697 = vmatprep.subr.bf16.mxu0 0
        %7698 = vmatpush1.bf16.msra.mxu0 %v5880
        %7699 = vmatprep.subr.bf16.mxu0 0
        %7700 = vmatpush1.bf16.msra.mxu0 %v5881
        %7701 = vmatprep.subr.bf16.mxu0 0
        %7702 = vmatpush1.bf16.msra.mxu0 %v5882
        %7703 = vmatprep.subr.bf16.mxu0 0
        %7704 = vmatpush1.bf16.msra.mxu0 %v5883
        %7705 = vmatprep.subr.bf16.mxu0 0
        %7706 = vmatpush1.bf16.msra.mxu0 %v5884
        %7707 = vmatprep.subr.bf16.mxu0 0
        %7708 = vmatpush1.bf16.msra.mxu0 %v5885
        %7709 = vmatprep.subr.bf16.mxu0 0
        %7710 = vmatpush1.bf16.msra.mxu0 %v5886
        %7711 = vmatprep.mubr.bf16.mxu0 %v2009
        %7712 = vmatmul.mubr.bf16.gmra.mrb[0].mxu0 %v1995
        %v7713 = vpop.f32.mrb[0].mxu0
        %v7714 = vadd.f32 %v7674, %v7713
        %v7715 = vpop.f32.mrb[0].mxu0
        %v7716 = vpop.f32.mrb[0].mxu0
        %v7717 = vpop.f32.mrb[0].mxu0
        %7718 = vdwg.mxu0
        %7719 = vmatprep.subr.bf16.mxu0 0
        %7720 = vmatpush1.bf16.msra.mxu0 %v5887
        %7721 = vmatprep.subr.bf16.mxu0 0
        %7722 = vmatpush1.bf16.msra.mxu0 %v5888
        %7723 = vmatprep.subr.bf16.mxu0 0
        %7724 = vmatpush1.bf16.msra.mxu0 %v5889
        %7725 = vmatprep.subr.bf16.mxu0 0
        %7726 = vmatpush1.bf16.msra.mxu0 %v5890
        %7727 = vmatprep.subr.bf16.mxu0 0
        %7728 = vmatpush1.bf16.msra.mxu0 %v5891
        %7729 = vmatprep.subr.bf16.mxu0 0
        %7730 = vmatpush1.bf16.msra.mxu0 %v5892
        %7731 = vmatprep.subr.bf16.mxu0 0
        %7732 = vmatpush1.bf16.msra.mxu0 %v5893
        %7733 = vmatprep.subr.bf16.mxu0 0
        %7734 = vmatpush1.bf16.msra.mxu0 %v5894
        %7735 = vmatprep.subr.bf16.mxu0 0
        %7736 = vmatpush1.bf16.msra.mxu0 %v5895
        %7737 = vmatprep.subr.bf16.mxu0 0
        %7738 = vmatpush1.bf16.msra.mxu0 %v5896
        %7739 = vmatprep.subr.bf16.mxu0 0
        %7740 = vmatpush1.bf16.msra.mxu0 %v5897
        %7741 = vmatprep.subr.bf16.mxu0 0
        %7742 = vmatpush1.bf16.msra.mxu0 %v5898
        %7743 = vmatprep.subr.bf16.mxu0 0
        %7744 = vmatpush1.bf16.msra.mxu0 %v5899
        %7745 = vmatprep.subr.bf16.mxu0 0
        %7746 = vmatpush1.bf16.msra.mxu0 %v5900
        %7747 = vmatprep.subr.bf16.mxu0 0
        %7748 = vmatpush1.bf16.msra.mxu0 %v5901
        %7749 = vmatprep.subr.bf16.mxu0 0
        %7750 = vmatpush1.bf16.msra.mxu0 %v5902
        %7751 = vmatprep.mubr.bf16.mxu0 %v2013
        %7752 = vmatmul.mubr.bf16.gmra.mrb[0].mxu0 %v2011
        %v7753 = vpop.f32.mrb[0].mxu0
        %v7754 = vadd.f32 %v7714, %v7753
        %v7755 = vpop.f32.mrb[0].mxu0
        %v7756 = vpop.f32.mrb[0].mxu0
        %v7757 = vpop.f32.mrb[0].mxu0
        %7758 = vdwg.mxu0
        %7759 = vmatprep.subr.bf16.mxu0 0
        %7760 = vmatpush1.bf16.msra.mxu0 %v5903
        %7761 = vmatprep.subr.bf16.mxu0 0
        %7762 = vmatpush1.bf16.msra.mxu0 %v5904
        %7763 = vmatprep.subr.bf16.mxu0 0
        %7764 = vmatpush1.bf16.msra.mxu0 %v5905
        %7765 = vmatprep.subr.bf16.mxu0 0
        %7766 = vmatpush1.bf16.msra.mxu0 %v5906
        %7767 = vmatprep.subr.bf16.mxu0 0
        %7768 = vmatpush1.bf16.msra.mxu0 %v5907
        %7769 = vmatprep.subr.bf16.mxu0 0
        %7770 = vmatpush1.bf16.msra.mxu0 %v5908
        %7771 = vmatprep.subr.bf16.mxu0 0
        %7772 = vmatpush1.bf16.msra.mxu0 %v5909
        %7773 = vmatprep.subr.bf16.mxu0 0
        %7774 = vmatpush1.bf16.msra.mxu0 %v5910
        %7775 = vmatprep.subr.bf16.mxu0 0
        %7776 = vmatpush1.bf16.msra.mxu0 %v5911
        %7777 = vmatprep.subr.bf16.mxu0 0
        %7778 = vmatpush1.bf16.msra.mxu0 %v5912
        %7779 = vmatprep.subr.bf16.mxu0 0
        %7780 = vmatpush1.bf16.msra.mxu0 %v5913
        %7781 = vmatprep.subr.bf16.mxu0 0
        %7782 = vmatpush1.bf16.msra.mxu0 %v5914
        %7783 = vmatprep.subr.bf16.mxu0 0
        %7784 = vmatpush1.bf16.msra.mxu0 %v5915
        %7785 = vmatprep.subr.bf16.mxu0 0
        %7786 = vmatpush1.bf16.msra.mxu0 %v5916
        %7787 = vmatprep.subr.bf16.mxu0 0
        %7788 = vmatpush1.bf16.msra.mxu0 %v5917
        %7789 = vmatprep.subr.bf16.mxu0 0
        %7790 = vmatpush1.bf16.msra.mxu0 %v5918
        %7791 = vmatprep.mubr.bf16.mxu0 %v2051
        %7792 = vmatmul.mubr.bf16.gmra.mrb[0].mxu0 %v2037
        %v7793 = vpop.f32.mrb[0].mxu0
        %v7794 = vadd.f32 %v7754, %v7793
        %v7795 = vpop.f32.mrb[0].mxu0
        %v7796 = vpop.f32.mrb[0].mxu0
        %v7797 = vpop.f32.mrb[0].mxu0
        %7798 = vdwg.mxu0
        %7799 = vmatprep.subr.bf16.mxu0 0
        %7800 = vmatpush1.bf16.msra.mxu0 %v5919
        %7801 = vmatprep.subr.bf16.mxu0 0
        %7802 = vmatpush1.bf16.msra.mxu0 %v5920
        %7803 = vmatprep.subr.bf16.mxu0 0
        %7804 = vmatpush1.bf16.msra.mxu0 %v5921
        %7805 = vmatprep.subr.bf16.mxu0 0
        %7806 = vmatpush1.bf16.msra.mxu0 %v5922
        %7807 = vmatprep.subr.bf16.mxu0 0
        %7808 = vmatpush1.bf16.msra.mxu0 %v5923
        %7809 = vmatprep.subr.bf16.mxu0 0
        %7810 = vmatpush1.bf16.msra.mxu0 %v5924
        %7811 = vmatprep.subr.bf16.mxu0 0
        %7812 = vmatpush1.bf16.msra.mxu0 %v5925
        %7813 = vmatprep.subr.bf16.mxu0 0
        %7814 = vmatpush1.bf16.msra.mxu0 %v5926
        %7815 = vmatprep.subr.bf16.mxu0 0
        %7816 = vmatpush1.bf16.msra.mxu0 %v5927
        %7817 = vmatprep.subr.bf16.mxu0 0
        %7818 = vmatpush1.bf16.msra.mxu0 %v5928
        %7819 = vmatprep.subr.bf16.mxu0 0
        %7820 = vmatpush1.bf16.msra.mxu0 %v5929
        %7821 = vmatprep.subr.bf16.mxu0 0
        %7822 = vmatpush1.bf16.msra.mxu0 %v5930
        %7823 = vmatprep.subr.bf16.mxu0 0
        %7824 = vmatpush1.bf16.msra.mxu0 %v5931
        %7825 = vmatprep.subr.bf16.mxu0 0
        %7826 = vmatpush1.bf16.msra.mxu0 %v5932
        %7827 = vmatprep.subr.bf16.mxu0 0
        %7828 = vmatpush1.bf16.msra.mxu0 %v5933
        %7829 = vmatprep.subr.bf16.mxu0 0
        %7830 = vmatpush1.bf16.msra.mxu0 %v5934
        %7831 = vmatprep.mubr.bf16.mxu0 %v2061
        %7832 = vmatmul.mubr.bf16.gmra.mrb[0].mxu0 %v2059
        %v7833 = vpop.f32.mrb[0].mxu0
        %v7834 = vadd.f32 %v7794, %v7833
        %v7835 = vpop.f32.mrb[0].mxu0
        %v7836 = vpop.f32.mrb[0].mxu0
        %v7837 = vpop.f32.mrb[0].mxu0
        %7838 = vdwg.mxu0
        %7839 = vmatprep.subr.bf16.mxu0 0
        %7840 = vmatpush1.bf16.msra.mxu0 %v5935
        %7841 = vmatprep.subr.bf16.mxu0 0
        %7842 = vmatpush1.bf16.msra.mxu0 %v5936
        %7843 = vmatprep.subr.bf16.mxu0 0
        %7844 = vmatpush1.bf16.msra.mxu0 %v5937
        %7845 = vmatprep.subr.bf16.mxu0 0
        %7846 = vmatpush1.bf16.msra.mxu0 %v5938
        %7847 = vmatprep.subr.bf16.mxu0 0
        %7848 = vmatpush1.bf16.msra.mxu0 %v5939
        %7849 = vmatprep.subr.bf16.mxu0 0
        %7850 = vmatpush1.bf16.msra.mxu0 %v5940
        %7851 = vmatprep.subr.bf16.mxu0 0
        %7852 = vmatpush1.bf16.msra.mxu0 %v5941
        %7853 = vmatprep.subr.bf16.mxu0 0
        %7854 = vmatpush1.bf16.msra.mxu0 %v5942
        %7855 = vmatprep.subr.bf16.mxu0 0
        %7856 = vmatpush1.bf16.msra.mxu0 %v5943
        %7857 = vmatprep.subr.bf16.mxu0 0
        %7858 = vmatpush1.bf16.msra.mxu0 %v5944
        %7859 = vmatprep.subr.bf16.mxu0 0
        %7860 = vmatpush1.bf16.msra.mxu0 %v5945
        %7861 = vmatprep.subr.bf16.mxu0 0
        %7862 = vmatpush1.bf16.msra.mxu0 %v5946
        %7863 = vmatprep.subr.bf16.mxu0 0
        %7864 = vmatpush1.bf16.msra.mxu0 %v5947
        %7865 = vmatprep.subr.bf16.mxu0 0
        %7866 = vmatpush1.bf16.msra.mxu0 %v5948
        %7867 = vmatprep.subr.bf16.mxu0 0
        %7868 = vmatpush1.bf16.msra.mxu0 %v5949
        %7869 = vmatprep.subr.bf16.mxu0 0
        %7870 = vmatpush1.bf16.msra.mxu0 %v5950
        %7871 = vmatprep.mubr.bf16.mxu0 %v2058
        %7872 = vmatmul.mubr.bf16.gmra.mrb[0].mxu0 %v2044
        %v7873 = vpop.f32.mrb[0].mxu0
        %v7874 = vadd.f32 %v7834, %v7873
        %v7875 = vpop.f32.mrb[0].mxu0
        %v7876 = vpop.f32.mrb[0].mxu0
        %v7877 = vpop.f32.mrb[0].mxu0
        %7878 = vdwg.mxu0
        %7879 = vmatprep.subr.bf16.mxu0 0
        %7880 = vmatpush1.bf16.msra.mxu0 %v5951
        %7881 = vmatprep.subr.bf16.mxu0 0
        %7882 = vmatpush1.bf16.msra.mxu0 %v5952
        %7883 = vmatprep.subr.bf16.mxu0 0
        %7884 = vmatpush1.bf16.msra.mxu0 %v5953
        %7885 = vmatprep.subr.bf16.mxu0 0
        %7886 = vmatpush1.bf16.msra.mxu0 %v5954
        %7887 = vmatprep.subr.bf16.mxu0 0
        %7888 = vmatpush1.bf16.msra.mxu0 %v5955
        %7889 = vmatprep.subr.bf16.mxu0 0
        %7890 = vmatpush1.bf16.msra.mxu0 %v5956
        %7891 = vmatprep.subr.bf16.mxu0 0
        %7892 = vmatpush1.bf16.msra.mxu0 %v5957
        %7893 = vmatprep.subr.bf16.mxu0 0
        %7894 = vmatpush1.bf16.msra.mxu0 %v5958
        %7895 = vmatprep.subr.bf16.mxu0 0
        %7896 = vmatpush1.bf16.msra.mxu0 %v5959
        %7897 = vmatprep.subr.bf16.mxu0 0
        %7898 = vmatpush1.bf16.msra.mxu0 %v5960
        %7899 = vmatprep.subr.bf16.mxu0 0
        %7900 = vmatpush1.bf16.msra.mxu0 %v5961
        %7901 = vmatprep.subr.bf16.mxu0 0
        %7902 = vmatpush1.bf16.msra.mxu0 %v5962
        %7903 = vmatprep.subr.bf16.mxu0 0
        %7904 = vmatpush1.bf16.msra.mxu0 %v5963
        %7905 = vmatprep.subr.bf16.mxu0 0
        %7906 = vmatpush1.bf16.msra.mxu0 %v5964
        %7907 = vmatprep.subr.bf16.mxu0 0
        %7908 = vmatpush1.bf16.msra.mxu0 %v5965
        %7909 = vmatprep.subr.bf16.mxu0 0
        %7910 = vmatpush1.bf16.msra.mxu0 %v5966
        %7911 = vmatprep.mubr.bf16.mxu0 %v2062
        %7912 = vmatmul.mubr.bf16.gmra.mrb[0].mxu0 %v2060
        %v7913 = vpop.f32.mrb[0].mxu0
        %v7914 = vadd.f32 %v7874, %v7913
        %v7915 = vpop.f32.mrb[0].mxu0
        %v7916 = vpop.f32.mrb[0].mxu0
        %v7917 = vpop.f32.mrb[0].mxu0
        %7918 = vdwg.mxu0
        %7919 = vmatprep.subr.bf16.mxu0 0
        %7920 = vmatpush1.bf16.msra.mxu0 %v5967
        %7921 = vmatprep.subr.bf16.mxu0 0
        %7922 = vmatpush1.bf16.msra.mxu0 %v5968
        %7923 = vmatprep.subr.bf16.mxu0 0
        %7924 = vmatpush1.bf16.msra.mxu0 %v5969
        %7925 = vmatprep.subr.bf16.mxu0 0
        %7926 = vmatpush1.bf16.msra.mxu0 %v5970
        %7927 = vmatprep.subr.bf16.mxu0 0
        %7928 = vmatpush1.bf16.msra.mxu0 %v5971
        %7929 = vmatprep.subr.bf16.mxu0 0
        %7930 = vmatpush1.bf16.msra.mxu0 %v5972
        %7931 = vmatprep.subr.bf16.mxu0 0
        %7932 = vmatpush1.bf16.msra.mxu0 %v5973
        %7933 = vmatprep.subr.bf16.mxu0 0
        %7934 = vmatpush1.bf16.msra.mxu0 %v5974
        %7935 = vmatprep.subr.bf16.mxu0 0
        %7936 = vmatpush1.bf16.msra.mxu0 %v5975
        %7937 = vmatprep.subr.bf16.mxu0 0
        %7938 = vmatpush1.bf16.msra.mxu0 %v5976
        %7939 = vmatprep.subr.bf16.mxu0 0
        %7940 = vmatpush1.bf16.msra.mxu0 %v5977
        %7941 = vmatprep.subr.bf16.mxu0 0
        %7942 = vmatpush1.bf16.msra.mxu0 %v5978
        %7943 = vmatprep.subr.bf16.mxu0 0
        %7944 = vmatpush1.bf16.msra.mxu0 %v5979
        %7945 = vmatprep.subr.bf16.mxu0 0
        %7946 = vmatpush1.bf16.msra.mxu0 %v5980
        %7947 = vmatprep.subr.bf16.mxu0 0
        %7948 = vmatpush1.bf16.msra.mxu0 %v5981
        %7949 = vmatprep.subr.bf16.mxu0 0
        %7950 = vmatpush1.bf16.msra.mxu0 %v5982
        %7951 = vmatprep.mubr.bf16.mxu0 %v2100
        %7952 = vmatmul.mubr.bf16.gmra.mrb[0].mxu0 %v2086
        %v7953 = vpop.f32.mrb[0].mxu0
        %v7954 = vadd.f32 %v7914, %v7953
        %v7955 = vpop.f32.mrb[0].mxu0
        %v7956 = vpop.f32.mrb[0].mxu0
        %v7957 = vpop.f32.mrb[0].mxu0
        %7958 = vdwg.mxu0
        %7959 = vmatprep.subr.bf16.mxu0 0
        %7960 = vmatpush1.bf16.msra.mxu0 %v5983
        %7961 = vmatprep.subr.bf16.mxu0 0
        %7962 = vmatpush1.bf16.msra.mxu0 %v5984
        %7963 = vmatprep.subr.bf16.mxu0 0
        %7964 = vmatpush1.bf16.msra.mxu0 %v5985
        %7965 = vmatprep.subr.bf16.mxu0 0
        %7966 = vmatpush1.bf16.msra.mxu0 %v5986
        %7967 = vmatprep.subr.bf16.mxu0 0
        %7968 = vmatpush1.bf16.msra.mxu0 %v5987
        %7969 = vmatprep.subr.bf16.mxu0 0
        %7970 = vmatpush1.bf16.msra.mxu0 %v5988
        %7971 = vmatprep.subr.bf16.mxu0 0
        %7972 = vmatpush1.bf16.msra.mxu0 %v5989
        %7973 = vmatprep.subr.bf16.mxu0 0
        %7974 = vmatpush1.bf16.msra.mxu0 %v5990
        %7975 = vmatprep.subr.bf16.mxu0 0
        %7976 = vmatpush1.bf16.msra.mxu0 %v5991
        %7977 = vmatprep.subr.bf16.mxu0 0
        %7978 = vmatpush1.bf16.msra.mxu0 %v5992
        %7979 = vmatprep.subr.bf16.mxu0 0
        %7980 = vmatpush1.bf16.msra.mxu0 %v5993
        %7981 = vmatprep.subr.bf16.mxu0 0
        %7982 = vmatpush1.bf16.msra.mxu0 %v5994
        %7983 = vmatprep.subr.bf16.mxu0 0
        %7984 = vmatpush1.bf16.msra.mxu0 %v5995
        %7985 = vmatprep.subr.bf16.mxu0 0
        %7986 = vmatpush1.bf16.msra.mxu0 %v5996
        %7987 = vmatprep.subr.bf16.mxu0 0
        %7988 = vmatpush1.bf16.msra.mxu0 %v5997
        %7989 = vmatprep.subr.bf16.mxu0 0
        %7990 = vmatpush1.bf16.msra.mxu0 %v5998
        %7991 = vmatprep.mubr.bf16.mxu0 %v2110
        %7992 = vmatmul.mubr.bf16.gmra.mrb[0].mxu0 %v2108
        %v7993 = vpop.f32.mrb[0].mxu0
        %v7994 = vadd.f32 %v7954, %v7993
        %v7995 = vpop.f32.mrb[0].mxu0
        %v7996 = vpop.f32.mrb[0].mxu0
        %v7997 = vpop.f32.mrb[0].mxu0
        %7998 = vdwg.mxu0
        %7999 = vmatprep.subr.bf16.mxu0 0
        %8000 = vmatpush1.bf16.msra.mxu0 %v5999
        %8001 = vmatprep.subr.bf16.mxu0 0
        %8002 = vmatpush1.bf16.msra.mxu0 %v6000
        %8003 = vmatprep.subr.bf16.mxu0 0
        %8004 = vmatpush1.bf16.msra.mxu0 %v6001
        %8005 = vmatprep.subr.bf16.mxu0 0
        %8006 = vmatpush1.bf16.msra.mxu0 %v6002
        %8007 = vmatprep.subr.bf16.mxu0 0
        %8008 = vmatpush1.bf16.msra.mxu0 %v6003
        %8009 = vmatprep.subr.bf16.mxu0 0
        %8010 = vmatpush1.bf16.msra.mxu0 %v6004
        %8011 = vmatprep.subr.bf16.mxu0 0
        %8012 = vmatpush1.bf16.msra.mxu0 %v6005
        %8013 = vmatprep.subr.bf16.mxu0 0
        %8014 = vmatpush1.bf16.msra.mxu0 %v6006
        %8015 = vmatprep.subr.bf16.mxu0 0
        %8016 = vmatpush1.bf16.msra.mxu0 %v6007
        %8017 = vmatprep.subr.bf16.mxu0 0
        %8018 = vmatpush1.bf16.msra.mxu0 %v6008
        %8019 = vmatprep.subr.bf16.mxu0 0
        %8020 = vmatpush1.bf16.msra.mxu0 %v6009
        %8021 = vmatprep.subr.bf16.mxu0 0
        %8022 = vmatpush1.bf16.msra.mxu0 %v6010
        %8023 = vmatprep.subr.bf16.mxu0 0
        %8024 = vmatpush1.bf16.msra.mxu0 %v6011
        %8025 = vmatprep.subr.bf16.mxu0 0
        %8026 = vmatpush1.bf16.msra.mxu0 %v6012
        %8027 = vmatprep.subr.bf16.mxu0 0
        %8028 = vmatpush1.bf16.msra.mxu0 %v6013
        %8029 = vmatprep.subr.bf16.mxu0 0
        %8030 = vmatpush1.bf16.msra.mxu0 %v6014
        %8031 = vmatprep.mubr.bf16.mxu0 %v2107
        %8032 = vmatmul.mubr.bf16.gmra.mrb[0].mxu0 %v2093
        %v8033 = vpop.f32.mrb[0].mxu0
        %v8034 = vadd.f32 %v7994, %v8033
        %v8035 = vpop.f32.mrb[0].mxu0
        %v8036 = vpop.f32.mrb[0].mxu0
        %v8037 = vpop.f32.mrb[0].mxu0
        %8038 = vdwg.mxu0
        %8039 = vmatprep.subr.bf16.mxu0 0
        %8040 = vmatpush1.bf16.msra.mxu0 %v6015
        %8041 = vmatprep.subr.bf16.mxu0 0
        %8042 = vmatpush1.bf16.msra.mxu0 %v6016
        %8043 = vmatprep.subr.bf16.mxu0 0
        %8044 = vmatpush1.bf16.msra.mxu0 %v6017
        %8045 = vmatprep.subr.bf16.mxu0 0
        %8046 = vmatpush1.bf16.msra.mxu0 %v6018
        %8047 = vmatprep.subr.bf16.mxu0 0
        %8048 = vmatpush1.bf16.msra.mxu0 %v6019
        %8049 = vmatprep.subr.bf16.mxu0 0
        %8050 = vmatpush1.bf16.msra.mxu0 %v6020
        %8051 = vmatprep.subr.bf16.mxu0 0
        %8052 = vmatpush1.bf16.msra.mxu0 %v6021
        %8053 = vmatprep.subr.bf16.mxu0 0
        %8054 = vmatpush1.bf16.msra.mxu0 %v6022
        %8055 = vmatprep.subr.bf16.mxu0 0
        %8056 = vmatpush1.bf16.msra.mxu0 %v6023
        %8057 = vmatprep.subr.bf16.mxu0 0
        %8058 = vmatpush1.bf16.msra.mxu0 %v6024
        %8059 = vmatprep.subr.bf16.mxu0 0
        %8060 = vmatpush1.bf16.msra.mxu0 %v6025
        %8061 = vmatprep.subr.bf16.mxu0 0
        %8062 = vmatpush1.bf16.msra.mxu0 %v6026
        %8063 = vmatprep.subr.bf16.mxu0 0
        %8064 = vmatpush1.bf16.msra.mxu0 %v6027
        %8065 = vmatprep.subr.bf16.mxu0 0
        %8066 = vmatpush1.bf16.msra.mxu0 %v6028
        %8067 = vmatprep.subr.bf16.mxu0 0
        %8068 = vmatpush1.bf16.msra.mxu0 %v6029
        %8069 = vmatprep.subr.bf16.mxu0 0
        %8070 = vmatpush1.bf16.msra.mxu0 %v6030
        %8071 = vmatprep.mubr.bf16.mxu0 %v2111
        %8072 = vmatmul.mubr.bf16.gmra.mrb[0].mxu0 %v2109
        %v8073 = vpop.f32.mrb[0].mxu0
        %v8074 = vadd.f32 %v8034, %v8073
        %v8075 = vpop.f32.mrb[0].mxu0
        %v8076 = vpop.f32.mrb[0].mxu0
        %v8077 = vpop.f32.mrb[0].mxu0
        %8078 = vdwg.mxu0
        %8079 = vmatprep.subr.bf16.mxu0 0
        %8080 = vmatpush1.bf16.msra.mxu0 %v6031
        %8081 = vmatprep.subr.bf16.mxu0 0
        %8082 = vmatpush1.bf16.msra.mxu0 %v6032
        %8083 = vmatprep.subr.bf16.mxu0 0
        %8084 = vmatpush1.bf16.msra.mxu0 %v6033
        %8085 = vmatprep.subr.bf16.mxu0 0
        %8086 = vmatpush1.bf16.msra.mxu0 %v6034
        %8087 = vmatprep.subr.bf16.mxu0 0
        %8088 = vmatpush1.bf16.msra.mxu0 %v6035
        %8089 = vmatprep.subr.bf16.mxu0 0
        %8090 = vmatpush1.bf16.msra.mxu0 %v6036
        %8091 = vmatprep.subr.bf16.mxu0 0
        %8092 = vmatpush1.bf16.msra.mxu0 %v6037
        %8093 = vmatprep.subr.bf16.mxu0 0
        %8094 = vmatpush1.bf16.msra.mxu0 %v6038
        %8095 = vmatprep.subr.bf16.mxu0 0
        %8096 = vmatpush1.bf16.msra.mxu0 %v6039
        %8097 = vmatprep.subr.bf16.mxu0 0
        %8098 = vmatpush1.bf16.msra.mxu0 %v6040
        %8099 = vmatprep.subr.bf16.mxu0 0
        %8100 = vmatpush1.bf16.msra.mxu0 %v6041
        %8101 = vmatprep.subr.bf16.mxu0 0
        %8102 = vmatpush1.bf16.msra.mxu0 %v6042
        %8103 = vmatprep.subr.bf16.mxu0 0
        %8104 = vmatpush1.bf16.msra.mxu0 %v6043
        %8105 = vmatprep.subr.bf16.mxu0 0
        %8106 = vmatpush1.bf16.msra.mxu0 %v6044
        %8107 = vmatprep.subr.bf16.mxu0 0
        %8108 = vmatpush1.bf16.msra.mxu0 %v6045
        %8109 = vmatprep.subr.bf16.mxu0 0
        %8110 = vmatpush1.bf16.msra.mxu0 %v6046
        %8111 = vmatprep.mubr.bf16.mxu0 %v2149
        %8112 = vmatmul.mubr.bf16.gmra.mrb[0].mxu0 %v2135
        %v8113 = vpop.f32.mrb[0].mxu0
        %v8114 = vadd.f32 %v8074, %v8113
        %v8115 = vpop.f32.mrb[0].mxu0
        %v8116 = vpop.f32.mrb[0].mxu0
        %v8117 = vpop.f32.mrb[0].mxu0
        %8118 = vdwg.mxu0
        %8119 = vmatprep.subr.bf16.mxu0 0
        %8120 = vmatpush1.bf16.msra.mxu0 %v6047
        %8121 = vmatprep.subr.bf16.mxu0 0
        %8122 = vmatpush1.bf16.msra.mxu0 %v6048
        %8123 = vmatprep.subr.bf16.mxu0 0
        %8124 = vmatpush1.bf16.msra.mxu0 %v6049
        %8125 = vmatprep.subr.bf16.mxu0 0
        %8126 = vmatpush1.bf16.msra.mxu0 %v6050
        %8127 = vmatprep.subr.bf16.mxu0 0
        %8128 = vmatpush1.bf16.msra.mxu0 %v6051
        %8129 = vmatprep.subr.bf16.mxu0 0
        %8130 = vmatpush1.bf16.msra.mxu0 %v6052
        %8131 = vmatprep.subr.bf16.mxu0 0
        %8132 = vmatpush1.bf16.msra.mxu0 %v6053
        %8133 = vmatprep.subr.bf16.mxu0 0
        %8134 = vmatpush1.bf16.msra.mxu0 %v6054
        %8135 = vmatprep.subr.bf16.mxu0 0
        %8136 = vmatpush1.bf16.msra.mxu0 %v6055
        %8137 = vmatprep.subr.bf16.mxu0 0
        %8138 = vmatpush1.bf16.msra.mxu0 %v6056
        %8139 = vmatprep.subr.bf16.mxu0 0
        %8140 = vmatpush1.bf16.msra.mxu0 %v6057
        %8141 = vmatprep.subr.bf16.mxu0 0
        %8142 = vmatpush1.bf16.msra.mxu0 %v6058
        %8143 = vmatprep.subr.bf16.mxu0 0
        %8144 = vmatpush1.bf16.msra.mxu0 %v6059
        %8145 = vmatprep.subr.bf16.mxu0 0
        %8146 = vmatpush1.bf16.msra.mxu0 %v6060
        %8147 = vmatprep.subr.bf16.mxu0 0
        %8148 = vmatpush1.bf16.msra.mxu0 %v6061
        %8149 = vmatprep.subr.bf16.mxu0 0
        %8150 = vmatpush1.bf16.msra.mxu0 %v6062
        %8151 = vmatprep.mubr.bf16.mxu0 %v2159
        %8152 = vmatmul.mubr.bf16.gmra.mrb[0].mxu0 %v2157
        %v8153 = vpop.f32.mrb[0].mxu0
        %v8154 = vadd.f32 %v8114, %v8153
        %v8155 = vpop.f32.mrb[0].mxu0
        %v8156 = vpop.f32.mrb[0].mxu0
        %v8157 = vpop.f32.mrb[0].mxu0
        %8158 = vdwg.mxu0
        %8159 = vmatprep.subr.bf16.mxu0 0
        %8160 = vmatpush1.bf16.msra.mxu0 %v6063
        %8161 = vmatprep.subr.bf16.mxu0 0
        %8162 = vmatpush1.bf16.msra.mxu0 %v6064
        %8163 = vmatprep.subr.bf16.mxu0 0
        %8164 = vmatpush1.bf16.msra.mxu0 %v6065
        %8165 = vmatprep.subr.bf16.mxu0 0
        %8166 = vmatpush1.bf16.msra.mxu0 %v6066
        %8167 = vmatprep.subr.bf16.mxu0 0
        %8168 = vmatpush1.bf16.msra.mxu0 %v6067
        %8169 = vmatprep.subr.bf16.mxu0 0
        %8170 = vmatpush1.bf16.msra.mxu0 %v6068
        %8171 = vmatprep.subr.bf16.mxu0 0
        %8172 = vmatpush1.bf16.msra.mxu0 %v6069
        %8173 = vmatprep.subr.bf16.mxu0 0
        %8174 = vmatpush1.bf16.msra.mxu0 %v6070
        %8175 = vmatprep.subr.bf16.mxu0 0
        %8176 = vmatpush1.bf16.msra.mxu0 %v6071
        %8177 = vmatprep.subr.bf16.mxu0 0
        %8178 = vmatpush1.bf16.msra.mxu0 %v6072
        %8179 = vmatprep.subr.bf16.mxu0 0
        %8180 = vmatpush1.bf16.msra.mxu0 %v6073
        %8181 = vmatprep.subr.bf16.mxu0 0
        %8182 = vmatpush1.bf16.msra.mxu0 %v6074
        %8183 = vmatprep.subr.bf16.mxu0 0
        %8184 = vmatpush1.bf16.msra.mxu0 %v6075
        %8185 = vmatprep.subr.bf16.mxu0 0
        %8186 = vmatpush1.bf16.msra.mxu0 %v6076
        %8187 = vmatprep.subr.bf16.mxu0 0
        %8188 = vmatpush1.bf16.msra.mxu0 %v6077
        %8189 = vmatprep.subr.bf16.mxu0 0
        %8190 = vmatpush1.bf16.msra.mxu0 %v6078
        %8191 = vmatprep.mubr.bf16.mxu0 %v2156
        %8192 = vmatmul.mubr.bf16.gmra.mrb[0].mxu0 %v2142
        %v8193 = vpop.f32.mrb[0].mxu0
        %v8194 = vadd.f32 %v8154, %v8193
        %v8195 = vpop.f32.mrb[0].mxu0
        %v8196 = vpop.f32.mrb[0].mxu0
        %v8197 = vpop.f32.mrb[0].mxu0
        %8198 = vdwg.mxu0
        %8199 = vmatprep.subr.bf16.mxu0 0
        %8200 = vmatpush1.bf16.msra.mxu0 %v6079
        %8201 = vmatprep.subr.bf16.mxu0 0
        %8202 = vmatpush1.bf16.msra.mxu0 %v6080
        %8203 = vmatprep.subr.bf16.mxu0 0
        %8204 = vmatpush1.bf16.msra.mxu0 %v6081
        %8205 = vmatprep.subr.bf16.mxu0 0
        %8206 = vmatpush1.bf16.msra.mxu0 %v6082
        %8207 = vmatprep.subr.bf16.mxu0 0
        %8208 = vmatpush1.bf16.msra.mxu0 %v6083
        %8209 = vmatprep.subr.bf16.mxu0 0
        %8210 = vmatpush1.bf16.msra.mxu0 %v6084
        %8211 = vmatprep.subr.bf16.mxu0 0
        %8212 = vmatpush1.bf16.msra.mxu0 %v6085
        %8213 = vmatprep.subr.bf16.mxu0 0
        %8214 = vmatpush1.bf16.msra.mxu0 %v6086
        %8215 = vmatprep.subr.bf16.mxu0 0
        %8216 = vmatpush1.bf16.msra.mxu0 %v6087
        %8217 = vmatprep.subr.bf16.mxu0 0
        %8218 = vmatpush1.bf16.msra.mxu0 %v6088
        %8219 = vmatprep.subr.bf16.mxu0 0
        %8220 = vmatpush1.bf16.msra.mxu0 %v6089
        %8221 = vmatprep.subr.bf16.mxu0 0
        %8222 = vmatpush1.bf16.msra.mxu0 %v6090
        %8223 = vmatprep.subr.bf16.mxu0 0
        %8224 = vmatpush1.bf16.msra.mxu0 %v6091
        %8225 = vmatprep.subr.bf16.mxu0 0
        %8226 = vmatpush1.bf16.msra.mxu0 %v6092
        %8227 = vmatprep.subr.bf16.mxu0 0
        %8228 = vmatpush1.bf16.msra.mxu0 %v6093
        %8229 = vmatprep.subr.bf16.mxu0 0
        %8230 = vmatpush1.bf16.msra.mxu0 %v6094
        %8231 = vmatprep.mubr.bf16.mxu0 %v2160
        %8232 = vmatmul.mubr.bf16.gmra.mrb[0].mxu0 %v2158
        %v8233 = vpop.f32.mrb[0].mxu0
        %v8234 = vadd.f32 %v8194, %v8233
        %v8235 = vpop.f32.mrb[0].mxu0
        %v8236 = vpop.f32.mrb[0].mxu0
        %v8237 = vpop.f32.mrb[0].mxu0
        %8238 = vdwg.mxu0
        %8239 = vmatprep.subr.bf16.mxu0 0
        %8240 = vmatpush1.bf16.msra.mxu0 %v6095
        %8241 = vmatprep.subr.bf16.mxu0 0
        %8242 = vmatpush1.bf16.msra.mxu0 %v6096
        %8243 = vmatprep.subr.bf16.mxu0 0
        %8244 = vmatpush1.bf16.msra.mxu0 %v6097
        %8245 = vmatprep.subr.bf16.mxu0 0
        %8246 = vmatpush1.bf16.msra.mxu0 %v6098
        %8247 = vmatprep.subr.bf16.mxu0 0
        %8248 = vmatpush1.bf16.msra.mxu0 %v6099
        %8249 = vmatprep.subr.bf16.mxu0 0
        %8250 = vmatpush1.bf16.msra.mxu0 %v6100
        %8251 = vmatprep.subr.bf16.mxu0 0
        %8252 = vmatpush1.bf16.msra.mxu0 %v6101
        %8253 = vmatprep.subr.bf16.mxu0 0
        %8254 = vmatpush1.bf16.msra.mxu0 %v6102
        %8255 = vmatprep.subr.bf16.mxu0 0
        %8256 = vmatpush1.bf16.msra.mxu0 %v6103
        %8257 = vmatprep.subr.bf16.mxu0 0
        %8258 = vmatpush1.bf16.msra.mxu0 %v6104
        %8259 = vmatprep.subr.bf16.mxu0 0
        %8260 = vmatpush1.bf16.msra.mxu0 %v6105
        %8261 = vmatprep.subr.bf16.mxu0 0
        %8262 = vmatpush1.bf16.msra.mxu0 %v6106
        %8263 = vmatprep.subr.bf16.mxu0 0
        %8264 = vmatpush1.bf16.msra.mxu0 %v6107
        %8265 = vmatprep.subr.bf16.mxu0 0
        %8266 = vmatpush1.bf16.msra.mxu0 %v6108
        %8267 = vmatprep.subr.bf16.mxu0 0
        %8268 = vmatpush1.bf16.msra.mxu0 %v6109
        %8269 = vmatprep.subr.bf16.mxu0 0
        %8270 = vmatpush1.bf16.msra.mxu0 %v6110
        %8271 = vmatprep.mubr.bf16.mxu0 %v2198
        %8272 = vmatmul.mubr.bf16.gmra.mrb[0].mxu0 %v2184
        %v8273 = vpop.f32.mrb[0].mxu0
        %v8274 = vadd.f32 %v8234, %v8273
        %v8275 = vpop.f32.mrb[0].mxu0
        %v8276 = vpop.f32.mrb[0].mxu0
        %v8277 = vpop.f32.mrb[0].mxu0
        %8278 = vdwg.mxu0
        %8279 = vmatprep.subr.bf16.mxu0 0
        %8280 = vmatpush1.bf16.msra.mxu0 %v6111
        %8281 = vmatprep.subr.bf16.mxu0 0
        %8282 = vmatpush1.bf16.msra.mxu0 %v6112
        %8283 = vmatprep.subr.bf16.mxu0 0
        %8284 = vmatpush1.bf16.msra.mxu0 %v6113
        %8285 = vmatprep.subr.bf16.mxu0 0
        %8286 = vmatpush1.bf16.msra.mxu0 %v6114
        %8287 = vmatprep.subr.bf16.mxu0 0
        %8288 = vmatpush1.bf16.msra.mxu0 %v6115
        %8289 = vmatprep.subr.bf16.mxu0 0
        %8290 = vmatpush1.bf16.msra.mxu0 %v6116
        %8291 = vmatprep.subr.bf16.mxu0 0
        %8292 = vmatpush1.bf16.msra.mxu0 %v6117
        %8293 = vmatprep.subr.bf16.mxu0 0
        %8294 = vmatpush1.bf16.msra.mxu0 %v6118
        %8295 = vmatprep.subr.bf16.mxu0 0
        %8296 = vmatpush1.bf16.msra.mxu0 %v6119
        %8297 = vmatprep.subr.bf16.mxu0 0
        %8298 = vmatpush1.bf16.msra.mxu0 %v6120
        %8299 = vmatprep.subr.bf16.mxu0 0
        %8300 = vmatpush1.bf16.msra.mxu0 %v6121
        %8301 = vmatprep.subr.bf16.mxu0 0
        %8302 = vmatpush1.bf16.msra.mxu0 %v6122
        %8303 = vmatprep.subr.bf16.mxu0 0
        %8304 = vmatpush1.bf16.msra.mxu0 %v6123
        %8305 = vmatprep.subr.bf16.mxu0 0
        %8306 = vmatpush1.bf16.msra.mxu0 %v6124
        %8307 = vmatprep.subr.bf16.mxu0 0
        %8308 = vmatpush1.bf16.msra.mxu0 %v6125
        %8309 = vmatprep.subr.bf16.mxu0 0
        %8310 = vmatpush1.bf16.msra.mxu0 %v6126
        %8311 = vmatprep.mubr.bf16.mxu0 %v2208
        %8312 = vmatmul.mubr.bf16.gmra.mrb[0].mxu0 %v2206
        %v8313 = vpop.f32.mrb[0].mxu0
        %v8314 = vadd.f32 %v8274, %v8313
        %v8315 = vpop.f32.mrb[0].mxu0
        %v8316 = vpop.f32.mrb[0].mxu0
        %v8317 = vpop.f32.mrb[0].mxu0
        %8318 = vdwg.mxu0
        %8319 = vmatprep.subr.bf16.mxu0 0
        %8320 = vmatpush1.bf16.msra.mxu0 %v6127
        %8321 = vmatprep.subr.bf16.mxu0 0
        %8322 = vmatpush1.bf16.msra.mxu0 %v6128
        %8323 = vmatprep.subr.bf16.mxu0 0
        %8324 = vmatpush1.bf16.msra.mxu0 %v6129
        %8325 = vmatprep.subr.bf16.mxu0 0
        %8326 = vmatpush1.bf16.msra.mxu0 %v6130
        %8327 = vmatprep.subr.bf16.mxu0 0
        %8328 = vmatpush1.bf16.msra.mxu0 %v6131
        %8329 = vmatprep.subr.bf16.mxu0 0
        %8330 = vmatpush1.bf16.msra.mxu0 %v6132
        %8331 = vmatprep.subr.bf16.mxu0 0
        %8332 = vmatpush1.bf16.msra.mxu0 %v6133
        %8333 = vmatprep.subr.bf16.mxu0 0
        %8334 = vmatpush1.bf16.msra.mxu0 %v6134
        %8335 = vmatprep.subr.bf16.mxu0 0
        %8336 = vmatpush1.bf16.msra.mxu0 %v6135
        %8337 = vmatprep.subr.bf16.mxu0 0
        %8338 = vmatpush1.bf16.msra.mxu0 %v6136
        %8339 = vmatprep.subr.bf16.mxu0 0
        %8340 = vmatpush1.bf16.msra.mxu0 %v6137
        %8341 = vmatprep.subr.bf16.mxu0 0
        %8342 = vmatpush1.bf16.msra.mxu0 %v6138
        %8343 = vmatprep.subr.bf16.mxu0 0
        %8344 = vmatpush1.bf16.msra.mxu0 %v6139
        %8345 = vmatprep.subr.bf16.mxu0 0
        %8346 = vmatpush1.bf16.msra.mxu0 %v6140
        %8347 = vmatprep.subr.bf16.mxu0 0
        %8348 = vmatpush1.bf16.msra.mxu0 %v6141
        %8349 = vmatprep.subr.bf16.mxu0 0
        %8350 = vmatpush1.bf16.msra.mxu0 %v6142
        %8351 = vmatprep.mubr.bf16.mxu0 %v2205
        %8352 = vmatmul.mubr.bf16.gmra.mrb[0].mxu0 %v2191
        %v8353 = vpop.f32.mrb[0].mxu0
        %v8354 = vadd.f32 %v8314, %v8353
        %v8355 = vpop.f32.mrb[0].mxu0
        %v8356 = vpop.f32.mrb[0].mxu0
        %v8357 = vpop.f32.mrb[0].mxu0
        %8358 = vdwg.mxu0
        %8359 = vmatprep.subr.bf16.mxu0 0
        %8360 = vmatpush1.bf16.msra.mxu0 %v6143
        %8361 = vmatprep.subr.bf16.mxu0 0
        %8362 = vmatpush1.bf16.msra.mxu0 %v6144
        %8363 = vmatprep.subr.bf16.mxu0 0
        %8364 = vmatpush1.bf16.msra.mxu0 %v6145
        %8365 = vmatprep.subr.bf16.mxu0 0
        %8366 = vmatpush1.bf16.msra.mxu0 %v6146
        %8367 = vmatprep.subr.bf16.mxu0 0
        %8368 = vmatpush1.bf16.msra.mxu0 %v6147
        %8369 = vmatprep.subr.bf16.mxu0 0
        %8370 = vmatpush1.bf16.msra.mxu0 %v6148
        %8371 = vmatprep.subr.bf16.mxu0 0
        %8372 = vmatpush1.bf16.msra.mxu0 %v6149
        %8373 = vmatprep.subr.bf16.mxu0 0
        %8374 = vmatpush1.bf16.msra.mxu0 %v6150
        %8375 = vmatprep.subr.bf16.mxu0 0
        %8376 = vmatpush1.bf16.msra.mxu0 %v6151
        %8377 = vmatprep.subr.bf16.mxu0 0
        %8378 = vmatpush1.bf16.msra.mxu0 %v6152
        %8379 = vmatprep.subr.bf16.mxu0 0
        %8380 = vmatpush1.bf16.msra.mxu0 %v6153
        %8381 = vmatprep.subr.bf16.mxu0 0
        %8382 = vmatpush1.bf16.msra.mxu0 %v6154
        %8383 = vmatprep.subr.bf16.mxu0 0
        %8384 = vmatpush1.bf16.msra.mxu0 %v6155
        %8385 = vmatprep.subr.bf16.mxu0 0
        %8386 = vmatpush1.bf16.msra.mxu0 %v6156
        %8387 = vmatprep.subr.bf16.mxu0 0
        %8388 = vmatpush1.bf16.msra.mxu0 %v6157
        %8389 = vmatprep.subr.bf16.mxu0 0
        %8390 = vmatpush1.bf16.msra.mxu0 %v6158
        %8391 = vmatprep.mubr.bf16.mxu0 %v2209
        %8392 = vmatmul.mubr.bf16.gmra.mrb[0].mxu0 %v2207
        %v8393 = vpop.f32.mrb[0].mxu0
        %v8394 = vadd.f32 %v8354, %v8393
        %v8395 = vpop.f32.mrb[0].mxu0
        %v8396 = vpop.f32.mrb[0].mxu0
        %v8397 = vpop.f32.mrb[0].mxu0
        %8398 = vdwg.mxu0
        %8399 = vmatprep.subr.bf16.mxu0 0
        %8400 = vmatpush1.bf16.msra.mxu0 %v6159
        %8401 = vmatprep.subr.bf16.mxu0 0
        %8402 = vmatpush1.bf16.msra.mxu0 %v6160
        %8403 = vmatprep.subr.bf16.mxu0 0
        %8404 = vmatpush1.bf16.msra.mxu0 %v6161
        %8405 = vmatprep.subr.bf16.mxu0 0
        %8406 = vmatpush1.bf16.msra.mxu0 %v6162
        %8407 = vmatprep.subr.bf16.mxu0 0
        %8408 = vmatpush1.bf16.msra.mxu0 %v6163
        %8409 = vmatprep.subr.bf16.mxu0 0
        %8410 = vmatpush1.bf16.msra.mxu0 %v6164
        %8411 = vmatprep.subr.bf16.mxu0 0
        %8412 = vmatpush1.bf16.msra.mxu0 %v6165
        %8413 = vmatprep.subr.bf16.mxu0 0
        %8414 = vmatpush1.bf16.msra.mxu0 %v6166
        %8415 = vmatprep.subr.bf16.mxu0 0
        %8416 = vmatpush1.bf16.msra.mxu0 %v6167
        %8417 = vmatprep.subr.bf16.mxu0 0
        %8418 = vmatpush1.bf16.msra.mxu0 %v6168
        %8419 = vmatprep.subr.bf16.mxu0 0
        %8420 = vmatpush1.bf16.msra.mxu0 %v6169
        %8421 = vmatprep.subr.bf16.mxu0 0
        %8422 = vmatpush1.bf16.msra.mxu0 %v6170
        %8423 = vmatprep.subr.bf16.mxu0 0
        %8424 = vmatpush1.bf16.msra.mxu0 %v6171
        %8425 = vmatprep.subr.bf16.mxu0 0
        %8426 = vmatpush1.bf16.msra.mxu0 %v6172
        %8427 = vmatprep.subr.bf16.mxu0 0
        %8428 = vmatpush1.bf16.msra.mxu0 %v6173
        %8429 = vmatprep.subr.bf16.mxu0 0
        %8430 = vmatpush1.bf16.msra.mxu0 %v6174
        %8431 = vmatprep.mubr.bf16.mxu0 %v2247
        %8432 = vmatmul.mubr.bf16.gmra.mrb[0].mxu0 %v2233
        %v8433 = vpop.f32.mrb[0].mxu0
        %v8434 = vadd.f32 %v8394, %v8433
        %v8435 = vpop.f32.mrb[0].mxu0
        %v8436 = vpop.f32.mrb[0].mxu0
        %v8437 = vpop.f32.mrb[0].mxu0
        %8438 = vdwg.mxu0
        %8439 = vmatprep.subr.bf16.mxu0 0
        %8440 = vmatpush1.bf16.msra.mxu0 %v6175
        %8441 = vmatprep.subr.bf16.mxu0 0
        %8442 = vmatpush1.bf16.msra.mxu0 %v6176
        %8443 = vmatprep.subr.bf16.mxu0 0
        %8444 = vmatpush1.bf16.msra.mxu0 %v6177
        %8445 = vmatprep.subr.bf16.mxu0 0
        %8446 = vmatpush1.bf16.msra.mxu0 %v6178
        %8447 = vmatprep.subr.bf16.mxu0 0
        %8448 = vmatpush1.bf16.msra.mxu0 %v6179
        %8449 = vmatprep.subr.bf16.mxu0 0
        %8450 = vmatpush1.bf16.msra.mxu0 %v6180
        %8451 = vmatprep.subr.bf16.mxu0 0
        %8452 = vmatpush1.bf16.msra.mxu0 %v6181
        %8453 = vmatprep.subr.bf16.mxu0 0
        %8454 = vmatpush1.bf16.msra.mxu0 %v6182
        %8455 = vmatprep.subr.bf16.mxu0 0
        %8456 = vmatpush1.bf16.msra.mxu0 %v6183
        %8457 = vmatprep.subr.bf16.mxu0 0
        %8458 = vmatpush1.bf16.msra.mxu0 %v6184
        %8459 = vmatprep.subr.bf16.mxu0 0
        %8460 = vmatpush1.bf16.msra.mxu0 %v6185
        %8461 = vmatprep.subr.bf16.mxu0 0
        %8462 = vmatpush1.bf16.msra.mxu0 %v6186
        %8463 = vmatprep.subr.bf16.mxu0 0
        %8464 = vmatpush1.bf16.msra.mxu0 %v6187
        %8465 = vmatprep.subr.bf16.mxu0 0
        %8466 = vmatpush1.bf16.msra.mxu0 %v6188
        %8467 = vmatprep.subr.bf16.mxu0 0
        %8468 = vmatpush1.bf16.msra.mxu0 %v6189
        %8469 = vmatprep.subr.bf16.mxu0 0
        %8470 = vmatpush1.bf16.msra.mxu0 %v6190
        %8471 = vmatprep.mubr.bf16.mxu0 %v2257
        %8472 = vmatmul.mubr.bf16.gmra.mrb[0].mxu0 %v2255
        %v8473 = vpop.f32.mrb[0].mxu0
        %v8474 = vadd.f32 %v8434, %v8473
        %v8475 = vpop.f32.mrb[0].mxu0
        %v8476 = vpop.f32.mrb[0].mxu0
        %v8477 = vpop.f32.mrb[0].mxu0
        %8478 = vdwg.mxu0
        %8479 = vmatprep.subr.bf16.mxu0 0
        %8480 = vmatpush1.bf16.msra.mxu0 %v6191
        %8481 = vmatprep.subr.bf16.mxu0 0
        %8482 = vmatpush1.bf16.msra.mxu0 %v6192
        %8483 = vmatprep.subr.bf16.mxu0 0
        %8484 = vmatpush1.bf16.msra.mxu0 %v6193
        %8485 = vmatprep.subr.bf16.mxu0 0
        %8486 = vmatpush1.bf16.msra.mxu0 %v6194
        %8487 = vmatprep.subr.bf16.mxu0 0
        %8488 = vmatpush1.bf16.msra.mxu0 %v6195
        %8489 = vmatprep.subr.bf16.mxu0 0
        %8490 = vmatpush1.bf16.msra.mxu0 %v6196
        %8491 = vmatprep.subr.bf16.mxu0 0
        %8492 = vmatpush1.bf16.msra.mxu0 %v6197
        %8493 = vmatprep.subr.bf16.mxu0 0
        %8494 = vmatpush1.bf16.msra.mxu0 %v6198
        %8495 = vmatprep.subr.bf16.mxu0 0
        %8496 = vmatpush1.bf16.msra.mxu0 %v6199
        %8497 = vmatprep.subr.bf16.mxu0 0
        %8498 = vmatpush1.bf16.msra.mxu0 %v6200
        %8499 = vmatprep.subr.bf16.mxu0 0
        %8500 = vmatpush1.bf16.msra.mxu0 %v6201
        %8501 = vmatprep.subr.bf16.mxu0 0
        %8502 = vmatpush1.bf16.msra.mxu0 %v6202
        %8503 = vmatprep.subr.bf16.mxu0 0
        %8504 = vmatpush1.bf16.msra.mxu0 %v6203
        %8505 = vmatprep.subr.bf16.mxu0 0
        %8506 = vmatpush1.bf16.msra.mxu0 %v6204
        %8507 = vmatprep.subr.bf16.mxu0 0
        %8508 = vmatpush1.bf16.msra.mxu0 %v6205
        %8509 = vmatprep.subr.bf16.mxu0 0
        %8510 = vmatpush1.bf16.msra.mxu0 %v6206
        %8511 = vmatprep.mubr.bf16.mxu0 %v2254
        %8512 = vmatmul.mubr.bf16.gmra.mrb[0].mxu0 %v2240
        %v8513 = vpop.f32.mrb[0].mxu0
        %v8514 = vadd.f32 %v8474, %v8513
        %v8515 = vpop.f32.mrb[0].mxu0
        %v8516 = vpop.f32.mrb[0].mxu0
        %v8517 = vpop.f32.mrb[0].mxu0
        %8518 = vdwg.mxu0
        %8519 = vmatprep.subr.bf16.mxu0 0
        %8520 = vmatpush1.bf16.msra.mxu0 %v6207
        %8521 = vmatprep.subr.bf16.mxu0 0
        %8522 = vmatpush1.bf16.msra.mxu0 %v6208
        %8523 = vmatprep.subr.bf16.mxu0 0
        %8524 = vmatpush1.bf16.msra.mxu0 %v6209
        %8525 = vmatprep.subr.bf16.mxu0 0
        %8526 = vmatpush1.bf16.msra.mxu0 %v6210
        %8527 = vmatprep.subr.bf16.mxu0 0
        %8528 = vmatpush1.bf16.msra.mxu0 %v6211
        %8529 = vmatprep.subr.bf16.mxu0 0
        %8530 = vmatpush1.bf16.msra.mxu0 %v6212
        %8531 = vmatprep.subr.bf16.mxu0 0
        %8532 = vmatpush1.bf16.msra.mxu0 %v6213
        %8533 = vmatprep.subr.bf16.mxu0 0
        %8534 = vmatpush1.bf16.msra.mxu0 %v6214
        %8535 = vmatprep.subr.bf16.mxu0 0
        %8536 = vmatpush1.bf16.msra.mxu0 %v6215
        %8537 = vmatprep.subr.bf16.mxu0 0
        %8538 = vmatpush1.bf16.msra.mxu0 %v6216
        %8539 = vmatprep.subr.bf16.mxu0 0
        %8540 = vmatpush1.bf16.msra.mxu0 %v6217
        %8541 = vmatprep.subr.bf16.mxu0 0
        %8542 = vmatpush1.bf16.msra.mxu0 %v6218
        %8543 = vmatprep.subr.bf16.mxu0 0
        %8544 = vmatpush1.bf16.msra.mxu0 %v6219
        %8545 = vmatprep.subr.bf16.mxu0 0
        %8546 = vmatpush1.bf16.msra.mxu0 %v6220
        %8547 = vmatprep.subr.bf16.mxu0 0
        %8548 = vmatpush1.bf16.msra.mxu0 %v6221
        %8549 = vmatprep.subr.bf16.mxu0 0
        %8550 = vmatpush1.bf16.msra.mxu0 %v6222
        %8551 = vmatprep.mubr.bf16.mxu0 %v2258
        %8552 = vmatmul.mubr.bf16.gmra.mrb[0].mxu0 %v2256
        %v8553 = vpop.f32.mrb[0].mxu0
        %v8554 = vadd.f32 %v8514, %v8553
        %v8555 = vpop.f32.mrb[0].mxu0
        %v8556 = vpop.f32.mrb[0].mxu0
        %v8557 = vpop.f32.mrb[0].mxu0
        %8558 = vdwg.mxu0
        %8559 = vmatprep.subr.bf16.mxu0 0
        %8560 = vmatpush1.bf16.msra.mxu0 %v6223
        %8561 = vmatprep.subr.bf16.mxu0 0
        %8562 = vmatpush1.bf16.msra.mxu0 %v6224
        %8563 = vmatprep.subr.bf16.mxu0 0
        %8564 = vmatpush1.bf16.msra.mxu0 %v6225
        %8565 = vmatprep.subr.bf16.mxu0 0
        %8566 = vmatpush1.bf16.msra.mxu0 %v6226
        %8567 = vmatprep.subr.bf16.mxu0 0
        %8568 = vmatpush1.bf16.msra.mxu0 %v6227
        %8569 = vmatprep.subr.bf16.mxu0 0
        %8570 = vmatpush1.bf16.msra.mxu0 %v6228
        %8571 = vmatprep.subr.bf16.mxu0 0
        %8572 = vmatpush1.bf16.msra.mxu0 %v6229
        %8573 = vmatprep.subr.bf16.mxu0 0
        %8574 = vmatpush1.bf16.msra.mxu0 %v6230
        %8575 = vmatprep.subr.bf16.mxu0 0
        %8576 = vmatpush1.bf16.msra.mxu0 %v6231
        %8577 = vmatprep.subr.bf16.mxu0 0
        %8578 = vmatpush1.bf16.msra.mxu0 %v6232
        %8579 = vmatprep.subr.bf16.mxu0 0
        %8580 = vmatpush1.bf16.msra.mxu0 %v6233
        %8581 = vmatprep.subr.bf16.mxu0 0
        %8582 = vmatpush1.bf16.msra.mxu0 %v6234
        %8583 = vmatprep.subr.bf16.mxu0 0
        %8584 = vmatpush1.bf16.msra.mxu0 %v6235
        %8585 = vmatprep.subr.bf16.mxu0 0
        %8586 = vmatpush1.bf16.msra.mxu0 %v6236
        %8587 = vmatprep.subr.bf16.mxu0 0
        %8588 = vmatpush1.bf16.msra.mxu0 %v6237
        %8589 = vmatprep.subr.bf16.mxu0 0
        %8590 = vmatpush1.bf16.msra.mxu0 %v6238
        %8591 = vmatprep.mubr.bf16.mxu0 %v2296
        %8592 = vmatmul.mubr.bf16.gmra.mrb[0].mxu0 %v2282
        %v8593 = vpop.f32.mrb[0].mxu0
        %v8594 = vadd.f32 %v8554, %v8593
        %v8595 = vpop.f32.mrb[0].mxu0
        %v8596 = vpop.f32.mrb[0].mxu0
        %v8597 = vpop.f32.mrb[0].mxu0
        %8598 = vdwg.mxu0
        %8599 = vmatprep.subr.bf16.mxu0 0
        %8600 = vmatpush1.bf16.msra.mxu0 %v6239
        %8601 = vmatprep.subr.bf16.mxu0 0
        %8602 = vmatpush1.bf16.msra.mxu0 %v6240
        %8603 = vmatprep.subr.bf16.mxu0 0
        %8604 = vmatpush1.bf16.msra.mxu0 %v6241
        %8605 = vmatprep.subr.bf16.mxu0 0
        %8606 = vmatpush1.bf16.msra.mxu0 %v6242
        %8607 = vmatprep.subr.bf16.mxu0 0
        %8608 = vmatpush1.bf16.msra.mxu0 %v6243
        %8609 = vmatprep.subr.bf16.mxu0 0
        %8610 = vmatpush1.bf16.msra.mxu0 %v6244
        %8611 = vmatprep.subr.bf16.mxu0 0
        %8612 = vmatpush1.bf16.msra.mxu0 %v6245
        %8613 = vmatprep.subr.bf16.mxu0 0
        %8614 = vmatpush1.bf16.msra.mxu0 %v6246
        %8615 = vmatprep.subr.bf16.mxu0 0
        %8616 = vmatpush1.bf16.msra.mxu0 %v6247
        %8617 = vmatprep.subr.bf16.mxu0 0
        %8618 = vmatpush1.bf16.msra.mxu0 %v6248
        %8619 = vmatprep.subr.bf16.mxu0 0
        %8620 = vmatpush1.bf16.msra.mxu0 %v6249
        %8621 = vmatprep.subr.bf16.mxu0 0
        %8622 = vmatpush1.bf16.msra.mxu0 %v6250
        %8623 = vmatprep.subr.bf16.mxu0 0
        %8624 = vmatpush1.bf16.msra.mxu0 %v6251
        %8625 = vmatprep.subr.bf16.mxu0 0
        %8626 = vmatpush1.bf16.msra.mxu0 %v6252
        %8627 = vmatprep.subr.bf16.mxu0 0
        %8628 = vmatpush1.bf16.msra.mxu0 %v6253
        %8629 = vmatprep.subr.bf16.mxu0 0
        %8630 = vmatpush1.bf16.msra.mxu0 %v6254
        %8631 = vmatprep.mubr.bf16.mxu0 %v2306
        %8632 = vmatmul.mubr.bf16.gmra.mrb[0].mxu0 %v2304
        %v8633 = vpop.f32.mrb[0].mxu0
        %v8634 = vadd.f32 %v8594, %v8633
        %v8635 = vpop.f32.mrb[0].mxu0
        %v8636 = vpop.f32.mrb[0].mxu0
        %v8637 = vpop.f32.mrb[0].mxu0
        %8638 = vdwg.mxu0
        %8639 = vmatprep.subr.bf16.mxu0 0
        %8640 = vmatpush1.bf16.msra.mxu0 %v6255
        %8641 = vmatprep.subr.bf16.mxu0 0
        %8642 = vmatpush1.bf16.msra.mxu0 %v6256
        %8643 = vmatprep.subr.bf16.mxu0 0
        %8644 = vmatpush1.bf16.msra.mxu0 %v6257
        %8645 = vmatprep.subr.bf16.mxu0 0
        %8646 = vmatpush1.bf16.msra.mxu0 %v6258
        %8647 = vmatprep.subr.bf16.mxu0 0
        %8648 = vmatpush1.bf16.msra.mxu0 %v6259
        %8649 = vmatprep.subr.bf16.mxu0 0
        %8650 = vmatpush1.bf16.msra.mxu0 %v6260
        %8651 = vmatprep.subr.bf16.mxu0 0
        %8652 = vmatpush1.bf16.msra.mxu0 %v6261
        %8653 = vmatprep.subr.bf16.mxu0 0
        %8654 = vmatpush1.bf16.msra.mxu0 %v6262
        %8655 = vmatprep.subr.bf16.mxu0 0
        %8656 = vmatpush1.bf16.msra.mxu0 %v6263
        %8657 = vmatprep.subr.bf16.mxu0 0
        %8658 = vmatpush1.bf16.msra.mxu0 %v6264
        %8659 = vmatprep.subr.bf16.mxu0 0
        %8660 = vmatpush1.bf16.msra.mxu0 %v6265
        %8661 = vmatprep.subr.bf16.mxu0 0
        %8662 = vmatpush1.bf16.msra.mxu0 %v6266
        %8663 = vmatprep.subr.bf16.mxu0 0
        %8664 = vmatpush1.bf16.msra.mxu0 %v6267
        %8665 = vmatprep.subr.bf16.mxu0 0
        %8666 = vmatpush1.bf16.msra.mxu0 %v6268
        %8667 = vmatprep.subr.bf16.mxu0 0
        %8668 = vmatpush1.bf16.msra.mxu0 %v6269
        %8669 = vmatprep.subr.bf16.mxu0 0
        %8670 = vmatpush1.bf16.msra.mxu0 %v6270
        %8671 = vmatprep.mubr.bf16.mxu0 %v2303
        %8672 = vmatmul.mubr.bf16.gmra.mrb[0].mxu0 %v2289
        %v8673 = vpop.f32.mrb[0].mxu0
        %v8674 = vadd.f32 %v8634, %v8673
        %v8675 = vpop.f32.mrb[0].mxu0
        %v8676 = vpop.f32.mrb[0].mxu0
        %v8677 = vpop.f32.mrb[0].mxu0
        %8678 = vdwg.mxu0
        %8679 = vmatprep.subr.bf16.mxu0 0
        %8680 = vmatpush1.bf16.msra.mxu0 %v6271
        %8681 = vmatprep.subr.bf16.mxu0 0
        %8682 = vmatpush1.bf16.msra.mxu0 %v6272
        %8683 = vmatprep.subr.bf16.mxu0 0
        %8684 = vmatpush1.bf16.msra.mxu0 %v6273
        %8685 = vmatprep.subr.bf16.mxu0 0
        %8686 = vmatpush1.bf16.msra.mxu0 %v6274
        %8687 = vmatprep.subr.bf16.mxu0 0
        %8688 = vmatpush1.bf16.msra.mxu0 %v6275
        %8689 = vmatprep.subr.bf16.mxu0 0
        %8690 = vmatpush1.bf16.msra.mxu0 %v6276
        %8691 = vmatprep.subr.bf16.mxu0 0
        %8692 = vmatpush1.bf16.msra.mxu0 %v6277
        %8693 = vmatprep.subr.bf16.mxu0 0
        %8694 = vmatpush1.bf16.msra.mxu0 %v6278
        %8695 = vmatprep.subr.bf16.mxu0 0
        %8696 = vmatpush1.bf16.msra.mxu0 %v6279
        %8697 = vmatprep.subr.bf16.mxu0 0
        %8698 = vmatpush1.bf16.msra.mxu0 %v6280
        %8699 = vmatprep.subr.bf16.mxu0 0
        %8700 = vmatpush1.bf16.msra.mxu0 %v6281
        %8701 = vmatprep.subr.bf16.mxu0 0
        %8702 = vmatpush1.bf16.msra.mxu0 %v6282
        %8703 = vmatprep.subr.bf16.mxu0 0
        %8704 = vmatpush1.bf16.msra.mxu0 %v6283
        %8705 = vmatprep.subr.bf16.mxu0 0
        %8706 = vmatpush1.bf16.msra.mxu0 %v6284
        %8707 = vmatprep.subr.bf16.mxu0 0
        %8708 = vmatpush1.bf16.msra.mxu0 %v6285
        %8709 = vmatprep.subr.bf16.mxu0 0
        %8710 = vmatpush1.bf16.msra.mxu0 %v6286
        %8711 = vmatprep.mubr.bf16.mxu0 %v2307
        %8712 = vmatmul.mubr.bf16.gmra.mrb[0].mxu0 %v2305
        %v8713 = vpop.f32.mrb[0].mxu0
        %v8714 = vadd.f32 %v8674, %v8713
        %v8715 = vpop.f32.mrb[0].mxu0
        %v8716 = vpop.f32.mrb[0].mxu0
        %v8717 = vpop.f32.mrb[0].mxu0
        %8718 = vdwg.mxu0
        %8719 = vmatprep.subr.bf16.mxu0 0
        %8720 = vmatpush1.bf16.msra.mxu0 %v6287
        %8721 = vmatprep.subr.bf16.mxu0 0
        %8722 = vmatpush1.bf16.msra.mxu0 %v6288
        %8723 = vmatprep.subr.bf16.mxu0 0
        %8724 = vmatpush1.bf16.msra.mxu0 %v6289
        %8725 = vmatprep.subr.bf16.mxu0 0
        %8726 = vmatpush1.bf16.msra.mxu0 %v6290
        %8727 = vmatprep.subr.bf16.mxu0 0
        %8728 = vmatpush1.bf16.msra.mxu0 %v6291
        %8729 = vmatprep.subr.bf16.mxu0 0
        %8730 = vmatpush1.bf16.msra.mxu0 %v6292
        %8731 = vmatprep.subr.bf16.mxu0 0
        %8732 = vmatpush1.bf16.msra.mxu0 %v6293
        %8733 = vmatprep.subr.bf16.mxu0 0
        %8734 = vmatpush1.bf16.msra.mxu0 %v6294
        %8735 = vmatprep.subr.bf16.mxu0 0
        %8736 = vmatpush1.bf16.msra.mxu0 %v6295
        %8737 = vmatprep.subr.bf16.mxu0 0
        %8738 = vmatpush1.bf16.msra.mxu0 %v6296
        %8739 = vmatprep.subr.bf16.mxu0 0
        %8740 = vmatpush1.bf16.msra.mxu0 %v6297
        %8741 = vmatprep.subr.bf16.mxu0 0
        %8742 = vmatpush1.bf16.msra.mxu0 %v6298
        %8743 = vmatprep.subr.bf16.mxu0 0
        %8744 = vmatpush1.bf16.msra.mxu0 %v6299
        %8745 = vmatprep.subr.bf16.mxu0 0
        %8746 = vmatpush1.bf16.msra.mxu0 %v6300
        %8747 = vmatprep.subr.bf16.mxu0 0
        %8748 = vmatpush1.bf16.msra.mxu0 %v6301
        %8749 = vmatprep.subr.bf16.mxu0 0
        %8750 = vmatpush1.bf16.msra.mxu0 %v6302
        %8751 = vmatprep.mubr.bf16.mxu0 %v2345
        %8752 = vmatmul.mubr.bf16.gmra.mrb[0].mxu0 %v2331
        %v8753 = vpop.f32.mrb[0].mxu0
        %v8754 = vadd.f32 %v8714, %v8753
        %v8755 = vpop.f32.mrb[0].mxu0
        %v8756 = vpop.f32.mrb[0].mxu0
        %v8757 = vpop.f32.mrb[0].mxu0
        %8758 = vdwg.mxu0
        %8759 = vmatprep.subr.bf16.mxu0 0
        %8760 = vmatpush1.bf16.msra.mxu0 %v6303
        %8761 = vmatprep.subr.bf16.mxu0 0
        %8762 = vmatpush1.bf16.msra.mxu0 %v6304
        %8763 = vmatprep.subr.bf16.mxu0 0
        %8764 = vmatpush1.bf16.msra.mxu0 %v6305
        %8765 = vmatprep.subr.bf16.mxu0 0
        %8766 = vmatpush1.bf16.msra.mxu0 %v6306
        %8767 = vmatprep.subr.bf16.mxu0 0
        %8768 = vmatpush1.bf16.msra.mxu0 %v6307
        %8769 = vmatprep.subr.bf16.mxu0 0
        %8770 = vmatpush1.bf16.msra.mxu0 %v6308
        %8771 = vmatprep.subr.bf16.mxu0 0
        %8772 = vmatpush1.bf16.msra.mxu0 %v6309
        %8773 = vmatprep.subr.bf16.mxu0 0
        %8774 = vmatpush1.bf16.msra.mxu0 %v6310
        %8775 = vmatprep.subr.bf16.mxu0 0
        %8776 = vmatpush1.bf16.msra.mxu0 %v6311
        %8777 = vmatprep.subr.bf16.mxu0 0
        %8778 = vmatpush1.bf16.msra.mxu0 %v6312
        %8779 = vmatprep.subr.bf16.mxu0 0
        %8780 = vmatpush1.bf16.msra.mxu0 %v6313
        %8781 = vmatprep.subr.bf16.mxu0 0
        %8782 = vmatpush1.bf16.msra.mxu0 %v6314
        %8783 = vmatprep.subr.bf16.mxu0 0
        %8784 = vmatpush1.bf16.msra.mxu0 %v6315
        %8785 = vmatprep.subr.bf16.mxu0 0
        %8786 = vmatpush1.bf16.msra.mxu0 %v6316
        %8787 = vmatprep.subr.bf16.mxu0 0
        %8788 = vmatpush1.bf16.msra.mxu0 %v6317
        %8789 = vmatprep.subr.bf16.mxu0 0
        %8790 = vmatpush1.bf16.msra.mxu0 %v6318
        %8791 = vmatprep.mubr.bf16.mxu0 %v2355
        %8792 = vmatmul.mubr.bf16.gmra.mrb[0].mxu0 %v2353
        %v8793 = vpop.f32.mrb[0].mxu0
        %v8794 = vadd.f32 %v8754, %v8793
        %v8795 = vpop.f32.mrb[0].mxu0
        %v8796 = vpop.f32.mrb[0].mxu0
        %v8797 = vpop.f32.mrb[0].mxu0
        %8798 = vdwg.mxu0
        %8799 = vmatprep.subr.bf16.mxu0 0
        %8800 = vmatpush1.bf16.msra.mxu0 %v6319
        %8801 = vmatprep.subr.bf16.mxu0 0
        %8802 = vmatpush1.bf16.msra.mxu0 %v6320
        %8803 = vmatprep.subr.bf16.mxu0 0
        %8804 = vmatpush1.bf16.msra.mxu0 %v6321
        %8805 = vmatprep.subr.bf16.mxu0 0
        %8806 = vmatpush1.bf16.msra.mxu0 %v6322
        %8807 = vmatprep.subr.bf16.mxu0 0
        %8808 = vmatpush1.bf16.msra.mxu0 %v6323
        %8809 = vmatprep.subr.bf16.mxu0 0
        %8810 = vmatpush1.bf16.msra.mxu0 %v6324
        %8811 = vmatprep.subr.bf16.mxu0 0
        %8812 = vmatpush1.bf16.msra.mxu0 %v6325
        %8813 = vmatprep.subr.bf16.mxu0 0
        %8814 = vmatpush1.bf16.msra.mxu0 %v6326
        %8815 = vmatprep.subr.bf16.mxu0 0
        %8816 = vmatpush1.bf16.msra.mxu0 %v6327
        %8817 = vmatprep.subr.bf16.mxu0 0
        %8818 = vmatpush1.bf16.msra.mxu0 %v6328
        %8819 = vmatprep.subr.bf16.mxu0 0
        %8820 = vmatpush1.bf16.msra.mxu0 %v6329
        %8821 = vmatprep.subr.bf16.mxu0 0
        %8822 = vmatpush1.bf16.msra.mxu0 %v6330
        %8823 = vmatprep.subr.bf16.mxu0 0
        %8824 = vmatpush1.bf16.msra.mxu0 %v6331
        %8825 = vmatprep.subr.bf16.mxu0 0
        %8826 = vmatpush1.bf16.msra.mxu0 %v6332
        %8827 = vmatprep.subr.bf16.mxu0 0
        %8828 = vmatpush1.bf16.msra.mxu0 %v6333
        %8829 = vmatprep.subr.bf16.mxu0 0
        %8830 = vmatpush1.bf16.msra.mxu0 %v6334
        %8831 = vmatprep.mubr.bf16.mxu0 %v2352
        %8832 = vmatmul.mubr.bf16.gmra.mrb[0].mxu0 %v2338
        %v8833 = vpop.f32.mrb[0].mxu0
        %v8834 = vadd.f32 %v8794, %v8833
        %v8835 = vpop.f32.mrb[0].mxu0
        %v8836 = vpop.f32.mrb[0].mxu0
        %v8837 = vpop.f32.mrb[0].mxu0
        %8838 = vdwg.mxu0
        %8839 = vmatprep.subr.bf16.mxu0 0
        %8840 = vmatpush1.bf16.msra.mxu0 %v6335
        %8841 = vmatprep.subr.bf16.mxu0 0
        %8842 = vmatpush1.bf16.msra.mxu0 %v6336
        %8843 = vmatprep.subr.bf16.mxu0 0
        %8844 = vmatpush1.bf16.msra.mxu0 %v6337
        %8845 = vmatprep.subr.bf16.mxu0 0
        %8846 = vmatpush1.bf16.msra.mxu0 %v6338
        %8847 = vmatprep.subr.bf16.mxu0 0
        %8848 = vmatpush1.bf16.msra.mxu0 %v6339
        %8849 = vmatprep.subr.bf16.mxu0 0
        %8850 = vmatpush1.bf16.msra.mxu0 %v6340
        %8851 = vmatprep.subr.bf16.mxu0 0
        %8852 = vmatpush1.bf16.msra.mxu0 %v6341
        %8853 = vmatprep.subr.bf16.mxu0 0
        %8854 = vmatpush1.bf16.msra.mxu0 %v6342
        %8855 = vmatprep.subr.bf16.mxu0 0
        %8856 = vmatpush1.bf16.msra.mxu0 %v6343
        %8857 = vmatprep.subr.bf16.mxu0 0
        %8858 = vmatpush1.bf16.msra.mxu0 %v6344
        %8859 = vmatprep.subr.bf16.mxu0 0
        %8860 = vmatpush1.bf16.msra.mxu0 %v6345
        %8861 = vmatprep.subr.bf16.mxu0 0
        %8862 = vmatpush1.bf16.msra.mxu0 %v6346
        %8863 = vmatprep.subr.bf16.mxu0 0
        %8864 = vmatpush1.bf16.msra.mxu0 %v6347
        %8865 = vmatprep.subr.bf16.mxu0 0
        %8866 = vmatpush1.bf16.msra.mxu0 %v6348
        %8867 = vmatprep.subr.bf16.mxu0 0
        %8868 = vmatpush1.bf16.msra.mxu0 %v6349
        %8869 = vmatprep.subr.bf16.mxu0 0
        %8870 = vmatpush1.bf16.msra.mxu0 %v6350
        %8871 = vmatprep.mubr.bf16.mxu0 %v2356
        %8872 = vmatmul.mubr.bf16.gmra.mrb[0].mxu0 %v2354
        %v8873 = vpop.f32.mrb[0].mxu0
        %v8874 = vadd.f32 %v8834, %v8873
        %v8875 = vpop.f32.mrb[0].mxu0
        %v8876 = vpop.f32.mrb[0].mxu0
        %v8877 = vpop.f32.mrb[0].mxu0
        %8878 = vdwg.mxu0
        %8879 = vmatprep.subr.bf16.mxu0 0
        %8880 = vmatpush1.bf16.msra.mxu0 %v6351
        %8881 = vmatprep.subr.bf16.mxu0 0
        %8882 = vmatpush1.bf16.msra.mxu0 %v6352
        %8883 = vmatprep.subr.bf16.mxu0 0
        %8884 = vmatpush1.bf16.msra.mxu0 %v6353
        %8885 = vmatprep.subr.bf16.mxu0 0
        %8886 = vmatpush1.bf16.msra.mxu0 %v6354
        %8887 = vmatprep.subr.bf16.mxu0 0
        %8888 = vmatpush1.bf16.msra.mxu0 %v6355
        %8889 = vmatprep.subr.bf16.mxu0 0
        %8890 = vmatpush1.bf16.msra.mxu0 %v6356
        %8891 = vmatprep.subr.bf16.mxu0 0
        %8892 = vmatpush1.bf16.msra.mxu0 %v6357
        %8893 = vmatprep.subr.bf16.mxu0 0
        %8894 = vmatpush1.bf16.msra.mxu0 %v6358
        %8895 = vmatprep.subr.bf16.mxu0 0
        %8896 = vmatpush1.bf16.msra.mxu0 %v6359
        %8897 = vmatprep.subr.bf16.mxu0 0
        %8898 = vmatpush1.bf16.msra.mxu0 %v6360
        %8899 = vmatprep.subr.bf16.mxu0 0
        %8900 = vmatpush1.bf16.msra.mxu0 %v6361
        %8901 = vmatprep.subr.bf16.mxu0 0
        %8902 = vmatpush1.bf16.msra.mxu0 %v6362
        %8903 = vmatprep.subr.bf16.mxu0 0
        %8904 = vmatpush1.bf16.msra.mxu0 %v6363
        %8905 = vmatprep.subr.bf16.mxu0 0
        %8906 = vmatpush1.bf16.msra.mxu0 %v6364
        %8907 = vmatprep.subr.bf16.mxu0 0
        %8908 = vmatpush1.bf16.msra.mxu0 %v6365
        %8909 = vmatprep.subr.bf16.mxu0 0
        %8910 = vmatpush1.bf16.msra.mxu0 %v6366
        %8911 = vmatprep.mubr.bf16.mxu0 %v2394
        %8912 = vmatmul.mubr.bf16.gmra.mrb[0].mxu0 %v2380
        %v8913 = vpop.f32.mrb[0].mxu0
        %v8914 = vadd.f32 %v8874, %v8913
        %v8915 = vpop.f32.mrb[0].mxu0
        %v8916 = vpop.f32.mrb[0].mxu0
        %v8917 = vpop.f32.mrb[0].mxu0
        %8918 = vdwg.mxu0
        %8919 = vmatprep.subr.bf16.mxu0 0
        %8920 = vmatpush1.bf16.msra.mxu0 %v6367
        %8921 = vmatprep.subr.bf16.mxu0 0
        %8922 = vmatpush1.bf16.msra.mxu0 %v6368
        %8923 = vmatprep.subr.bf16.mxu0 0
        %8924 = vmatpush1.bf16.msra.mxu0 %v6369
        %8925 = vmatprep.subr.bf16.mxu0 0
        %8926 = vmatpush1.bf16.msra.mxu0 %v6370
        %8927 = vmatprep.subr.bf16.mxu0 0
        %8928 = vmatpush1.bf16.msra.mxu0 %v6371
        %8929 = vmatprep.subr.bf16.mxu0 0
        %8930 = vmatpush1.bf16.msra.mxu0 %v6372
        %8931 = vmatprep.subr.bf16.mxu0 0
        %8932 = vmatpush1.bf16.msra.mxu0 %v6373
        %8933 = vmatprep.subr.bf16.mxu0 0
        %8934 = vmatpush1.bf16.msra.mxu0 %v6374
        %8935 = vmatprep.subr.bf16.mxu0 0
        %8936 = vmatpush1.bf16.msra.mxu0 %v6375
        %8937 = vmatprep.subr.bf16.mxu0 0
        %8938 = vmatpush1.bf16.msra.mxu0 %v6376
        %8939 = vmatprep.subr.bf16.mxu0 0
        %8940 = vmatpush1.bf16.msra.mxu0 %v6377
        %8941 = vmatprep.subr.bf16.mxu0 0
        %8942 = vmatpush1.bf16.msra.mxu0 %v6378
        %8943 = vmatprep.subr.bf16.mxu0 0
        %8944 = vmatpush1.bf16.msra.mxu0 %v6379
        %8945 = vmatprep.subr.bf16.mxu0 0
        %8946 = vmatpush1.bf16.msra.mxu0 %v6380
        %8947 = vmatprep.subr.bf16.mxu0 0
        %8948 = vmatpush1.bf16.msra.mxu0 %v6381
        %8949 = vmatprep.subr.bf16.mxu0 0
        %8950 = vmatpush1.bf16.msra.mxu0 %v6382
        %8951 = vmatprep.mubr.bf16.mxu0 %v2404
        %8952 = vmatmul.mubr.bf16.gmra.mrb[0].mxu0 %v2402
        %v8953 = vpop.f32.mrb[0].mxu0
        %v8954 = vadd.f32 %v8914, %v8953
        %v8955 = vpop.f32.mrb[0].mxu0
        %v8956 = vpop.f32.mrb[0].mxu0
        %v8957 = vpop.f32.mrb[0].mxu0
        %8958 = vdwg.mxu0
        %8959 = vmatprep.subr.bf16.mxu0 0
        %8960 = vmatpush1.bf16.msra.mxu0 %v6383
        %8961 = vmatprep.subr.bf16.mxu0 0
        %8962 = vmatpush1.bf16.msra.mxu0 %v6384
        %8963 = vmatprep.subr.bf16.mxu0 0
        %8964 = vmatpush1.bf16.msra.mxu0 %v6385
        %8965 = vmatprep.subr.bf16.mxu0 0
        %8966 = vmatpush1.bf16.msra.mxu0 %v6386
        %8967 = vmatprep.subr.bf16.mxu0 0
        %8968 = vmatpush1.bf16.msra.mxu0 %v6387
        %8969 = vmatprep.subr.bf16.mxu0 0
        %8970 = vmatpush1.bf16.msra.mxu0 %v6388
        %8971 = vmatprep.subr.bf16.mxu0 0
        %8972 = vmatpush1.bf16.msra.mxu0 %v6389
        %8973 = vmatprep.subr.bf16.mxu0 0
        %8974 = vmatpush1.bf16.msra.mxu0 %v6390
        %8975 = vmatprep.subr.bf16.mxu0 0
        %8976 = vmatpush1.bf16.msra.mxu0 %v6391
        %8977 = vmatprep.subr.bf16.mxu0 0
        %8978 = vmatpush1.bf16.msra.mxu0 %v6392
        %8979 = vmatprep.subr.bf16.mxu0 0
        %8980 = vmatpush1.bf16.msra.mxu0 %v6393
        %8981 = vmatprep.subr.bf16.mxu0 0
        %8982 = vmatpush1.bf16.msra.mxu0 %v6394
        %8983 = vmatprep.subr.bf16.mxu0 0
        %8984 = vmatpush1.bf16.msra.mxu0 %v6395
        %8985 = vmatprep.subr.bf16.mxu0 0
        %8986 = vmatpush1.bf16.msra.mxu0 %v6396
        %8987 = vmatprep.subr.bf16.mxu0 0
        %8988 = vmatpush1.bf16.msra.mxu0 %v6397
        %8989 = vmatprep.subr.bf16.mxu0 0
        %8990 = vmatpush1.bf16.msra.mxu0 %v6398
        %8991 = vmatprep.mubr.bf16.mxu0 %v2401
        %8992 = vmatmul.mubr.bf16.gmra.mrb[0].mxu0 %v2387
        %v8993 = vpop.f32.mrb[0].mxu0
        %v8994 = vadd.f32 %v8954, %v8993
        %v8995 = vpop.f32.mrb[0].mxu0
        %v8996 = vpop.f32.mrb[0].mxu0
        %v8997 = vpop.f32.mrb[0].mxu0
        %8998 = vdwg.mxu0
        %8999 = vmatprep.subr.bf16.mxu0 0
        %9000 = vmatpush1.bf16.msra.mxu0 %v6399
        %9001 = vmatprep.subr.bf16.mxu0 0
        %9002 = vmatpush1.bf16.msra.mxu0 %v6400
        %9003 = vmatprep.subr.bf16.mxu0 0
        %9004 = vmatpush1.bf16.msra.mxu0 %v6401
        %9005 = vmatprep.subr.bf16.mxu0 0
        %9006 = vmatpush1.bf16.msra.mxu0 %v6402
        %9007 = vmatprep.subr.bf16.mxu0 0
        %9008 = vmatpush1.bf16.msra.mxu0 %v6403
        %9009 = vmatprep.subr.bf16.mxu0 0
        %9010 = vmatpush1.bf16.msra.mxu0 %v6404
        %9011 = vmatprep.subr.bf16.mxu0 0
        %9012 = vmatpush1.bf16.msra.mxu0 %v6405
        %9013 = vmatprep.subr.bf16.mxu0 0
        %9014 = vmatpush1.bf16.msra.mxu0 %v6406
        %9015 = vmatprep.subr.bf16.mxu0 0
        %9016 = vmatpush1.bf16.msra.mxu0 %v6407
        %9017 = vmatprep.subr.bf16.mxu0 0
        %9018 = vmatpush1.bf16.msra.mxu0 %v6408
        %9019 = vmatprep.subr.bf16.mxu0 0
        %9020 = vmatpush1.bf16.msra.mxu0 %v6409
        %9021 = vmatprep.subr.bf16.mxu0 0
        %9022 = vmatpush1.bf16.msra.mxu0 %v6410
        %9023 = vmatprep.subr.bf16.mxu0 0
        %9024 = vmatpush1.bf16.msra.mxu0 %v6411
        %9025 = vmatprep.subr.bf16.mxu0 0
        %9026 = vmatpush1.bf16.msra.mxu0 %v6412
        %9027 = vmatprep.subr.bf16.mxu0 0
        %9028 = vmatpush1.bf16.msra.mxu0 %v6413
        %9029 = vmatprep.subr.bf16.mxu0 0
        %9030 = vmatpush1.bf16.msra.mxu0 %v6414
        %9031 = vmatprep.mubr.bf16.mxu0 %v2405
        %9032 = vmatmul.mubr.bf16.gmra.mrb[0].mxu0 %v2403
        %v9033 = vpop.f32.mrb[0].mxu0
        %v9034 = vadd.f32 %v8994, %v9033
        %v9035 = vpop.f32.mrb[0].mxu0
        %v9036 = vpop.f32.mrb[0].mxu0
        %v9037 = vpop.f32.mrb[0].mxu0
        %9038 = vdwg.mxu0
        %9039 = vmatprep.subr.bf16.mxu0 0
        %9040 = vmatpush1.bf16.msra.mxu0 %v6415
        %9041 = vmatprep.subr.bf16.mxu0 0
        %9042 = vmatpush1.bf16.msra.mxu0 %v6416
        %9043 = vmatprep.subr.bf16.mxu0 0
        %9044 = vmatpush1.bf16.msra.mxu0 %v6417
        %9045 = vmatprep.subr.bf16.mxu0 0
        %9046 = vmatpush1.bf16.msra.mxu0 %v6418
        %9047 = vmatprep.subr.bf16.mxu0 0
        %9048 = vmatpush1.bf16.msra.mxu0 %v6419
        %9049 = vmatprep.subr.bf16.mxu0 0
        %9050 = vmatpush1.bf16.msra.mxu0 %v6420
        %9051 = vmatprep.subr.bf16.mxu0 0
        %9052 = vmatpush1.bf16.msra.mxu0 %v6421
        %9053 = vmatprep.subr.bf16.mxu0 0
        %9054 = vmatpush1.bf16.msra.mxu0 %v6422
        %9055 = vmatprep.subr.bf16.mxu0 0
        %9056 = vmatpush1.bf16.msra.mxu0 %v6423
        %9057 = vmatprep.subr.bf16.mxu0 0
        %9058 = vmatpush1.bf16.msra.mxu0 %v6424
        %9059 = vmatprep.subr.bf16.mxu0 0
        %9060 = vmatpush1.bf16.msra.mxu0 %v6425
        %9061 = vmatprep.subr.bf16.mxu0 0
        %9062 = vmatpush1.bf16.msra.mxu0 %v6426
        %9063 = vmatprep.subr.bf16.mxu0 0
        %9064 = vmatpush1.bf16.msra.mxu0 %v6427
        %9065 = vmatprep.subr.bf16.mxu0 0
        %9066 = vmatpush1.bf16.msra.mxu0 %v6428
        %9067 = vmatprep.subr.bf16.mxu0 0
        %9068 = vmatpush1.bf16.msra.mxu0 %v6429
        %9069 = vmatprep.subr.bf16.mxu0 0
        %9070 = vmatpush1.bf16.msra.mxu0 %v6430
        %9071 = vmatprep.mubr.bf16.mxu0 %v2443
        %9072 = vmatmul.mubr.bf16.gmra.mrb[0].mxu0 %v2429
        %v9073 = vpop.f32.mrb[0].mxu0
        %v9074 = vadd.f32 %v9034, %v9073
        %v9075 = vpop.f32.mrb[0].mxu0
        %v9076 = vpop.f32.mrb[0].mxu0
        %v9077 = vpop.f32.mrb[0].mxu0
        %9078 = vdwg.mxu0
        %9079 = vmatprep.subr.bf16.mxu0 0
        %9080 = vmatpush1.bf16.msra.mxu0 %v6431
        %9081 = vmatprep.subr.bf16.mxu0 0
        %9082 = vmatpush1.bf16.msra.mxu0 %v6432
        %9083 = vmatprep.subr.bf16.mxu0 0
        %9084 = vmatpush1.bf16.msra.mxu0 %v6433
        %9085 = vmatprep.subr.bf16.mxu0 0
        %9086 = vmatpush1.bf16.msra.mxu0 %v6434
        %9087 = vmatprep.subr.bf16.mxu0 0
        %9088 = vmatpush1.bf16.msra.mxu0 %v6435
        %9089 = vmatprep.subr.bf16.mxu0 0
        %9090 = vmatpush1.bf16.msra.mxu0 %v6436
        %9091 = vmatprep.subr.bf16.mxu0 0
        %9092 = vmatpush1.bf16.msra.mxu0 %v6437
        %9093 = vmatprep.subr.bf16.mxu0 0
        %9094 = vmatpush1.bf16.msra.mxu0 %v6438
        %9095 = vmatprep.subr.bf16.mxu0 0
        %9096 = vmatpush1.bf16.msra.mxu0 %v6439
        %9097 = vmatprep.subr.bf16.mxu0 0
        %9098 = vmatpush1.bf16.msra.mxu0 %v6440
        %9099 = vmatprep.subr.bf16.mxu0 0
        %9100 = vmatpush1.bf16.msra.mxu0 %v6441
        %9101 = vmatprep.subr.bf16.mxu0 0
        %9102 = vmatpush1.bf16.msra.mxu0 %v6442
        %9103 = vmatprep.subr.bf16.mxu0 0
        %9104 = vmatpush1.bf16.msra.mxu0 %v6443
        %9105 = vmatprep.subr.bf16.mxu0 0
        %9106 = vmatpush1.bf16.msra.mxu0 %v6444
        %9107 = vmatprep.subr.bf16.mxu0 0
        %9108 = vmatpush1.bf16.msra.mxu0 %v6445
        %9109 = vmatprep.subr.bf16.mxu0 0
        %9110 = vmatpush1.bf16.msra.mxu0 %v6446
        %9111 = vmatprep.mubr.bf16.mxu0 %v2453
        %9112 = vmatmul.mubr.bf16.gmra.mrb[0].mxu0 %v2451
        %v9113 = vpop.f32.mrb[0].mxu0
        %v9114 = vadd.f32 %v9074, %v9113
        %v9115 = vpop.f32.mrb[0].mxu0
        %v9116 = vpop.f32.mrb[0].mxu0
        %v9117 = vpop.f32.mrb[0].mxu0
        %9118 = vdwg.mxu0
        %9119 = vmatprep.subr.bf16.mxu0 0
        %9120 = vmatpush1.bf16.msra.mxu0 %v6447
        %9121 = vmatprep.subr.bf16.mxu0 0
        %9122 = vmatpush1.bf16.msra.mxu0 %v6448
        %9123 = vmatprep.subr.bf16.mxu0 0
        %9124 = vmatpush1.bf16.msra.mxu0 %v6449
        %9125 = vmatprep.subr.bf16.mxu0 0
        %9126 = vmatpush1.bf16.msra.mxu0 %v6450
        %9127 = vmatprep.subr.bf16.mxu0 0
        %9128 = vmatpush1.bf16.msra.mxu0 %v6451
        %9129 = vmatprep.subr.bf16.mxu0 0
        %9130 = vmatpush1.bf16.msra.mxu0 %v6452
        %9131 = vmatprep.subr.bf16.mxu0 0
        %9132 = vmatpush1.bf16.msra.mxu0 %v6453
        %9133 = vmatprep.subr.bf16.mxu0 0
        %9134 = vmatpush1.bf16.msra.mxu0 %v6454
        %9135 = vmatprep.subr.bf16.mxu0 0
        %9136 = vmatpush1.bf16.msra.mxu0 %v6455
        %9137 = vmatprep.subr.bf16.mxu0 0
        %9138 = vmatpush1.bf16.msra.mxu0 %v6456
        %9139 = vmatprep.subr.bf16.mxu0 0
        %9140 = vmatpush1.bf16.msra.mxu0 %v6457
        %9141 = vmatprep.subr.bf16.mxu0 0
        %9142 = vmatpush1.bf16.msra.mxu0 %v6458
        %9143 = vmatprep.subr.bf16.mxu0 0
        %9144 = vmatpush1.bf16.msra.mxu0 %v6459
        %9145 = vmatprep.subr.bf16.mxu0 0
        %9146 = vmatpush1.bf16.msra.mxu0 %v6460
        %9147 = vmatprep.subr.bf16.mxu0 0
        %9148 = vmatpush1.bf16.msra.mxu0 %v6461
        %9149 = vmatprep.subr.bf16.mxu0 0
        %9150 = vmatpush1.bf16.msra.mxu0 %v6462
        %9151 = vmatprep.mubr.bf16.mxu0 %v2450
        %9152 = vmatmul.mubr.bf16.gmra.mrb[0].mxu0 %v2436
        %v9153 = vpop.f32.mrb[0].mxu0
        %v9154 = vadd.f32 %v9114, %v9153
        %v9155 = vpop.f32.mrb[0].mxu0
        %v9156 = vpop.f32.mrb[0].mxu0
        %v9157 = vpop.f32.mrb[0].mxu0
        %9158 = vdwg.mxu0
        %9159 = vmatprep.subr.bf16.mxu0 0
        %9160 = vmatpush1.bf16.msra.mxu0 %v6463
        %9161 = vmatprep.subr.bf16.mxu0 0
        %9162 = vmatpush1.bf16.msra.mxu0 %v6464
        %9163 = vmatprep.subr.bf16.mxu0 0
        %9164 = vmatpush1.bf16.msra.mxu0 %v6465
        %9165 = vmatprep.subr.bf16.mxu0 0
        %9166 = vmatpush1.bf16.msra.mxu0 %v6466
        %9167 = vmatprep.subr.bf16.mxu0 0
        %9168 = vmatpush1.bf16.msra.mxu0 %v6467
        %9169 = vmatprep.subr.bf16.mxu0 0
        %9170 = vmatpush1.bf16.msra.mxu0 %v6468
        %9171 = vmatprep.subr.bf16.mxu0 0
        %9172 = vmatpush1.bf16.msra.mxu0 %v6469
        %9173 = vmatprep.subr.bf16.mxu0 0
        %9174 = vmatpush1.bf16.msra.mxu0 %v6470
        %9175 = vmatprep.subr.bf16.mxu0 0
        %9176 = vmatpush1.bf16.msra.mxu0 %v6471
        %9177 = vmatprep.subr.bf16.mxu0 0
        %9178 = vmatpush1.bf16.msra.mxu0 %v6472
        %9179 = vmatprep.subr.bf16.mxu0 0
        %9180 = vmatpush1.bf16.msra.mxu0 %v6473
        %9181 = vmatprep.subr.bf16.mxu0 0
        %9182 = vmatpush1.bf16.msra.mxu0 %v6474
        %9183 = vmatprep.subr.bf16.mxu0 0
        %9184 = vmatpush1.bf16.msra.mxu0 %v6475
        %9185 = vmatprep.subr.bf16.mxu0 0
        %9186 = vmatpush1.bf16.msra.mxu0 %v6476
        %9187 = vmatprep.subr.bf16.mxu0 0
        %9188 = vmatpush1.bf16.msra.mxu0 %v6477
        %9189 = vmatprep.subr.bf16.mxu0 0
        %9190 = vmatpush1.bf16.msra.mxu0 %v6478
        %9191 = vmatprep.mubr.bf16.mxu0 %v2454
        %9192 = vmatmul.mubr.bf16.gmra.mrb[0].mxu0 %v2452
        %v9193 = vpop.f32.mrb[0].mxu0
        %v9194 = vadd.f32 %v9154, %v9193
        %v9195 = vpop.f32.mrb[0].mxu0
        %v9196 = vpop.f32.mrb[0].mxu0
        %v9197 = vpop.f32.mrb[0].mxu0
        %9198 = vdwg.mxu0
        %9199 = vmatprep.subr.bf16.mxu0 0
        %9200 = vmatpush1.bf16.msra.mxu0 %v6479
        %9201 = vmatprep.subr.bf16.mxu0 0
        %9202 = vmatpush1.bf16.msra.mxu0 %v6480
        %9203 = vmatprep.subr.bf16.mxu0 0
        %9204 = vmatpush1.bf16.msra.mxu0 %v6481
        %9205 = vmatprep.subr.bf16.mxu0 0
        %9206 = vmatpush1.bf16.msra.mxu0 %v6482
        %9207 = vmatprep.subr.bf16.mxu0 0
        %9208 = vmatpush1.bf16.msra.mxu0 %v6483
        %9209 = vmatprep.subr.bf16.mxu0 0
        %9210 = vmatpush1.bf16.msra.mxu0 %v6484
        %9211 = vmatprep.subr.bf16.mxu0 0
        %9212 = vmatpush1.bf16.msra.mxu0 %v6485
        %9213 = vmatprep.subr.bf16.mxu0 0
        %9214 = vmatpush1.bf16.msra.mxu0 %v6486
        %9215 = vmatprep.subr.bf16.mxu0 0
        %9216 = vmatpush1.bf16.msra.mxu0 %v6487
        %9217 = vmatprep.subr.bf16.mxu0 0
        %9218 = vmatpush1.bf16.msra.mxu0 %v6488
        %9219 = vmatprep.subr.bf16.mxu0 0
        %9220 = vmatpush1.bf16.msra.mxu0 %v6489
        %9221 = vmatprep.subr.bf16.mxu0 0
        %9222 = vmatpush1.bf16.msra.mxu0 %v6490
        %9223 = vmatprep.subr.bf16.mxu0 0
        %9224 = vmatpush1.bf16.msra.mxu0 %v6491
        %9225 = vmatprep.subr.bf16.mxu0 0
        %9226 = vmatpush1.bf16.msra.mxu0 %v6492
        %9227 = vmatprep.subr.bf16.mxu0 0
        %9228 = vmatpush1.bf16.msra.mxu0 %v6493
        %9229 = vmatprep.subr.bf16.mxu0 0
        %9230 = vmatpush1.bf16.msra.mxu0 %v6494
        %9231 = vmatprep.mubr.bf16.mxu0 %v2476
        %9232 = vmatmul.mubr.bf16.gmra.mrb[0].mxu0 %v2469
        %v9233 = vpop.f32.mrb[0].mxu0
        %v9234 = vadd.f32 %v9194, %v9233
        %v9235 = vpop.f32.mrb[0].mxu0
        %v9236 = vpop.f32.mrb[0].mxu0
        %v9237 = vpop.f32.mrb[0].mxu0
        %9238 = vdwg.mxu0
        %v9239 = vadd.f32 %v1853, %v9234
        %9240 = vst [vmem:[%s258] sm:$0x3] %v9239
        %p9241 = scmp.eq.s32.totalorder %s25, 3
        // Predicated region
        $region45: #{cnn_forward.6} parent=31 // pred_check
          %p9242 = pneg %p9241
        $region46: #{cnn_forward.6} parent=31 // pred_check_branch
          %9244 = sbr.rel (%p9242) target = $region48
        $region47: #{cnn_forward.6} parent=31 // pred_region
          %v9245 = vld [vmem:[%s258] sm:$0x3]
          %v9246 = vmax.f32 %v9245, 0.0
          %9247 = vst [vmem:[%s258] sm:$0x3] %v9246
        $region48: #{cnn_forward.6} parent=31 // pred_fallthru
          _
        %p9248 = scmp.lt.s32.totalorder %s24, 1
        %s9249 = scalar_select %p9248, %s24, 1
        %s9250 = smul.addr %s9249, 2
        %s9251 = scalar_lea.vmem %s3, %s9250
        // Predicated region
        $region49: #{cnn_forward.6} parent=31 // pred_check
          %p9252 = pneg %p130
        $region50: #{cnn_forward.6} parent=31 // pred_check_branch
          %9254 = sbr.rel (%p9252) target = $region52
        $region51: #{cnn_forward.6} parent=31 // pred_region
          _
        $region52: #{cnn_forward.6} parent=31 // pred_fallthru
          _
      $region32: #{cnn_forward.6} parent=5 // pred_fallthru
        _
      %p9255 = scmp.le.s32.totalorder 2, %s15
      // Predicated region
      $region53: #{cnn_forward.6} parent=5 // pred_check
        %p9256 = pneg %p9255
      $region54: #{cnn_forward.6} parent=5 // pred_check_branch
        %9258 = sbr.rel (%p9256) target = $region56
      $region55: #{cnn_forward.6} parent=5 // pred_region
        %s9259 = ssub.s32 %s15, 2
        // Predicated region
        $region57: #{cnn_forward.6} parent=55 // pred_check
          %p9260 = pneg %p136
        $region58: #{cnn_forward.6} parent=55 // pred_check_branch
          %9262 = sbr.rel (%p9260) target = $region60
        $region59: #{cnn_forward.6} parent=55 // pred_region
          %p9263 = scmp.lt.s32.totalorder %s26, 1
          %s9264 = scalar_select %p9263, %s26, 1
          %s9265 = smul.addr %s9264, 2
          %s9266 = scalar_lea.vmem %s3, %s9265
        $region60: #{cnn_forward.6} parent=55 // pred_fallthru
          _
      $region56: #{cnn_forward.6} parent=5 // pred_fallthru
        _
    $region6: #{cnn_forward.6} parent=1 // loop_footer
      %s19 = sadd.s32 1, %s15
    $region7: #{cnn_forward.6} parent=1 // loop_footer_branch
      %14 = sbr.rel target = $region3
    $region8: #{cnn_forward.6} parent=1 // loop_exit
      _
    %9267 = vsyncpa [#allocation3], 1
    %s9268 = scalar_lea.sflag [#allocation3], 1
    %9269 = vsyncpa %s9268, 1
    %9270 = vsyncpa [#allocation5], 1
    %s9271 = scalar_lea.sflag [#allocation5], 1
    %9272 = vsyncpa %s9271, 1

</llo_original>
